<compile_context>
chip_gen: v7x
topology: tpu7x:2x2x1
jax: 0.10.0
libtpu: 0.0.40
codegen_flags: <defaults>
</compile_context>

<pallas_src>
import functools

import jax
import jax.numpy as jnp
from jax.experimental import pallas as pl
from jax.experimental.pallas import tpu as pltpu

NUM_CLASSES = 5
HIDDEN = 32            # transformer_hidden_dim (divisible by NHEAD=8)
NHEAD = 8              # nn.TransformerEncoderLayer(nhead=8)
HEAD_DIM = HIDDEN // NHEAD
NUM_LAYERS = 2         # num_transformer_layers
DFF = 2048             # PyTorch default dim_feedforward
DFF_CHUNK = 512        # FFN chunking over the feed-forward dimension
LN_EPS = 1e-5          # PyTorch LayerNorm default eps
BACKBONE_CH = 16       # stand-in backbone output channels (!= HIDDEN on purpose)
PATCH = 4              # stand-in backbone conv kernel/stride
CPP = 3 * PATCH * PATCH          # flattened patch size (3-channel input)
ATTN_W = 2 * HIDDEN + NHEAD * HIDDEN     # 320: [q | k | per-head (Wv@Wo)]

# ----- f32 weight-slab row layout (shared by host packing and kernel slicing) -----
ROW_ATTN = 0                               # L blocks of 32 rows: (32, 320) per layer
ROW_TOK = ROW_ATTN + NUM_LAYERS * HIDDEN   # 64 : folded patchify+proj weight (48, 32)
ROW_PE = ROW_TOK + CPP                     # 112: pointing embedding weight (3, 32)
ROW_FC = ROW_PE + 3                        # 115: classifier weight (32, 5)
ROW_VEC = ROW_FC + HIDDEN                  # 147: one small vector per row
VEC_B_TOK, VEC_B_PE, VEC_B_FC = 0, 1, 2
VEC_PER_LAYER = 8                          # b_q*s, b_k, b_o', g1, be1, g2, be2, b2
N_ROWS = ROW_VEC + 3 + NUM_LAYERS * VEC_PER_LAYER            # 166
N_ROWS_PAD = ((N_ROWS + 7) // 8) * 8                         # 168


def _layernorm(x, g, b):
    mu = jnp.mean(x, axis=-1, keepdims=True)
    xc = x - mu
    var = jnp.mean(xc * xc, axis=-1, keepdims=True)
    return xc * jax.lax.rsqrt(var + LN_EPS) * g + b


# --------------------------- fused forward kernel ---------------------------
def _fused_forward_kernel(bblk, n_img_tok, seq_real, seq_pad,
                          patches_ref, point_ref, wf_ref, b1_ref, w1_ref, w2_ref,
                          o_ref):
    D, H, hd = HIDDEN, NHEAD, HEAD_DIM
    mrows = bblk * seq_pad

    def vrow(r, n=D):                      # (1, n) vector from the f32 slab
        return wf_ref[ROW_VEC + r:ROW_VEC + r + 1, 0:n]

    # ---- token construction, fully in registers (no scratch round trips) ----
    w_tok = wf_ref[ROW_TOK:ROW_TOK + CPP, 0:D]                       # (48, 32)
    w_pe = wf_ref[ROW_PE:ROW_PE + 3, 0:D]                            # (3, 32)
    img_tok = jnp.dot(patches_ref[...], w_tok,
                      preferred_element_type=jnp.float32) + vrow(VEC_B_TOK)   # (M, D)
    pt = jnp.dot(point_ref[...].reshape(bblk, 3), w_pe,
                 preferred_element_type=jnp.float32) + vrow(VEC_B_PE)         # (bblk, D)
    # insert the pointing token at sequence position n_img_tok via one-hot select
    seq_iota = jax.lax.broadcasted_iota(jnp.int32, (seq_pad, 1), 0)           # (S, 1)
    x = jnp.where(seq_iota == n_img_tok,
                  pt.reshape(bblk, 1, D),
                  img_tok.reshape(bblk, seq_pad, D)).reshape(mrows, D)

    # additive mask for padded key columns (real keys: [0, seq_real))
    kv_iota = jax.lax.broadcasted_iota(jnp.int32, (1, seq_pad), 1)
    key_bias = jnp.where(kv_iota < seq_real, 0.0, -1e30)

    for li in range(NUM_LAYERS):           # static unroll; weights resident in VMEM
        v0 = 3 + li * VEC_PER_LAYER
        # ---- attention: ONE fused projection matmul [q | k | per-head x@(Wv_h@Wo_h)]
        a0 = ROW_ATTN + li * D
        proj = jnp.dot(x, wf_ref[a0:a0 + D, :],
                       preferred_element_type=jnp.float32)           # (M, 320)
        q = proj[:, 0:D] + vrow(v0 + 0)    # 1/sqrt(hd) pre-folded into Wq / b_q
        k = proj[:, D:2 * D] + vrow(v0 + 1)
        vp = proj[:, 2 * D:]               # (M, 256): head h -> lanes [h*32, h*32+32)

        attn_rows = []
        for b in range(bblk):              # per-sample attention (static unroll)
            r0 = b * seq_pad
            qb = q[r0:r0 + seq_pad]
            kb = k[r0:r0 + seq_pad]
            vb = vp[r0:r0 + seq_pad]
            acc = None
            for h in range(H):
                c0 = h * hd
                s = jax.lax.dot_general(                              # q_h @ k_h^T
                    qb[:, c0:c0 + hd], kb[:, c0:c0 + hd],
                    (((1,), (1,)), ((), ())),
                    preferred_element_type=jnp.float32)               # (S, S)
                s = s + key_bias
                s = s - jnp.max(s, axis=-1, keepdims=True)
                p = jnp.exp(s)
                p = p / jnp.sum(p, axis=-1, keepdims=True)            # exact softmax
                ctx = jnp.dot(p, vb[:, h * D:(h + 1) * D],
                              preferred_element_type=jnp.float32)     # (S, 32)
                acc = ctx if acc is None else acc + ctx
            attn_rows.append(acc)
        attn = attn_rows[0] if bblk == 1 else jnp.concatenate(attn_rows, axis=0)
        attn = attn + vrow(v0 + 2)         # b_o' = b_o + b_v @ W_o (host-folded)

        # post-norm residual blocks (norm_first=False default)
        x = _layernorm(x + attn, vrow(v0 + 3), vrow(v0 + 4))

        # ---- FFN: bf16 weights, f32 accumulation, chunked over DFF ----
        xb = x.astype(jnp.bfloat16)
        ffn = jnp.zeros((mrows, D), jnp.float32)
        for c0 in range(0, DFF, DFF_CHUNK):
            h1 = jnp.dot(xb, w1_ref[li, :, c0:c0 + DFF_CHUNK],
                         preferred_element_type=jnp.float32)
            h1 = jnp.maximum(h1 + b1_ref[li:li + 1, c0:c0 + DFF_CHUNK], 0.0)
            ffn = ffn + jnp.dot(h1.astype(jnp.bfloat16),
                                w2_ref[li, c0:c0 + DFF_CHUNK, :],
                                preferred_element_type=jnp.float32)
        x = _layernorm(x + ffn + vrow(v0 + 7), vrow(v0 + 5), vrow(v0 + 6))

    # ---- classifier on the pointing token (static row slices, no scratch) ----
    rows = [x[b * seq_pad + (seq_real - 1):b * seq_pad + seq_real, :]
            for b in range(bblk)]
    last = rows[0] if bblk == 1 else jnp.concatenate(rows, axis=0)    # (bblk, D)
    logits = jnp.dot(last, wf_ref[ROW_FC:ROW_FC + D, 0:NUM_CLASSES],
                     preferred_element_type=jnp.float32) + vrow(VEC_B_FC, NUM_CLASSES)
    o_ref[0] = logits


def _full_spec(a):
    nd = a.ndim
    return pl.BlockSpec(a.shape, lambda i, _nd=nd: (0,) * _nd)


def _choose_bblk(batch, s_pad):
    # Fold batch into the matmul M dimension (raise MXU row utilization), but keep
    # >= 2 grid steps whenever B >= 2 so both v7x TensorCores get work.
    best = 1
    for cand in range(1, batch + 1):
        if batch % cand != 0:
            continue
        if batch > 1 and batch // cand < 2:
            continue
        if cand * s_pad > 256:
            continue
        best = cand
    return best


# ------------------------------- forward wrapper -------------------------------
def forward(weights, image, pointing_vector):
    B, C, Himg, Wimg = image.shape
    hp, wp = Himg // PATCH, Wimg // PATCH
    P = hp * wp
    S_real = P + 1
    S_pad = ((S_real + 7) // 8) * 8
    cpp = C * PATCH * PATCH
    assert cpp == CPP, "weight slab was packed for 3-channel 4x4 patches"

    # host-side patchify (pure layout on tiny images), padded to S_pad rows so the
    # kernel sees a flat (bblk*S_pad, CPP) slab and needs no masked sub-tile stores
    patches = image.reshape(B, C, hp, PATCH, wp, PATCH)
    patches = patches.transpose(0, 2, 4, 1, 3, 5).reshape(B, P, cpp)
    patches = jnp.pad(patches, ((0, 0), (0, S_pad - P), (0, 0)))
    patches = patches.reshape(B * S_pad, cpp)
    point3 = pointing_vector.reshape(B, 1, pointing_vector.shape[-1])

    bblk = _choose_bblk(B, S_pad)
    nblk = B // bblk

    kernel = functools.partial(_fused_forward_kernel, bblk, P, S_real, S_pad)

    out = pl.pallas_call(
        kernel,
        out_shape=jax.ShapeDtypeStruct((nblk, bblk, NUM_CLASSES), jnp.float32),
        grid=(nblk,),
        in_specs=[pl.BlockSpec((bblk * S_pad, cpp), lambda i: (i, 0)),
                  pl.BlockSpec((bblk, 1, 3), lambda i: (i, 0, 0)),
                  _full_spec(weights["w_f32"]),
                  _full_spec(weights["b1"]),
                  _full_spec(weights["w1"]),
                  _full_spec(weights["w2"])],
        out_specs=pl.BlockSpec((1, bblk, NUM_CLASSES), lambda i: (i, 0, 0)),
        compiler_params=pltpu.CompilerParams(dimension_semantics=("parallel",)),
    )(patches, point3, weights["w_f32"], weights["b1"], weights["w1"], weights["w2"])
    return out.reshape(B, NUM_CLASSES)


# ---------------- parameter init (deterministic, synthetic, PyTorch-shaped) ----------------
def init_params(key):
    ks = jax.random.split(key, 4 + NUM_LAYERS)

    def w(k, shape, scale=0.02):
        return scale * jax.random.normal(k, shape, jnp.float32)

    p = {
        "w_patch": w(ks[0], (3 * PATCH * PATCH, BACKBONE_CH)),
        "b_patch": jnp.zeros((BACKBONE_CH,), jnp.float32),
        "w_proj": w(ks[1], (BACKBONE_CH, HIDDEN)),     # Linear(channels, hidden)
        "b_proj": jnp.zeros((HIDDEN,), jnp.float32),
        "w_pe": w(ks[2], (3, HIDDEN)),                 # pointing_embedding
        "b_pe": jnp.zeros((HIDDEN,), jnp.float32),
        "w_fc": w(ks[3], (HIDDEN, NUM_CLASSES)),       # fc
        "b_fc": jnp.zeros((NUM_CLASSES,), jnp.float32),
    }
    layers = []
    for li in range(NUM_LAYERS):
        lk = jax.random.split(ks[4 + li], 4)
        layers.append(dict(
            w_qkv=w(lk[0], (HIDDEN, 3 * HIDDEN)), b_qkv=jnp.zeros((3 * HIDDEN,), jnp.float32),
            w_o=w(lk[1], (HIDDEN, HIDDEN)),       b_o=jnp.zeros((HIDDEN,), jnp.float32),
            w_1=w(lk[2], (HIDDEN, DFF)),          b_1=jnp.zeros((DFF,), jnp.float32),
            w_2=w(lk[3], (DFF, HIDDEN)),          b_2=jnp.zeros((HIDDEN,), jnp.float32),
            g_1=jnp.ones((HIDDEN,), jnp.float32), be_1=jnp.zeros((HIDDEN,), jnp.float32),
            g_2=jnp.ones((HIDDEN,), jnp.float32), be_2=jnp.zeros((HIDDEN,), jnp.float32),
        ))
    p["layers"] = layers
    return p


# ---------------- one-time host-side weight preparation / packing ----------------
def prepare_weights(p):
    D, H, hd = HIDDEN, NHEAD, HEAD_DIM
    scale = 1.0 / float(HEAD_DIM) ** 0.5
    slab = jnp.zeros((N_ROWS_PAD, ATTN_W), jnp.float32)

    # fold patchify conv + hidden projection (no nonlinearity between them)
    w_tok = jnp.dot(p["w_patch"], p["w_proj"])                         # (CPP, D)
    b_tok = jnp.dot(p["b_patch"], p["w_proj"]) + p["b_proj"]           # (D,)
    slab = slab.at[ROW_TOK:ROW_TOK + CPP, 0:D].set(w_tok)
    slab = slab.at[ROW_PE:ROW_PE + 3, 0:D].set(p["w_pe"])
    slab = slab.at[ROW_FC:ROW_FC + D, 0:NUM_CLASSES].set(p["w_fc"])
    slab = slab.at[ROW_VEC + VEC_B_TOK, 0:D].set(b_tok)
    slab = slab.at[ROW_VEC + VEC_B_PE, 0:D].set(p["b_pe"])
    slab = slab.at[ROW_VEC + VEC_B_FC, 0:NUM_CLASSES].set(p["b_fc"])

    b1_list, w1_list, w2_list = [], [], []
    for li, lp in enumerate(p["layers"]):
        wq = lp["w_qkv"][:, :D] * scale          # fold 1/sqrt(head_dim) into q
        wk = lp["w_qkv"][:, D:2 * D]
        wv = lp["w_qkv"][:, 2 * D:]
        bq = lp["b_qkv"][:D] * scale
        bk = lp["b_qkv"][D:2 * D]
        bv = lp["b_qkv"][2 * D:]
        # fold Wo into Wv per head: W'_h = Wv_h @ Wo_h; bias: b_o' = b_o + b_v @ Wo
        wvo = jnp.einsum('dhe,hef->dhf', wv.reshape(D, H, hd),
                         lp["w_o"].reshape(H, hd, D)).reshape(D, H * D)
        bo_p = lp["b_o"] + jnp.dot(bv, lp["w_o"])

        r0 = ROW_ATTN + li * D
        slab = slab.at[r0:r0 + D, 0:D].set(wq)
        slab = slab.at[r0:r0 + D, D:2 * D].set(wk)
        slab = slab.at[r0:r0 + D, 2 * D:].set(wvo)
        v0 = ROW_VEC + 3 + li * VEC_PER_LAYER
        slab = slab.at[v0 + 0, 0:D].set(bq)
        slab = slab.at[v0 + 1, 0:D].set(bk)
        slab = slab.at[v0 + 2, 0:D].set(bo_p)
        slab = slab.at[v0 + 3, 0:D].set(lp["g_1"])
        slab = slab.at[v0 + 4, 0:D].set(lp["be_1"])
        slab = slab.at[v0 + 5, 0:D].set(lp["g_2"])
        slab = slab.at[v0 + 6, 0:D].set(lp["be_2"])
        slab = slab.at[v0 + 7, 0:D].set(lp["b_2"])

        b1_list.append(lp["b_1"])
        w1_list.append(lp["w_1"].astype(jnp.bfloat16))
        w2_list.append(lp["w_2"].astype(jnp.bfloat16))

    return {
        "w_f32": slab,                                  # (168, 320) f32
        "b1": jnp.stack(b1_list, axis=0),               # (L, DFF)    f32
        "w1": jnp.stack(w1_list, axis=0),               # (L, D, DFF) bf16
        "w2": jnp.stack(w2_list, axis=0),               # (L, DFF, D) bf16
    }


if __name__ == "__main__":
    key = jax.random.PRNGKey(0)
    kp, ki, kv = jax.random.split(key, 3)
    params = init_params(kp)
    weights = prepare_weights(params)

    image = jax.random.normal(ki, (2, 3, 16, 16), jnp.float32)        # NCHW
    pointing_vector = jax.random.normal(kv, (2, 3), jnp.float32)

    out = forward(weights, image, pointing_vector)
    jax.block_until_ready(out)
    assert out.shape == (2, NUM_CLASSES) and out.dtype == jnp.float32
    assert bool(jnp.all(jnp.isfinite(out)))
    print("KERNEL_OK")
</pallas_src>

<mosaic_0001>
module attributes {stable_mosaic.version = 11 : i64} {
  func.func @_fused_forward_kernel(%arg0: i32, %arg1: memref<24x48xf32, #tpu.memory_space<vmem>>, %arg2: memref<1x1x3xf32, #tpu.memory_space<vmem>>, %arg3: memref<168x320xf32, #tpu.memory_space<vmem>>, %arg4: memref<2x2048xf32, #tpu.memory_space<vmem>>, %arg5: memref<2x32x2048xbf16, #tpu.memory_space<vmem>>, %arg6: memref<2x2048x32xbf16, #tpu.memory_space<vmem>>, %arg7: memref<1x1x5xf32, #tpu.memory_space<vmem>>) attributes {dimension_semantics = [#tpu.dimension_semantics<parallel>], iteration_bounds = array<i64: 2>, scalar_prefetch = 0 : i64, scratch_operands = 0 : i64, tpu.core_type = #tpu.core_type<tc>, window_params = [{transform_indices = @transform_0, window_bounds = array<i64: 24, 48>}, {transform_indices = @transform_1, window_bounds = array<i64: 1, 1, 3>}, {pipeline_mode = #tpu.pipeline_mode<synchronous>, transform_indices = @transform_2, window_bounds = array<i64: 168, 320>}, {pipeline_mode = #tpu.pipeline_mode<synchronous>, transform_indices = @transform_3, window_bounds = array<i64: 2, 2048>}, {pipeline_mode = #tpu.pipeline_mode<synchronous>, transform_indices = @transform_4, window_bounds = array<i64: 2, 32, 2048>}, {pipeline_mode = #tpu.pipeline_mode<synchronous>, transform_indices = @transform_5, window_bounds = array<i64: 2, 2048, 32>}, {transform_indices = @transform_6, window_bounds = array<i64: 1, 1, 5>}]} {
    %c64 = arith.constant 64 : index
    %c0 = arith.constant 0 : index
    %0 = vector.load %arg3[%c64, %c0] : memref<168x320xf32, #tpu.memory_space<vmem>>, vector<48x32xf32>
    %c112 = arith.constant 112 : index
    %c0_0 = arith.constant 0 : index
    %1 = vector.load %arg3[%c112, %c0_0] : memref<168x320xf32, #tpu.memory_space<vmem>>, vector<3x32xf32>
    %c0_1 = arith.constant 0 : index
    %c0_2 = arith.constant 0 : index
    %2 = vector.load %arg1[%c0_1, %c0_2] : memref<24x48xf32, #tpu.memory_space<vmem>>, vector<24x48xf32>
    %cst = arith.constant dense<0.000000e+00> : vector<24x32xf32>
    %3 = tpu.matmul %2, %0, %cst {dimension_numbers = #tpu.dot_dimension_numbers<[1], [0], [0], [1], [0, 0, 1, 1], [], []>} : vector<24x48xf32>, vector<48x32xf32>, vector<24x32xf32> -> vector<24x32xf32>
    %c147 = arith.constant 147 : index
    %c0_3 = arith.constant 0 : index
    %4 = vector.load %arg3[%c147, %c0_3] : memref<168x320xf32, #tpu.memory_space<vmem>>, vector<1x32xf32>
    %5 = vector.broadcast %4 : vector<1x32xf32> to vector<24x32xf32>
    %6 = arith.addf %3, %5 : vector<24x32xf32>
    %c0_4 = arith.constant 0 : index
    %c0_5 = arith.constant 0 : index
    %c0_6 = arith.constant 0 : index
    %7 = vector.load %arg2[%c0_4, %c0_5, %c0_6] : memref<1x1x3xf32, #tpu.memory_space<vmem>>, vector<1x1x3xf32>
    %8 = vector.shape_cast %7 : vector<1x1x3xf32> to vector<1x3xf32>
    %cst_7 = arith.constant dense<0.000000e+00> : vector<1x32xf32>
    %9 = tpu.matmul %8, %1, %cst_7 {dimension_numbers = #tpu.dot_dimension_numbers<[1], [0], [0], [1], [0, 0, 1, 1], [], []>} : vector<1x3xf32>, vector<3x32xf32>, vector<1x32xf32> -> vector<1x32xf32>
    %c148 = arith.constant 148 : index
    %c0_8 = arith.constant 0 : index
    %10 = vector.load %arg3[%c148, %c0_8] : memref<168x320xf32, #tpu.memory_space<vmem>>, vector<1x32xf32>
    %11 = arith.addf %9, %10 : vector<1x32xf32>
    %12 = tpu.iota {dimensions = array<i32: 0>} : vector<24x1xi32>
    %c16_i32 = arith.constant 16 : i32
    %13 = vector.broadcast %c16_i32 : i32 to vector<24x1xi32>
    %14 = arith.cmpi eq, %12, %13 : vector<24x1xi32>
    %15 = vector.shape_cast %11 : vector<1x32xf32> to vector<1x1x32xf32>
    %16 = vector.shape_cast %6 : vector<24x32xf32> to vector<1x24x32xf32>
    %17 = vector.shape_cast %14 : vector<24x1xi1> to vector<1x24x1xi1>
    %18 = vector.broadcast %17 : vector<1x24x1xi1> to vector<1x24x32xi1>
    %19 = vector.shape_cast %15 : vector<1x1x32xf32> to vector<1x1x32xf32>
    %20 = vector.broadcast %19 : vector<1x1x32xf32> to vector<1x24x32xf32>
    %21 = arith.select %18, %20, %16 : vector<1x24x32xi1>, vector<1x24x32xf32>
    %22 = vector.shape_cast %21 : vector<1x24x32xf32> to vector<24x32xf32>
    %23 = tpu.iota {dimensions = array<i32: 1>} : vector<1x24xi32>
    %c17_i32 = arith.constant 17 : i32
    %24 = vector.broadcast %c17_i32 : i32 to vector<1x24xi32>
    %25 = arith.cmpi slt, %23, %24 : vector<1x24xi32>
    %cst_9 = arith.constant 0.000000e+00 : f32
    %cst_10 = arith.constant -1.000000e+30 : f32
    %26 = vector.broadcast %cst_9 : f32 to vector<1x24xf32>
    %27 = vector.broadcast %cst_10 : f32 to vector<1x24xf32>
    %28 = arith.select %25, %26, %27 : vector<1x24xi1>, vector<1x24xf32>
    %c0_11 = arith.constant 0 : index
    %c0_12 = arith.constant 0 : index
    %29 = vector.load %arg3[%c0_11, %c0_12] : memref<168x320xf32, #tpu.memory_space<vmem>>, vector<32x320xf32>
    %cst_13 = arith.constant dense<0.000000e+00> : vector<24x320xf32>
    %30 = tpu.matmul %22, %29, %cst_13 {dimension_numbers = #tpu.dot_dimension_numbers<[1], [0], [0], [1], [0, 0, 1, 1], [], []>} : vector<24x32xf32>, vector<32x320xf32>, vector<24x320xf32> -> vector<24x320xf32>
    %31 = vector.extract_strided_slice %30 {offsets = [0, 0], sizes = [24, 32], strides = [1, 1]} : vector<24x320xf32> to vector<24x32xf32>
    %c150 = arith.constant 150 : index
    %c0_14 = arith.constant 0 : index
    %32 = vector.load %arg3[%c150, %c0_14] : memref<168x320xf32, #tpu.memory_space<vmem>>, vector<1x32xf32>
    %33 = vector.broadcast %32 : vector<1x32xf32> to vector<24x32xf32>
    %34 = arith.addf %31, %33 : vector<24x32xf32>
    %35 = vector.extract_strided_slice %30 {offsets = [0, 32], sizes = [24, 32], strides = [1, 1]} : vector<24x320xf32> to vector<24x32xf32>
    %c151 = arith.constant 151 : index
    %c0_15 = arith.constant 0 : index
    %36 = vector.load %arg3[%c151, %c0_15] : memref<168x320xf32, #tpu.memory_space<vmem>>, vector<1x32xf32>
    %37 = vector.broadcast %36 : vector<1x32xf32> to vector<24x32xf32>
    %38 = arith.addf %35, %37 : vector<24x32xf32>
    %39 = vector.extract_strided_slice %30 {offsets = [0, 64], sizes = [24, 256], strides = [1, 1]} : vector<24x320xf32> to vector<24x256xf32>
    %40 = vector.extract_strided_slice %34 {offsets = [0, 0], sizes = [24, 4], strides = [1, 1]} : vector<24x32xf32> to vector<24x4xf32>
    %41 = vector.extract_strided_slice %38 {offsets = [0, 0], sizes = [24, 4], strides = [1, 1]} : vector<24x32xf32> to vector<24x4xf32>
    %cst_16 = arith.constant dense<0.000000e+00> : vector<24x24xf32>
    %42 = tpu.matmul %40, %41, %cst_16 {dimension_numbers = #tpu.dot_dimension_numbers<[1], [1], [0], [0], [0, 0, 1, 0], [], []>} : vector<24x4xf32>, vector<24x4xf32>, vector<24x24xf32> -> vector<24x24xf32>
    %43 = vector.broadcast %28 : vector<1x24xf32> to vector<24x24xf32>
    %44 = arith.addf %42, %43 : vector<24x24xf32>
    %cst_17 = arith.constant dense<0xFF800000> : vector<24xf32>
    %45 = vector.multi_reduction <maximumf>, %44, %cst_17 [1] : vector<24x24xf32> to vector<24xf32>
    %46 = vector.shape_cast %45 : vector<24xf32> to vector<24x1xf32>
    %47 = vector.broadcast %46 : vector<24x1xf32> to vector<24x24xf32>
    %48 = arith.subf %44, %47 : vector<24x24xf32>
    %49 = math.exp %48 : vector<24x24xf32>
    %cst_18 = arith.constant dense<0.000000e+00> : vector<24xf32>
    %50 = vector.multi_reduction <add>, %49, %cst_18 [1] : vector<24x24xf32> to vector<24xf32>
    %51 = vector.shape_cast %50 : vector<24xf32> to vector<24x1xf32>
    %52 = vector.broadcast %51 : vector<24x1xf32> to vector<24x24xf32>
    %53 = arith.divf %49, %52 : vector<24x24xf32>
    %54 = vector.extract_strided_slice %39 {offsets = [0, 0], sizes = [24, 32], strides = [1, 1]} : vector<24x256xf32> to vector<24x32xf32>
    %cst_19 = arith.constant dense<0.000000e+00> : vector<24x32xf32>
    %55 = tpu.matmul %53, %54, %cst_19 {dimension_numbers = #tpu.dot_dimension_numbers<[1], [0], [0], [1], [0, 0, 1, 1], [], []>} : vector<24x24xf32>, vector<24x32xf32>, vector<24x32xf32> -> vector<24x32xf32>
    %56 = vector.extract_strided_slice %34 {offsets = [0, 4], sizes = [24, 4], strides = [1, 1]} : vector<24x32xf32> to vector<24x4xf32>
    %57 = vector.extract_strided_slice %38 {offsets = [0, 4], sizes = [24, 4], strides = [1, 1]} : vector<24x32xf32> to vector<24x4xf32>
    %cst_20 = arith.constant dense<0.000000e+00> : vector<24x24xf32>
    %58 = tpu.matmul %56, %57, %cst_20 {dimension_numbers = #tpu.dot_dimension_numbers<[1], [1], [0], [0], [0, 0, 1, 0], [], []>} : vector<24x4xf32>, vector<24x4xf32>, vector<24x24xf32> -> vector<24x24xf32>
    %59 = vector.broadcast %28 : vector<1x24xf32> to vector<24x24xf32>
    %60 = arith.addf %58, %59 : vector<24x24xf32>
    %cst_21 = arith.constant dense<0xFF800000> : vector<24xf32>
    %61 = vector.multi_reduction <maximumf>, %60, %cst_21 [1] : vector<24x24xf32> to vector<24xf32>
    %62 = vector.shape_cast %61 : vector<24xf32> to vector<24x1xf32>
    %63 = vector.broadcast %62 : vector<24x1xf32> to vector<24x24xf32>
    %64 = arith.subf %60, %63 : vector<24x24xf32>
    %65 = math.exp %64 : vector<24x24xf32>
    %cst_22 = arith.constant dense<0.000000e+00> : vector<24xf32>
    %66 = vector.multi_reduction <add>, %65, %cst_22 [1] : vector<24x24xf32> to vector<24xf32>
    %67 = vector.shape_cast %66 : vector<24xf32> to vector<24x1xf32>
    %68 = vector.broadcast %67 : vector<24x1xf32> to vector<24x24xf32>
    %69 = arith.divf %65, %68 : vector<24x24xf32>
    %70 = vector.extract_strided_slice %39 {offsets = [0, 32], sizes = [24, 32], strides = [1, 1]} : vector<24x256xf32> to vector<24x32xf32>
    %cst_23 = arith.constant dense<0.000000e+00> : vector<24x32xf32>
    %71 = tpu.matmul %69, %70, %cst_23 {dimension_numbers = #tpu.dot_dimension_numbers<[1], [0], [0], [1], [0, 0, 1, 1], [], []>} : vector<24x24xf32>, vector<24x32xf32>, vector<24x32xf32> -> vector<24x32xf32>
    %72 = arith.addf %55, %71 : vector<24x32xf32>
    %73 = vector.extract_strided_slice %34 {offsets = [0, 8], sizes = [24, 4], strides = [1, 1]} : vector<24x32xf32> to vector<24x4xf32>
    %74 = vector.extract_strided_slice %38 {offsets = [0, 8], sizes = [24, 4], strides = [1, 1]} : vector<24x32xf32> to vector<24x4xf32>
    %cst_24 = arith.constant dense<0.000000e+00> : vector<24x24xf32>
    %75 = tpu.matmul %73, %74, %cst_24 {dimension_numbers = #tpu.dot_dimension_numbers<[1], [1], [0], [0], [0, 0, 1, 0], [], []>} : vector<24x4xf32>, vector<24x4xf32>, vector<24x24xf32> -> vector<24x24xf32>
    %76 = vector.broadcast %28 : vector<1x24xf32> to vector<24x24xf32>
    %77 = arith.addf %75, %76 : vector<24x24xf32>
    %cst_25 = arith.constant dense<0xFF800000> : vector<24xf32>
    %78 = vector.multi_reduction <maximumf>, %77, %cst_25 [1] : vector<24x24xf32> to vector<24xf32>
    %79 = vector.shape_cast %78 : vector<24xf32> to vector<24x1xf32>
    %80 = vector.broadcast %79 : vector<24x1xf32> to vector<24x24xf32>
    %81 = arith.subf %77, %80 : vector<24x24xf32>
    %82 = math.exp %81 : vector<24x24xf32>
    %cst_26 = arith.constant dense<0.000000e+00> : vector<24xf32>
    %83 = vector.multi_reduction <add>, %82, %cst_26 [1] : vector<24x24xf32> to vector<24xf32>
    %84 = vector.shape_cast %83 : vector<24xf32> to vector<24x1xf32>
    %85 = vector.broadcast %84 : vector<24x1xf32> to vector<24x24xf32>
    %86 = arith.divf %82, %85 : vector<24x24xf32>
    %87 = vector.extract_strided_slice %39 {offsets = [0, 64], sizes = [24, 32], strides = [1, 1]} : vector<24x256xf32> to vector<24x32xf32>
    %cst_27 = arith.constant dense<0.000000e+00> : vector<24x32xf32>
    %88 = tpu.matmul %86, %87, %cst_27 {dimension_numbers = #tpu.dot_dimension_numbers<[1], [0], [0], [1], [0, 0, 1, 1], [], []>} : vector<24x24xf32>, vector<24x32xf32>, vector<24x32xf32> -> vector<24x32xf32>
    %89 = arith.addf %72, %88 : vector<24x32xf32>
    %90 = vector.extract_strided_slice %34 {offsets = [0, 12], sizes = [24, 4], strides = [1, 1]} : vector<24x32xf32> to vector<24x4xf32>
    %91 = vector.extract_strided_slice %38 {offsets = [0, 12], sizes = [24, 4], strides = [1, 1]} : vector<24x32xf32> to vector<24x4xf32>
    %cst_28 = arith.constant dense<0.000000e+00> : vector<24x24xf32>
    %92 = tpu.matmul %90, %91, %cst_28 {dimension_numbers = #tpu.dot_dimension_numbers<[1], [1], [0], [0], [0, 0, 1, 0], [], []>} : vector<24x4xf32>, vector<24x4xf32>, vector<24x24xf32> -> vector<24x24xf32>
    %93 = vector.broadcast %28 : vector<1x24xf32> to vector<24x24xf32>
    %94 = arith.addf %92, %93 : vector<24x24xf32>
    %cst_29 = arith.constant dense<0xFF800000> : vector<24xf32>
    %95 = vector.multi_reduction <maximumf>, %94, %cst_29 [1] : vector<24x24xf32> to vector<24xf32>
    %96 = vector.shape_cast %95 : vector<24xf32> to vector<24x1xf32>
    %97 = vector.broadcast %96 : vector<24x1xf32> to vector<24x24xf32>
    %98 = arith.subf %94, %97 : vector<24x24xf32>
    %99 = math.exp %98 : vector<24x24xf32>
    %cst_30 = arith.constant dense<0.000000e+00> : vector<24xf32>
    %100 = vector.multi_reduction <add>, %99, %cst_30 [1] : vector<24x24xf32> to vector<24xf32>
    %101 = vector.shape_cast %100 : vector<24xf32> to vector<24x1xf32>
    %102 = vector.broadcast %101 : vector<24x1xf32> to vector<24x24xf32>
    %103 = arith.divf %99, %102 : vector<24x24xf32>
    %104 = vector.extract_strided_slice %39 {offsets = [0, 96], sizes = [24, 32], strides = [1, 1]} : vector<24x256xf32> to vector<24x32xf32>
    %cst_31 = arith.constant dense<0.000000e+00> : vector<24x32xf32>
    %105 = tpu.matmul %103, %104, %cst_31 {dimension_numbers = #tpu.dot_dimension_numbers<[1], [0], [0], [1], [0, 0, 1, 1], [], []>} : vector<24x24xf32>, vector<24x32xf32>, vector<24x32xf32> -> vector<24x32xf32>
    %106 = arith.addf %89, %105 : vector<24x32xf32>
    %107 = vector.extract_strided_slice %34 {offsets = [0, 16], sizes = [24, 4], strides = [1, 1]} : vector<24x32xf32> to vector<24x4xf32>
    %108 = vector.extract_strided_slice %38 {offsets = [0, 16], sizes = [24, 4], strides = [1, 1]} : vector<24x32xf32> to vector<24x4xf32>
    %cst_32 = arith.constant dense<0.000000e+00> : vector<24x24xf32>
    %109 = tpu.matmul %107, %108, %cst_32 {dimension_numbers = #tpu.dot_dimension_numbers<[1], [1], [0], [0], [0, 0, 1, 0], [], []>} : vector<24x4xf32>, vector<24x4xf32>, vector<24x24xf32> -> vector<24x24xf32>
    %110 = vector.broadcast %28 : vector<1x24xf32> to vector<24x24xf32>
    %111 = arith.addf %109, %110 : vector<24x24xf32>
    %cst_33 = arith.constant dense<0xFF800000> : vector<24xf32>
    %112 = vector.multi_reduction <maximumf>, %111, %cst_33 [1] : vector<24x24xf32> to vector<24xf32>
    %113 = vector.shape_cast %112 : vector<24xf32> to vector<24x1xf32>
    %114 = vector.broadcast %113 : vector<24x1xf32> to vector<24x24xf32>
    %115 = arith.subf %111, %114 : vector<24x24xf32>
    %116 = math.exp %115 : vector<24x24xf32>
    %cst_34 = arith.constant dense<0.000000e+00> : vector<24xf32>
    %117 = vector.multi_reduction <add>, %116, %cst_34 [1] : vector<24x24xf32> to vector<24xf32>
    %118 = vector.shape_cast %117 : vector<24xf32> to vector<24x1xf32>
    %119 = vector.broadcast %118 : vector<24x1xf32> to vector<24x24xf32>
    %120 = arith.divf %116, %119 : vector<24x24xf32>
    %121 = vector.extract_strided_slice %39 {offsets = [0, 128], sizes = [24, 32], strides = [1, 1]} : vector<24x256xf32> to vector<24x32xf32>
    %cst_35 = arith.constant dense<0.000000e+00> : vector<24x32xf32>
    %122 = tpu.matmul %120, %121, %cst_35 {dimension_numbers = #tpu.dot_dimension_numbers<[1], [0], [0], [1], [0, 0, 1, 1], [], []>} : vector<24x24xf32>, vector<24x32xf32>, vector<24x32xf32> -> vector<24x32xf32>
    %123 = arith.addf %106, %122 : vector<24x32xf32>
    %124 = vector.extract_strided_slice %34 {offsets = [0, 20], sizes = [24, 4], strides = [1, 1]} : vector<24x32xf32> to vector<24x4xf32>
    %125 = vector.extract_strided_slice %38 {offsets = [0, 20], sizes = [24, 4], strides = [1, 1]} : vector<24x32xf32> to vector<24x4xf32>
    %cst_36 = arith.constant dense<0.000000e+00> : vector<24x24xf32>
    %126 = tpu.matmul %124, %125, %cst_36 {dimension_numbers = #tpu.dot_dimension_numbers<[1], [1], [0], [0], [0, 0, 1, 0], [], []>} : vector<24x4xf32>, vector<24x4xf32>, vector<24x24xf32> -> vector<24x24xf32>
    %127 = vector.broadcast %28 : vector<1x24xf32> to vector<24x24xf32>
    %128 = arith.addf %126, %127 : vector<24x24xf32>
    %cst_37 = arith.constant dense<0xFF800000> : vector<24xf32>
    %129 = vector.multi_reduction <maximumf>, %128, %cst_37 [1] : vector<24x24xf32> to vector<24xf32>
    %130 = vector.shape_cast %129 : vector<24xf32> to vector<24x1xf32>
    %131 = vector.broadcast %130 : vector<24x1xf32> to vector<24x24xf32>
    %132 = arith.subf %128, %131 : vector<24x24xf32>
    %133 = math.exp %132 : vector<24x24xf32>
    %cst_38 = arith.constant dense<0.000000e+00> : vector<24xf32>
    %134 = vector.multi_reduction <add>, %133, %cst_38 [1] : vector<24x24xf32> to vector<24xf32>
    %135 = vector.shape_cast %134 : vector<24xf32> to vector<24x1xf32>
    %136 = vector.broadcast %135 : vector<24x1xf32> to vector<24x24xf32>
    %137 = arith.divf %133, %136 : vector<24x24xf32>
    %138 = vector.extract_strided_slice %39 {offsets = [0, 160], sizes = [24, 32], strides = [1, 1]} : vector<24x256xf32> to vector<24x32xf32>
    %cst_39 = arith.constant dense<0.000000e+00> : vector<24x32xf32>
    %139 = tpu.matmul %137, %138, %cst_39 {dimension_numbers = #tpu.dot_dimension_numbers<[1], [0], [0], [1], [0, 0, 1, 1], [], []>} : vector<24x24xf32>, vector<24x32xf32>, vector<24x32xf32> -> vector<24x32xf32>
    %140 = arith.addf %123, %139 : vector<24x32xf32>
    %141 = vector.extract_strided_slice %34 {offsets = [0, 24], sizes = [24, 4], strides = [1, 1]} : vector<24x32xf32> to vector<24x4xf32>
    %142 = vector.extract_strided_slice %38 {offsets = [0, 24], sizes = [24, 4], strides = [1, 1]} : vector<24x32xf32> to vector<24x4xf32>
    %cst_40 = arith.constant dense<0.000000e+00> : vector<24x24xf32>
    %143 = tpu.matmul %141, %142, %cst_40 {dimension_numbers = #tpu.dot_dimension_numbers<[1], [1], [0], [0], [0, 0, 1, 0], [], []>} : vector<24x4xf32>, vector<24x4xf32>, vector<24x24xf32> -> vector<24x24xf32>
    %144 = vector.broadcast %28 : vector<1x24xf32> to vector<24x24xf32>
    %145 = arith.addf %143, %144 : vector<24x24xf32>
    %cst_41 = arith.constant dense<0xFF800000> : vector<24xf32>
    %146 = vector.multi_reduction <maximumf>, %145, %cst_41 [1] : vector<24x24xf32> to vector<24xf32>
    %147 = vector.shape_cast %146 : vector<24xf32> to vector<24x1xf32>
    %148 = vector.broadcast %147 : vector<24x1xf32> to vector<24x24xf32>
    %149 = arith.subf %145, %148 : vector<24x24xf32>
    %150 = math.exp %149 : vector<24x24xf32>
    %cst_42 = arith.constant dense<0.000000e+00> : vector<24xf32>
    %151 = vector.multi_reduction <add>, %150, %cst_42 [1] : vector<24x24xf32> to vector<24xf32>
    %152 = vector.shape_cast %151 : vector<24xf32> to vector<24x1xf32>
    %153 = vector.broadcast %152 : vector<24x1xf32> to vector<24x24xf32>
    %154 = arith.divf %150, %153 : vector<24x24xf32>
    %155 = vector.extract_strided_slice %39 {offsets = [0, 192], sizes = [24, 32], strides = [1, 1]} : vector<24x256xf32> to vector<24x32xf32>
    %cst_43 = arith.constant dense<0.000000e+00> : vector<24x32xf32>
    %156 = tpu.matmul %154, %155, %cst_43 {dimension_numbers = #tpu.dot_dimension_numbers<[1], [0], [0], [1], [0, 0, 1, 1], [], []>} : vector<24x24xf32>, vector<24x32xf32>, vector<24x32xf32> -> vector<24x32xf32>
    %157 = arith.addf %140, %156 : vector<24x32xf32>
    %158 = vector.extract_strided_slice %34 {offsets = [0, 28], sizes = [24, 4], strides = [1, 1]} : vector<24x32xf32> to vector<24x4xf32>
    %159 = vector.extract_strided_slice %38 {offsets = [0, 28], sizes = [24, 4], strides = [1, 1]} : vector<24x32xf32> to vector<24x4xf32>
    %cst_44 = arith.constant dense<0.000000e+00> : vector<24x24xf32>
    %160 = tpu.matmul %158, %159, %cst_44 {dimension_numbers = #tpu.dot_dimension_numbers<[1], [1], [0], [0], [0, 0, 1, 0], [], []>} : vector<24x4xf32>, vector<24x4xf32>, vector<24x24xf32> -> vector<24x24xf32>
    %161 = vector.broadcast %28 : vector<1x24xf32> to vector<24x24xf32>
    %162 = arith.addf %160, %161 : vector<24x24xf32>
    %cst_45 = arith.constant dense<0xFF800000> : vector<24xf32>
    %163 = vector.multi_reduction <maximumf>, %162, %cst_45 [1] : vector<24x24xf32> to vector<24xf32>
    %164 = vector.shape_cast %163 : vector<24xf32> to vector<24x1xf32>
    %165 = vector.broadcast %164 : vector<24x1xf32> to vector<24x24xf32>
    %166 = arith.subf %162, %165 : vector<24x24xf32>
    %167 = math.exp %166 : vector<24x24xf32>
    %cst_46 = arith.constant dense<0.000000e+00> : vector<24xf32>
    %168 = vector.multi_reduction <add>, %167, %cst_46 [1] : vector<24x24xf32> to vector<24xf32>
    %169 = vector.shape_cast %168 : vector<24xf32> to vector<24x1xf32>
    %170 = vector.broadcast %169 : vector<24x1xf32> to vector<24x24xf32>
    %171 = arith.divf %167, %170 : vector<24x24xf32>
    %172 = vector.extract_strided_slice %39 {offsets = [0, 224], sizes = [24, 32], strides = [1, 1]} : vector<24x256xf32> to vector<24x32xf32>
    %cst_47 = arith.constant dense<0.000000e+00> : vector<24x32xf32>
    %173 = tpu.matmul %171, %172, %cst_47 {dimension_numbers = #tpu.dot_dimension_numbers<[1], [0], [0], [1], [0, 0, 1, 1], [], []>} : vector<24x24xf32>, vector<24x32xf32>, vector<24x32xf32> -> vector<24x32xf32>
    %174 = arith.addf %157, %173 : vector<24x32xf32>
    %c152 = arith.constant 152 : index
    %c0_48 = arith.constant 0 : index
    %175 = vector.load %arg3[%c152, %c0_48] : memref<168x320xf32, #tpu.memory_space<vmem>>, vector<1x32xf32>
    %176 = vector.broadcast %175 : vector<1x32xf32> to vector<24x32xf32>
    %177 = arith.addf %174, %176 : vector<24x32xf32>
    %178 = arith.addf %22, %177 : vector<24x32xf32>
    %c153 = arith.constant 153 : index
    %c0_49 = arith.constant 0 : index
    %179 = vector.load %arg3[%c153, %c0_49] : memref<168x320xf32, #tpu.memory_space<vmem>>, vector<1x32xf32>
    %c154 = arith.constant 154 : index
    %c0_50 = arith.constant 0 : index
    %180 = vector.load %arg3[%c154, %c0_50] : memref<168x320xf32, #tpu.memory_space<vmem>>, vector<1x32xf32>
    %cst_51 = arith.constant dense<0.000000e+00> : vector<24xf32>
    %181 = vector.multi_reduction <add>, %178, %cst_51 [1] : vector<24x32xf32> to vector<24xf32>
    %182 = vector.shape_cast %181 : vector<24xf32> to vector<24x1xf32>
    %cst_52 = arith.constant 3.200000e+01 : f32
    %183 = vector.broadcast %cst_52 : f32 to vector<24x1xf32>
    %184 = arith.divf %182, %183 : vector<24x1xf32>
    %185 = vector.broadcast %184 : vector<24x1xf32> to vector<24x32xf32>
    %186 = arith.subf %178, %185 : vector<24x32xf32>
    %187 = arith.mulf %186, %186 : vector<24x32xf32>
    %cst_53 = arith.constant dense<0.000000e+00> : vector<24xf32>
    %188 = vector.multi_reduction <add>, %187, %cst_53 [1] : vector<24x32xf32> to vector<24xf32>
    %189 = vector.shape_cast %188 : vector<24xf32> to vector<24x1xf32>
    %cst_54 = arith.constant 3.200000e+01 : f32
    %190 = vector.broadcast %cst_54 : f32 to vector<24x1xf32>
    %191 = arith.divf %189, %190 : vector<24x1xf32>
    %cst_55 = arith.constant 9.99999974E-6 : f32
    %192 = vector.broadcast %cst_55 : f32 to vector<24x1xf32>
    %193 = arith.addf %191, %192 : vector<24x1xf32>
    %194 = math.rsqrt %193 : vector<24x1xf32>
    %195 = vector.broadcast %194 : vector<24x1xf32> to vector<24x32xf32>
    %196 = arith.mulf %186, %195 : vector<24x32xf32>
    %197 = vector.broadcast %179 : vector<1x32xf32> to vector<24x32xf32>
    %198 = arith.mulf %196, %197 : vector<24x32xf32>
    %199 = vector.broadcast %180 : vector<1x32xf32> to vector<24x32xf32>
    %200 = arith.addf %198, %199 : vector<24x32xf32>
    %201 = arith.truncf %200 : vector<24x32xf32> to vector<24x32xbf16>
    %cst_56 = arith.constant 0.000000e+00 : f32
    %202 = vector.broadcast %cst_56 : f32 to vector<24x32xf32>
    %c0_57 = arith.constant 0 : index
    %c0_58 = arith.constant 0 : index
    %c0_59 = arith.constant 0 : index
    %203 = vector.load %arg5[%c0_57, %c0_58, %c0_59] : memref<2x32x2048xbf16, #tpu.memory_space<vmem>>, vector<1x32x512xbf16>
    %204 = vector.shape_cast %203 : vector<1x32x512xbf16> to vector<32x512xbf16>
    %cst_60 = arith.constant dense<0.000000e+00> : vector<24x512xf32>
    %205 = tpu.matmul %201, %204, %cst_60 {dimension_numbers = #tpu.dot_dimension_numbers<[1], [0], [0], [1], [0, 0, 1, 1], [], []>} : vector<24x32xbf16>, vector<32x512xbf16>, vector<24x512xf32> -> vector<24x512xf32>
    %c0_61 = arith.constant 0 : index
    %c0_62 = arith.constant 0 : index
    %206 = vector.load %arg4[%c0_61, %c0_62] : memref<2x2048xf32, #tpu.memory_space<vmem>>, vector<1x512xf32>
    %207 = vector.broadcast %206 : vector<1x512xf32> to vector<24x512xf32>
    %208 = arith.addf %205, %207 : vector<24x512xf32>
    %cst_63 = arith.constant 0.000000e+00 : f32
    %209 = vector.broadcast %cst_63 : f32 to vector<24x512xf32>
    %210 = arith.maximumf %208, %209 : vector<24x512xf32>
    %211 = arith.truncf %210 : vector<24x512xf32> to vector<24x512xbf16>
    %c0_64 = arith.constant 0 : index
    %c0_65 = arith.constant 0 : index
    %c0_66 = arith.constant 0 : index
    %212 = vector.load %arg6[%c0_64, %c0_65, %c0_66] : memref<2x2048x32xbf16, #tpu.memory_space<vmem>>, vector<1x512x32xbf16>
    %213 = vector.shape_cast %212 : vector<1x512x32xbf16> to vector<512x32xbf16>
    %cst_67 = arith.constant dense<0.000000e+00> : vector<24x32xf32>
    %214 = tpu.matmul %211, %213, %cst_67 {dimension_numbers = #tpu.dot_dimension_numbers<[1], [0], [0], [1], [0, 0, 1, 1], [], []>} : vector<24x512xbf16>, vector<512x32xbf16>, vector<24x32xf32> -> vector<24x32xf32>
    %215 = arith.addf %202, %214 : vector<24x32xf32>
    %c0_68 = arith.constant 0 : index
    %c0_69 = arith.constant 0 : index
    %c512 = arith.constant 512 : index
    %216 = vector.load %arg5[%c0_68, %c0_69, %c512] : memref<2x32x2048xbf16, #tpu.memory_space<vmem>>, vector<1x32x512xbf16>
    %217 = vector.shape_cast %216 : vector<1x32x512xbf16> to vector<32x512xbf16>
    %cst_70 = arith.constant dense<0.000000e+00> : vector<24x512xf32>
    %218 = tpu.matmul %201, %217, %cst_70 {dimension_numbers = #tpu.dot_dimension_numbers<[1], [0], [0], [1], [0, 0, 1, 1], [], []>} : vector<24x32xbf16>, vector<32x512xbf16>, vector<24x512xf32> -> vector<24x512xf32>
    %c0_71 = arith.constant 0 : index
    %c512_72 = arith.constant 512 : index
    %219 = vector.load %arg4[%c0_71, %c512_72] : memref<2x2048xf32, #tpu.memory_space<vmem>>, vector<1x512xf32>
    %220 = vector.broadcast %219 : vector<1x512xf32> to vector<24x512xf32>
    %221 = arith.addf %218, %220 : vector<24x512xf32>
    %cst_73 = arith.constant 0.000000e+00 : f32
    %222 = vector.broadcast %cst_73 : f32 to vector<24x512xf32>
    %223 = arith.maximumf %221, %222 : vector<24x512xf32>
    %224 = arith.truncf %223 : vector<24x512xf32> to vector<24x512xbf16>
    %c0_74 = arith.constant 0 : index
    %c512_75 = arith.constant 512 : index
    %c0_76 = arith.constant 0 : index
    %225 = vector.load %arg6[%c0_74, %c512_75, %c0_76] : memref<2x2048x32xbf16, #tpu.memory_space<vmem>>, vector<1x512x32xbf16>
    %226 = vector.shape_cast %225 : vector<1x512x32xbf16> to vector<512x32xbf16>
    %cst_77 = arith.constant dense<0.000000e+00> : vector<24x32xf32>
    %227 = tpu.matmul %224, %226, %cst_77 {dimension_numbers = #tpu.dot_dimension_numbers<[1], [0], [0], [1], [0, 0, 1, 1], [], []>} : vector<24x512xbf16>, vector<512x32xbf16>, vector<24x32xf32> -> vector<24x32xf32>
    %228 = arith.addf %215, %227 : vector<24x32xf32>
    %c0_78 = arith.constant 0 : index
    %c0_79 = arith.constant 0 : index
    %c1024 = arith.constant 1024 : index
    %229 = vector.load %arg5[%c0_78, %c0_79, %c1024] : memref<2x32x2048xbf16, #tpu.memory_space<vmem>>, vector<1x32x512xbf16>
    %230 = vector.shape_cast %229 : vector<1x32x512xbf16> to vector<32x512xbf16>
    %cst_80 = arith.constant dense<0.000000e+00> : vector<24x512xf32>
    %231 = tpu.matmul %201, %230, %cst_80 {dimension_numbers = #tpu.dot_dimension_numbers<[1], [0], [0], [1], [0, 0, 1, 1], [], []>} : vector<24x32xbf16>, vector<32x512xbf16>, vector<24x512xf32> -> vector<24x512xf32>
    %c0_81 = arith.constant 0 : index
    %c1024_82 = arith.constant 1024 : index
    %232 = vector.load %arg4[%c0_81, %c1024_82] : memref<2x2048xf32, #tpu.memory_space<vmem>>, vector<1x512xf32>
    %233 = vector.broadcast %232 : vector<1x512xf32> to vector<24x512xf32>
    %234 = arith.addf %231, %233 : vector<24x512xf32>
    %cst_83 = arith.constant 0.000000e+00 : f32
    %235 = vector.broadcast %cst_83 : f32 to vector<24x512xf32>
    %236 = arith.maximumf %234, %235 : vector<24x512xf32>
    %237 = arith.truncf %236 : vector<24x512xf32> to vector<24x512xbf16>
    %c0_84 = arith.constant 0 : index
    %c1024_85 = arith.constant 1024 : index
    %c0_86 = arith.constant 0 : index
    %238 = vector.load %arg6[%c0_84, %c1024_85, %c0_86] : memref<2x2048x32xbf16, #tpu.memory_space<vmem>>, vector<1x512x32xbf16>
    %239 = vector.shape_cast %238 : vector<1x512x32xbf16> to vector<512x32xbf16>
    %cst_87 = arith.constant dense<0.000000e+00> : vector<24x32xf32>
    %240 = tpu.matmul %237, %239, %cst_87 {dimension_numbers = #tpu.dot_dimension_numbers<[1], [0], [0], [1], [0, 0, 1, 1], [], []>} : vector<24x512xbf16>, vector<512x32xbf16>, vector<24x32xf32> -> vector<24x32xf32>
    %241 = arith.addf %228, %240 : vector<24x32xf32>
    %c0_88 = arith.constant 0 : index
    %c0_89 = arith.constant 0 : index
    %c1536 = arith.constant 1536 : index
    %242 = vector.load %arg5[%c0_88, %c0_89, %c1536] : memref<2x32x2048xbf16, #tpu.memory_space<vmem>>, vector<1x32x512xbf16>
    %243 = vector.shape_cast %242 : vector<1x32x512xbf16> to vector<32x512xbf16>
    %cst_90 = arith.constant dense<0.000000e+00> : vector<24x512xf32>
    %244 = tpu.matmul %201, %243, %cst_90 {dimension_numbers = #tpu.dot_dimension_numbers<[1], [0], [0], [1], [0, 0, 1, 1], [], []>} : vector<24x32xbf16>, vector<32x512xbf16>, vector<24x512xf32> -> vector<24x512xf32>
    %c0_91 = arith.constant 0 : index
    %c1536_92 = arith.constant 1536 : index
    %245 = vector.load %arg4[%c0_91, %c1536_92] : memref<2x2048xf32, #tpu.memory_space<vmem>>, vector<1x512xf32>
    %246 = vector.broadcast %245 : vector<1x512xf32> to vector<24x512xf32>
    %247 = arith.addf %244, %246 : vector<24x512xf32>
    %cst_93 = arith.constant 0.000000e+00 : f32
    %248 = vector.broadcast %cst_93 : f32 to vector<24x512xf32>
    %249 = arith.maximumf %247, %248 : vector<24x512xf32>
    %250 = arith.truncf %249 : vector<24x512xf32> to vector<24x512xbf16>
    %c0_94 = arith.constant 0 : index
    %c1536_95 = arith.constant 1536 : index
    %c0_96 = arith.constant 0 : index
    %251 = vector.load %arg6[%c0_94, %c1536_95, %c0_96] : memref<2x2048x32xbf16, #tpu.memory_space<vmem>>, vector<1x512x32xbf16>
    %252 = vector.shape_cast %251 : vector<1x512x32xbf16> to vector<512x32xbf16>
    %cst_97 = arith.constant dense<0.000000e+00> : vector<24x32xf32>
    %253 = tpu.matmul %250, %252, %cst_97 {dimension_numbers = #tpu.dot_dimension_numbers<[1], [0], [0], [1], [0, 0, 1, 1], [], []>} : vector<24x512xbf16>, vector<512x32xbf16>, vector<24x32xf32> -> vector<24x32xf32>
    %254 = arith.addf %241, %253 : vector<24x32xf32>
    %255 = arith.addf %200, %254 : vector<24x32xf32>
    %c157 = arith.constant 157 : index
    %c0_98 = arith.constant 0 : index
    %256 = vector.load %arg3[%c157, %c0_98] : memref<168x320xf32, #tpu.memory_space<vmem>>, vector<1x32xf32>
    %257 = vector.broadcast %256 : vector<1x32xf32> to vector<24x32xf32>
    %258 = arith.addf %255, %257 : vector<24x32xf32>
    %c155 = arith.constant 155 : index
    %c0_99 = arith.constant 0 : index
    %259 = vector.load %arg3[%c155, %c0_99] : memref<168x320xf32, #tpu.memory_space<vmem>>, vector<1x32xf32>
    %c156 = arith.constant 156 : index
    %c0_100 = arith.constant 0 : index
    %260 = vector.load %arg3[%c156, %c0_100] : memref<168x320xf32, #tpu.memory_space<vmem>>, vector<1x32xf32>
    %cst_101 = arith.constant dense<0.000000e+00> : vector<24xf32>
    %261 = vector.multi_reduction <add>, %258, %cst_101 [1] : vector<24x32xf32> to vector<24xf32>
    %262 = vector.shape_cast %261 : vector<24xf32> to vector<24x1xf32>
    %cst_102 = arith.constant 3.200000e+01 : f32
    %263 = vector.broadcast %cst_102 : f32 to vector<24x1xf32>
    %264 = arith.divf %262, %263 : vector<24x1xf32>
    %265 = vector.broadcast %264 : vector<24x1xf32> to vector<24x32xf32>
    %266 = arith.subf %258, %265 : vector<24x32xf32>
    %267 = arith.mulf %266, %266 : vector<24x32xf32>
    %cst_103 = arith.constant dense<0.000000e+00> : vector<24xf32>
    %268 = vector.multi_reduction <add>, %267, %cst_103 [1] : vector<24x32xf32> to vector<24xf32>
    %269 = vector.shape_cast %268 : vector<24xf32> to vector<24x1xf32>
    %cst_104 = arith.constant 3.200000e+01 : f32
    %270 = vector.broadcast %cst_104 : f32 to vector<24x1xf32>
    %271 = arith.divf %269, %270 : vector<24x1xf32>
    %cst_105 = arith.constant 9.99999974E-6 : f32
    %272 = vector.broadcast %cst_105 : f32 to vector<24x1xf32>
    %273 = arith.addf %271, %272 : vector<24x1xf32>
    %274 = math.rsqrt %273 : vector<24x1xf32>
    %275 = vector.broadcast %274 : vector<24x1xf32> to vector<24x32xf32>
    %276 = arith.mulf %266, %275 : vector<24x32xf32>
    %277 = vector.broadcast %259 : vector<1x32xf32> to vector<24x32xf32>
    %278 = arith.mulf %276, %277 : vector<24x32xf32>
    %279 = vector.broadcast %260 : vector<1x32xf32> to vector<24x32xf32>
    %280 = arith.addf %278, %279 : vector<24x32xf32>
    %c32 = arith.constant 32 : index
    %c0_106 = arith.constant 0 : index
    %281 = vector.load %arg3[%c32, %c0_106] : memref<168x320xf32, #tpu.memory_space<vmem>>, vector<32x320xf32>
    %cst_107 = arith.constant dense<0.000000e+00> : vector<24x320xf32>
    %282 = tpu.matmul %280, %281, %cst_107 {dimension_numbers = #tpu.dot_dimension_numbers<[1], [0], [0], [1], [0, 0, 1, 1], [], []>} : vector<24x32xf32>, vector<32x320xf32>, vector<24x320xf32> -> vector<24x320xf32>
    %283 = vector.extract_strided_slice %282 {offsets = [0, 0], sizes = [24, 32], strides = [1, 1]} : vector<24x320xf32> to vector<24x32xf32>
    %c158 = arith.constant 158 : index
    %c0_108 = arith.constant 0 : index
    %284 = vector.load %arg3[%c158, %c0_108] : memref<168x320xf32, #tpu.memory_space<vmem>>, vector<1x32xf32>
    %285 = vector.broadcast %284 : vector<1x32xf32> to vector<24x32xf32>
    %286 = arith.addf %283, %285 : vector<24x32xf32>
    %287 = vector.extract_strided_slice %282 {offsets = [0, 32], sizes = [24, 32], strides = [1, 1]} : vector<24x320xf32> to vector<24x32xf32>
    %c159 = arith.constant 159 : index
    %c0_109 = arith.constant 0 : index
    %288 = vector.load %arg3[%c159, %c0_109] : memref<168x320xf32, #tpu.memory_space<vmem>>, vector<1x32xf32>
    %289 = vector.broadcast %288 : vector<1x32xf32> to vector<24x32xf32>
    %290 = arith.addf %287, %289 : vector<24x32xf32>
    %291 = vector.extract_strided_slice %282 {offsets = [0, 64], sizes = [24, 256], strides = [1, 1]} : vector<24x320xf32> to vector<24x256xf32>
    %292 = vector.extract_strided_slice %286 {offsets = [0, 0], sizes = [24, 4], strides = [1, 1]} : vector<24x32xf32> to vector<24x4xf32>
    %293 = vector.extract_strided_slice %290 {offsets = [0, 0], sizes = [24, 4], strides = [1, 1]} : vector<24x32xf32> to vector<24x4xf32>
    %cst_110 = arith.constant dense<0.000000e+00> : vector<24x24xf32>
    %294 = tpu.matmul %292, %293, %cst_110 {dimension_numbers = #tpu.dot_dimension_numbers<[1], [1], [0], [0], [0, 0, 1, 0], [], []>} : vector<24x4xf32>, vector<24x4xf32>, vector<24x24xf32> -> vector<24x24xf32>
    %295 = vector.broadcast %28 : vector<1x24xf32> to vector<24x24xf32>
    %296 = arith.addf %294, %295 : vector<24x24xf32>
    %cst_111 = arith.constant dense<0xFF800000> : vector<24xf32>
    %297 = vector.multi_reduction <maximumf>, %296, %cst_111 [1] : vector<24x24xf32> to vector<24xf32>
    %298 = vector.shape_cast %297 : vector<24xf32> to vector<24x1xf32>
    %299 = vector.broadcast %298 : vector<24x1xf32> to vector<24x24xf32>
    %300 = arith.subf %296, %299 : vector<24x24xf32>
    %301 = math.exp %300 : vector<24x24xf32>
    %cst_112 = arith.constant dense<0.000000e+00> : vector<24xf32>
    %302 = vector.multi_reduction <add>, %301, %cst_112 [1] : vector<24x24xf32> to vector<24xf32>
    %303 = vector.shape_cast %302 : vector<24xf32> to vector<24x1xf32>
    %304 = vector.broadcast %303 : vector<24x1xf32> to vector<24x24xf32>
    %305 = arith.divf %301, %304 : vector<24x24xf32>
    %306 = vector.extract_strided_slice %291 {offsets = [0, 0], sizes = [24, 32], strides = [1, 1]} : vector<24x256xf32> to vector<24x32xf32>
    %cst_113 = arith.constant dense<0.000000e+00> : vector<24x32xf32>
    %307 = tpu.matmul %305, %306, %cst_113 {dimension_numbers = #tpu.dot_dimension_numbers<[1], [0], [0], [1], [0, 0, 1, 1], [], []>} : vector<24x24xf32>, vector<24x32xf32>, vector<24x32xf32> -> vector<24x32xf32>
    %308 = vector.extract_strided_slice %286 {offsets = [0, 4], sizes = [24, 4], strides = [1, 1]} : vector<24x32xf32> to vector<24x4xf32>
    %309 = vector.extract_strided_slice %290 {offsets = [0, 4], sizes = [24, 4], strides = [1, 1]} : vector<24x32xf32> to vector<24x4xf32>
    %cst_114 = arith.constant dense<0.000000e+00> : vector<24x24xf32>
    %310 = tpu.matmul %308, %309, %cst_114 {dimension_numbers = #tpu.dot_dimension_numbers<[1], [1], [0], [0], [0, 0, 1, 0], [], []>} : vector<24x4xf32>, vector<24x4xf32>, vector<24x24xf32> -> vector<24x24xf32>
    %311 = vector.broadcast %28 : vector<1x24xf32> to vector<24x24xf32>
    %312 = arith.addf %310, %311 : vector<24x24xf32>
    %cst_115 = arith.constant dense<0xFF800000> : vector<24xf32>
    %313 = vector.multi_reduction <maximumf>, %312, %cst_115 [1] : vector<24x24xf32> to vector<24xf32>
    %314 = vector.shape_cast %313 : vector<24xf32> to vector<24x1xf32>
    %315 = vector.broadcast %314 : vector<24x1xf32> to vector<24x24xf32>
    %316 = arith.subf %312, %315 : vector<24x24xf32>
    %317 = math.exp %316 : vector<24x24xf32>
    %cst_116 = arith.constant dense<0.000000e+00> : vector<24xf32>
    %318 = vector.multi_reduction <add>, %317, %cst_116 [1] : vector<24x24xf32> to vector<24xf32>
    %319 = vector.shape_cast %318 : vector<24xf32> to vector<24x1xf32>
    %320 = vector.broadcast %319 : vector<24x1xf32> to vector<24x24xf32>
    %321 = arith.divf %317, %320 : vector<24x24xf32>
    %322 = vector.extract_strided_slice %291 {offsets = [0, 32], sizes = [24, 32], strides = [1, 1]} : vector<24x256xf32> to vector<24x32xf32>
    %cst_117 = arith.constant dense<0.000000e+00> : vector<24x32xf32>
    %323 = tpu.matmul %321, %322, %cst_117 {dimension_numbers = #tpu.dot_dimension_numbers<[1], [0], [0], [1], [0, 0, 1, 1], [], []>} : vector<24x24xf32>, vector<24x32xf32>, vector<24x32xf32> -> vector<24x32xf32>
    %324 = arith.addf %307, %323 : vector<24x32xf32>
    %325 = vector.extract_strided_slice %286 {offsets = [0, 8], sizes = [24, 4], strides = [1, 1]} : vector<24x32xf32> to vector<24x4xf32>
    %326 = vector.extract_strided_slice %290 {offsets = [0, 8], sizes = [24, 4], strides = [1, 1]} : vector<24x32xf32> to vector<24x4xf32>
    %cst_118 = arith.constant dense<0.000000e+00> : vector<24x24xf32>
    %327 = tpu.matmul %325, %326, %cst_118 {dimension_numbers = #tpu.dot_dimension_numbers<[1], [1], [0], [0], [0, 0, 1, 0], [], []>} : vector<24x4xf32>, vector<24x4xf32>, vector<24x24xf32> -> vector<24x24xf32>
    %328 = vector.broadcast %28 : vector<1x24xf32> to vector<24x24xf32>
    %329 = arith.addf %327, %328 : vector<24x24xf32>
    %cst_119 = arith.constant dense<0xFF800000> : vector<24xf32>
    %330 = vector.multi_reduction <maximumf>, %329, %cst_119 [1] : vector<24x24xf32> to vector<24xf32>
    %331 = vector.shape_cast %330 : vector<24xf32> to vector<24x1xf32>
    %332 = vector.broadcast %331 : vector<24x1xf32> to vector<24x24xf32>
    %333 = arith.subf %329, %332 : vector<24x24xf32>
    %334 = math.exp %333 : vector<24x24xf32>
    %cst_120 = arith.constant dense<0.000000e+00> : vector<24xf32>
    %335 = vector.multi_reduction <add>, %334, %cst_120 [1] : vector<24x24xf32> to vector<24xf32>
    %336 = vector.shape_cast %335 : vector<24xf32> to vector<24x1xf32>
    %337 = vector.broadcast %336 : vector<24x1xf32> to vector<24x24xf32>
    %338 = arith.divf %334, %337 : vector<24x24xf32>
    %339 = vector.extract_strided_slice %291 {offsets = [0, 64], sizes = [24, 32], strides = [1, 1]} : vector<24x256xf32> to vector<24x32xf32>
    %cst_121 = arith.constant dense<0.000000e+00> : vector<24x32xf32>
    %340 = tpu.matmul %338, %339, %cst_121 {dimension_numbers = #tpu.dot_dimension_numbers<[1], [0], [0], [1], [0, 0, 1, 1], [], []>} : vector<24x24xf32>, vector<24x32xf32>, vector<24x32xf32> -> vector<24x32xf32>
    %341 = arith.addf %324, %340 : vector<24x32xf32>
    %342 = vector.extract_strided_slice %286 {offsets = [0, 12], sizes = [24, 4], strides = [1, 1]} : vector<24x32xf32> to vector<24x4xf32>
    %343 = vector.extract_strided_slice %290 {offsets = [0, 12], sizes = [24, 4], strides = [1, 1]} : vector<24x32xf32> to vector<24x4xf32>
    %cst_122 = arith.constant dense<0.000000e+00> : vector<24x24xf32>
    %344 = tpu.matmul %342, %343, %cst_122 {dimension_numbers = #tpu.dot_dimension_numbers<[1], [1], [0], [0], [0, 0, 1, 0], [], []>} : vector<24x4xf32>, vector<24x4xf32>, vector<24x24xf32> -> vector<24x24xf32>
    %345 = vector.broadcast %28 : vector<1x24xf32> to vector<24x24xf32>
    %346 = arith.addf %344, %345 : vector<24x24xf32>
    %cst_123 = arith.constant dense<0xFF800000> : vector<24xf32>
    %347 = vector.multi_reduction <maximumf>, %346, %cst_123 [1] : vector<24x24xf32> to vector<24xf32>
    %348 = vector.shape_cast %347 : vector<24xf32> to vector<24x1xf32>
    %349 = vector.broadcast %348 : vector<24x1xf32> to vector<24x24xf32>
    %350 = arith.subf %346, %349 : vector<24x24xf32>
    %351 = math.exp %350 : vector<24x24xf32>
    %cst_124 = arith.constant dense<0.000000e+00> : vector<24xf32>
    %352 = vector.multi_reduction <add>, %351, %cst_124 [1] : vector<24x24xf32> to vector<24xf32>
    %353 = vector.shape_cast %352 : vector<24xf32> to vector<24x1xf32>
    %354 = vector.broadcast %353 : vector<24x1xf32> to vector<24x24xf32>
    %355 = arith.divf %351, %354 : vector<24x24xf32>
    %356 = vector.extract_strided_slice %291 {offsets = [0, 96], sizes = [24, 32], strides = [1, 1]} : vector<24x256xf32> to vector<24x32xf32>
    %cst_125 = arith.constant dense<0.000000e+00> : vector<24x32xf32>
    %357 = tpu.matmul %355, %356, %cst_125 {dimension_numbers = #tpu.dot_dimension_numbers<[1], [0], [0], [1], [0, 0, 1, 1], [], []>} : vector<24x24xf32>, vector<24x32xf32>, vector<24x32xf32> -> vector<24x32xf32>
    %358 = arith.addf %341, %357 : vector<24x32xf32>
    %359 = vector.extract_strided_slice %286 {offsets = [0, 16], sizes = [24, 4], strides = [1, 1]} : vector<24x32xf32> to vector<24x4xf32>
    %360 = vector.extract_strided_slice %290 {offsets = [0, 16], sizes = [24, 4], strides = [1, 1]} : vector<24x32xf32> to vector<24x4xf32>
    %cst_126 = arith.constant dense<0.000000e+00> : vector<24x24xf32>
    %361 = tpu.matmul %359, %360, %cst_126 {dimension_numbers = #tpu.dot_dimension_numbers<[1], [1], [0], [0], [0, 0, 1, 0], [], []>} : vector<24x4xf32>, vector<24x4xf32>, vector<24x24xf32> -> vector<24x24xf32>
    %362 = vector.broadcast %28 : vector<1x24xf32> to vector<24x24xf32>
    %363 = arith.addf %361, %362 : vector<24x24xf32>
    %cst_127 = arith.constant dense<0xFF800000> : vector<24xf32>
    %364 = vector.multi_reduction <maximumf>, %363, %cst_127 [1] : vector<24x24xf32> to vector<24xf32>
    %365 = vector.shape_cast %364 : vector<24xf32> to vector<24x1xf32>
    %366 = vector.broadcast %365 : vector<24x1xf32> to vector<24x24xf32>
    %367 = arith.subf %363, %366 : vector<24x24xf32>
    %368 = math.exp %367 : vector<24x24xf32>
    %cst_128 = arith.constant dense<0.000000e+00> : vector<24xf32>
    %369 = vector.multi_reduction <add>, %368, %cst_128 [1] : vector<24x24xf32> to vector<24xf32>
    %370 = vector.shape_cast %369 : vector<24xf32> to vector<24x1xf32>
    %371 = vector.broadcast %370 : vector<24x1xf32> to vector<24x24xf32>
    %372 = arith.divf %368, %371 : vector<24x24xf32>
    %373 = vector.extract_strided_slice %291 {offsets = [0, 128], sizes = [24, 32], strides = [1, 1]} : vector<24x256xf32> to vector<24x32xf32>
    %cst_129 = arith.constant dense<0.000000e+00> : vector<24x32xf32>
    %374 = tpu.matmul %372, %373, %cst_129 {dimension_numbers = #tpu.dot_dimension_numbers<[1], [0], [0], [1], [0, 0, 1, 1], [], []>} : vector<24x24xf32>, vector<24x32xf32>, vector<24x32xf32> -> vector<24x32xf32>
    %375 = arith.addf %358, %374 : vector<24x32xf32>
    %376 = vector.extract_strided_slice %286 {offsets = [0, 20], sizes = [24, 4], strides = [1, 1]} : vector<24x32xf32> to vector<24x4xf32>
    %377 = vector.extract_strided_slice %290 {offsets = [0, 20], sizes = [24, 4], strides = [1, 1]} : vector<24x32xf32> to vector<24x4xf32>
    %cst_130 = arith.constant dense<0.000000e+00> : vector<24x24xf32>
    %378 = tpu.matmul %376, %377, %cst_130 {dimension_numbers = #tpu.dot_dimension_numbers<[1], [1], [0], [0], [0, 0, 1, 0], [], []>} : vector<24x4xf32>, vector<24x4xf32>, vector<24x24xf32> -> vector<24x24xf32>
    %379 = vector.broadcast %28 : vector<1x24xf32> to vector<24x24xf32>
    %380 = arith.addf %378, %379 : vector<24x24xf32>
    %cst_131 = arith.constant dense<0xFF800000> : vector<24xf32>
    %381 = vector.multi_reduction <maximumf>, %380, %cst_131 [1] : vector<24x24xf32> to vector<24xf32>
    %382 = vector.shape_cast %381 : vector<24xf32> to vector<24x1xf32>
    %383 = vector.broadcast %382 : vector<24x1xf32> to vector<24x24xf32>
    %384 = arith.subf %380, %383 : vector<24x24xf32>
    %385 = math.exp %384 : vector<24x24xf32>
    %cst_132 = arith.constant dense<0.000000e+00> : vector<24xf32>
    %386 = vector.multi_reduction <add>, %385, %cst_132 [1] : vector<24x24xf32> to vector<24xf32>
    %387 = vector.shape_cast %386 : vector<24xf32> to vector<24x1xf32>
    %388 = vector.broadcast %387 : vector<24x1xf32> to vector<24x24xf32>
    %389 = arith.divf %385, %388 : vector<24x24xf32>
    %390 = vector.extract_strided_slice %291 {offsets = [0, 160], sizes = [24, 32], strides = [1, 1]} : vector<24x256xf32> to vector<24x32xf32>
    %cst_133 = arith.constant dense<0.000000e+00> : vector<24x32xf32>
    %391 = tpu.matmul %389, %390, %cst_133 {dimension_numbers = #tpu.dot_dimension_numbers<[1], [0], [0], [1], [0, 0, 1, 1], [], []>} : vector<24x24xf32>, vector<24x32xf32>, vector<24x32xf32> -> vector<24x32xf32>
    %392 = arith.addf %375, %391 : vector<24x32xf32>
    %393 = vector.extract_strided_slice %286 {offsets = [0, 24], sizes = [24, 4], strides = [1, 1]} : vector<24x32xf32> to vector<24x4xf32>
    %394 = vector.extract_strided_slice %290 {offsets = [0, 24], sizes = [24, 4], strides = [1, 1]} : vector<24x32xf32> to vector<24x4xf32>
    %cst_134 = arith.constant dense<0.000000e+00> : vector<24x24xf32>
    %395 = tpu.matmul %393, %394, %cst_134 {dimension_numbers = #tpu.dot_dimension_numbers<[1], [1], [0], [0], [0, 0, 1, 0], [], []>} : vector<24x4xf32>, vector<24x4xf32>, vector<24x24xf32> -> vector<24x24xf32>
    %396 = vector.broadcast %28 : vector<1x24xf32> to vector<24x24xf32>
    %397 = arith.addf %395, %396 : vector<24x24xf32>
    %cst_135 = arith.constant dense<0xFF800000> : vector<24xf32>
    %398 = vector.multi_reduction <maximumf>, %397, %cst_135 [1] : vector<24x24xf32> to vector<24xf32>
    %399 = vector.shape_cast %398 : vector<24xf32> to vector<24x1xf32>
    %400 = vector.broadcast %399 : vector<24x1xf32> to vector<24x24xf32>
    %401 = arith.subf %397, %400 : vector<24x24xf32>
    %402 = math.exp %401 : vector<24x24xf32>
    %cst_136 = arith.constant dense<0.000000e+00> : vector<24xf32>
    %403 = vector.multi_reduction <add>, %402, %cst_136 [1] : vector<24x24xf32> to vector<24xf32>
    %404 = vector.shape_cast %403 : vector<24xf32> to vector<24x1xf32>
    %405 = vector.broadcast %404 : vector<24x1xf32> to vector<24x24xf32>
    %406 = arith.divf %402, %405 : vector<24x24xf32>
    %407 = vector.extract_strided_slice %291 {offsets = [0, 192], sizes = [24, 32], strides = [1, 1]} : vector<24x256xf32> to vector<24x32xf32>
    %cst_137 = arith.constant dense<0.000000e+00> : vector<24x32xf32>
    %408 = tpu.matmul %406, %407, %cst_137 {dimension_numbers = #tpu.dot_dimension_numbers<[1], [0], [0], [1], [0, 0, 1, 1], [], []>} : vector<24x24xf32>, vector<24x32xf32>, vector<24x32xf32> -> vector<24x32xf32>
    %409 = arith.addf %392, %408 : vector<24x32xf32>
    %410 = vector.extract_strided_slice %286 {offsets = [0, 28], sizes = [24, 4], strides = [1, 1]} : vector<24x32xf32> to vector<24x4xf32>
    %411 = vector.extract_strided_slice %290 {offsets = [0, 28], sizes = [24, 4], strides = [1, 1]} : vector<24x32xf32> to vector<24x4xf32>
    %cst_138 = arith.constant dense<0.000000e+00> : vector<24x24xf32>
    %412 = tpu.matmul %410, %411, %cst_138 {dimension_numbers = #tpu.dot_dimension_numbers<[1], [1], [0], [0], [0, 0, 1, 0], [], []>} : vector<24x4xf32>, vector<24x4xf32>, vector<24x24xf32> -> vector<24x24xf32>
    %413 = vector.broadcast %28 : vector<1x24xf32> to vector<24x24xf32>
    %414 = arith.addf %412, %413 : vector<24x24xf32>
    %cst_139 = arith.constant dense<0xFF800000> : vector<24xf32>
    %415 = vector.multi_reduction <maximumf>, %414, %cst_139 [1] : vector<24x24xf32> to vector<24xf32>
    %416 = vector.shape_cast %415 : vector<24xf32> to vector<24x1xf32>
    %417 = vector.broadcast %416 : vector<24x1xf32> to vector<24x24xf32>
    %418 = arith.subf %414, %417 : vector<24x24xf32>
    %419 = math.exp %418 : vector<24x24xf32>
    %cst_140 = arith.constant dense<0.000000e+00> : vector<24xf32>
    %420 = vector.multi_reduction <add>, %419, %cst_140 [1] : vector<24x24xf32> to vector<24xf32>
    %421 = vector.shape_cast %420 : vector<24xf32> to vector<24x1xf32>
    %422 = vector.broadcast %421 : vector<24x1xf32> to vector<24x24xf32>
    %423 = arith.divf %419, %422 : vector<24x24xf32>
    %424 = vector.extract_strided_slice %291 {offsets = [0, 224], sizes = [24, 32], strides = [1, 1]} : vector<24x256xf32> to vector<24x32xf32>
    %cst_141 = arith.constant dense<0.000000e+00> : vector<24x32xf32>
    %425 = tpu.matmul %423, %424, %cst_141 {dimension_numbers = #tpu.dot_dimension_numbers<[1], [0], [0], [1], [0, 0, 1, 1], [], []>} : vector<24x24xf32>, vector<24x32xf32>, vector<24x32xf32> -> vector<24x32xf32>
    %426 = arith.addf %409, %425 : vector<24x32xf32>
    %c160 = arith.constant 160 : index
    %c0_142 = arith.constant 0 : index
    %427 = vector.load %arg3[%c160, %c0_142] : memref<168x320xf32, #tpu.memory_space<vmem>>, vector<1x32xf32>
    %428 = vector.broadcast %427 : vector<1x32xf32> to vector<24x32xf32>
    %429 = arith.addf %426, %428 : vector<24x32xf32>
    %430 = arith.addf %280, %429 : vector<24x32xf32>
    %c161 = arith.constant 161 : index
    %c0_143 = arith.constant 0 : index
    %431 = vector.load %arg3[%c161, %c0_143] : memref<168x320xf32, #tpu.memory_space<vmem>>, vector<1x32xf32>
    %c162 = arith.constant 162 : index
    %c0_144 = arith.constant 0 : index
    %432 = vector.load %arg3[%c162, %c0_144] : memref<168x320xf32, #tpu.memory_space<vmem>>, vector<1x32xf32>
    %cst_145 = arith.constant dense<0.000000e+00> : vector<24xf32>
    %433 = vector.multi_reduction <add>, %430, %cst_145 [1] : vector<24x32xf32> to vector<24xf32>
    %434 = vector.shape_cast %433 : vector<24xf32> to vector<24x1xf32>
    %cst_146 = arith.constant 3.200000e+01 : f32
    %435 = vector.broadcast %cst_146 : f32 to vector<24x1xf32>
    %436 = arith.divf %434, %435 : vector<24x1xf32>
    %437 = vector.broadcast %436 : vector<24x1xf32> to vector<24x32xf32>
    %438 = arith.subf %430, %437 : vector<24x32xf32>
    %439 = arith.mulf %438, %438 : vector<24x32xf32>
    %cst_147 = arith.constant dense<0.000000e+00> : vector<24xf32>
    %440 = vector.multi_reduction <add>, %439, %cst_147 [1] : vector<24x32xf32> to vector<24xf32>
    %441 = vector.shape_cast %440 : vector<24xf32> to vector<24x1xf32>
    %cst_148 = arith.constant 3.200000e+01 : f32
    %442 = vector.broadcast %cst_148 : f32 to vector<24x1xf32>
    %443 = arith.divf %441, %442 : vector<24x1xf32>
    %cst_149 = arith.constant 9.99999974E-6 : f32
    %444 = vector.broadcast %cst_149 : f32 to vector<24x1xf32>
    %445 = arith.addf %443, %444 : vector<24x1xf32>
    %446 = math.rsqrt %445 : vector<24x1xf32>
    %447 = vector.broadcast %446 : vector<24x1xf32> to vector<24x32xf32>
    %448 = arith.mulf %438, %447 : vector<24x32xf32>
    %449 = vector.broadcast %431 : vector<1x32xf32> to vector<24x32xf32>
    %450 = arith.mulf %448, %449 : vector<24x32xf32>
    %451 = vector.broadcast %432 : vector<1x32xf32> to vector<24x32xf32>
    %452 = arith.addf %450, %451 : vector<24x32xf32>
    %453 = arith.truncf %452 : vector<24x32xf32> to vector<24x32xbf16>
    %cst_150 = arith.constant 0.000000e+00 : f32
    %454 = vector.broadcast %cst_150 : f32 to vector<24x32xf32>
    %c1 = arith.constant 1 : index
    %c0_151 = arith.constant 0 : index
    %c0_152 = arith.constant 0 : index
    %455 = vector.load %arg5[%c1, %c0_151, %c0_152] : memref<2x32x2048xbf16, #tpu.memory_space<vmem>>, vector<1x32x512xbf16>
    %456 = vector.shape_cast %455 : vector<1x32x512xbf16> to vector<32x512xbf16>
    %cst_153 = arith.constant dense<0.000000e+00> : vector<24x512xf32>
    %457 = tpu.matmul %453, %456, %cst_153 {dimension_numbers = #tpu.dot_dimension_numbers<[1], [0], [0], [1], [0, 0, 1, 1], [], []>} : vector<24x32xbf16>, vector<32x512xbf16>, vector<24x512xf32> -> vector<24x512xf32>
    %c1_154 = arith.constant 1 : index
    %c0_155 = arith.constant 0 : index
    %458 = vector.load %arg4[%c1_154, %c0_155] : memref<2x2048xf32, #tpu.memory_space<vmem>>, vector<1x512xf32>
    %459 = vector.broadcast %458 : vector<1x512xf32> to vector<24x512xf32>
    %460 = arith.addf %457, %459 : vector<24x512xf32>
    %cst_156 = arith.constant 0.000000e+00 : f32
    %461 = vector.broadcast %cst_156 : f32 to vector<24x512xf32>
    %462 = arith.maximumf %460, %461 : vector<24x512xf32>
    %463 = arith.truncf %462 : vector<24x512xf32> to vector<24x512xbf16>
    %c1_157 = arith.constant 1 : index
    %c0_158 = arith.constant 0 : index
    %c0_159 = arith.constant 0 : index
    %464 = vector.load %arg6[%c1_157, %c0_158, %c0_159] : memref<2x2048x32xbf16, #tpu.memory_space<vmem>>, vector<1x512x32xbf16>
    %465 = vector.shape_cast %464 : vector<1x512x32xbf16> to vector<512x32xbf16>
    %cst_160 = arith.constant dense<0.000000e+00> : vector<24x32xf32>
    %466 = tpu.matmul %463, %465, %cst_160 {dimension_numbers = #tpu.dot_dimension_numbers<[1], [0], [0], [1], [0, 0, 1, 1], [], []>} : vector<24x512xbf16>, vector<512x32xbf16>, vector<24x32xf32> -> vector<24x32xf32>
    %467 = arith.addf %454, %466 : vector<24x32xf32>
    %c1_161 = arith.constant 1 : index
    %c0_162 = arith.constant 0 : index
    %c512_163 = arith.constant 512 : index
    %468 = vector.load %arg5[%c1_161, %c0_162, %c512_163] : memref<2x32x2048xbf16, #tpu.memory_space<vmem>>, vector<1x32x512xbf16>
    %469 = vector.shape_cast %468 : vector<1x32x512xbf16> to vector<32x512xbf16>
    %cst_164 = arith.constant dense<0.000000e+00> : vector<24x512xf32>
    %470 = tpu.matmul %453, %469, %cst_164 {dimension_numbers = #tpu.dot_dimension_numbers<[1], [0], [0], [1], [0, 0, 1, 1], [], []>} : vector<24x32xbf16>, vector<32x512xbf16>, vector<24x512xf32> -> vector<24x512xf32>
    %c1_165 = arith.constant 1 : index
    %c512_166 = arith.constant 512 : index
    %471 = vector.load %arg4[%c1_165, %c512_166] : memref<2x2048xf32, #tpu.memory_space<vmem>>, vector<1x512xf32>
    %472 = vector.broadcast %471 : vector<1x512xf32> to vector<24x512xf32>
    %473 = arith.addf %470, %472 : vector<24x512xf32>
    %cst_167 = arith.constant 0.000000e+00 : f32
    %474 = vector.broadcast %cst_167 : f32 to vector<24x512xf32>
    %475 = arith.maximumf %473, %474 : vector<24x512xf32>
    %476 = arith.truncf %475 : vector<24x512xf32> to vector<24x512xbf16>
    %c1_168 = arith.constant 1 : index
    %c512_169 = arith.constant 512 : index
    %c0_170 = arith.constant 0 : index
    %477 = vector.load %arg6[%c1_168, %c512_169, %c0_170] : memref<2x2048x32xbf16, #tpu.memory_space<vmem>>, vector<1x512x32xbf16>
    %478 = vector.shape_cast %477 : vector<1x512x32xbf16> to vector<512x32xbf16>
    %cst_171 = arith.constant dense<0.000000e+00> : vector<24x32xf32>
    %479 = tpu.matmul %476, %478, %cst_171 {dimension_numbers = #tpu.dot_dimension_numbers<[1], [0], [0], [1], [0, 0, 1, 1], [], []>} : vector<24x512xbf16>, vector<512x32xbf16>, vector<24x32xf32> -> vector<24x32xf32>
    %480 = arith.addf %467, %479 : vector<24x32xf32>
    %c1_172 = arith.constant 1 : index
    %c0_173 = arith.constant 0 : index
    %c1024_174 = arith.constant 1024 : index
    %481 = vector.load %arg5[%c1_172, %c0_173, %c1024_174] : memref<2x32x2048xbf16, #tpu.memory_space<vmem>>, vector<1x32x512xbf16>
    %482 = vector.shape_cast %481 : vector<1x32x512xbf16> to vector<32x512xbf16>
    %cst_175 = arith.constant dense<0.000000e+00> : vector<24x512xf32>
    %483 = tpu.matmul %453, %482, %cst_175 {dimension_numbers = #tpu.dot_dimension_numbers<[1], [0], [0], [1], [0, 0, 1, 1], [], []>} : vector<24x32xbf16>, vector<32x512xbf16>, vector<24x512xf32> -> vector<24x512xf32>
    %c1_176 = arith.constant 1 : index
    %c1024_177 = arith.constant 1024 : index
    %484 = vector.load %arg4[%c1_176, %c1024_177] : memref<2x2048xf32, #tpu.memory_space<vmem>>, vector<1x512xf32>
    %485 = vector.broadcast %484 : vector<1x512xf32> to vector<24x512xf32>
    %486 = arith.addf %483, %485 : vector<24x512xf32>
    %cst_178 = arith.constant 0.000000e+00 : f32
    %487 = vector.broadcast %cst_178 : f32 to vector<24x512xf32>
    %488 = arith.maximumf %486, %487 : vector<24x512xf32>
    %489 = arith.truncf %488 : vector<24x512xf32> to vector<24x512xbf16>
    %c1_179 = arith.constant 1 : index
    %c1024_180 = arith.constant 1024 : index
    %c0_181 = arith.constant 0 : index
    %490 = vector.load %arg6[%c1_179, %c1024_180, %c0_181] : memref<2x2048x32xbf16, #tpu.memory_space<vmem>>, vector<1x512x32xbf16>
    %491 = vector.shape_cast %490 : vector<1x512x32xbf16> to vector<512x32xbf16>
    %cst_182 = arith.constant dense<0.000000e+00> : vector<24x32xf32>
    %492 = tpu.matmul %489, %491, %cst_182 {dimension_numbers = #tpu.dot_dimension_numbers<[1], [0], [0], [1], [0, 0, 1, 1], [], []>} : vector<24x512xbf16>, vector<512x32xbf16>, vector<24x32xf32> -> vector<24x32xf32>
    %493 = arith.addf %480, %492 : vector<24x32xf32>
    %c1_183 = arith.constant 1 : index
    %c0_184 = arith.constant 0 : index
    %c1536_185 = arith.constant 1536 : index
    %494 = vector.load %arg5[%c1_183, %c0_184, %c1536_185] : memref<2x32x2048xbf16, #tpu.memory_space<vmem>>, vector<1x32x512xbf16>
    %495 = vector.shape_cast %494 : vector<1x32x512xbf16> to vector<32x512xbf16>
    %cst_186 = arith.constant dense<0.000000e+00> : vector<24x512xf32>
    %496 = tpu.matmul %453, %495, %cst_186 {dimension_numbers = #tpu.dot_dimension_numbers<[1], [0], [0], [1], [0, 0, 1, 1], [], []>} : vector<24x32xbf16>, vector<32x512xbf16>, vector<24x512xf32> -> vector<24x512xf32>
    %c1_187 = arith.constant 1 : index
    %c1536_188 = arith.constant 1536 : index
    %497 = vector.load %arg4[%c1_187, %c1536_188] : memref<2x2048xf32, #tpu.memory_space<vmem>>, vector<1x512xf32>
    %498 = vector.broadcast %497 : vector<1x512xf32> to vector<24x512xf32>
    %499 = arith.addf %496, %498 : vector<24x512xf32>
    %cst_189 = arith.constant 0.000000e+00 : f32
    %500 = vector.broadcast %cst_189 : f32 to vector<24x512xf32>
    %501 = arith.maximumf %499, %500 : vector<24x512xf32>
    %502 = arith.truncf %501 : vector<24x512xf32> to vector<24x512xbf16>
    %c1_190 = arith.constant 1 : index
    %c1536_191 = arith.constant 1536 : index
    %c0_192 = arith.constant 0 : index
    %503 = vector.load %arg6[%c1_190, %c1536_191, %c0_192] : memref<2x2048x32xbf16, #tpu.memory_space<vmem>>, vector<1x512x32xbf16>
    %504 = vector.shape_cast %503 : vector<1x512x32xbf16> to vector<512x32xbf16>
    %cst_193 = arith.constant dense<0.000000e+00> : vector<24x32xf32>
    %505 = tpu.matmul %502, %504, %cst_193 {dimension_numbers = #tpu.dot_dimension_numbers<[1], [0], [0], [1], [0, 0, 1, 1], [], []>} : vector<24x512xbf16>, vector<512x32xbf16>, vector<24x32xf32> -> vector<24x32xf32>
    %506 = arith.addf %493, %505 : vector<24x32xf32>
    %507 = arith.addf %452, %506 : vector<24x32xf32>
    %c165 = arith.constant 165 : index
    %c0_194 = arith.constant 0 : index
    %508 = vector.load %arg3[%c165, %c0_194] : memref<168x320xf32, #tpu.memory_space<vmem>>, vector<1x32xf32>
    %509 = vector.broadcast %508 : vector<1x32xf32> to vector<24x32xf32>
    %510 = arith.addf %507, %509 : vector<24x32xf32>
    %c163 = arith.constant 163 : index
    %c0_195 = arith.constant 0 : index
    %511 = vector.load %arg3[%c163, %c0_195] : memref<168x320xf32, #tpu.memory_space<vmem>>, vector<1x32xf32>
    %c164 = arith.constant 164 : index
    %c0_196 = arith.constant 0 : index
    %512 = vector.load %arg3[%c164, %c0_196] : memref<168x320xf32, #tpu.memory_space<vmem>>, vector<1x32xf32>
    %cst_197 = arith.constant dense<0.000000e+00> : vector<24xf32>
    %513 = vector.multi_reduction <add>, %510, %cst_197 [1] : vector<24x32xf32> to vector<24xf32>
    %514 = vector.shape_cast %513 : vector<24xf32> to vector<24x1xf32>
    %cst_198 = arith.constant 3.200000e+01 : f32
    %515 = vector.broadcast %cst_198 : f32 to vector<24x1xf32>
    %516 = arith.divf %514, %515 : vector<24x1xf32>
    %517 = vector.broadcast %516 : vector<24x1xf32> to vector<24x32xf32>
    %518 = arith.subf %510, %517 : vector<24x32xf32>
    %519 = arith.mulf %518, %518 : vector<24x32xf32>
    %cst_199 = arith.constant dense<0.000000e+00> : vector<24xf32>
    %520 = vector.multi_reduction <add>, %519, %cst_199 [1] : vector<24x32xf32> to vector<24xf32>
    %521 = vector.shape_cast %520 : vector<24xf32> to vector<24x1xf32>
    %cst_200 = arith.constant 3.200000e+01 : f32
    %522 = vector.broadcast %cst_200 : f32 to vector<24x1xf32>
    %523 = arith.divf %521, %522 : vector<24x1xf32>
    %cst_201 = arith.constant 9.99999974E-6 : f32
    %524 = vector.broadcast %cst_201 : f32 to vector<24x1xf32>
    %525 = arith.addf %523, %524 : vector<24x1xf32>
    %526 = math.rsqrt %525 : vector<24x1xf32>
    %527 = vector.broadcast %526 : vector<24x1xf32> to vector<24x32xf32>
    %528 = arith.mulf %518, %527 : vector<24x32xf32>
    %529 = vector.broadcast %511 : vector<1x32xf32> to vector<24x32xf32>
    %530 = arith.mulf %528, %529 : vector<24x32xf32>
    %531 = vector.broadcast %512 : vector<1x32xf32> to vector<24x32xf32>
    %532 = arith.addf %530, %531 : vector<24x32xf32>
    %533 = vector.extract_strided_slice %532 {offsets = [16, 0], sizes = [1, 32], strides = [1, 1]} : vector<24x32xf32> to vector<1x32xf32>
    %c115 = arith.constant 115 : index
    %c0_202 = arith.constant 0 : index
    %534 = vector.load %arg3[%c115, %c0_202] : memref<168x320xf32, #tpu.memory_space<vmem>>, vector<32x5xf32>
    %cst_203 = arith.constant dense<0.000000e+00> : vector<1x5xf32>
    %535 = tpu.matmul %533, %534, %cst_203 {dimension_numbers = #tpu.dot_dimension_numbers<[1], [0], [0], [1], [0, 0, 1, 1], [], []>} : vector<1x32xf32>, vector<32x5xf32>, vector<1x5xf32> -> vector<1x5xf32>
    %c149 = arith.constant 149 : index
    %c0_204 = arith.constant 0 : index
    %536 = vector.load %arg3[%c149, %c0_204] : memref<168x320xf32, #tpu.memory_space<vmem>>, vector<1x5xf32>
    %537 = arith.addf %535, %536 : vector<1x5xf32>
    %c0_205 = arith.constant 0 : index
    %c0_206 = arith.constant 0 : index
    %c0_207 = arith.constant 0 : index
    %538 = vector.load %arg7[%c0_205, %c0_206, %c0_207] : memref<1x1x5xf32, #tpu.memory_space<vmem>>, vector<1x1x5xf32>
    %539 = vector.shape_cast %538 : vector<1x1x5xf32> to vector<1x5xf32>
    %540 = vector.shape_cast %537 : vector<1x5xf32> to vector<1x1x5xf32>
    tpu.vector_store %arg7[%c0_205, %c0_206, %c0_207], %540 {strides = array<i32>} : memref<1x1x5xf32, #tpu.memory_space<vmem>>, vector<1x1x5xf32>,
    return
  }
  func.func @transform_0(%arg0: i32) -> (i32, i32) {
    %c0_i32 = arith.constant 0 : i32
    %c0_i32_0 = arith.constant 0 : i32
    return %arg0, %c0_i32 : i32, i32
  }
  func.func @transform_1(%arg0: i32) -> (i32, i32, i32) {
    %c0_i32 = arith.constant 0 : i32
    %c0_i32_0 = arith.constant 0 : i32
    %c0_i32_1 = arith.constant 0 : i32
    return %arg0, %c0_i32, %c0_i32_0 : i32, i32, i32
  }
  func.func @transform_2(%arg0: i32) -> (i32, i32) {
    %c0_i32 = arith.constant 0 : i32
    %c0_i32_0 = arith.constant 0 : i32
    %c0_i32_1 = arith.constant 0 : i32
    return %c0_i32, %c0_i32_0 : i32, i32
  }
  func.func @transform_3(%arg0: i32) -> (i32, i32) {
    %c0_i32 = arith.constant 0 : i32
    %c0_i32_0 = arith.constant 0 : i32
    %c0_i32_1 = arith.constant 0 : i32
    return %c0_i32, %c0_i32_0 : i32, i32
  }
  func.func @transform_4(%arg0: i32) -> (i32, i32, i32) {
    %c0_i32 = arith.constant 0 : i32
    %c0_i32_0 = arith.constant 0 : i32
    %c0_i32_1 = arith.constant 0 : i32
    %c0_i32_2 = arith.constant 0 : i32
    return %c0_i32, %c0_i32_0, %c0_i32_1 : i32, i32, i32
  }
  func.func @transform_5(%arg0: i32) -> (i32, i32, i32) {
    %c0_i32 = arith.constant 0 : i32
    %c0_i32_0 = arith.constant 0 : i32
    %c0_i32_1 = arith.constant 0 : i32
    %c0_i32_2 = arith.constant 0 : i32
    return %c0_i32, %c0_i32_0, %c0_i32_1 : i32, i32, i32
  }
  func.func @transform_6(%arg0: i32) -> (i32, i32, i32) {
    %c0_i32 = arith.constant 0 : i32
    %c0_i32_0 = arith.constant 0 : i32
    %c0_i32_1 = arith.constant 0 : i32
    return %arg0, %c0_i32, %c0_i32_0 : i32, i32, i32
  }
}

</mosaic_0001>

<llo_original>
// kernel: tpu_custom_call.1
$region0: #{tpu_custom_call.1}
  #allocation0 [shape = 'u32[]', space=smem, size = 0x4, offset = 0x4, fixed_abs, tag = 'smem constant byte address 0x4 - core index']
  #allocation1 [shape = 'u32[144,128]{1,0:T(1,128)}', space=vmem, size = 0x12000, scoped, tag = 'internal scratch']
  %s0 = inlined_call_operand.vmem [shape: f32[48,48], index: 0, kind: input, shape index: {}]
  %s1 = inlined_call_operand.vmem [shape: f32[2,1,3], index: 1, kind: input, shape index: {}]
  %s2 = inlined_call_operand.vmem [shape: f32[168,320], index: 2, kind: input, shape index: {}]
  %s3 = inlined_call_operand.vmem [shape: f32[2,2048], index: 3, kind: input, shape index: {}]
  %s4 = inlined_call_operand.vmem [shape: bf16[2,32,2048], index: 4, kind: input, shape index: {}]
  %s5 = inlined_call_operand.vmem [shape: bf16[2,2048,32], index: 5, kind: input, shape index: {}]
  %s6 = inlined_call_operand.hbm [shape: f32[2,1,5], index: 6, kind: output, shape index: {}]
  %s7 = sld [smem:[#allocation0]]
  $region57: #{tpu_custom_call.1} parent=0
    _
  %s9 = ssub.s32 1, %s7
  %s10 = scalar_select 0, %s9, %s7
  $region1: #{tpu_custom_call.1} parent=0
    #allocation2 [shape = 'u8[1024]{0}', space=vmem, size = 0x400, scoped, tag = 'output window, operand 0']
    #allocation3 [shape = 's32[2]{0}', space=sflag, size = 0x8, scoped, tag = 'scoped memory for tpu_custom_call.1']
    %11 = vsyncpa [#allocation3], 0
    %s12 = scalar_lea.sflag [#allocation3], 1
    %13 = vsyncpa %s12, 0
    loop: start=0, step=1, limit=4
    $region2: #{tpu_custom_call.1} parent=1 // loop_pre_header
      _
    $region3: #{tpu_custom_call.1} parent=1 // loop_header
      %s15 = sphi 0, %s19
      %p16 = scmp.ge.s32.totalorder %s15, 4
      %s25 = sphi 0, %s27
      %s28 = sphi 0, %s25
      %s29 = sphi 0, %s28
      %s45 = sphi 0, %s29
      %s51 = sphi 0, %s53
      %s54 = sphi 0, %s51
      %s55 = sphi 0, %s54
      %s71 = sphi 0, %s55
      %s75 = sphi 0, %s75
      %s77 = sphi 0, %s75
      %s78 = sphi 0, %s77
      %s92 = sphi 0, %s78
      %s96 = sphi 0, %s96
      %s98 = sphi 0, %s96
      %s99 = sphi 0, %s98
      %s113 = sphi 0, %s99
      %s117 = sphi 0, %s117
      %s119 = sphi 0, %s117
      %s120 = sphi 0, %s119
      %s134 = sphi 0, %s120
      %s138 = sphi 0, %s138
      %s140 = sphi 0, %s138
      %s141 = sphi 0, %s140
      %s155 = sphi 0, %s141
      %s161 = sphi 0, %s163
      %s164 = sphi 0, %s161
      %s165 = sphi 0, %s164
      %s181 = sphi 0, %s165
    $region4: #{tpu_custom_call.1} parent=1 // loop_header_branch
      %18 = sbr.rel (%p16) target = $region8
    $region5: #{tpu_custom_call.1} parent=1 // loop_body
      %s20 = ssub.s32 %s15, 1
      %s21 = ssub.s32 %s15, 2
      %s22 = sadd.s32 %s15, 1
      %s23 = ssub.s32 %s15, %s22
      %p24 = scmp.eq.s32.totalorder %s23, 0
      %s26 = sadd.s32 %s25, 1
      %s27 = scalar_select %p24, %s25, %s26
      %p30 = pneg %p24
      %p31 = scmp.eq.s32.totalorder %s15, 1
      %p32 = por %p30, %p31
      %p33 = scmp.ne.s32.totalorder %s25, %s28
      %p34 = scmp.eq.s32.totalorder %s15, 0
      %p35 = por %p33, %p34
      %p36 = scmp.ne.s32.totalorder %s25, %s28
      %p37 = scmp.eq.s32.totalorder %s20, 1
      %p38 = por %p36, %p37
      %p39 = scmp.ne.s32.totalorder %s28, %s29
      %p40 = scmp.eq.s32.totalorder %s20, 0
      %p41 = por %p39, %p40
      %p42 = scmp.ne.s32.totalorder %s28, %s29
      %p43 = scmp.eq.s32.totalorder %s21, 1
      %p44 = por %p42, %p43
      %p46 = scmp.ne.s32.totalorder %s29, %s45
      %p47 = scmp.eq.s32.totalorder %s21, 0
      %p48 = por %p46, %p47
      %s49 = ssub.s32 %s15, %s22
      %p50 = scmp.eq.s32.totalorder %s49, 0
      %s52 = sadd.s32 %s51, 1
      %s53 = scalar_select %p50, %s51, %s52
      %p56 = pneg %p50
      %p57 = scmp.eq.s32.totalorder %s15, 1
      %p58 = por %p56, %p57
      %p59 = scmp.ne.s32.totalorder %s51, %s54
      %p60 = scmp.eq.s32.totalorder %s15, 0
      %p61 = por %p59, %p60
      %p62 = scmp.ne.s32.totalorder %s51, %s54
      %p63 = scmp.eq.s32.totalorder %s20, 1
      %p64 = por %p62, %p63
      %p65 = scmp.ne.s32.totalorder %s54, %s55
      %p66 = scmp.eq.s32.totalorder %s20, 0
      %p67 = por %p65, %p66
      %p68 = scmp.ne.s32.totalorder %s54, %s55
      %p69 = scmp.eq.s32.totalorder %s21, 1
      %p70 = por %p68, %p69
      %p72 = scmp.ne.s32.totalorder %s55, %s71
      %p73 = scmp.eq.s32.totalorder %s21, 0
      %p74 = por %p72, %p73
      %s76 = sadd.s32 %s75, 1
      %p79 = scmp.eq.s32.totalorder %s15, 1
      %p80 = scmp.ne.s32.totalorder %s75, %s77
      %p81 = scmp.eq.s32.totalorder %s15, 0
      %p82 = por %p80, %p81
      %p83 = scmp.ne.s32.totalorder %s75, %s77
      %p84 = scmp.eq.s32.totalorder %s20, 1
      %p85 = por %p83, %p84
      %p86 = scmp.ne.s32.totalorder %s77, %s78
      %p87 = scmp.eq.s32.totalorder %s20, 0
      %p88 = por %p86, %p87
      %p89 = scmp.ne.s32.totalorder %s77, %s78
      %p90 = scmp.eq.s32.totalorder %s21, 1
      %p91 = por %p89, %p90
      %p93 = scmp.ne.s32.totalorder %s78, %s92
      %p94 = scmp.eq.s32.totalorder %s21, 0
      %p95 = por %p93, %p94
      %s97 = sadd.s32 %s96, 1
      %p100 = scmp.eq.s32.totalorder %s15, 1
      %p101 = scmp.ne.s32.totalorder %s96, %s98
      %p102 = scmp.eq.s32.totalorder %s15, 0
      %p103 = por %p101, %p102
      %p104 = scmp.ne.s32.totalorder %s96, %s98
      %p105 = scmp.eq.s32.totalorder %s20, 1
      %p106 = por %p104, %p105
      %p107 = scmp.ne.s32.totalorder %s98, %s99
      %p108 = scmp.eq.s32.totalorder %s20, 0
      %p109 = por %p107, %p108
      %p110 = scmp.ne.s32.totalorder %s98, %s99
      %p111 = scmp.eq.s32.totalorder %s21, 1
      %p112 = por %p110, %p111
      %p114 = scmp.ne.s32.totalorder %s99, %s113
      %p115 = scmp.eq.s32.totalorder %s21, 0
      %p116 = por %p114, %p115
      %s118 = sadd.s32 %s117, 1
      %p121 = scmp.eq.s32.totalorder %s15, 1
      %p122 = scmp.ne.s32.totalorder %s117, %s119
      %p123 = scmp.eq.s32.totalorder %s15, 0
      %p124 = por %p122, %p123
      %p125 = scmp.ne.s32.totalorder %s117, %s119
      %p126 = scmp.eq.s32.totalorder %s20, 1
      %p127 = por %p125, %p126
      %p128 = scmp.ne.s32.totalorder %s119, %s120
      %p129 = scmp.eq.s32.totalorder %s20, 0
      %p130 = por %p128, %p129
      %p131 = scmp.ne.s32.totalorder %s119, %s120
      %p132 = scmp.eq.s32.totalorder %s21, 1
      %p133 = por %p131, %p132
      %p135 = scmp.ne.s32.totalorder %s120, %s134
      %p136 = scmp.eq.s32.totalorder %s21, 0
      %p137 = por %p135, %p136
      %s139 = sadd.s32 %s138, 1
      %p142 = scmp.eq.s32.totalorder %s15, 1
      %p143 = scmp.ne.s32.totalorder %s138, %s140
      %p144 = scmp.eq.s32.totalorder %s15, 0
      %p145 = por %p143, %p144
      %p146 = scmp.ne.s32.totalorder %s138, %s140
      %p147 = scmp.eq.s32.totalorder %s20, 1
      %p148 = por %p146, %p147
      %p149 = scmp.ne.s32.totalorder %s140, %s141
      %p150 = scmp.eq.s32.totalorder %s20, 0
      %p151 = por %p149, %p150
      %p152 = scmp.ne.s32.totalorder %s140, %s141
      %p153 = scmp.eq.s32.totalorder %s21, 1
      %p154 = por %p152, %p153
      %p156 = scmp.ne.s32.totalorder %s141, %s155
      %p157 = scmp.eq.s32.totalorder %s21, 0
      %p158 = por %p156, %p157
      %s159 = ssub.s32 %s15, %s22
      %p160 = scmp.eq.s32.totalorder %s159, 0
      %s162 = sadd.s32 %s161, 1
      %s163 = scalar_select %p160, %s161, %s162
      %p166 = pneg %p160
      %p167 = scmp.eq.s32.totalorder %s15, 1
      %p168 = por %p166, %p167
      %p169 = scmp.ne.s32.totalorder %s161, %s164
      %p170 = scmp.eq.s32.totalorder %s15, 0
      %p171 = por %p169, %p170
      %p172 = scmp.ne.s32.totalorder %s161, %s164
      %p173 = scmp.eq.s32.totalorder %s20, 1
      %p174 = por %p172, %p173
      %p175 = scmp.ne.s32.totalorder %s164, %s165
      %p176 = scmp.eq.s32.totalorder %s20, 0
      %p177 = por %p175, %p176
      %p178 = scmp.ne.s32.totalorder %s164, %s165
      %p179 = scmp.eq.s32.totalorder %s21, 1
      %p180 = por %p178, %p179
      %p182 = scmp.ne.s32.totalorder %s165, %s181
      %p183 = scmp.eq.s32.totalorder %s21, 0
      %p184 = por %p182, %p183
      %p185 = scmp.le.s32.totalorder 1, %s15
      %p186 = scmp.lt.s32.totalorder %s15, 3
      %p187 = pnand %p185, %p186
      %p188 = pneg %p187
      // Predicated region
      $region9: #{tpu_custom_call.1} parent=5 // pred_check
        _
      $region10: #{tpu_custom_call.1} parent=5 // pred_check_branch
        %190 = sbr.rel (%p187) target = $region12
      $region11: #{tpu_custom_call.1} parent=5 // pred_region
        %s191 = ssub.s32 %s15, 1
        // Predicated region
        $region13: #{tpu_custom_call.1} parent=11 // pred_check
          %p192 = pneg %p88
        $region14: #{tpu_custom_call.1} parent=11 // pred_check_branch
          %194 = sbr.rel (%p192) target = $region16
        $region15: #{tpu_custom_call.1} parent=11 // pred_region
          _
        $region16: #{tpu_custom_call.1} parent=11 // pred_fallthru
          _
        // Predicated region
        $region17: #{tpu_custom_call.1} parent=11 // pred_check
          %p195 = pneg %p109
        $region18: #{tpu_custom_call.1} parent=11 // pred_check_branch
          %197 = sbr.rel (%p195) target = $region20
        $region19: #{tpu_custom_call.1} parent=11 // pred_region
          _
        $region20: #{tpu_custom_call.1} parent=11 // pred_fallthru
          _
        // Predicated region
        $region21: #{tpu_custom_call.1} parent=11 // pred_check
          %p198 = pneg %p130
        $region22: #{tpu_custom_call.1} parent=11 // pred_check_branch
          %200 = sbr.rel (%p198) target = $region24
        $region23: #{tpu_custom_call.1} parent=11 // pred_region
          _
        $region24: #{tpu_custom_call.1} parent=11 // pred_fallthru
          _
        // Predicated region
        $region25: #{tpu_custom_call.1} parent=11 // pred_check
          %p201 = pneg %p151
        $region26: #{tpu_custom_call.1} parent=11 // pred_check_branch
          %203 = sbr.rel (%p201) target = $region28
        $region27: #{tpu_custom_call.1} parent=11 // pred_region
          _
        $region28: #{tpu_custom_call.1} parent=11 // pred_fallthru
          _
      $region12: #{tpu_custom_call.1} parent=5 // pred_fallthru
        _
      %p204 = scmp.lt.s32.totalorder %s15, 2
      // Predicated region
      $region29: #{tpu_custom_call.1} parent=5 // pred_check
        %p205 = pneg %p204
      $region30: #{tpu_custom_call.1} parent=5 // pred_check_branch
        %207 = sbr.rel (%p205) target = $region32
      $region31: #{tpu_custom_call.1} parent=5 // pred_region
        // Predicated region
        $region33: #{tpu_custom_call.1} parent=31 // pred_check
          %p208 = pneg %p35
        $region34: #{tpu_custom_call.1} parent=31 // pred_check_branch
          %210 = sbr.rel (%p208) target = $region36
        $region35: #{tpu_custom_call.1} parent=31 // pred_region
          %s211 = smul.u32 3, %s15
          %p212 = scmp.lt.s32.totalorder %s211, 5
          %s213 = scalar_select %p212, %s211, 5
          %s214 = smul.addr %s213, 8
          %s215 = scalar_lea.vmem %s0, %s214
          %s216 = smul.u32 3, %s15
        $region36: #{tpu_custom_call.1} parent=31 // pred_fallthru
          _
        // Predicated region
        $region37: #{tpu_custom_call.1} parent=31 // pred_check
          %p217 = pneg %p61
        $region38: #{tpu_custom_call.1} parent=31 // pred_check_branch
          %219 = sbr.rel (%p217) target = $region40
        $region39: #{tpu_custom_call.1} parent=31 // pred_region
          %p220 = scmp.lt.s32.totalorder %s15, 1
          %s221 = scalar_select %p220, %s15, 1
          %s222 = scalar_lea.vmem %s1, %s221
        $region40: #{tpu_custom_call.1} parent=31 // pred_fallthru
          _
      $region32: #{tpu_custom_call.1} parent=5 // pred_fallthru
        _
      %p223 = scmp.le.s32.totalorder 1, %s15
      %p224 = scmp.lt.s32.totalorder %s15, 3
      %p225 = pnand %p223, %p224
      %p226 = pneg %p225
      // Predicated region
      $region41: #{tpu_custom_call.1} parent=5 // pred_check
        _
      $region42: #{tpu_custom_call.1} parent=5 // pred_check_branch
        %228 = sbr.rel (%p225) target = $region44
      $region43: #{tpu_custom_call.1} parent=5 // pred_region
        %s229 = ssub.s32 %s15, 1
        %s230 = smul.u32 3, %s20
        %p231 = scmp.lt.s32.totalorder %s230, 5
        %s232 = scalar_select %p231, %s230, 5
        %s233 = smul.addr %s232, 8
        %s234 = scalar_lea.vmem %s0, %s233
        %p235 = pneg %p41
        %p236 = pneg %p38
        %p237 = scmp.lt.s32.totalorder %s20, 1
        %s238 = scalar_select %p237, %s20, 1
        %s239 = scalar_lea.vmem %s1, %s238
        %p240 = pneg %p67
        %p241 = pneg %p64
        %p242 = pneg %p88
        %p243 = pneg %p85
        %p244 = pneg %p109
        %p245 = pneg %p106
        %p246 = pneg %p130
        %p247 = pneg %p127
        %p248 = pneg %p151
        %p249 = pneg %p148
        %p250 = pneg %p177
        %p251 = pneg %p174
        %s252 = sand.u32 %s164, 1
        %s253 = scalar_lea.sflag [#allocation3], %s252
        %s254 = sand.u32 %s164, 1
        %s255 = scalar_lea.vmem [#allocation2], %s254
        %s256 = smul.u32 3, %s20
        %p257 = scmp.lt.s32.totalorder %s256, 5
        %s258 = scalar_select %p257, %s256, 5
        %s259 = smul.addr %s258, 8
        %s260 = scalar_lea.vmem %s0, %s259
        %s261 = smul.u32 3, %s20
        %p262 = scmp.lt.s32.totalorder %s20, 1
        %s263 = scalar_select %p262, %s20, 1
        %s264 = scalar_lea.vmem %s1, %s263
        %v266 = vld [vmem:[%s2 + $0xc0] sm:$0xff]
        %v267 = vld [vmem:[%s2 + $0xd8] sm:$0xff]
        %v268 = vld [vmem:[%s2 + $0xf0] sm:$0xff]
        %v269 = vld [vmem:[%s2 + $0x108] sm:$0xff]
        %v270 = vld [vmem:[%s2 + $0x120] sm:$0xff]
        %v271 = vld [vmem:[%s2 + $0x138] sm:$0xff]
        %v272 = vld [vmem:[%s2 + $0x150] sm:$0x7]
        %v273 = vld [vmem:[%s260] sm:$0xff]
        %v274 = vld [vmem:[%s260 + $0x8] sm:$0xff]
        %v275 = vld [vmem:[%s260 + $0x10] sm:$0xff]
        %v276 = vld [vmem:[%s2 + $0x1b3] ss:$0 sm:$0xff]
        %vm277 = vcmask 392192
        %v279 = vsel %vm277, %v273, 0
        %v282 = vsel %vm277, %v274, 0
        %v285 = vsel %vm277, %v275, 0
        %287 = vmatprep.subr.mxu0 0.0
        %288 = vmatpush1.msra.mxu0 %v266
        %289 = vmatprep.subr.mxu0 0.0
        %290 = vmatpush1.msra.mxu0 %v267
        %291 = vmatprep.subr.mxu0 0.0
        %292 = vmatpush1.msra.mxu0 %v268
        %293 = vmatprep.subr.mxu0 0.0
        %294 = vmatpush1.msra.mxu0 %v269
        %295 = vmatprep.subr.mxu0 0.0
        %296 = vmatpush1.msra.mxu0 %v270
        %297 = vmatprep.subr.mxu0 0.0
        %298 = vmatpush1.msra.mxu0 %v271
        %299 = vmatprep.subr.mxu0 0.0
        %300 = vmatpush1.msra.mxu0 0.0
        %301 = vmatprep.subr.mxu0 0.0
        %302 = vmatpush1.msra.mxu0 0.0
        %303 = vmatprep.subr.mxu0 0.0
        %304 = vmatpush1.msra.mxu0 0.0
        %305 = vmatprep.subr.mxu0 0.0
        %306 = vmatpush1.msra.mxu0 0.0
        %307 = vmatprep.subr.mxu0 0.0
        %308 = vmatpush1.msra.mxu0 0.0
        %309 = vmatprep.subr.mxu0 0.0
        %310 = vmatpush1.msra.mxu0 0.0
        %311 = vmatprep.subr.mxu0 0.0
        %312 = vmatpush1.msra.mxu0 0.0
        %313 = vmatprep.subr.mxu0 0.0
        %314 = vmatpush1.msra.mxu0 0.0
        %315 = vmatprep.subr.mxu0 0.0
        %316 = vmatpush1.msra.mxu0 0.0
        %317 = vmatprep.subr.mxu0 0.0
        %318 = vmatpush1.msra.mxu0 0.0
        %319 = vmatprep.subr.mxu0 0.0
        %320 = vmatpush1.msra.mxu0 0.0
        %321 = vmatprep.subr.mxu0 0.0
        %322 = vmatpush1.msra.mxu0 0.0
        %323 = vmatprep.subr.mxu0 0.0
        %324 = vmatpush1.msra.mxu0 0.0
        %325 = vmatprep.subr.mxu0 0.0
        %326 = vmatpush1.msra.mxu0 0.0
        %327 = vmatprep.subr.mxu0 0.0
        %328 = vmatpush1.msra.mxu0 0.0
        %329 = vmatprep.subr.mxu0 0.0
        %330 = vmatpush1.msra.mxu0 0.0
        %331 = vmatprep.subr.mxu0 0.0
        %332 = vmatpush1.msra.mxu0 0.0
        %333 = vmatprep.subr.mxu0 0.0
        %334 = vmatpush1.msra.mxu0 0.0
        %335 = vmatprep.subr.mxu0 0.0
        %336 = vmatpush1.msra.mxu0 0.0
        %337 = vmatprep.subr.mxu0 0.0
        %338 = vmatpush1.msra.mxu0 0.0
        %339 = vmatprep.subr.mxu0 0.0
        %340 = vmatpush1.msra.mxu0 0.0
        %341 = vmatprep.subr.mxu0 0.0
        %342 = vmatpush1.msra.mxu0 0.0
        %343 = vmatprep.subr.mxu0 0.0
        %344 = vmatpush1.msra.mxu0 0.0
        %345 = vmatprep.subr.mxu0 0.0
        %346 = vmatpush1.msra.mxu0 0.0
        %347 = vmatprep.subr.mxu0 0.0
        %348 = vmatpush1.msra.mxu0 0.0
        %349 = vmatprep.subr.mxu0 0.0
        %350 = vmatpush1.msra.mxu0 0.0
        %351 = vmatprep.mubr.f32.mxu0 0.0
        %352 = vmatmul.mubr.f32.gmra.mrb[0].mxu0 %v279
        %v353 = vpop.f32.mrb[0].mxu0
        %v354 = vadd.f32 %v276, %v353
        %v355 = vpop.f32.mrb[0].mxu0
        %356 = vmatprep.mubr.f32.mxu0 0.0
        %357 = vmatmul.mubr.f32.gmra.mrb[0].mxu0 %v282
        %v358 = vpop.f32.mrb[0].mxu0
        %v359 = vadd.f32 %v276, %v358
        %v360 = vpop.f32.mrb[0].mxu0
        %361 = vmatprep.mubr.f32.mxu0 0.0
        %362 = vmatmul.mubr.f32.gmra.mrb[0].mxu0 %v285
        %v363 = vpop.f32.mrb[0].mxu0
        %v364 = vadd.f32 %v276, %v363
        %v365 = vpop.f32.mrb[0].mxu0
        %366 = vdwg.mxu0
        %v367 = vld [vmem:[%s264] sm:$0x1]
        %v368 = vld [vmem:[%s2 + $0x1b4] ss:$0 sm:$0xff]
        %vm369 = vcmask 23552
        %v371 = vsel %vm369, %v367, 0
        %vm373 = vcmask 1042432
        %v375 = vsel %vm373, %v272, 0
        %377 = vmatprep.subr.mxu0 0.0
        %378 = vmatpush1.msra.mxu0 %v375
        %379 = vmatprep.subr.mxu0 0.0
        %380 = vmatpush1.msra.mxu0 0.0
        %381 = vmatprep.subr.mxu0 0.0
        %382 = vmatpush1.msra.mxu0 0.0
        %383 = vmatprep.subr.mxu0 0.0
        %384 = vmatpush1.msra.mxu0 0.0
        %385 = vmatprep.subr.mxu0 0.0
        %386 = vmatpush1.msra.mxu0 0.0
        %387 = vmatprep.subr.mxu0 0.0
        %388 = vmatpush1.msra.mxu0 0.0
        %389 = vmatprep.subr.mxu0 0.0
        %390 = vmatpush1.msra.mxu0 0.0
        %391 = vmatprep.subr.mxu0 0.0
        %392 = vmatpush1.msra.mxu0 0.0
        %393 = vmatprep.subr.mxu0 0.0
        %394 = vmatpush1.msra.mxu0 0.0
        %395 = vmatprep.subr.mxu0 0.0
        %396 = vmatpush1.msra.mxu0 0.0
        %397 = vmatprep.subr.mxu0 0.0
        %398 = vmatpush1.msra.mxu0 0.0
        %399 = vmatprep.subr.mxu0 0.0
        %400 = vmatpush1.msra.mxu0 0.0
        %401 = vmatprep.subr.mxu0 0.0
        %402 = vmatpush1.msra.mxu0 0.0
        %403 = vmatprep.subr.mxu0 0.0
        %404 = vmatpush1.msra.mxu0 0.0
        %405 = vmatprep.subr.mxu0 0.0
        %406 = vmatpush1.msra.mxu0 0.0
        %407 = vmatprep.subr.mxu0 0.0
        %408 = vmatpush1.msra.mxu0 0.0
        %409 = vmatprep.subr.mxu0 0.0
        %410 = vmatpush1.msra.mxu0 0.0
        %411 = vmatprep.subr.mxu0 0.0
        %412 = vmatpush1.msra.mxu0 0.0
        %413 = vmatprep.subr.mxu0 0.0
        %414 = vmatpush1.msra.mxu0 0.0
        %415 = vmatprep.subr.mxu0 0.0
        %416 = vmatpush1.msra.mxu0 0.0
        %417 = vmatprep.subr.mxu0 0.0
        %418 = vmatpush1.msra.mxu0 0.0
        %419 = vmatprep.subr.mxu0 0.0
        %420 = vmatpush1.msra.mxu0 0.0
        %421 = vmatprep.subr.mxu0 0.0
        %422 = vmatpush1.msra.mxu0 0.0
        %423 = vmatprep.subr.mxu0 0.0
        %424 = vmatpush1.msra.mxu0 0.0
        %425 = vmatprep.subr.mxu0 0.0
        %426 = vmatpush1.msra.mxu0 0.0
        %427 = vmatprep.subr.mxu0 0.0
        %428 = vmatpush1.msra.mxu0 0.0
        %429 = vmatprep.subr.mxu0 0.0
        %430 = vmatpush1.msra.mxu0 0.0
        %431 = vmatprep.subr.mxu0 0.0
        %432 = vmatpush1.msra.mxu0 0.0
        %433 = vmatprep.subr.mxu0 0.0
        %434 = vmatpush1.msra.mxu0 0.0
        %435 = vmatprep.subr.mxu0 0.0
        %436 = vmatpush1.msra.mxu0 0.0
        %437 = vmatprep.subr.mxu0 0.0
        %438 = vmatpush1.msra.mxu0 0.0
        %439 = vmatprep.subr.mxu0 0.0
        %440 = vmatpush1.msra.mxu0 0.0
        %441 = vmatprep.mubr.f32.mxu0 0.0
        %442 = vmatmul.mubr.f32.gmra.mrb[0].mxu0 %v371
        %v443 = vpop.f32.mrb[0].mxu0
        %v444 = vadd.f32 %v368, %v443
        %v445 = vpop.f32.mrb[0].mxu0
        %446 = vdwg.mxu0
        %v447 = vlaneseq
        %v448 = vshrl.u32 %v447, 7
        %v449 = vadd.s32 %v448, 8
        %v450 = vadd.s32 %v448, 16
        %vm451 = vcmp.eq.s32.totalorder %v448, 16
        %vm452 = vcmp.eq.s32.totalorder %v449, 16
        %vm453 = vcmp.eq.s32.totalorder %v450, 16
        %v454 = vsel %vm451, 1, 0
        %v455 = vsel %vm452, 1, 0
        %v456 = vsel %vm453, 1, 0
        %vm457 = vcmp.eq.s32.totalorder %v454, 1
        %vm458 = vcmp.eq.s32.totalorder %v455, 1
        %vm459 = vcmp.eq.s32.totalorder %v456, 1
        %v460 = vlaneseq
        %v461 = vshrl.u32 %v460, 7
        %v462 = vsub.s32 0, %v461
        %v463 = vrot.slane %v444, %v462
        %v464 = vsel %vm457, %v463, %v354
        %v465 = vsel %vm458, %v463, %v359
        %v466 = vsel %vm459, %v463, %v364
        %v467 = vlaneseq
        %v468 = vand.u32 %v467, 127
        %vm469 = vcmp.lt.s32.totalorder %v468, 17
        %v470 = vsel %vm469, 0.0, -1e+30
        %v471 = vld [vmem:[%s2] sm:$0xff]
        %v472 = vld [vmem:[%s2 + $0x8] sm:$0xff]
        %v473 = vld [vmem:[%s2 + $0x10] sm:$0xff]
        %v474 = vld [vmem:[%s2 + $0x18] sm:$0xff]
        %v475 = vld [vmem:[%s2 + $0x20] sm:$0xff]
        %v476 = vld [vmem:[%s2 + $0x28] sm:$0xff]
        %v477 = vld [vmem:[%s2 + $0x30] sm:$0xff]
        %v478 = vld [vmem:[%s2 + $0x38] sm:$0xff]
        %v479 = vld [vmem:[%s2 + $0x40] sm:$0xff]
        %v480 = vld [vmem:[%s2 + $0x48] sm:$0xff]
        %v481 = vld [vmem:[%s2 + $0x50] sm:$0xff]
        %v482 = vld [vmem:[%s2 + $0x58] sm:$0xff]
        %vm483 = vcmask 261120
        %v485 = vsel %vm483, %v464, 0
        %v488 = vsel %vm483, %v465, 0
        %v491 = vsel %vm483, %v466, 0
        %493 = vmatprep.subr.mxu0 %v472
        %494 = vmatpush1.msra.mxu0 %v471
        %495 = vmatprep.subr.mxu0 %v475
        %496 = vmatpush1.msra.mxu0 %v474
        %497 = vmatprep.subr.mxu0 %v478
        %498 = vmatpush1.msra.mxu0 %v477
        %499 = vmatprep.subr.mxu0 %v481
        %500 = vmatpush1.msra.mxu0 %v480
        %501 = vmatprep.subr.mxu0 0.0
        %502 = vmatpush1.msra.mxu0 0.0
        %503 = vmatprep.subr.mxu0 0.0
        %504 = vmatpush1.msra.mxu0 0.0
        %505 = vmatprep.subr.mxu0 0.0
        %506 = vmatpush1.msra.mxu0 0.0
        %507 = vmatprep.subr.mxu0 0.0
        %508 = vmatpush1.msra.mxu0 0.0
        %509 = vmatprep.subr.mxu0 0.0
        %510 = vmatpush1.msra.mxu0 0.0
        %511 = vmatprep.subr.mxu0 0.0
        %512 = vmatpush1.msra.mxu0 0.0
        %513 = vmatprep.subr.mxu0 0.0
        %514 = vmatpush1.msra.mxu0 0.0
        %515 = vmatprep.subr.mxu0 0.0
        %516 = vmatpush1.msra.mxu0 0.0
        %517 = vmatprep.subr.mxu0 0.0
        %518 = vmatpush1.msra.mxu0 0.0
        %519 = vmatprep.subr.mxu0 0.0
        %520 = vmatpush1.msra.mxu0 0.0
        %521 = vmatprep.subr.mxu0 0.0
        %522 = vmatpush1.msra.mxu0 0.0
        %523 = vmatprep.subr.mxu0 0.0
        %524 = vmatpush1.msra.mxu0 0.0
        %525 = vmatprep.subr.mxu0 0.0
        %526 = vmatpush1.msra.mxu0 0.0
        %527 = vmatprep.subr.mxu0 0.0
        %528 = vmatpush1.msra.mxu0 0.0
        %529 = vmatprep.subr.mxu0 0.0
        %530 = vmatpush1.msra.mxu0 0.0
        %531 = vmatprep.subr.mxu0 0.0
        %532 = vmatpush1.msra.mxu0 0.0
        %533 = vmatprep.subr.mxu0 0.0
        %534 = vmatpush1.msra.mxu0 0.0
        %535 = vmatprep.subr.mxu0 0.0
        %536 = vmatpush1.msra.mxu0 0.0
        %537 = vmatprep.subr.mxu0 0.0
        %538 = vmatpush1.msra.mxu0 0.0
        %539 = vmatprep.subr.mxu0 0.0
        %540 = vmatpush1.msra.mxu0 0.0
        %541 = vmatprep.subr.mxu0 0.0
        %542 = vmatpush1.msra.mxu0 0.0
        %543 = vmatprep.subr.mxu0 0.0
        %544 = vmatpush1.msra.mxu0 0.0
        %545 = vmatprep.subr.mxu0 0.0
        %546 = vmatpush1.msra.mxu0 0.0
        %547 = vmatprep.subr.mxu0 0.0
        %548 = vmatpush1.msra.mxu0 0.0
        %549 = vmatprep.subr.mxu0 0.0
        %550 = vmatpush1.msra.mxu0 0.0
        %551 = vmatprep.subr.mxu0 0.0
        %552 = vmatpush1.msra.mxu0 0.0
        %553 = vmatprep.subr.mxu0 0.0
        %554 = vmatpush1.msra.mxu0 0.0
        %555 = vmatprep.subr.mxu0 0.0
        %556 = vmatpush1.msra.mxu0 0.0
        %557 = vmatprep.mubr.f32.mxu0 0.0
        %558 = vmatmul.mubr.f32.gmra.mrb[0].mxu0 %v485
        %v559 = vpop.f32.mrb[0].mxu0
        %v560 = vadd.f32 0.0, %v559
        %v561 = vpop.f32.mrb[0].mxu0
        %v562 = vadd.f32 0.0, %v561
        %563 = vmatprep.mubr.f32.mxu0 0.0
        %564 = vmatmul.mubr.f32.gmra.mrb[0].mxu0 %v488
        %v565 = vpop.f32.mrb[0].mxu0
        %v566 = vadd.f32 0.0, %v565
        %v567 = vpop.f32.mrb[0].mxu0
        %v568 = vadd.f32 0.0, %v567
        %569 = vmatprep.mubr.f32.mxu0 0.0
        %570 = vmatmul.mubr.f32.gmra.mrb[0].mxu0 %v491
        %v571 = vpop.f32.mrb[0].mxu0
        %v572 = vadd.f32 0.0, %v571
        %v573 = vpop.f32.mrb[0].mxu0
        %v574 = vadd.f32 0.0, %v573
        %575 = vdwg.mxu0
        %576 = vmatprep.subr.mxu0 0.0
        %577 = vmatpush1.msra.mxu0 %v473
        %578 = vmatprep.subr.mxu0 0.0
        %579 = vmatpush1.msra.mxu0 %v476
        %580 = vmatprep.subr.mxu0 0.0
        %581 = vmatpush1.msra.mxu0 %v479
        %582 = vmatprep.subr.mxu0 0.0
        %583 = vmatpush1.msra.mxu0 %v482
        %584 = vmatprep.subr.mxu0 0.0
        %585 = vmatpush1.msra.mxu0 0.0
        %586 = vmatprep.subr.mxu0 0.0
        %587 = vmatpush1.msra.mxu0 0.0
        %588 = vmatprep.subr.mxu0 0.0
        %589 = vmatpush1.msra.mxu0 0.0
        %590 = vmatprep.subr.mxu0 0.0
        %591 = vmatpush1.msra.mxu0 0.0
        %592 = vmatprep.subr.mxu0 0.0
        %593 = vmatpush1.msra.mxu0 0.0
        %594 = vmatprep.subr.mxu0 0.0
        %595 = vmatpush1.msra.mxu0 0.0
        %596 = vmatprep.subr.mxu0 0.0
        %597 = vmatpush1.msra.mxu0 0.0
        %598 = vmatprep.subr.mxu0 0.0
        %599 = vmatpush1.msra.mxu0 0.0
        %600 = vmatprep.subr.mxu0 0.0
        %601 = vmatpush1.msra.mxu0 0.0
        %602 = vmatprep.subr.mxu0 0.0
        %603 = vmatpush1.msra.mxu0 0.0
        %604 = vmatprep.subr.mxu0 0.0
        %605 = vmatpush1.msra.mxu0 0.0
        %606 = vmatprep.subr.mxu0 0.0
        %607 = vmatpush1.msra.mxu0 0.0
        %608 = vmatprep.subr.mxu0 0.0
        %609 = vmatpush1.msra.mxu0 0.0
        %610 = vmatprep.subr.mxu0 0.0
        %611 = vmatpush1.msra.mxu0 0.0
        %612 = vmatprep.subr.mxu0 0.0
        %613 = vmatpush1.msra.mxu0 0.0
        %614 = vmatprep.subr.mxu0 0.0
        %615 = vmatpush1.msra.mxu0 0.0
        %616 = vmatprep.subr.mxu0 0.0
        %617 = vmatpush1.msra.mxu0 0.0
        %618 = vmatprep.subr.mxu0 0.0
        %619 = vmatpush1.msra.mxu0 0.0
        %620 = vmatprep.subr.mxu0 0.0
        %621 = vmatpush1.msra.mxu0 0.0
        %622 = vmatprep.subr.mxu0 0.0
        %623 = vmatpush1.msra.mxu0 0.0
        %624 = vmatprep.subr.mxu0 0.0
        %625 = vmatpush1.msra.mxu0 0.0
        %626 = vmatprep.subr.mxu0 0.0
        %627 = vmatpush1.msra.mxu0 0.0
        %628 = vmatprep.subr.mxu0 0.0
        %629 = vmatpush1.msra.mxu0 0.0
        %630 = vmatprep.subr.mxu0 0.0
        %631 = vmatpush1.msra.mxu0 0.0
        %632 = vmatprep.subr.mxu0 0.0
        %633 = vmatpush1.msra.mxu0 0.0
        %634 = vmatprep.subr.mxu0 0.0
        %635 = vmatpush1.msra.mxu0 0.0
        %636 = vmatprep.subr.mxu0 0.0
        %637 = vmatpush1.msra.mxu0 0.0
        %638 = vmatprep.subr.mxu0 0.0
        %639 = vmatpush1.msra.mxu0 0.0
        %640 = vmatprep.mubr.f32.mxu0 0.0
        %641 = vmatmul.mubr.f32.gmra.mrb[0].mxu0 %v485
        %v642 = vpop.f32.mrb[0].mxu0
        %v643 = vadd.f32 0.0, %v642
        %v644 = vpop.f32.mrb[0].mxu0
        %645 = vmatprep.mubr.f32.mxu0 0.0
        %646 = vmatmul.mubr.f32.gmra.mrb[0].mxu0 %v488
        %v647 = vpop.f32.mrb[0].mxu0
        %v648 = vadd.f32 0.0, %v647
        %v649 = vpop.f32.mrb[0].mxu0
        %650 = vmatprep.mubr.f32.mxu0 0.0
        %651 = vmatmul.mubr.f32.gmra.mrb[0].mxu0 %v491
        %v652 = vpop.f32.mrb[0].mxu0
        %v653 = vadd.f32 0.0, %v652
        %v654 = vpop.f32.mrb[0].mxu0
        %655 = vdwg.mxu0
        %v656 = vld [vmem:[%s2 + $0x1b6] ss:$0 sm:$0xff]
        %v657 = vadd.f32 %v560, %v656
        %v658 = vadd.f32 %v566, %v656
        %v659 = vadd.f32 %v572, %v656
        %v660 = vld [vmem:[%s2 + $0x1b7] ss:$0 sm:$0xff]
        %662 = vrot.lane.b32.xlu0 %v660, 32
        %v663 = vpop.permute.xlu0 %662
        %v665 = vadd.f32 %v560, %v663
        %v666 = vadd.f32 %v566, %v663
        %v667 = vadd.f32 %v572, %v663
        %671 = vrot.lane.b32.xlu0 %v665, 96
        %v672 = vpop.permute.xlu0 %671
        %673 = vrot.lane.b32.xlu0 %v666, 96
        %v674 = vpop.permute.xlu0 %673
        %675 = vrot.lane.b32.xlu0 %v667, 96
        %v676 = vpop.permute.xlu0 %675
        %vm677 = vcmask 31744
        %v679 = vsel %vm677, %v657, 0
        %v682 = vsel %vm677, %v658, 0
        %v685 = vsel %vm677, %v659, 0
        %v687 = vsel %vm677, %v672, 0
        %v689 = vsel %vm677, %v674, 0
        %v691 = vsel %vm677, %v676, 0
        %693 = vmatprep.subr.mxu0 0.0
        %694 = vmatpush1.xpose.msra.mxu0 %v687
        %695 = vmatprep.subr.mxu0 0.0
        %696 = vmatpush1.xpose.msra.mxu0 %v689
        %697 = vmatprep.subr.mxu0 0.0
        %698 = vmatpush1.xpose.msra.mxu0 %v691
        %699 = vmatprep.subr.mxu0 0.0
        %700 = vmatpush1.xpose.msra.mxu0 0.0
        %701 = vmatprep.subr.mxu0 0.0
        %702 = vmatpush1.xpose.msra.mxu0 0.0
        %703 = vmatprep.subr.mxu0 0.0
        %704 = vmatpush1.xpose.msra.mxu0 0.0
        %705 = vmatprep.subr.mxu0 0.0
        %706 = vmatpush1.xpose.msra.mxu0 0.0
        %707 = vmatprep.subr.mxu0 0.0
        %708 = vmatpush1.xpose.msra.mxu0 0.0
        %709 = vmatprep.subr.mxu0 0.0
        %710 = vmatpush1.xpose.msra.mxu0 0.0
        %711 = vmatprep.subr.mxu0 0.0
        %712 = vmatpush1.xpose.msra.mxu0 0.0
        %713 = vmatprep.subr.mxu0 0.0
        %714 = vmatpush1.xpose.msra.mxu0 0.0
        %715 = vmatprep.subr.mxu0 0.0
        %716 = vmatpush1.xpose.msra.mxu0 0.0
        %717 = vmatprep.subr.mxu0 0.0
        %718 = vmatpush1.xpose.msra.mxu0 0.0
        %719 = vmatprep.subr.mxu0 0.0
        %720 = vmatpush1.xpose.msra.mxu0 0.0
        %721 = vmatprep.subr.mxu0 0.0
        %722 = vmatpush1.xpose.msra.mxu0 0.0
        %723 = vmatprep.subr.mxu0 0.0
        %724 = vmatpush1.xpose.msra.mxu0 0.0
        %725 = vmatprep.subr.mxu0 0.0
        %726 = vmatpush1.xpose.msra.mxu0 0.0
        %727 = vmatprep.subr.mxu0 0.0
        %728 = vmatpush1.xpose.msra.mxu0 0.0
        %729 = vmatprep.subr.mxu0 0.0
        %730 = vmatpush1.xpose.msra.mxu0 0.0
        %731 = vmatprep.subr.mxu0 0.0
        %732 = vmatpush1.xpose.msra.mxu0 0.0
        %733 = vmatprep.subr.mxu0 0.0
        %734 = vmatpush1.xpose.msra.mxu0 0.0
        %735 = vmatprep.subr.mxu0 0.0
        %736 = vmatpush1.xpose.msra.mxu0 0.0
        %737 = vmatprep.subr.mxu0 0.0
        %738 = vmatpush1.xpose.msra.mxu0 0.0
        %739 = vmatprep.subr.mxu0 0.0
        %740 = vmatpush1.xpose.msra.mxu0 0.0
        %741 = vmatprep.subr.mxu0 0.0
        %742 = vmatpush1.xpose.msra.mxu0 0.0
        %743 = vmatprep.subr.mxu0 0.0
        %744 = vmatpush1.xpose.msra.mxu0 0.0
        %745 = vmatprep.subr.mxu0 0.0
        %746 = vmatpush1.xpose.msra.mxu0 0.0
        %747 = vmatprep.subr.mxu0 0.0
        %748 = vmatpush1.xpose.msra.mxu0 0.0
        %749 = vmatprep.subr.mxu0 0.0
        %750 = vmatpush1.xpose.msra.mxu0 0.0
        %751 = vmatprep.subr.mxu0 0.0
        %752 = vmatpush1.xpose.msra.mxu0 0.0
        %753 = vmatprep.subr.mxu0 0.0
        %754 = vmatpush1.xpose.msra.mxu0 0.0
        %755 = vmatprep.subr.mxu0 0.0
        %756 = vmatpush1.xpose.msra.mxu0 0.0
        %757 = vmatprep.mubr.f32.mxu0 0.0
        %758 = vmatmul.mubr.f32.gmra.mrb[0].mxu0 %v679
        %v759 = vpop.f32.mrb[0].mxu0
        %v760 = vadd.f32 %v470, %v759
        %v761 = vpop.f32.mrb[0].mxu0
        %762 = vmatprep.mubr.f32.mxu0 0.0
        %763 = vmatmul.mubr.f32.gmra.mrb[0].mxu0 %v682
        %v764 = vpop.f32.mrb[0].mxu0
        %v765 = vadd.f32 %v470, %v764
        %v766 = vpop.f32.mrb[0].mxu0
        %767 = vmatprep.mubr.f32.mxu0 0.0
        %768 = vmatmul.mubr.f32.gmra.mrb[0].mxu0 %v685
        %v769 = vpop.f32.mrb[0].mxu0
        %v770 = vadd.f32 %v470, %v769
        %v771 = vpop.f32.mrb[0].mxu0
        %772 = vdwg.mxu0
        %vm773 = vcmask 195584
        %v774 = vsel %vm773, %v760, -inf
        %775 = vmax.xlane.f32.xlu0 %v774
        %v776 = vpop.xlane.xlu0 %775
        %v777 = vsel %vm773, %v765, -inf
        %778 = vmax.xlane.f32.xlu0 %v777
        %v779 = vpop.xlane.xlu0 %778
        %v780 = vsel %vm773, %v770, -inf
        %781 = vmax.xlane.f32.xlu0 %v780
        %v782 = vpop.xlane.xlu0 %781
        %v783 = vsub.f32 %v760, %v776
        %v784 = vsub.f32 %v765, %v779
        %v785 = vsub.f32 %v770, %v782
        %v786 = vmul.f32 %v783, 1.442695
        %v787 = vpow.pop %v786
        %v788 = vmul.f32 %v784, 1.442695
        %v789 = vpow.pop %v788
        %v790 = vmul.f32 %v785, 1.442695
        %v791 = vpow.pop %v790
        %v792 = vsel %vm773, %v787, 0.0
        %793 = vadd.xlane.f32.xlu0 %v792
        %v794 = vpop.xlane.xlu0 %793
        %v795 = vsel %vm773, %v789, 0.0
        %796 = vadd.xlane.f32.xlu0 %v795
        %v797 = vpop.xlane.xlu0 %796
        %v798 = vsel %vm773, %v791, 0.0
        %799 = vadd.xlane.f32.xlu0 %v798
        %v800 = vpop.xlane.xlu0 %799
        %v801 = vrcp.pop %v794
        %v802 = vmul.f32 %v787, %v801
        %v803 = vrcp.pop %v797
        %v804 = vmul.f32 %v789, %v803
        %v805 = vrcp.pop %v800
        %v806 = vmul.f32 %v791, %v805
        %807 = vrot.lane.b32.xlu0 %v657, 124
        %v808 = vpop.permute.xlu0 %807
        %809 = vrot.lane.b32.xlu0 %v658, 124
        %v810 = vpop.permute.xlu0 %809
        %811 = vrot.lane.b32.xlu0 %v659, 124
        %v812 = vpop.permute.xlu0 %811
        %813 = vrot.lane.b32.xlu0 %v665, 92
        %v814 = vpop.permute.xlu0 %813
        %815 = vrot.lane.b32.xlu0 %v666, 92
        %v816 = vpop.permute.xlu0 %815
        %817 = vrot.lane.b32.xlu0 %v667, 92
        %v818 = vpop.permute.xlu0 %817
        %v819 = vsel %vm677, %v808, 0
        %v821 = vsel %vm677, %v810, 0
        %v823 = vsel %vm677, %v812, 0
        %v825 = vsel %vm677, %v814, 0
        %v827 = vsel %vm677, %v816, 0
        %v829 = vsel %vm677, %v818, 0
        %831 = vmatprep.subr.mxu0 0.0
        %832 = vmatpush1.xpose.msra.mxu0 %v825
        %833 = vmatprep.subr.mxu0 0.0
        %834 = vmatpush1.xpose.msra.mxu0 %v827
        %835 = vmatprep.subr.mxu0 0.0
        %836 = vmatpush1.xpose.msra.mxu0 %v829
        %837 = vmatprep.subr.mxu0 0.0
        %838 = vmatpush1.xpose.msra.mxu0 0.0
        %839 = vmatprep.subr.mxu0 0.0
        %840 = vmatpush1.xpose.msra.mxu0 0.0
        %841 = vmatprep.subr.mxu0 0.0
        %842 = vmatpush1.xpose.msra.mxu0 0.0
        %843 = vmatprep.subr.mxu0 0.0
        %844 = vmatpush1.xpose.msra.mxu0 0.0
        %845 = vmatprep.subr.mxu0 0.0
        %846 = vmatpush1.xpose.msra.mxu0 0.0
        %847 = vmatprep.subr.mxu0 0.0
        %848 = vmatpush1.xpose.msra.mxu0 0.0
        %849 = vmatprep.subr.mxu0 0.0
        %850 = vmatpush1.xpose.msra.mxu0 0.0
        %851 = vmatprep.subr.mxu0 0.0
        %852 = vmatpush1.xpose.msra.mxu0 0.0
        %853 = vmatprep.subr.mxu0 0.0
        %854 = vmatpush1.xpose.msra.mxu0 0.0
        %855 = vmatprep.subr.mxu0 0.0
        %856 = vmatpush1.xpose.msra.mxu0 0.0
        %857 = vmatprep.subr.mxu0 0.0
        %858 = vmatpush1.xpose.msra.mxu0 0.0
        %859 = vmatprep.subr.mxu0 0.0
        %860 = vmatpush1.xpose.msra.mxu0 0.0
        %861 = vmatprep.subr.mxu0 0.0
        %862 = vmatpush1.xpose.msra.mxu0 0.0
        %863 = vmatprep.subr.mxu0 0.0
        %864 = vmatpush1.xpose.msra.mxu0 0.0
        %865 = vmatprep.subr.mxu0 0.0
        %866 = vmatpush1.xpose.msra.mxu0 0.0
        %867 = vmatprep.subr.mxu0 0.0
        %868 = vmatpush1.xpose.msra.mxu0 0.0
        %869 = vmatprep.subr.mxu0 0.0
        %870 = vmatpush1.xpose.msra.mxu0 0.0
        %871 = vmatprep.subr.mxu0 0.0
        %872 = vmatpush1.xpose.msra.mxu0 0.0
        %873 = vmatprep.subr.mxu0 0.0
        %874 = vmatpush1.xpose.msra.mxu0 0.0
        %875 = vmatprep.subr.mxu0 0.0
        %876 = vmatpush1.xpose.msra.mxu0 0.0
        %877 = vmatprep.subr.mxu0 0.0
        %878 = vmatpush1.xpose.msra.mxu0 0.0
        %879 = vmatprep.subr.mxu0 0.0
        %880 = vmatpush1.xpose.msra.mxu0 0.0
        %881 = vmatprep.subr.mxu0 0.0
        %882 = vmatpush1.xpose.msra.mxu0 0.0
        %883 = vmatprep.subr.mxu0 0.0
        %884 = vmatpush1.xpose.msra.mxu0 0.0
        %885 = vmatprep.subr.mxu0 0.0
        %886 = vmatpush1.xpose.msra.mxu0 0.0
        %887 = vmatprep.subr.mxu0 0.0
        %888 = vmatpush1.xpose.msra.mxu0 0.0
        %889 = vmatprep.subr.mxu0 0.0
        %890 = vmatpush1.xpose.msra.mxu0 0.0
        %891 = vmatprep.subr.mxu0 0.0
        %892 = vmatpush1.xpose.msra.mxu0 0.0
        %893 = vmatprep.subr.mxu0 0.0
        %894 = vmatpush1.xpose.msra.mxu0 0.0
        %895 = vmatprep.mubr.f32.mxu0 0.0
        %896 = vmatmul.mubr.f32.gmra.mrb[0].mxu0 %v819
        %v897 = vpop.f32.mrb[0].mxu0
        %v898 = vadd.f32 %v470, %v897
        %v899 = vpop.f32.mrb[0].mxu0
        %900 = vmatprep.mubr.f32.mxu0 0.0
        %901 = vmatmul.mubr.f32.gmra.mrb[0].mxu0 %v821
        %v902 = vpop.f32.mrb[0].mxu0
        %v903 = vadd.f32 %v470, %v902
        %v904 = vpop.f32.mrb[0].mxu0
        %905 = vmatprep.mubr.f32.mxu0 0.0
        %906 = vmatmul.mubr.f32.gmra.mrb[0].mxu0 %v823
        %v907 = vpop.f32.mrb[0].mxu0
        %v908 = vadd.f32 %v470, %v907
        %v909 = vpop.f32.mrb[0].mxu0
        %910 = vdwg.mxu0
        %v911 = vsel %vm773, %v898, -inf
        %912 = vmax.xlane.f32.xlu0 %v911
        %v913 = vpop.xlane.xlu0 %912
        %v914 = vsel %vm773, %v903, -inf
        %915 = vmax.xlane.f32.xlu0 %v914
        %v916 = vpop.xlane.xlu0 %915
        %v917 = vsel %vm773, %v908, -inf
        %918 = vmax.xlane.f32.xlu0 %v917
        %v919 = vpop.xlane.xlu0 %918
        %v920 = vsub.f32 %v898, %v913
        %v921 = vsub.f32 %v903, %v916
        %v922 = vsub.f32 %v908, %v919
        %v923 = vmul.f32 %v920, 1.442695
        %v924 = vpow.pop %v923
        %v925 = vmul.f32 %v921, 1.442695
        %v926 = vpow.pop %v925
        %v927 = vmul.f32 %v922, 1.442695
        %v928 = vpow.pop %v927
        %v929 = vsel %vm773, %v924, 0.0
        %930 = vadd.xlane.f32.xlu0 %v929
        %v931 = vpop.xlane.xlu0 %930
        %v932 = vsel %vm773, %v926, 0.0
        %933 = vadd.xlane.f32.xlu0 %v932
        %v934 = vpop.xlane.xlu0 %933
        %v935 = vsel %vm773, %v928, 0.0
        %936 = vadd.xlane.f32.xlu0 %v935
        %v937 = vpop.xlane.xlu0 %936
        %v938 = vrcp.pop %v931
        %v939 = vmul.f32 %v924, %v938
        %v940 = vrcp.pop %v934
        %v941 = vmul.f32 %v926, %v940
        %v942 = vrcp.pop %v937
        %v943 = vmul.f32 %v928, %v942
        %947 = vrot.lane.b32.xlu0 %v560, 32
        %v948 = vpop.permute.xlu0 %947
        %949 = vrot.lane.b32.xlu0 %v566, 32
        %v950 = vpop.permute.xlu0 %949
        %951 = vrot.lane.b32.xlu0 %v572, 32
        %v952 = vpop.permute.xlu0 %951
        %v957 = vsel %vm773, %v939, 0
        %v960 = vsel %vm773, %v941, 0
        %v963 = vsel %vm773, %v943, 0
        %965 = vmatprep.subr.mxu0 0.0
        %966 = vmatpush1.msra.mxu0 %v948
        %967 = vmatprep.subr.mxu0 0.0
        %968 = vmatpush1.msra.mxu0 %v950
        %969 = vmatprep.subr.mxu0 0.0
        %970 = vmatpush1.msra.mxu0 %v952
        %971 = vmatprep.subr.mxu0 0.0
        %972 = vmatpush1.msra.mxu0 0.0
        %973 = vmatprep.subr.mxu0 0.0
        %974 = vmatpush1.msra.mxu0 0.0
        %975 = vmatprep.subr.mxu0 0.0
        %976 = vmatpush1.msra.mxu0 0.0
        %977 = vmatprep.subr.mxu0 0.0
        %978 = vmatpush1.msra.mxu0 0.0
        %979 = vmatprep.subr.mxu0 0.0
        %980 = vmatpush1.msra.mxu0 0.0
        %981 = vmatprep.subr.mxu0 0.0
        %982 = vmatpush1.msra.mxu0 0.0
        %983 = vmatprep.subr.mxu0 0.0
        %984 = vmatpush1.msra.mxu0 0.0
        %985 = vmatprep.subr.mxu0 0.0
        %986 = vmatpush1.msra.mxu0 0.0
        %987 = vmatprep.subr.mxu0 0.0
        %988 = vmatpush1.msra.mxu0 0.0
        %989 = vmatprep.subr.mxu0 0.0
        %990 = vmatpush1.msra.mxu0 0.0
        %991 = vmatprep.subr.mxu0 0.0
        %992 = vmatpush1.msra.mxu0 0.0
        %993 = vmatprep.subr.mxu0 0.0
        %994 = vmatpush1.msra.mxu0 0.0
        %995 = vmatprep.subr.mxu0 0.0
        %996 = vmatpush1.msra.mxu0 0.0
        %997 = vmatprep.subr.mxu0 0.0
        %998 = vmatpush1.msra.mxu0 0.0
        %999 = vmatprep.subr.mxu0 0.0
        %1000 = vmatpush1.msra.mxu0 0.0
        %1001 = vmatprep.subr.mxu0 0.0
        %1002 = vmatpush1.msra.mxu0 0.0
        %1003 = vmatprep.subr.mxu0 0.0
        %1004 = vmatpush1.msra.mxu0 0.0
        %1005 = vmatprep.subr.mxu0 0.0
        %1006 = vmatpush1.msra.mxu0 0.0
        %1007 = vmatprep.subr.mxu0 0.0
        %1008 = vmatpush1.msra.mxu0 0.0
        %1009 = vmatprep.subr.mxu0 0.0
        %1010 = vmatpush1.msra.mxu0 0.0
        %1011 = vmatprep.subr.mxu0 0.0
        %1012 = vmatpush1.msra.mxu0 0.0
        %1013 = vmatprep.subr.mxu0 0.0
        %1014 = vmatpush1.msra.mxu0 0.0
        %1015 = vmatprep.subr.mxu0 0.0
        %1016 = vmatpush1.msra.mxu0 0.0
        %1017 = vmatprep.subr.mxu0 0.0
        %1018 = vmatpush1.msra.mxu0 0.0
        %1019 = vmatprep.subr.mxu0 0.0
        %1020 = vmatpush1.msra.mxu0 0.0
        %1021 = vmatprep.subr.mxu0 0.0
        %1022 = vmatpush1.msra.mxu0 0.0
        %1023 = vmatprep.subr.mxu0 0.0
        %1024 = vmatpush1.msra.mxu0 0.0
        %1025 = vmatprep.subr.mxu0 0.0
        %1026 = vmatpush1.msra.mxu0 0.0
        %1027 = vmatprep.subr.mxu0 0.0
        %1028 = vmatpush1.msra.mxu0 0.0
        %1029 = vmatprep.mubr.f32.mxu0 0.0
        %1030 = vmatmul.mubr.f32.gmra.mrb[0].mxu0 %v957
        %v1031 = vpop.f32.mrb[0].mxu0
        %v1032 = vadd.f32 0.0, %v1031
        %v1033 = vpop.f32.mrb[0].mxu0
        %1034 = vmatprep.mubr.f32.mxu0 0.0
        %1035 = vmatmul.mubr.f32.gmra.mrb[0].mxu0 %v960
        %v1036 = vpop.f32.mrb[0].mxu0
        %v1037 = vadd.f32 0.0, %v1036
        %v1038 = vpop.f32.mrb[0].mxu0
        %1039 = vmatprep.mubr.f32.mxu0 0.0
        %1040 = vmatmul.mubr.f32.gmra.mrb[0].mxu0 %v963
        %v1041 = vpop.f32.mrb[0].mxu0
        %v1042 = vadd.f32 0.0, %v1041
        %v1043 = vpop.f32.mrb[0].mxu0
        %1044 = vdwg.mxu0
        %1045 = vrot.lane.b32.xlu0 %v560, 64
        %v1046 = vpop.permute.xlu0 %1045
        %1047 = vrot.lane.b32.xlu0 %v566, 64
        %v1048 = vpop.permute.xlu0 %1047
        %1049 = vrot.lane.b32.xlu0 %v572, 64
        %v1050 = vpop.permute.xlu0 %1049
        %v1055 = vsel %vm773, %v802, 0
        %v1058 = vsel %vm773, %v804, 0
        %v1061 = vsel %vm773, %v806, 0
        %1063 = vmatprep.subr.mxu0 0.0
        %1064 = vmatpush1.msra.mxu0 %v1046
        %1065 = vmatprep.subr.mxu0 0.0
        %1066 = vmatpush1.msra.mxu0 %v1048
        %1067 = vmatprep.subr.mxu0 0.0
        %1068 = vmatpush1.msra.mxu0 %v1050
        %1069 = vmatprep.subr.mxu0 0.0
        %1070 = vmatpush1.msra.mxu0 0.0
        %1071 = vmatprep.subr.mxu0 0.0
        %1072 = vmatpush1.msra.mxu0 0.0
        %1073 = vmatprep.subr.mxu0 0.0
        %1074 = vmatpush1.msra.mxu0 0.0
        %1075 = vmatprep.subr.mxu0 0.0
        %1076 = vmatpush1.msra.mxu0 0.0
        %1077 = vmatprep.subr.mxu0 0.0
        %1078 = vmatpush1.msra.mxu0 0.0
        %1079 = vmatprep.subr.mxu0 0.0
        %1080 = vmatpush1.msra.mxu0 0.0
        %1081 = vmatprep.subr.mxu0 0.0
        %1082 = vmatpush1.msra.mxu0 0.0
        %1083 = vmatprep.subr.mxu0 0.0
        %1084 = vmatpush1.msra.mxu0 0.0
        %1085 = vmatprep.subr.mxu0 0.0
        %1086 = vmatpush1.msra.mxu0 0.0
        %1087 = vmatprep.subr.mxu0 0.0
        %1088 = vmatpush1.msra.mxu0 0.0
        %1089 = vmatprep.subr.mxu0 0.0
        %1090 = vmatpush1.msra.mxu0 0.0
        %1091 = vmatprep.subr.mxu0 0.0
        %1092 = vmatpush1.msra.mxu0 0.0
        %1093 = vmatprep.subr.mxu0 0.0
        %1094 = vmatpush1.msra.mxu0 0.0
        %1095 = vmatprep.subr.mxu0 0.0
        %1096 = vmatpush1.msra.mxu0 0.0
        %1097 = vmatprep.subr.mxu0 0.0
        %1098 = vmatpush1.msra.mxu0 0.0
        %1099 = vmatprep.subr.mxu0 0.0
        %1100 = vmatpush1.msra.mxu0 0.0
        %1101 = vmatprep.subr.mxu0 0.0
        %1102 = vmatpush1.msra.mxu0 0.0
        %1103 = vmatprep.subr.mxu0 0.0
        %1104 = vmatpush1.msra.mxu0 0.0
        %1105 = vmatprep.subr.mxu0 0.0
        %1106 = vmatpush1.msra.mxu0 0.0
        %1107 = vmatprep.subr.mxu0 0.0
        %1108 = vmatpush1.msra.mxu0 0.0
        %1109 = vmatprep.subr.mxu0 0.0
        %1110 = vmatpush1.msra.mxu0 0.0
        %1111 = vmatprep.subr.mxu0 0.0
        %1112 = vmatpush1.msra.mxu0 0.0
        %1113 = vmatprep.subr.mxu0 0.0
        %1114 = vmatpush1.msra.mxu0 0.0
        %1115 = vmatprep.subr.mxu0 0.0
        %1116 = vmatpush1.msra.mxu0 0.0
        %1117 = vmatprep.subr.mxu0 0.0
        %1118 = vmatpush1.msra.mxu0 0.0
        %1119 = vmatprep.subr.mxu0 0.0
        %1120 = vmatpush1.msra.mxu0 0.0
        %1121 = vmatprep.subr.mxu0 0.0
        %1122 = vmatpush1.msra.mxu0 0.0
        %1123 = vmatprep.subr.mxu0 0.0
        %1124 = vmatpush1.msra.mxu0 0.0
        %1125 = vmatprep.subr.mxu0 0.0
        %1126 = vmatpush1.msra.mxu0 0.0
        %1127 = vmatprep.mubr.f32.mxu0 0.0
        %1128 = vmatmul.mubr.f32.gmra.mrb[0].mxu0 %v1055
        %v1129 = vpop.f32.mrb[0].mxu0
        %v1130 = vadd.f32 %v1032, %v1129
        %v1131 = vpop.f32.mrb[0].mxu0
        %1132 = vmatprep.mubr.f32.mxu0 0.0
        %1133 = vmatmul.mubr.f32.gmra.mrb[0].mxu0 %v1058
        %v1134 = vpop.f32.mrb[0].mxu0
        %v1135 = vadd.f32 %v1037, %v1134
        %v1136 = vpop.f32.mrb[0].mxu0
        %1137 = vmatprep.mubr.f32.mxu0 0.0
        %1138 = vmatmul.mubr.f32.gmra.mrb[0].mxu0 %v1061
        %v1139 = vpop.f32.mrb[0].mxu0
        %v1140 = vadd.f32 %v1042, %v1139
        %v1141 = vpop.f32.mrb[0].mxu0
        %1142 = vdwg.mxu0
        %1143 = vrot.lane.b32.xlu0 %v657, 120
        %v1144 = vpop.permute.xlu0 %1143
        %1145 = vrot.lane.b32.xlu0 %v658, 120
        %v1146 = vpop.permute.xlu0 %1145
        %1147 = vrot.lane.b32.xlu0 %v659, 120
        %v1148 = vpop.permute.xlu0 %1147
        %1149 = vrot.lane.b32.xlu0 %v665, 88
        %v1150 = vpop.permute.xlu0 %1149
        %1151 = vrot.lane.b32.xlu0 %v666, 88
        %v1152 = vpop.permute.xlu0 %1151
        %1153 = vrot.lane.b32.xlu0 %v667, 88
        %v1154 = vpop.permute.xlu0 %1153
        %v1155 = vsel %vm677, %v1144, 0
        %v1157 = vsel %vm677, %v1146, 0
        %v1159 = vsel %vm677, %v1148, 0
        %v1161 = vsel %vm677, %v1150, 0
        %v1163 = vsel %vm677, %v1152, 0
        %v1165 = vsel %vm677, %v1154, 0
        %1167 = vmatprep.subr.mxu0 0.0
        %1168 = vmatpush1.xpose.msra.mxu0 %v1161
        %1169 = vmatprep.subr.mxu0 0.0
        %1170 = vmatpush1.xpose.msra.mxu0 %v1163
        %1171 = vmatprep.subr.mxu0 0.0
        %1172 = vmatpush1.xpose.msra.mxu0 %v1165
        %1173 = vmatprep.subr.mxu0 0.0
        %1174 = vmatpush1.xpose.msra.mxu0 0.0
        %1175 = vmatprep.subr.mxu0 0.0
        %1176 = vmatpush1.xpose.msra.mxu0 0.0
        %1177 = vmatprep.subr.mxu0 0.0
        %1178 = vmatpush1.xpose.msra.mxu0 0.0
        %1179 = vmatprep.subr.mxu0 0.0
        %1180 = vmatpush1.xpose.msra.mxu0 0.0
        %1181 = vmatprep.subr.mxu0 0.0
        %1182 = vmatpush1.xpose.msra.mxu0 0.0
        %1183 = vmatprep.subr.mxu0 0.0
        %1184 = vmatpush1.xpose.msra.mxu0 0.0
        %1185 = vmatprep.subr.mxu0 0.0
        %1186 = vmatpush1.xpose.msra.mxu0 0.0
        %1187 = vmatprep.subr.mxu0 0.0
        %1188 = vmatpush1.xpose.msra.mxu0 0.0
        %1189 = vmatprep.subr.mxu0 0.0
        %1190 = vmatpush1.xpose.msra.mxu0 0.0
        %1191 = vmatprep.subr.mxu0 0.0
        %1192 = vmatpush1.xpose.msra.mxu0 0.0
        %1193 = vmatprep.subr.mxu0 0.0
        %1194 = vmatpush1.xpose.msra.mxu0 0.0
        %1195 = vmatprep.subr.mxu0 0.0
        %1196 = vmatpush1.xpose.msra.mxu0 0.0
        %1197 = vmatprep.subr.mxu0 0.0
        %1198 = vmatpush1.xpose.msra.mxu0 0.0
        %1199 = vmatprep.subr.mxu0 0.0
        %1200 = vmatpush1.xpose.msra.mxu0 0.0
        %1201 = vmatprep.subr.mxu0 0.0
        %1202 = vmatpush1.xpose.msra.mxu0 0.0
        %1203 = vmatprep.subr.mxu0 0.0
        %1204 = vmatpush1.xpose.msra.mxu0 0.0
        %1205 = vmatprep.subr.mxu0 0.0
        %1206 = vmatpush1.xpose.msra.mxu0 0.0
        %1207 = vmatprep.subr.mxu0 0.0
        %1208 = vmatpush1.xpose.msra.mxu0 0.0
        %1209 = vmatprep.subr.mxu0 0.0
        %1210 = vmatpush1.xpose.msra.mxu0 0.0
        %1211 = vmatprep.subr.mxu0 0.0
        %1212 = vmatpush1.xpose.msra.mxu0 0.0
        %1213 = vmatprep.subr.mxu0 0.0
        %1214 = vmatpush1.xpose.msra.mxu0 0.0
        %1215 = vmatprep.subr.mxu0 0.0
        %1216 = vmatpush1.xpose.msra.mxu0 0.0
        %1217 = vmatprep.subr.mxu0 0.0
        %1218 = vmatpush1.xpose.msra.mxu0 0.0
        %1219 = vmatprep.subr.mxu0 0.0
        %1220 = vmatpush1.xpose.msra.mxu0 0.0
        %1221 = vmatprep.subr.mxu0 0.0
        %1222 = vmatpush1.xpose.msra.mxu0 0.0
        %1223 = vmatprep.subr.mxu0 0.0
        %1224 = vmatpush1.xpose.msra.mxu0 0.0
        %1225 = vmatprep.subr.mxu0 0.0
        %1226 = vmatpush1.xpose.msra.mxu0 0.0
        %1227 = vmatprep.subr.mxu0 0.0
        %1228 = vmatpush1.xpose.msra.mxu0 0.0
        %1229 = vmatprep.subr.mxu0 0.0
        %1230 = vmatpush1.xpose.msra.mxu0 0.0
        %1231 = vmatprep.mubr.f32.mxu0 0.0
        %1232 = vmatmul.mubr.f32.gmra.mrb[0].mxu0 %v1155
        %v1233 = vpop.f32.mrb[0].mxu0
        %v1234 = vadd.f32 %v470, %v1233
        %v1235 = vpop.f32.mrb[0].mxu0
        %1236 = vmatprep.mubr.f32.mxu0 0.0
        %1237 = vmatmul.mubr.f32.gmra.mrb[0].mxu0 %v1157
        %v1238 = vpop.f32.mrb[0].mxu0
        %v1239 = vadd.f32 %v470, %v1238
        %v1240 = vpop.f32.mrb[0].mxu0
        %1241 = vmatprep.mubr.f32.mxu0 0.0
        %1242 = vmatmul.mubr.f32.gmra.mrb[0].mxu0 %v1159
        %v1243 = vpop.f32.mrb[0].mxu0
        %v1244 = vadd.f32 %v470, %v1243
        %v1245 = vpop.f32.mrb[0].mxu0
        %1246 = vdwg.mxu0
        %v1247 = vsel %vm773, %v1234, -inf
        %1248 = vmax.xlane.f32.xlu0 %v1247
        %v1249 = vpop.xlane.xlu0 %1248
        %v1250 = vsel %vm773, %v1239, -inf
        %1251 = vmax.xlane.f32.xlu0 %v1250
        %v1252 = vpop.xlane.xlu0 %1251
        %v1253 = vsel %vm773, %v1244, -inf
        %1254 = vmax.xlane.f32.xlu0 %v1253
        %v1255 = vpop.xlane.xlu0 %1254
        %v1256 = vsub.f32 %v1234, %v1249
        %v1257 = vsub.f32 %v1239, %v1252
        %v1258 = vsub.f32 %v1244, %v1255
        %v1259 = vmul.f32 %v1256, 1.442695
        %v1260 = vpow.pop %v1259
        %v1261 = vmul.f32 %v1257, 1.442695
        %v1262 = vpow.pop %v1261
        %v1263 = vmul.f32 %v1258, 1.442695
        %v1264 = vpow.pop %v1263
        %v1265 = vsel %vm773, %v1260, 0.0
        %1266 = vadd.xlane.f32.xlu0 %v1265
        %v1267 = vpop.xlane.xlu0 %1266
        %v1268 = vsel %vm773, %v1262, 0.0
        %1269 = vadd.xlane.f32.xlu0 %v1268
        %v1270 = vpop.xlane.xlu0 %1269
        %v1271 = vsel %vm773, %v1264, 0.0
        %1272 = vadd.xlane.f32.xlu0 %v1271
        %v1273 = vpop.xlane.xlu0 %1272
        %v1274 = vrcp.pop %v1267
        %v1275 = vmul.f32 %v1260, %v1274
        %v1276 = vrcp.pop %v1270
        %v1277 = vmul.f32 %v1262, %v1276
        %v1278 = vrcp.pop %v1273
        %v1279 = vmul.f32 %v1264, %v1278
        %v1281 = vsel %vm773, %v1275, 0
        %v1284 = vsel %vm773, %v1277, 0
        %v1287 = vsel %vm773, %v1279, 0
        %1289 = vmatprep.subr.mxu0 0.0
        %1290 = vmatpush1.msra.mxu0 %v562
        %1291 = vmatprep.subr.mxu0 0.0
        %1292 = vmatpush1.msra.mxu0 %v568
        %1293 = vmatprep.subr.mxu0 0.0
        %1294 = vmatpush1.msra.mxu0 %v574
        %1295 = vmatprep.subr.mxu0 0.0
        %1296 = vmatpush1.msra.mxu0 0.0
        %1297 = vmatprep.subr.mxu0 0.0
        %1298 = vmatpush1.msra.mxu0 0.0
        %1299 = vmatprep.subr.mxu0 0.0
        %1300 = vmatpush1.msra.mxu0 0.0
        %1301 = vmatprep.subr.mxu0 0.0
        %1302 = vmatpush1.msra.mxu0 0.0
        %1303 = vmatprep.subr.mxu0 0.0
        %1304 = vmatpush1.msra.mxu0 0.0
        %1305 = vmatprep.subr.mxu0 0.0
        %1306 = vmatpush1.msra.mxu0 0.0
        %1307 = vmatprep.subr.mxu0 0.0
        %1308 = vmatpush1.msra.mxu0 0.0
        %1309 = vmatprep.subr.mxu0 0.0
        %1310 = vmatpush1.msra.mxu0 0.0
        %1311 = vmatprep.subr.mxu0 0.0
        %1312 = vmatpush1.msra.mxu0 0.0
        %1313 = vmatprep.subr.mxu0 0.0
        %1314 = vmatpush1.msra.mxu0 0.0
        %1315 = vmatprep.subr.mxu0 0.0
        %1316 = vmatpush1.msra.mxu0 0.0
        %1317 = vmatprep.subr.mxu0 0.0
        %1318 = vmatpush1.msra.mxu0 0.0
        %1319 = vmatprep.subr.mxu0 0.0
        %1320 = vmatpush1.msra.mxu0 0.0
        %1321 = vmatprep.subr.mxu0 0.0
        %1322 = vmatpush1.msra.mxu0 0.0
        %1323 = vmatprep.subr.mxu0 0.0
        %1324 = vmatpush1.msra.mxu0 0.0
        %1325 = vmatprep.subr.mxu0 0.0
        %1326 = vmatpush1.msra.mxu0 0.0
        %1327 = vmatprep.subr.mxu0 0.0
        %1328 = vmatpush1.msra.mxu0 0.0
        %1329 = vmatprep.subr.mxu0 0.0
        %1330 = vmatpush1.msra.mxu0 0.0
        %1331 = vmatprep.subr.mxu0 0.0
        %1332 = vmatpush1.msra.mxu0 0.0
        %1333 = vmatprep.subr.mxu0 0.0
        %1334 = vmatpush1.msra.mxu0 0.0
        %1335 = vmatprep.subr.mxu0 0.0
        %1336 = vmatpush1.msra.mxu0 0.0
        %1337 = vmatprep.subr.mxu0 0.0
        %1338 = vmatpush1.msra.mxu0 0.0
        %1339 = vmatprep.subr.mxu0 0.0
        %1340 = vmatpush1.msra.mxu0 0.0
        %1341 = vmatprep.subr.mxu0 0.0
        %1342 = vmatpush1.msra.mxu0 0.0
        %1343 = vmatprep.subr.mxu0 0.0
        %1344 = vmatpush1.msra.mxu0 0.0
        %1345 = vmatprep.subr.mxu0 0.0
        %1346 = vmatpush1.msra.mxu0 0.0
        %1347 = vmatprep.subr.mxu0 0.0
        %1348 = vmatpush1.msra.mxu0 0.0
        %1349 = vmatprep.subr.mxu0 0.0
        %1350 = vmatpush1.msra.mxu0 0.0
        %1351 = vmatprep.subr.mxu0 0.0
        %1352 = vmatpush1.msra.mxu0 0.0
        %1353 = vmatprep.mubr.f32.mxu0 0.0
        %1354 = vmatmul.mubr.f32.gmra.mrb[0].mxu0 %v1281
        %v1355 = vpop.f32.mrb[0].mxu0
        %v1356 = vadd.f32 0.0, %v1355
        %v1357 = vpop.f32.mrb[0].mxu0
        %1358 = vmatprep.mubr.f32.mxu0 0.0
        %1359 = vmatmul.mubr.f32.gmra.mrb[0].mxu0 %v1284
        %v1360 = vpop.f32.mrb[0].mxu0
        %v1361 = vadd.f32 0.0, %v1360
        %v1362 = vpop.f32.mrb[0].mxu0
        %1363 = vmatprep.mubr.f32.mxu0 0.0
        %1364 = vmatmul.mubr.f32.gmra.mrb[0].mxu0 %v1287
        %v1365 = vpop.f32.mrb[0].mxu0
        %v1366 = vadd.f32 0.0, %v1365
        %v1367 = vpop.f32.mrb[0].mxu0
        %1368 = vdwg.mxu0
        %v1369 = vadd.f32 %v1130, %v1356
        %v1370 = vadd.f32 %v1135, %v1361
        %v1371 = vadd.f32 %v1140, %v1366
        %1372 = vrot.lane.b32.xlu0 %v657, 116
        %v1373 = vpop.permute.xlu0 %1372
        %1374 = vrot.lane.b32.xlu0 %v658, 116
        %v1375 = vpop.permute.xlu0 %1374
        %1376 = vrot.lane.b32.xlu0 %v659, 116
        %v1377 = vpop.permute.xlu0 %1376
        %1378 = vrot.lane.b32.xlu0 %v665, 84
        %v1379 = vpop.permute.xlu0 %1378
        %1380 = vrot.lane.b32.xlu0 %v666, 84
        %v1381 = vpop.permute.xlu0 %1380
        %1382 = vrot.lane.b32.xlu0 %v667, 84
        %v1383 = vpop.permute.xlu0 %1382
        %v1384 = vsel %vm677, %v1373, 0
        %v1386 = vsel %vm677, %v1375, 0
        %v1388 = vsel %vm677, %v1377, 0
        %v1390 = vsel %vm677, %v1379, 0
        %v1392 = vsel %vm677, %v1381, 0
        %v1394 = vsel %vm677, %v1383, 0
        %1396 = vmatprep.subr.mxu0 0.0
        %1397 = vmatpush1.xpose.msra.mxu0 %v1390
        %1398 = vmatprep.subr.mxu0 0.0
        %1399 = vmatpush1.xpose.msra.mxu0 %v1392
        %1400 = vmatprep.subr.mxu0 0.0
        %1401 = vmatpush1.xpose.msra.mxu0 %v1394
        %1402 = vmatprep.subr.mxu0 0.0
        %1403 = vmatpush1.xpose.msra.mxu0 0.0
        %1404 = vmatprep.subr.mxu0 0.0
        %1405 = vmatpush1.xpose.msra.mxu0 0.0
        %1406 = vmatprep.subr.mxu0 0.0
        %1407 = vmatpush1.xpose.msra.mxu0 0.0
        %1408 = vmatprep.subr.mxu0 0.0
        %1409 = vmatpush1.xpose.msra.mxu0 0.0
        %1410 = vmatprep.subr.mxu0 0.0
        %1411 = vmatpush1.xpose.msra.mxu0 0.0
        %1412 = vmatprep.subr.mxu0 0.0
        %1413 = vmatpush1.xpose.msra.mxu0 0.0
        %1414 = vmatprep.subr.mxu0 0.0
        %1415 = vmatpush1.xpose.msra.mxu0 0.0
        %1416 = vmatprep.subr.mxu0 0.0
        %1417 = vmatpush1.xpose.msra.mxu0 0.0
        %1418 = vmatprep.subr.mxu0 0.0
        %1419 = vmatpush1.xpose.msra.mxu0 0.0
        %1420 = vmatprep.subr.mxu0 0.0
        %1421 = vmatpush1.xpose.msra.mxu0 0.0
        %1422 = vmatprep.subr.mxu0 0.0
        %1423 = vmatpush1.xpose.msra.mxu0 0.0
        %1424 = vmatprep.subr.mxu0 0.0
        %1425 = vmatpush1.xpose.msra.mxu0 0.0
        %1426 = vmatprep.subr.mxu0 0.0
        %1427 = vmatpush1.xpose.msra.mxu0 0.0
        %1428 = vmatprep.subr.mxu0 0.0
        %1429 = vmatpush1.xpose.msra.mxu0 0.0
        %1430 = vmatprep.subr.mxu0 0.0
        %1431 = vmatpush1.xpose.msra.mxu0 0.0
        %1432 = vmatprep.subr.mxu0 0.0
        %1433 = vmatpush1.xpose.msra.mxu0 0.0
        %1434 = vmatprep.subr.mxu0 0.0
        %1435 = vmatpush1.xpose.msra.mxu0 0.0
        %1436 = vmatprep.subr.mxu0 0.0
        %1437 = vmatpush1.xpose.msra.mxu0 0.0
        %1438 = vmatprep.subr.mxu0 0.0
        %1439 = vmatpush1.xpose.msra.mxu0 0.0
        %1440 = vmatprep.subr.mxu0 0.0
        %1441 = vmatpush1.xpose.msra.mxu0 0.0
        %1442 = vmatprep.subr.mxu0 0.0
        %1443 = vmatpush1.xpose.msra.mxu0 0.0
        %1444 = vmatprep.subr.mxu0 0.0
        %1445 = vmatpush1.xpose.msra.mxu0 0.0
        %1446 = vmatprep.subr.mxu0 0.0
        %1447 = vmatpush1.xpose.msra.mxu0 0.0
        %1448 = vmatprep.subr.mxu0 0.0
        %1449 = vmatpush1.xpose.msra.mxu0 0.0
        %1450 = vmatprep.subr.mxu0 0.0
        %1451 = vmatpush1.xpose.msra.mxu0 0.0
        %1452 = vmatprep.subr.mxu0 0.0
        %1453 = vmatpush1.xpose.msra.mxu0 0.0
        %1454 = vmatprep.subr.mxu0 0.0
        %1455 = vmatpush1.xpose.msra.mxu0 0.0
        %1456 = vmatprep.subr.mxu0 0.0
        %1457 = vmatpush1.xpose.msra.mxu0 0.0
        %1458 = vmatprep.subr.mxu0 0.0
        %1459 = vmatpush1.xpose.msra.mxu0 0.0
        %1460 = vmatprep.mubr.f32.mxu0 0.0
        %1461 = vmatmul.mubr.f32.gmra.mrb[0].mxu0 %v1384
        %v1462 = vpop.f32.mrb[0].mxu0
        %v1463 = vadd.f32 %v470, %v1462
        %v1464 = vpop.f32.mrb[0].mxu0
        %1465 = vmatprep.mubr.f32.mxu0 0.0
        %1466 = vmatmul.mubr.f32.gmra.mrb[0].mxu0 %v1386
        %v1467 = vpop.f32.mrb[0].mxu0
        %v1468 = vadd.f32 %v470, %v1467
        %v1469 = vpop.f32.mrb[0].mxu0
        %1470 = vmatprep.mubr.f32.mxu0 0.0
        %1471 = vmatmul.mubr.f32.gmra.mrb[0].mxu0 %v1388
        %v1472 = vpop.f32.mrb[0].mxu0
        %v1473 = vadd.f32 %v470, %v1472
        %v1474 = vpop.f32.mrb[0].mxu0
        %1475 = vdwg.mxu0
        %v1476 = vsel %vm773, %v1463, -inf
        %1477 = vmax.xlane.f32.xlu0 %v1476
        %v1478 = vpop.xlane.xlu0 %1477
        %v1479 = vsel %vm773, %v1468, -inf
        %1480 = vmax.xlane.f32.xlu0 %v1479
        %v1481 = vpop.xlane.xlu0 %1480
        %v1482 = vsel %vm773, %v1473, -inf
        %1483 = vmax.xlane.f32.xlu0 %v1482
        %v1484 = vpop.xlane.xlu0 %1483
        %v1485 = vsub.f32 %v1463, %v1478
        %v1486 = vsub.f32 %v1468, %v1481
        %v1487 = vsub.f32 %v1473, %v1484
        %v1488 = vmul.f32 %v1485, 1.442695
        %v1489 = vpow.pop %v1488
        %v1490 = vmul.f32 %v1486, 1.442695
        %v1491 = vpow.pop %v1490
        %v1492 = vmul.f32 %v1487, 1.442695
        %v1493 = vpow.pop %v1492
        %v1494 = vsel %vm773, %v1489, 0.0
        %1495 = vadd.xlane.f32.xlu0 %v1494
        %v1496 = vpop.xlane.xlu0 %1495
        %v1497 = vsel %vm773, %v1491, 0.0
        %1498 = vadd.xlane.f32.xlu0 %v1497
        %v1499 = vpop.xlane.xlu0 %1498
        %v1500 = vsel %vm773, %v1493, 0.0
        %1501 = vadd.xlane.f32.xlu0 %v1500
        %v1502 = vpop.xlane.xlu0 %1501
        %v1503 = vrcp.pop %v1496
        %v1504 = vmul.f32 %v1489, %v1503
        %v1505 = vrcp.pop %v1499
        %v1506 = vmul.f32 %v1491, %v1505
        %v1507 = vrcp.pop %v1502
        %v1508 = vmul.f32 %v1493, %v1507
        %1512 = vrot.lane.b32.xlu0 %v562, 96
        %v1513 = vpop.permute.xlu0 %1512
        %1514 = vrot.lane.b32.xlu0 %v568, 96
        %v1515 = vpop.permute.xlu0 %1514
        %1516 = vrot.lane.b32.xlu0 %v574, 96
        %v1517 = vpop.permute.xlu0 %1516
        %v1522 = vsel %vm773, %v1504, 0
        %v1525 = vsel %vm773, %v1506, 0
        %v1528 = vsel %vm773, %v1508, 0
        %1530 = vmatprep.subr.mxu0 0.0
        %1531 = vmatpush1.msra.mxu0 %v1513
        %1532 = vmatprep.subr.mxu0 0.0
        %1533 = vmatpush1.msra.mxu0 %v1515
        %1534 = vmatprep.subr.mxu0 0.0
        %1535 = vmatpush1.msra.mxu0 %v1517
        %1536 = vmatprep.subr.mxu0 0.0
        %1537 = vmatpush1.msra.mxu0 0.0
        %1538 = vmatprep.subr.mxu0 0.0
        %1539 = vmatpush1.msra.mxu0 0.0
        %1540 = vmatprep.subr.mxu0 0.0
        %1541 = vmatpush1.msra.mxu0 0.0
        %1542 = vmatprep.subr.mxu0 0.0
        %1543 = vmatpush1.msra.mxu0 0.0
        %1544 = vmatprep.subr.mxu0 0.0
        %1545 = vmatpush1.msra.mxu0 0.0
        %1546 = vmatprep.subr.mxu0 0.0
        %1547 = vmatpush1.msra.mxu0 0.0
        %1548 = vmatprep.subr.mxu0 0.0
        %1549 = vmatpush1.msra.mxu0 0.0
        %1550 = vmatprep.subr.mxu0 0.0
        %1551 = vmatpush1.msra.mxu0 0.0
        %1552 = vmatprep.subr.mxu0 0.0
        %1553 = vmatpush1.msra.mxu0 0.0
        %1554 = vmatprep.subr.mxu0 0.0
        %1555 = vmatpush1.msra.mxu0 0.0
        %1556 = vmatprep.subr.mxu0 0.0
        %1557 = vmatpush1.msra.mxu0 0.0
        %1558 = vmatprep.subr.mxu0 0.0
        %1559 = vmatpush1.msra.mxu0 0.0
        %1560 = vmatprep.subr.mxu0 0.0
        %1561 = vmatpush1.msra.mxu0 0.0
        %1562 = vmatprep.subr.mxu0 0.0
        %1563 = vmatpush1.msra.mxu0 0.0
        %1564 = vmatprep.subr.mxu0 0.0
        %1565 = vmatpush1.msra.mxu0 0.0
        %1566 = vmatprep.subr.mxu0 0.0
        %1567 = vmatpush1.msra.mxu0 0.0
        %1568 = vmatprep.subr.mxu0 0.0
        %1569 = vmatpush1.msra.mxu0 0.0
        %1570 = vmatprep.subr.mxu0 0.0
        %1571 = vmatpush1.msra.mxu0 0.0
        %1572 = vmatprep.subr.mxu0 0.0
        %1573 = vmatpush1.msra.mxu0 0.0
        %1574 = vmatprep.subr.mxu0 0.0
        %1575 = vmatpush1.msra.mxu0 0.0
        %1576 = vmatprep.subr.mxu0 0.0
        %1577 = vmatpush1.msra.mxu0 0.0
        %1578 = vmatprep.subr.mxu0 0.0
        %1579 = vmatpush1.msra.mxu0 0.0
        %1580 = vmatprep.subr.mxu0 0.0
        %1581 = vmatpush1.msra.mxu0 0.0
        %1582 = vmatprep.subr.mxu0 0.0
        %1583 = vmatpush1.msra.mxu0 0.0
        %1584 = vmatprep.subr.mxu0 0.0
        %1585 = vmatpush1.msra.mxu0 0.0
        %1586 = vmatprep.subr.mxu0 0.0
        %1587 = vmatpush1.msra.mxu0 0.0
        %1588 = vmatprep.subr.mxu0 0.0
        %1589 = vmatpush1.msra.mxu0 0.0
        %1590 = vmatprep.subr.mxu0 0.0
        %1591 = vmatpush1.msra.mxu0 0.0
        %1592 = vmatprep.subr.mxu0 0.0
        %1593 = vmatpush1.msra.mxu0 0.0
        %1594 = vmatprep.mubr.f32.mxu0 0.0
        %1595 = vmatmul.mubr.f32.gmra.mrb[0].mxu0 %v1522
        %v1596 = vpop.f32.mrb[0].mxu0
        %v1597 = vadd.f32 0.0, %v1596
        %v1598 = vpop.f32.mrb[0].mxu0
        %1599 = vmatprep.mubr.f32.mxu0 0.0
        %1600 = vmatmul.mubr.f32.gmra.mrb[0].mxu0 %v1525
        %v1601 = vpop.f32.mrb[0].mxu0
        %v1602 = vadd.f32 0.0, %v1601
        %v1603 = vpop.f32.mrb[0].mxu0
        %1604 = vmatprep.mubr.f32.mxu0 0.0
        %1605 = vmatmul.mubr.f32.gmra.mrb[0].mxu0 %v1528
        %v1606 = vpop.f32.mrb[0].mxu0
        %v1607 = vadd.f32 0.0, %v1606
        %v1608 = vpop.f32.mrb[0].mxu0
        %1609 = vdwg.mxu0
        %v1610 = vadd.f32 %v1369, %v1597
        %v1611 = vadd.f32 %v1370, %v1602
        %v1612 = vadd.f32 %v1371, %v1607
        %1613 = vrot.lane.b32.xlu0 %v657, 112
        %v1614 = vpop.permute.xlu0 %1613
        %1615 = vrot.lane.b32.xlu0 %v658, 112
        %v1616 = vpop.permute.xlu0 %1615
        %1617 = vrot.lane.b32.xlu0 %v659, 112
        %v1618 = vpop.permute.xlu0 %1617
        %1619 = vrot.lane.b32.xlu0 %v665, 80
        %v1620 = vpop.permute.xlu0 %1619
        %1621 = vrot.lane.b32.xlu0 %v666, 80
        %v1622 = vpop.permute.xlu0 %1621
        %1623 = vrot.lane.b32.xlu0 %v667, 80
        %v1624 = vpop.permute.xlu0 %1623
        %v1625 = vsel %vm677, %v1614, 0
        %v1627 = vsel %vm677, %v1616, 0
        %v1629 = vsel %vm677, %v1618, 0
        %v1631 = vsel %vm677, %v1620, 0
        %v1633 = vsel %vm677, %v1622, 0
        %v1635 = vsel %vm677, %v1624, 0
        %1637 = vmatprep.subr.mxu0 0.0
        %1638 = vmatpush1.xpose.msra.mxu0 %v1631
        %1639 = vmatprep.subr.mxu0 0.0
        %1640 = vmatpush1.xpose.msra.mxu0 %v1633
        %1641 = vmatprep.subr.mxu0 0.0
        %1642 = vmatpush1.xpose.msra.mxu0 %v1635
        %1643 = vmatprep.subr.mxu0 0.0
        %1644 = vmatpush1.xpose.msra.mxu0 0.0
        %1645 = vmatprep.subr.mxu0 0.0
        %1646 = vmatpush1.xpose.msra.mxu0 0.0
        %1647 = vmatprep.subr.mxu0 0.0
        %1648 = vmatpush1.xpose.msra.mxu0 0.0
        %1649 = vmatprep.subr.mxu0 0.0
        %1650 = vmatpush1.xpose.msra.mxu0 0.0
        %1651 = vmatprep.subr.mxu0 0.0
        %1652 = vmatpush1.xpose.msra.mxu0 0.0
        %1653 = vmatprep.subr.mxu0 0.0
        %1654 = vmatpush1.xpose.msra.mxu0 0.0
        %1655 = vmatprep.subr.mxu0 0.0
        %1656 = vmatpush1.xpose.msra.mxu0 0.0
        %1657 = vmatprep.subr.mxu0 0.0
        %1658 = vmatpush1.xpose.msra.mxu0 0.0
        %1659 = vmatprep.subr.mxu0 0.0
        %1660 = vmatpush1.xpose.msra.mxu0 0.0
        %1661 = vmatprep.subr.mxu0 0.0
        %1662 = vmatpush1.xpose.msra.mxu0 0.0
        %1663 = vmatprep.subr.mxu0 0.0
        %1664 = vmatpush1.xpose.msra.mxu0 0.0
        %1665 = vmatprep.subr.mxu0 0.0
        %1666 = vmatpush1.xpose.msra.mxu0 0.0
        %1667 = vmatprep.subr.mxu0 0.0
        %1668 = vmatpush1.xpose.msra.mxu0 0.0
        %1669 = vmatprep.subr.mxu0 0.0
        %1670 = vmatpush1.xpose.msra.mxu0 0.0
        %1671 = vmatprep.subr.mxu0 0.0
        %1672 = vmatpush1.xpose.msra.mxu0 0.0
        %1673 = vmatprep.subr.mxu0 0.0
        %1674 = vmatpush1.xpose.msra.mxu0 0.0
        %1675 = vmatprep.subr.mxu0 0.0
        %1676 = vmatpush1.xpose.msra.mxu0 0.0
        %1677 = vmatprep.subr.mxu0 0.0
        %1678 = vmatpush1.xpose.msra.mxu0 0.0
        %1679 = vmatprep.subr.mxu0 0.0
        %1680 = vmatpush1.xpose.msra.mxu0 0.0
        %1681 = vmatprep.subr.mxu0 0.0
        %1682 = vmatpush1.xpose.msra.mxu0 0.0
        %1683 = vmatprep.subr.mxu0 0.0
        %1684 = vmatpush1.xpose.msra.mxu0 0.0
        %1685 = vmatprep.subr.mxu0 0.0
        %1686 = vmatpush1.xpose.msra.mxu0 0.0
        %1687 = vmatprep.subr.mxu0 0.0
        %1688 = vmatpush1.xpose.msra.mxu0 0.0
        %1689 = vmatprep.subr.mxu0 0.0
        %1690 = vmatpush1.xpose.msra.mxu0 0.0
        %1691 = vmatprep.subr.mxu0 0.0
        %1692 = vmatpush1.xpose.msra.mxu0 0.0
        %1693 = vmatprep.subr.mxu0 0.0
        %1694 = vmatpush1.xpose.msra.mxu0 0.0
        %1695 = vmatprep.subr.mxu0 0.0
        %1696 = vmatpush1.xpose.msra.mxu0 0.0
        %1697 = vmatprep.subr.mxu0 0.0
        %1698 = vmatpush1.xpose.msra.mxu0 0.0
        %1699 = vmatprep.subr.mxu0 0.0
        %1700 = vmatpush1.xpose.msra.mxu0 0.0
        %1701 = vmatprep.mubr.f32.mxu0 0.0
        %1702 = vmatmul.mubr.f32.gmra.mrb[0].mxu0 %v1625
        %v1703 = vpop.f32.mrb[0].mxu0
        %v1704 = vadd.f32 %v470, %v1703
        %v1705 = vpop.f32.mrb[0].mxu0
        %1706 = vmatprep.mubr.f32.mxu0 0.0
        %1707 = vmatmul.mubr.f32.gmra.mrb[0].mxu0 %v1627
        %v1708 = vpop.f32.mrb[0].mxu0
        %v1709 = vadd.f32 %v470, %v1708
        %v1710 = vpop.f32.mrb[0].mxu0
        %1711 = vmatprep.mubr.f32.mxu0 0.0
        %1712 = vmatmul.mubr.f32.gmra.mrb[0].mxu0 %v1629
        %v1713 = vpop.f32.mrb[0].mxu0
        %v1714 = vadd.f32 %v470, %v1713
        %v1715 = vpop.f32.mrb[0].mxu0
        %1716 = vdwg.mxu0
        %v1717 = vsel %vm773, %v1704, -inf
        %1718 = vmax.xlane.f32.xlu0 %v1717
        %v1719 = vpop.xlane.xlu0 %1718
        %v1720 = vsel %vm773, %v1709, -inf
        %1721 = vmax.xlane.f32.xlu0 %v1720
        %v1722 = vpop.xlane.xlu0 %1721
        %v1723 = vsel %vm773, %v1714, -inf
        %1724 = vmax.xlane.f32.xlu0 %v1723
        %v1725 = vpop.xlane.xlu0 %1724
        %v1726 = vsub.f32 %v1704, %v1719
        %v1727 = vsub.f32 %v1709, %v1722
        %v1728 = vsub.f32 %v1714, %v1725
        %v1729 = vmul.f32 %v1726, 1.442695
        %v1730 = vpow.pop %v1729
        %v1731 = vmul.f32 %v1727, 1.442695
        %v1732 = vpow.pop %v1731
        %v1733 = vmul.f32 %v1728, 1.442695
        %v1734 = vpow.pop %v1733
        %v1735 = vsel %vm773, %v1730, 0.0
        %1736 = vadd.xlane.f32.xlu0 %v1735
        %v1737 = vpop.xlane.xlu0 %1736
        %v1738 = vsel %vm773, %v1732, 0.0
        %1739 = vadd.xlane.f32.xlu0 %v1738
        %v1740 = vpop.xlane.xlu0 %1739
        %v1741 = vsel %vm773, %v1734, 0.0
        %1742 = vadd.xlane.f32.xlu0 %v1741
        %v1743 = vpop.xlane.xlu0 %1742
        %v1744 = vrcp.pop %v1737
        %v1745 = vmul.f32 %v1730, %v1744
        %v1746 = vrcp.pop %v1740
        %v1747 = vmul.f32 %v1732, %v1746
        %v1748 = vrcp.pop %v1743
        %v1749 = vmul.f32 %v1734, %v1748
        %1750 = vrot.lane.b32.xlu0 %v562, 64
        %v1751 = vpop.permute.xlu0 %1750
        %1752 = vrot.lane.b32.xlu0 %v568, 64
        %v1753 = vpop.permute.xlu0 %1752
        %1754 = vrot.lane.b32.xlu0 %v574, 64
        %v1755 = vpop.permute.xlu0 %1754
        %v1760 = vsel %vm773, %v1745, 0
        %v1763 = vsel %vm773, %v1747, 0
        %v1766 = vsel %vm773, %v1749, 0
        %1768 = vmatprep.subr.mxu0 0.0
        %1769 = vmatpush1.msra.mxu0 %v1751
        %1770 = vmatprep.subr.mxu0 0.0
        %1771 = vmatpush1.msra.mxu0 %v1753
        %1772 = vmatprep.subr.mxu0 0.0
        %1773 = vmatpush1.msra.mxu0 %v1755
        %1774 = vmatprep.subr.mxu0 0.0
        %1775 = vmatpush1.msra.mxu0 0.0
        %1776 = vmatprep.subr.mxu0 0.0
        %1777 = vmatpush1.msra.mxu0 0.0
        %1778 = vmatprep.subr.mxu0 0.0
        %1779 = vmatpush1.msra.mxu0 0.0
        %1780 = vmatprep.subr.mxu0 0.0
        %1781 = vmatpush1.msra.mxu0 0.0
        %1782 = vmatprep.subr.mxu0 0.0
        %1783 = vmatpush1.msra.mxu0 0.0
        %1784 = vmatprep.subr.mxu0 0.0
        %1785 = vmatpush1.msra.mxu0 0.0
        %1786 = vmatprep.subr.mxu0 0.0
        %1787 = vmatpush1.msra.mxu0 0.0
        %1788 = vmatprep.subr.mxu0 0.0
        %1789 = vmatpush1.msra.mxu0 0.0
        %1790 = vmatprep.subr.mxu0 0.0
        %1791 = vmatpush1.msra.mxu0 0.0
        %1792 = vmatprep.subr.mxu0 0.0
        %1793 = vmatpush1.msra.mxu0 0.0
        %1794 = vmatprep.subr.mxu0 0.0
        %1795 = vmatpush1.msra.mxu0 0.0
        %1796 = vmatprep.subr.mxu0 0.0
        %1797 = vmatpush1.msra.mxu0 0.0
        %1798 = vmatprep.subr.mxu0 0.0
        %1799 = vmatpush1.msra.mxu0 0.0
        %1800 = vmatprep.subr.mxu0 0.0
        %1801 = vmatpush1.msra.mxu0 0.0
        %1802 = vmatprep.subr.mxu0 0.0
        %1803 = vmatpush1.msra.mxu0 0.0
        %1804 = vmatprep.subr.mxu0 0.0
        %1805 = vmatpush1.msra.mxu0 0.0
        %1806 = vmatprep.subr.mxu0 0.0
        %1807 = vmatpush1.msra.mxu0 0.0
        %1808 = vmatprep.subr.mxu0 0.0
        %1809 = vmatpush1.msra.mxu0 0.0
        %1810 = vmatprep.subr.mxu0 0.0
        %1811 = vmatpush1.msra.mxu0 0.0
        %1812 = vmatprep.subr.mxu0 0.0
        %1813 = vmatpush1.msra.mxu0 0.0
        %1814 = vmatprep.subr.mxu0 0.0
        %1815 = vmatpush1.msra.mxu0 0.0
        %1816 = vmatprep.subr.mxu0 0.0
        %1817 = vmatpush1.msra.mxu0 0.0
        %1818 = vmatprep.subr.mxu0 0.0
        %1819 = vmatpush1.msra.mxu0 0.0
        %1820 = vmatprep.subr.mxu0 0.0
        %1821 = vmatpush1.msra.mxu0 0.0
        %1822 = vmatprep.subr.mxu0 0.0
        %1823 = vmatpush1.msra.mxu0 0.0
        %1824 = vmatprep.subr.mxu0 0.0
        %1825 = vmatpush1.msra.mxu0 0.0
        %1826 = vmatprep.subr.mxu0 0.0
        %1827 = vmatpush1.msra.mxu0 0.0
        %1828 = vmatprep.subr.mxu0 0.0
        %1829 = vmatpush1.msra.mxu0 0.0
        %1830 = vmatprep.subr.mxu0 0.0
        %1831 = vmatpush1.msra.mxu0 0.0
        %1832 = vmatprep.mubr.f32.mxu0 0.0
        %1833 = vmatmul.mubr.f32.gmra.mrb[0].mxu0 %v1760
        %v1834 = vpop.f32.mrb[0].mxu0
        %v1835 = vadd.f32 0.0, %v1834
        %v1836 = vpop.f32.mrb[0].mxu0
        %1837 = vmatprep.mubr.f32.mxu0 0.0
        %1838 = vmatmul.mubr.f32.gmra.mrb[0].mxu0 %v1763
        %v1839 = vpop.f32.mrb[0].mxu0
        %v1840 = vadd.f32 0.0, %v1839
        %v1841 = vpop.f32.mrb[0].mxu0
        %1842 = vmatprep.mubr.f32.mxu0 0.0
        %1843 = vmatmul.mubr.f32.gmra.mrb[0].mxu0 %v1766
        %v1844 = vpop.f32.mrb[0].mxu0
        %v1845 = vadd.f32 0.0, %v1844
        %v1846 = vpop.f32.mrb[0].mxu0
        %1847 = vdwg.mxu0
        %v1848 = vadd.f32 %v1610, %v1835
        %v1849 = vadd.f32 %v1611, %v1840
        %v1850 = vadd.f32 %v1612, %v1845
        %1851 = vrot.lane.b32.xlu0 %v657, 108
        %v1852 = vpop.permute.xlu0 %1851
        %1853 = vrot.lane.b32.xlu0 %v658, 108
        %v1854 = vpop.permute.xlu0 %1853
        %1855 = vrot.lane.b32.xlu0 %v659, 108
        %v1856 = vpop.permute.xlu0 %1855
        %1857 = vrot.lane.b32.xlu0 %v665, 76
        %v1858 = vpop.permute.xlu0 %1857
        %1859 = vrot.lane.b32.xlu0 %v666, 76
        %v1860 = vpop.permute.xlu0 %1859
        %1861 = vrot.lane.b32.xlu0 %v667, 76
        %v1862 = vpop.permute.xlu0 %1861
        %v1863 = vsel %vm677, %v1852, 0
        %v1865 = vsel %vm677, %v1854, 0
        %v1867 = vsel %vm677, %v1856, 0
        %v1869 = vsel %vm677, %v1858, 0
        %v1871 = vsel %vm677, %v1860, 0
        %v1873 = vsel %vm677, %v1862, 0
        %1875 = vmatprep.subr.mxu0 0.0
        %1876 = vmatpush1.xpose.msra.mxu0 %v1869
        %1877 = vmatprep.subr.mxu0 0.0
        %1878 = vmatpush1.xpose.msra.mxu0 %v1871
        %1879 = vmatprep.subr.mxu0 0.0
        %1880 = vmatpush1.xpose.msra.mxu0 %v1873
        %1881 = vmatprep.subr.mxu0 0.0
        %1882 = vmatpush1.xpose.msra.mxu0 0.0
        %1883 = vmatprep.subr.mxu0 0.0
        %1884 = vmatpush1.xpose.msra.mxu0 0.0
        %1885 = vmatprep.subr.mxu0 0.0
        %1886 = vmatpush1.xpose.msra.mxu0 0.0
        %1887 = vmatprep.subr.mxu0 0.0
        %1888 = vmatpush1.xpose.msra.mxu0 0.0
        %1889 = vmatprep.subr.mxu0 0.0
        %1890 = vmatpush1.xpose.msra.mxu0 0.0
        %1891 = vmatprep.subr.mxu0 0.0
        %1892 = vmatpush1.xpose.msra.mxu0 0.0
        %1893 = vmatprep.subr.mxu0 0.0
        %1894 = vmatpush1.xpose.msra.mxu0 0.0
        %1895 = vmatprep.subr.mxu0 0.0
        %1896 = vmatpush1.xpose.msra.mxu0 0.0
        %1897 = vmatprep.subr.mxu0 0.0
        %1898 = vmatpush1.xpose.msra.mxu0 0.0
        %1899 = vmatprep.subr.mxu0 0.0
        %1900 = vmatpush1.xpose.msra.mxu0 0.0
        %1901 = vmatprep.subr.mxu0 0.0
        %1902 = vmatpush1.xpose.msra.mxu0 0.0
        %1903 = vmatprep.subr.mxu0 0.0
        %1904 = vmatpush1.xpose.msra.mxu0 0.0
        %1905 = vmatprep.subr.mxu0 0.0
        %1906 = vmatpush1.xpose.msra.mxu0 0.0
        %1907 = vmatprep.subr.mxu0 0.0
        %1908 = vmatpush1.xpose.msra.mxu0 0.0
        %1909 = vmatprep.subr.mxu0 0.0
        %1910 = vmatpush1.xpose.msra.mxu0 0.0
        %1911 = vmatprep.subr.mxu0 0.0
        %1912 = vmatpush1.xpose.msra.mxu0 0.0
        %1913 = vmatprep.subr.mxu0 0.0
        %1914 = vmatpush1.xpose.msra.mxu0 0.0
        %1915 = vmatprep.subr.mxu0 0.0
        %1916 = vmatpush1.xpose.msra.mxu0 0.0
        %1917 = vmatprep.subr.mxu0 0.0
        %1918 = vmatpush1.xpose.msra.mxu0 0.0
        %1919 = vmatprep.subr.mxu0 0.0
        %1920 = vmatpush1.xpose.msra.mxu0 0.0
        %1921 = vmatprep.subr.mxu0 0.0
        %1922 = vmatpush1.xpose.msra.mxu0 0.0
        %1923 = vmatprep.subr.mxu0 0.0
        %1924 = vmatpush1.xpose.msra.mxu0 0.0
        %1925 = vmatprep.subr.mxu0 0.0
        %1926 = vmatpush1.xpose.msra.mxu0 0.0
        %1927 = vmatprep.subr.mxu0 0.0
        %1928 = vmatpush1.xpose.msra.mxu0 0.0
        %1929 = vmatprep.subr.mxu0 0.0
        %1930 = vmatpush1.xpose.msra.mxu0 0.0
        %1931 = vmatprep.subr.mxu0 0.0
        %1932 = vmatpush1.xpose.msra.mxu0 0.0
        %1933 = vmatprep.subr.mxu0 0.0
        %1934 = vmatpush1.xpose.msra.mxu0 0.0
        %1935 = vmatprep.subr.mxu0 0.0
        %1936 = vmatpush1.xpose.msra.mxu0 0.0
        %1937 = vmatprep.subr.mxu0 0.0
        %1938 = vmatpush1.xpose.msra.mxu0 0.0
        %1939 = vmatprep.mubr.f32.mxu0 0.0
        %1940 = vmatmul.mubr.f32.gmra.mrb[0].mxu0 %v1863
        %v1941 = vpop.f32.mrb[0].mxu0
        %v1942 = vadd.f32 %v470, %v1941
        %v1943 = vpop.f32.mrb[0].mxu0
        %1944 = vmatprep.mubr.f32.mxu0 0.0
        %1945 = vmatmul.mubr.f32.gmra.mrb[0].mxu0 %v1865
        %v1946 = vpop.f32.mrb[0].mxu0
        %v1947 = vadd.f32 %v470, %v1946
        %v1948 = vpop.f32.mrb[0].mxu0
        %1949 = vmatprep.mubr.f32.mxu0 0.0
        %1950 = vmatmul.mubr.f32.gmra.mrb[0].mxu0 %v1867
        %v1951 = vpop.f32.mrb[0].mxu0
        %v1952 = vadd.f32 %v470, %v1951
        %v1953 = vpop.f32.mrb[0].mxu0
        %1954 = vdwg.mxu0
        %v1955 = vsel %vm773, %v1942, -inf
        %1956 = vmax.xlane.f32.xlu0 %v1955
        %v1957 = vpop.xlane.xlu0 %1956
        %v1958 = vsel %vm773, %v1947, -inf
        %1959 = vmax.xlane.f32.xlu0 %v1958
        %v1960 = vpop.xlane.xlu0 %1959
        %v1961 = vsel %vm773, %v1952, -inf
        %1962 = vmax.xlane.f32.xlu0 %v1961
        %v1963 = vpop.xlane.xlu0 %1962
        %v1964 = vsub.f32 %v1942, %v1957
        %v1965 = vsub.f32 %v1947, %v1960
        %v1966 = vsub.f32 %v1952, %v1963
        %v1967 = vmul.f32 %v1964, 1.442695
        %v1968 = vpow.pop %v1967
        %v1969 = vmul.f32 %v1965, 1.442695
        %v1970 = vpow.pop %v1969
        %v1971 = vmul.f32 %v1966, 1.442695
        %v1972 = vpow.pop %v1971
        %v1973 = vsel %vm773, %v1968, 0.0
        %1974 = vadd.xlane.f32.xlu0 %v1973
        %v1975 = vpop.xlane.xlu0 %1974
        %v1976 = vsel %vm773, %v1970, 0.0
        %1977 = vadd.xlane.f32.xlu0 %v1976
        %v1978 = vpop.xlane.xlu0 %1977
        %v1979 = vsel %vm773, %v1972, 0.0
        %1980 = vadd.xlane.f32.xlu0 %v1979
        %v1981 = vpop.xlane.xlu0 %1980
        %v1982 = vrcp.pop %v1975
        %v1983 = vmul.f32 %v1968, %v1982
        %v1984 = vrcp.pop %v1978
        %v1985 = vmul.f32 %v1970, %v1984
        %v1986 = vrcp.pop %v1981
        %v1987 = vmul.f32 %v1972, %v1986
        %1988 = vrot.lane.b32.xlu0 %v562, 32
        %v1989 = vpop.permute.xlu0 %1988
        %1990 = vrot.lane.b32.xlu0 %v568, 32
        %v1991 = vpop.permute.xlu0 %1990
        %1992 = vrot.lane.b32.xlu0 %v574, 32
        %v1993 = vpop.permute.xlu0 %1992
        %v1998 = vsel %vm773, %v1983, 0
        %v2001 = vsel %vm773, %v1985, 0
        %v2004 = vsel %vm773, %v1987, 0
        %2006 = vmatprep.subr.mxu0 0.0
        %2007 = vmatpush1.msra.mxu0 %v1989
        %2008 = vmatprep.subr.mxu0 0.0
        %2009 = vmatpush1.msra.mxu0 %v1991
        %2010 = vmatprep.subr.mxu0 0.0
        %2011 = vmatpush1.msra.mxu0 %v1993
        %2012 = vmatprep.subr.mxu0 0.0
        %2013 = vmatpush1.msra.mxu0 0.0
        %2014 = vmatprep.subr.mxu0 0.0
        %2015 = vmatpush1.msra.mxu0 0.0
        %2016 = vmatprep.subr.mxu0 0.0
        %2017 = vmatpush1.msra.mxu0 0.0
        %2018 = vmatprep.subr.mxu0 0.0
        %2019 = vmatpush1.msra.mxu0 0.0
        %2020 = vmatprep.subr.mxu0 0.0
        %2021 = vmatpush1.msra.mxu0 0.0
        %2022 = vmatprep.subr.mxu0 0.0
        %2023 = vmatpush1.msra.mxu0 0.0
        %2024 = vmatprep.subr.mxu0 0.0
        %2025 = vmatpush1.msra.mxu0 0.0
        %2026 = vmatprep.subr.mxu0 0.0
        %2027 = vmatpush1.msra.mxu0 0.0
        %2028 = vmatprep.subr.mxu0 0.0
        %2029 = vmatpush1.msra.mxu0 0.0
        %2030 = vmatprep.subr.mxu0 0.0
        %2031 = vmatpush1.msra.mxu0 0.0
        %2032 = vmatprep.subr.mxu0 0.0
        %2033 = vmatpush1.msra.mxu0 0.0
        %2034 = vmatprep.subr.mxu0 0.0
        %2035 = vmatpush1.msra.mxu0 0.0
        %2036 = vmatprep.subr.mxu0 0.0
        %2037 = vmatpush1.msra.mxu0 0.0
        %2038 = vmatprep.subr.mxu0 0.0
        %2039 = vmatpush1.msra.mxu0 0.0
        %2040 = vmatprep.subr.mxu0 0.0
        %2041 = vmatpush1.msra.mxu0 0.0
        %2042 = vmatprep.subr.mxu0 0.0
        %2043 = vmatpush1.msra.mxu0 0.0
        %2044 = vmatprep.subr.mxu0 0.0
        %2045 = vmatpush1.msra.mxu0 0.0
        %2046 = vmatprep.subr.mxu0 0.0
        %2047 = vmatpush1.msra.mxu0 0.0
        %2048 = vmatprep.subr.mxu0 0.0
        %2049 = vmatpush1.msra.mxu0 0.0
        %2050 = vmatprep.subr.mxu0 0.0
        %2051 = vmatpush1.msra.mxu0 0.0
        %2052 = vmatprep.subr.mxu0 0.0
        %2053 = vmatpush1.msra.mxu0 0.0
        %2054 = vmatprep.subr.mxu0 0.0
        %2055 = vmatpush1.msra.mxu0 0.0
        %2056 = vmatprep.subr.mxu0 0.0
        %2057 = vmatpush1.msra.mxu0 0.0
        %2058 = vmatprep.subr.mxu0 0.0
        %2059 = vmatpush1.msra.mxu0 0.0
        %2060 = vmatprep.subr.mxu0 0.0
        %2061 = vmatpush1.msra.mxu0 0.0
        %2062 = vmatprep.subr.mxu0 0.0
        %2063 = vmatpush1.msra.mxu0 0.0
        %2064 = vmatprep.subr.mxu0 0.0
        %2065 = vmatpush1.msra.mxu0 0.0
        %2066 = vmatprep.subr.mxu0 0.0
        %2067 = vmatpush1.msra.mxu0 0.0
        %2068 = vmatprep.subr.mxu0 0.0
        %2069 = vmatpush1.msra.mxu0 0.0
        %2070 = vmatprep.mubr.f32.mxu0 0.0
        %2071 = vmatmul.mubr.f32.gmra.mrb[0].mxu0 %v1998
        %v2072 = vpop.f32.mrb[0].mxu0
        %v2073 = vadd.f32 0.0, %v2072
        %v2074 = vpop.f32.mrb[0].mxu0
        %2075 = vmatprep.mubr.f32.mxu0 0.0
        %2076 = vmatmul.mubr.f32.gmra.mrb[0].mxu0 %v2001
        %v2077 = vpop.f32.mrb[0].mxu0
        %v2078 = vadd.f32 0.0, %v2077
        %v2079 = vpop.f32.mrb[0].mxu0
        %2080 = vmatprep.mubr.f32.mxu0 0.0
        %2081 = vmatmul.mubr.f32.gmra.mrb[0].mxu0 %v2004
        %v2082 = vpop.f32.mrb[0].mxu0
        %v2083 = vadd.f32 0.0, %v2082
        %v2084 = vpop.f32.mrb[0].mxu0
        %2085 = vdwg.mxu0
        %v2086 = vadd.f32 %v1848, %v2073
        %v2087 = vadd.f32 %v1849, %v2078
        %v2088 = vadd.f32 %v1850, %v2083
        %2089 = vrot.lane.b32.xlu0 %v657, 104
        %v2090 = vpop.permute.xlu0 %2089
        %2091 = vrot.lane.b32.xlu0 %v658, 104
        %v2092 = vpop.permute.xlu0 %2091
        %2093 = vrot.lane.b32.xlu0 %v659, 104
        %v2094 = vpop.permute.xlu0 %2093
        %2095 = vrot.lane.b32.xlu0 %v665, 72
        %v2096 = vpop.permute.xlu0 %2095
        %2097 = vrot.lane.b32.xlu0 %v666, 72
        %v2098 = vpop.permute.xlu0 %2097
        %2099 = vrot.lane.b32.xlu0 %v667, 72
        %v2100 = vpop.permute.xlu0 %2099
        %v2101 = vsel %vm677, %v2090, 0
        %v2103 = vsel %vm677, %v2092, 0
        %v2105 = vsel %vm677, %v2094, 0
        %v2107 = vsel %vm677, %v2096, 0
        %v2109 = vsel %vm677, %v2098, 0
        %v2111 = vsel %vm677, %v2100, 0
        %2113 = vmatprep.subr.mxu0 0.0
        %2114 = vmatpush1.xpose.msra.mxu0 %v2107
        %2115 = vmatprep.subr.mxu0 0.0
        %2116 = vmatpush1.xpose.msra.mxu0 %v2109
        %2117 = vmatprep.subr.mxu0 0.0
        %2118 = vmatpush1.xpose.msra.mxu0 %v2111
        %2119 = vmatprep.subr.mxu0 0.0
        %2120 = vmatpush1.xpose.msra.mxu0 0.0
        %2121 = vmatprep.subr.mxu0 0.0
        %2122 = vmatpush1.xpose.msra.mxu0 0.0
        %2123 = vmatprep.subr.mxu0 0.0
        %2124 = vmatpush1.xpose.msra.mxu0 0.0
        %2125 = vmatprep.subr.mxu0 0.0
        %2126 = vmatpush1.xpose.msra.mxu0 0.0
        %2127 = vmatprep.subr.mxu0 0.0
        %2128 = vmatpush1.xpose.msra.mxu0 0.0
        %2129 = vmatprep.subr.mxu0 0.0
        %2130 = vmatpush1.xpose.msra.mxu0 0.0
        %2131 = vmatprep.subr.mxu0 0.0
        %2132 = vmatpush1.xpose.msra.mxu0 0.0
        %2133 = vmatprep.subr.mxu0 0.0
        %2134 = vmatpush1.xpose.msra.mxu0 0.0
        %2135 = vmatprep.subr.mxu0 0.0
        %2136 = vmatpush1.xpose.msra.mxu0 0.0
        %2137 = vmatprep.subr.mxu0 0.0
        %2138 = vmatpush1.xpose.msra.mxu0 0.0
        %2139 = vmatprep.subr.mxu0 0.0
        %2140 = vmatpush1.xpose.msra.mxu0 0.0
        %2141 = vmatprep.subr.mxu0 0.0
        %2142 = vmatpush1.xpose.msra.mxu0 0.0
        %2143 = vmatprep.subr.mxu0 0.0
        %2144 = vmatpush1.xpose.msra.mxu0 0.0
        %2145 = vmatprep.subr.mxu0 0.0
        %2146 = vmatpush1.xpose.msra.mxu0 0.0
        %2147 = vmatprep.subr.mxu0 0.0
        %2148 = vmatpush1.xpose.msra.mxu0 0.0
        %2149 = vmatprep.subr.mxu0 0.0
        %2150 = vmatpush1.xpose.msra.mxu0 0.0
        %2151 = vmatprep.subr.mxu0 0.0
        %2152 = vmatpush1.xpose.msra.mxu0 0.0
        %2153 = vmatprep.subr.mxu0 0.0
        %2154 = vmatpush1.xpose.msra.mxu0 0.0
        %2155 = vmatprep.subr.mxu0 0.0
        %2156 = vmatpush1.xpose.msra.mxu0 0.0
        %2157 = vmatprep.subr.mxu0 0.0
        %2158 = vmatpush1.xpose.msra.mxu0 0.0
        %2159 = vmatprep.subr.mxu0 0.0
        %2160 = vmatpush1.xpose.msra.mxu0 0.0
        %2161 = vmatprep.subr.mxu0 0.0
        %2162 = vmatpush1.xpose.msra.mxu0 0.0
        %2163 = vmatprep.subr.mxu0 0.0
        %2164 = vmatpush1.xpose.msra.mxu0 0.0
        %2165 = vmatprep.subr.mxu0 0.0
        %2166 = vmatpush1.xpose.msra.mxu0 0.0
        %2167 = vmatprep.subr.mxu0 0.0
        %2168 = vmatpush1.xpose.msra.mxu0 0.0
        %2169 = vmatprep.subr.mxu0 0.0
        %2170 = vmatpush1.xpose.msra.mxu0 0.0
        %2171 = vmatprep.subr.mxu0 0.0
        %2172 = vmatpush1.xpose.msra.mxu0 0.0
        %2173 = vmatprep.subr.mxu0 0.0
        %2174 = vmatpush1.xpose.msra.mxu0 0.0
        %2175 = vmatprep.subr.mxu0 0.0
        %2176 = vmatpush1.xpose.msra.mxu0 0.0
        %2177 = vmatprep.mubr.f32.mxu0 0.0
        %2178 = vmatmul.mubr.f32.gmra.mrb[0].mxu0 %v2101
        %v2179 = vpop.f32.mrb[0].mxu0
        %v2180 = vadd.f32 %v470, %v2179
        %v2181 = vpop.f32.mrb[0].mxu0
        %2182 = vmatprep.mubr.f32.mxu0 0.0
        %2183 = vmatmul.mubr.f32.gmra.mrb[0].mxu0 %v2103
        %v2184 = vpop.f32.mrb[0].mxu0
        %v2185 = vadd.f32 %v470, %v2184
        %v2186 = vpop.f32.mrb[0].mxu0
        %2187 = vmatprep.mubr.f32.mxu0 0.0
        %2188 = vmatmul.mubr.f32.gmra.mrb[0].mxu0 %v2105
        %v2189 = vpop.f32.mrb[0].mxu0
        %v2190 = vadd.f32 %v470, %v2189
        %v2191 = vpop.f32.mrb[0].mxu0
        %2192 = vdwg.mxu0
        %v2193 = vsel %vm773, %v2180, -inf
        %2194 = vmax.xlane.f32.xlu0 %v2193
        %v2195 = vpop.xlane.xlu0 %2194
        %v2196 = vsel %vm773, %v2185, -inf
        %2197 = vmax.xlane.f32.xlu0 %v2196
        %v2198 = vpop.xlane.xlu0 %2197
        %v2199 = vsel %vm773, %v2190, -inf
        %2200 = vmax.xlane.f32.xlu0 %v2199
        %v2201 = vpop.xlane.xlu0 %2200
        %v2202 = vsub.f32 %v2180, %v2195
        %v2203 = vsub.f32 %v2185, %v2198
        %v2204 = vsub.f32 %v2190, %v2201
        %v2205 = vmul.f32 %v2202, 1.442695
        %v2206 = vpow.pop %v2205
        %v2207 = vmul.f32 %v2203, 1.442695
        %v2208 = vpow.pop %v2207
        %v2209 = vmul.f32 %v2204, 1.442695
        %v2210 = vpow.pop %v2209
        %v2211 = vsel %vm773, %v2206, 0.0
        %2212 = vadd.xlane.f32.xlu0 %v2211
        %v2213 = vpop.xlane.xlu0 %2212
        %v2214 = vsel %vm773, %v2208, 0.0
        %2215 = vadd.xlane.f32.xlu0 %v2214
        %v2216 = vpop.xlane.xlu0 %2215
        %v2217 = vsel %vm773, %v2210, 0.0
        %2218 = vadd.xlane.f32.xlu0 %v2217
        %v2219 = vpop.xlane.xlu0 %2218
        %v2220 = vrcp.pop %v2213
        %v2221 = vmul.f32 %v2206, %v2220
        %v2222 = vrcp.pop %v2216
        %v2223 = vmul.f32 %v2208, %v2222
        %v2224 = vrcp.pop %v2219
        %v2225 = vmul.f32 %v2210, %v2224
        %v2227 = vsel %vm773, %v2221, 0
        %v2230 = vsel %vm773, %v2223, 0
        %v2233 = vsel %vm773, %v2225, 0
        %2235 = vmatprep.subr.mxu0 0.0
        %2236 = vmatpush1.msra.mxu0 %v643
        %2237 = vmatprep.subr.mxu0 0.0
        %2238 = vmatpush1.msra.mxu0 %v648
        %2239 = vmatprep.subr.mxu0 0.0
        %2240 = vmatpush1.msra.mxu0 %v653
        %2241 = vmatprep.subr.mxu0 0.0
        %2242 = vmatpush1.msra.mxu0 0.0
        %2243 = vmatprep.subr.mxu0 0.0
        %2244 = vmatpush1.msra.mxu0 0.0
        %2245 = vmatprep.subr.mxu0 0.0
        %2246 = vmatpush1.msra.mxu0 0.0
        %2247 = vmatprep.subr.mxu0 0.0
        %2248 = vmatpush1.msra.mxu0 0.0
        %2249 = vmatprep.subr.mxu0 0.0
        %2250 = vmatpush1.msra.mxu0 0.0
        %2251 = vmatprep.subr.mxu0 0.0
        %2252 = vmatpush1.msra.mxu0 0.0
        %2253 = vmatprep.subr.mxu0 0.0
        %2254 = vmatpush1.msra.mxu0 0.0
        %2255 = vmatprep.subr.mxu0 0.0
        %2256 = vmatpush1.msra.mxu0 0.0
        %2257 = vmatprep.subr.mxu0 0.0
        %2258 = vmatpush1.msra.mxu0 0.0
        %2259 = vmatprep.subr.mxu0 0.0
        %2260 = vmatpush1.msra.mxu0 0.0
        %2261 = vmatprep.subr.mxu0 0.0
        %2262 = vmatpush1.msra.mxu0 0.0
        %2263 = vmatprep.subr.mxu0 0.0
        %2264 = vmatpush1.msra.mxu0 0.0
        %2265 = vmatprep.subr.mxu0 0.0
        %2266 = vmatpush1.msra.mxu0 0.0
        %2267 = vmatprep.subr.mxu0 0.0
        %2268 = vmatpush1.msra.mxu0 0.0
        %2269 = vmatprep.subr.mxu0 0.0
        %2270 = vmatpush1.msra.mxu0 0.0
        %2271 = vmatprep.subr.mxu0 0.0
        %2272 = vmatpush1.msra.mxu0 0.0
        %2273 = vmatprep.subr.mxu0 0.0
        %2274 = vmatpush1.msra.mxu0 0.0
        %2275 = vmatprep.subr.mxu0 0.0
        %2276 = vmatpush1.msra.mxu0 0.0
        %2277 = vmatprep.subr.mxu0 0.0
        %2278 = vmatpush1.msra.mxu0 0.0
        %2279 = vmatprep.subr.mxu0 0.0
        %2280 = vmatpush1.msra.mxu0 0.0
        %2281 = vmatprep.subr.mxu0 0.0
        %2282 = vmatpush1.msra.mxu0 0.0
        %2283 = vmatprep.subr.mxu0 0.0
        %2284 = vmatpush1.msra.mxu0 0.0
        %2285 = vmatprep.subr.mxu0 0.0
        %2286 = vmatpush1.msra.mxu0 0.0
        %2287 = vmatprep.subr.mxu0 0.0
        %2288 = vmatpush1.msra.mxu0 0.0
        %2289 = vmatprep.subr.mxu0 0.0
        %2290 = vmatpush1.msra.mxu0 0.0
        %2291 = vmatprep.subr.mxu0 0.0
        %2292 = vmatpush1.msra.mxu0 0.0
        %2293 = vmatprep.subr.mxu0 0.0
        %2294 = vmatpush1.msra.mxu0 0.0
        %2295 = vmatprep.subr.mxu0 0.0
        %2296 = vmatpush1.msra.mxu0 0.0
        %2297 = vmatprep.subr.mxu0 0.0
        %2298 = vmatpush1.msra.mxu0 0.0
        %2299 = vmatprep.mubr.f32.mxu0 0.0
        %2300 = vmatmul.mubr.f32.gmra.mrb[0].mxu0 %v2227
        %v2301 = vpop.f32.mrb[0].mxu0
        %v2302 = vadd.f32 0.0, %v2301
        %v2303 = vpop.f32.mrb[0].mxu0
        %2304 = vmatprep.mubr.f32.mxu0 0.0
        %2305 = vmatmul.mubr.f32.gmra.mrb[0].mxu0 %v2230
        %v2306 = vpop.f32.mrb[0].mxu0
        %v2307 = vadd.f32 0.0, %v2306
        %v2308 = vpop.f32.mrb[0].mxu0
        %2309 = vmatprep.mubr.f32.mxu0 0.0
        %2310 = vmatmul.mubr.f32.gmra.mrb[0].mxu0 %v2233
        %v2311 = vpop.f32.mrb[0].mxu0
        %v2312 = vadd.f32 0.0, %v2311
        %v2313 = vpop.f32.mrb[0].mxu0
        %2314 = vdwg.mxu0
        %v2315 = vadd.f32 %v2086, %v2302
        %v2316 = vadd.f32 %v2087, %v2307
        %v2317 = vadd.f32 %v2088, %v2312
        %2318 = vrot.lane.b32.xlu0 %v657, 100
        %v2319 = vpop.permute.xlu0 %2318
        %2320 = vrot.lane.b32.xlu0 %v658, 100
        %v2321 = vpop.permute.xlu0 %2320
        %2322 = vrot.lane.b32.xlu0 %v659, 100
        %v2323 = vpop.permute.xlu0 %2322
        %2324 = vrot.lane.b32.xlu0 %v665, 68
        %v2325 = vpop.permute.xlu0 %2324
        %2326 = vrot.lane.b32.xlu0 %v666, 68
        %v2327 = vpop.permute.xlu0 %2326
        %2328 = vrot.lane.b32.xlu0 %v667, 68
        %v2329 = vpop.permute.xlu0 %2328
        %v2330 = vsel %vm677, %v2319, 0
        %v2332 = vsel %vm677, %v2321, 0
        %v2334 = vsel %vm677, %v2323, 0
        %v2336 = vsel %vm677, %v2325, 0
        %v2338 = vsel %vm677, %v2327, 0
        %v2340 = vsel %vm677, %v2329, 0
        %2342 = vmatprep.subr.mxu0 0.0
        %2343 = vmatpush1.xpose.msra.mxu0 %v2336
        %2344 = vmatprep.subr.mxu0 0.0
        %2345 = vmatpush1.xpose.msra.mxu0 %v2338
        %2346 = vmatprep.subr.mxu0 0.0
        %2347 = vmatpush1.xpose.msra.mxu0 %v2340
        %2348 = vmatprep.subr.mxu0 0.0
        %2349 = vmatpush1.xpose.msra.mxu0 0.0
        %2350 = vmatprep.subr.mxu0 0.0
        %2351 = vmatpush1.xpose.msra.mxu0 0.0
        %2352 = vmatprep.subr.mxu0 0.0
        %2353 = vmatpush1.xpose.msra.mxu0 0.0
        %2354 = vmatprep.subr.mxu0 0.0
        %2355 = vmatpush1.xpose.msra.mxu0 0.0
        %2356 = vmatprep.subr.mxu0 0.0
        %2357 = vmatpush1.xpose.msra.mxu0 0.0
        %2358 = vmatprep.subr.mxu0 0.0
        %2359 = vmatpush1.xpose.msra.mxu0 0.0
        %2360 = vmatprep.subr.mxu0 0.0
        %2361 = vmatpush1.xpose.msra.mxu0 0.0
        %2362 = vmatprep.subr.mxu0 0.0
        %2363 = vmatpush1.xpose.msra.mxu0 0.0
        %2364 = vmatprep.subr.mxu0 0.0
        %2365 = vmatpush1.xpose.msra.mxu0 0.0
        %2366 = vmatprep.subr.mxu0 0.0
        %2367 = vmatpush1.xpose.msra.mxu0 0.0
        %2368 = vmatprep.subr.mxu0 0.0
        %2369 = vmatpush1.xpose.msra.mxu0 0.0
        %2370 = vmatprep.subr.mxu0 0.0
        %2371 = vmatpush1.xpose.msra.mxu0 0.0
        %2372 = vmatprep.subr.mxu0 0.0
        %2373 = vmatpush1.xpose.msra.mxu0 0.0
        %2374 = vmatprep.subr.mxu0 0.0
        %2375 = vmatpush1.xpose.msra.mxu0 0.0
        %2376 = vmatprep.subr.mxu0 0.0
        %2377 = vmatpush1.xpose.msra.mxu0 0.0
        %2378 = vmatprep.subr.mxu0 0.0
        %2379 = vmatpush1.xpose.msra.mxu0 0.0
        %2380 = vmatprep.subr.mxu0 0.0
        %2381 = vmatpush1.xpose.msra.mxu0 0.0
        %2382 = vmatprep.subr.mxu0 0.0
        %2383 = vmatpush1.xpose.msra.mxu0 0.0
        %2384 = vmatprep.subr.mxu0 0.0
        %2385 = vmatpush1.xpose.msra.mxu0 0.0
        %2386 = vmatprep.subr.mxu0 0.0
        %2387 = vmatpush1.xpose.msra.mxu0 0.0
        %2388 = vmatprep.subr.mxu0 0.0
        %2389 = vmatpush1.xpose.msra.mxu0 0.0
        %2390 = vmatprep.subr.mxu0 0.0
        %2391 = vmatpush1.xpose.msra.mxu0 0.0
        %2392 = vmatprep.subr.mxu0 0.0
        %2393 = vmatpush1.xpose.msra.mxu0 0.0
        %2394 = vmatprep.subr.mxu0 0.0
        %2395 = vmatpush1.xpose.msra.mxu0 0.0
        %2396 = vmatprep.subr.mxu0 0.0
        %2397 = vmatpush1.xpose.msra.mxu0 0.0
        %2398 = vmatprep.subr.mxu0 0.0
        %2399 = vmatpush1.xpose.msra.mxu0 0.0
        %2400 = vmatprep.subr.mxu0 0.0
        %2401 = vmatpush1.xpose.msra.mxu0 0.0
        %2402 = vmatprep.subr.mxu0 0.0
        %2403 = vmatpush1.xpose.msra.mxu0 0.0
        %2404 = vmatprep.subr.mxu0 0.0
        %2405 = vmatpush1.xpose.msra.mxu0 0.0
        %2406 = vmatprep.mubr.f32.mxu0 0.0
        %2407 = vmatmul.mubr.f32.gmra.mrb[0].mxu0 %v2330
        %v2408 = vpop.f32.mrb[0].mxu0
        %v2409 = vadd.f32 %v470, %v2408
        %v2410 = vpop.f32.mrb[0].mxu0
        %2411 = vmatprep.mubr.f32.mxu0 0.0
        %2412 = vmatmul.mubr.f32.gmra.mrb[0].mxu0 %v2332
        %v2413 = vpop.f32.mrb[0].mxu0
        %v2414 = vadd.f32 %v470, %v2413
        %v2415 = vpop.f32.mrb[0].mxu0
        %2416 = vmatprep.mubr.f32.mxu0 0.0
        %2417 = vmatmul.mubr.f32.gmra.mrb[0].mxu0 %v2334
        %v2418 = vpop.f32.mrb[0].mxu0
        %v2419 = vadd.f32 %v470, %v2418
        %v2420 = vpop.f32.mrb[0].mxu0
        %2421 = vdwg.mxu0
        %v2422 = vsel %vm773, %v2409, -inf
        %2423 = vmax.xlane.f32.xlu0 %v2422
        %v2424 = vpop.xlane.xlu0 %2423
        %v2425 = vsel %vm773, %v2414, -inf
        %2426 = vmax.xlane.f32.xlu0 %v2425
        %v2427 = vpop.xlane.xlu0 %2426
        %v2428 = vsel %vm773, %v2419, -inf
        %2429 = vmax.xlane.f32.xlu0 %v2428
        %v2430 = vpop.xlane.xlu0 %2429
        %v2431 = vsub.f32 %v2409, %v2424
        %v2432 = vsub.f32 %v2414, %v2427
        %v2433 = vsub.f32 %v2419, %v2430
        %v2434 = vmul.f32 %v2431, 1.442695
        %v2435 = vpow.pop %v2434
        %v2436 = vmul.f32 %v2432, 1.442695
        %v2437 = vpow.pop %v2436
        %v2438 = vmul.f32 %v2433, 1.442695
        %v2439 = vpow.pop %v2438
        %v2440 = vsel %vm773, %v2435, 0.0
        %2441 = vadd.xlane.f32.xlu0 %v2440
        %v2442 = vpop.xlane.xlu0 %2441
        %v2443 = vsel %vm773, %v2437, 0.0
        %2444 = vadd.xlane.f32.xlu0 %v2443
        %v2445 = vpop.xlane.xlu0 %2444
        %v2446 = vsel %vm773, %v2439, 0.0
        %2447 = vadd.xlane.f32.xlu0 %v2446
        %v2448 = vpop.xlane.xlu0 %2447
        %v2449 = vrcp.pop %v2442
        %v2450 = vmul.f32 %v2435, %v2449
        %v2451 = vrcp.pop %v2445
        %v2452 = vmul.f32 %v2437, %v2451
        %v2453 = vrcp.pop %v2448
        %v2454 = vmul.f32 %v2439, %v2453
        %2458 = vrot.lane.b32.xlu0 %v643, 96
        %v2459 = vpop.permute.xlu0 %2458
        %2460 = vrot.lane.b32.xlu0 %v648, 96
        %v2461 = vpop.permute.xlu0 %2460
        %2462 = vrot.lane.b32.xlu0 %v653, 96
        %v2463 = vpop.permute.xlu0 %2462
        %v2468 = vsel %vm773, %v2450, 0
        %v2471 = vsel %vm773, %v2452, 0
        %v2474 = vsel %vm773, %v2454, 0
        %2476 = vmatprep.subr.mxu0 0.0
        %2477 = vmatpush1.msra.mxu0 %v2459
        %2478 = vmatprep.subr.mxu0 0.0
        %2479 = vmatpush1.msra.mxu0 %v2461
        %2480 = vmatprep.subr.mxu0 0.0
        %2481 = vmatpush1.msra.mxu0 %v2463
        %2482 = vmatprep.subr.mxu0 0.0
        %2483 = vmatpush1.msra.mxu0 0.0
        %2484 = vmatprep.subr.mxu0 0.0
        %2485 = vmatpush1.msra.mxu0 0.0
        %2486 = vmatprep.subr.mxu0 0.0
        %2487 = vmatpush1.msra.mxu0 0.0
        %2488 = vmatprep.subr.mxu0 0.0
        %2489 = vmatpush1.msra.mxu0 0.0
        %2490 = vmatprep.subr.mxu0 0.0
        %2491 = vmatpush1.msra.mxu0 0.0
        %2492 = vmatprep.subr.mxu0 0.0
        %2493 = vmatpush1.msra.mxu0 0.0
        %2494 = vmatprep.subr.mxu0 0.0
        %2495 = vmatpush1.msra.mxu0 0.0
        %2496 = vmatprep.subr.mxu0 0.0
        %2497 = vmatpush1.msra.mxu0 0.0
        %2498 = vmatprep.subr.mxu0 0.0
        %2499 = vmatpush1.msra.mxu0 0.0
        %2500 = vmatprep.subr.mxu0 0.0
        %2501 = vmatpush1.msra.mxu0 0.0
        %2502 = vmatprep.subr.mxu0 0.0
        %2503 = vmatpush1.msra.mxu0 0.0
        %2504 = vmatprep.subr.mxu0 0.0
        %2505 = vmatpush1.msra.mxu0 0.0
        %2506 = vmatprep.subr.mxu0 0.0
        %2507 = vmatpush1.msra.mxu0 0.0
        %2508 = vmatprep.subr.mxu0 0.0
        %2509 = vmatpush1.msra.mxu0 0.0
        %2510 = vmatprep.subr.mxu0 0.0
        %2511 = vmatpush1.msra.mxu0 0.0
        %2512 = vmatprep.subr.mxu0 0.0
        %2513 = vmatpush1.msra.mxu0 0.0
        %2514 = vmatprep.subr.mxu0 0.0
        %2515 = vmatpush1.msra.mxu0 0.0
        %2516 = vmatprep.subr.mxu0 0.0
        %2517 = vmatpush1.msra.mxu0 0.0
        %2518 = vmatprep.subr.mxu0 0.0
        %2519 = vmatpush1.msra.mxu0 0.0
        %2520 = vmatprep.subr.mxu0 0.0
        %2521 = vmatpush1.msra.mxu0 0.0
        %2522 = vmatprep.subr.mxu0 0.0
        %2523 = vmatpush1.msra.mxu0 0.0
        %2524 = vmatprep.subr.mxu0 0.0
        %2525 = vmatpush1.msra.mxu0 0.0
        %2526 = vmatprep.subr.mxu0 0.0
        %2527 = vmatpush1.msra.mxu0 0.0
        %2528 = vmatprep.subr.mxu0 0.0
        %2529 = vmatpush1.msra.mxu0 0.0
        %2530 = vmatprep.subr.mxu0 0.0
        %2531 = vmatpush1.msra.mxu0 0.0
        %2532 = vmatprep.subr.mxu0 0.0
        %2533 = vmatpush1.msra.mxu0 0.0
        %2534 = vmatprep.subr.mxu0 0.0
        %2535 = vmatpush1.msra.mxu0 0.0
        %2536 = vmatprep.subr.mxu0 0.0
        %2537 = vmatpush1.msra.mxu0 0.0
        %2538 = vmatprep.subr.mxu0 0.0
        %2539 = vmatpush1.msra.mxu0 0.0
        %2540 = vmatprep.mubr.f32.mxu0 0.0
        %2541 = vmatmul.mubr.f32.gmra.mrb[0].mxu0 %v2468
        %v2542 = vpop.f32.mrb[0].mxu0
        %v2543 = vadd.f32 0.0, %v2542
        %v2544 = vpop.f32.mrb[0].mxu0
        %2545 = vmatprep.mubr.f32.mxu0 0.0
        %2546 = vmatmul.mubr.f32.gmra.mrb[0].mxu0 %v2471
        %v2547 = vpop.f32.mrb[0].mxu0
        %v2548 = vadd.f32 0.0, %v2547
        %v2549 = vpop.f32.mrb[0].mxu0
        %2550 = vmatprep.mubr.f32.mxu0 0.0
        %2551 = vmatmul.mubr.f32.gmra.mrb[0].mxu0 %v2474
        %v2552 = vpop.f32.mrb[0].mxu0
        %v2553 = vadd.f32 0.0, %v2552
        %v2554 = vpop.f32.mrb[0].mxu0
        %2555 = vdwg.mxu0
        %v2556 = vadd.f32 %v2315, %v2543
        %v2557 = vadd.f32 %v2316, %v2548
        %v2558 = vadd.f32 %v2317, %v2553
        %v2559 = vld [vmem:[%s2 + $0x1c8] ss:$0 sm:$0xff]
        %v2560 = vadd.f32 %v2556, %v2559
        %v2561 = vadd.f32 %v2557, %v2559
        %v2562 = vadd.f32 %v2558, %v2559
        %v2563 = vadd.f32 %v464, %v2560
        %v2564 = vadd.f32 %v465, %v2561
        %v2565 = vadd.f32 %v466, %v2562
        %v2566 = vld [vmem:[%s2 + $0x1c9] ss:$0 sm:$0xff]
        %v2567 = vld [vmem:[%s2 + $0x1ca] ss:$0 sm:$0xff]
        %v2568 = vsel %vm483, %v2563, 0.0
        %2569 = vadd.xlane.f32.xlu0 %v2568
        %v2570 = vpop.xlane.xlu0 %2569
        %v2571 = vsel %vm483, %v2564, 0.0
        %2572 = vadd.xlane.f32.xlu0 %v2571
        %v2573 = vpop.xlane.xlu0 %2572
        %v2574 = vsel %vm483, %v2565, 0.0
        %2575 = vadd.xlane.f32.xlu0 %v2574
        %v2576 = vpop.xlane.xlu0 %2575
        %v2577 = vrcp.pop 32.0
        %v2578 = vmul.f32 %v2570, %v2577
        %v2579 = vmul.f32 %v2573, %v2577
        %v2580 = vmul.f32 %v2576, %v2577
        %v2581 = vsub.f32 %v2563, %v2578
        %v2582 = vsub.f32 %v2564, %v2579
        %v2583 = vsub.f32 %v2565, %v2580
        %v2584 = vmul.f32 %v2581, %v2581
        %v2585 = vmul.f32 %v2582, %v2582
        %v2586 = vmul.f32 %v2583, %v2583
        %v2587 = vsel %vm483, %v2584, 0.0
        %2588 = vadd.xlane.f32.xlu0 %v2587
        %v2589 = vpop.xlane.xlu0 %2588
        %v2590 = vsel %vm483, %v2585, 0.0
        %2591 = vadd.xlane.f32.xlu0 %v2590
        %v2592 = vpop.xlane.xlu0 %2591
        %v2593 = vsel %vm483, %v2586, 0.0
        %2594 = vadd.xlane.f32.xlu0 %v2593
        %v2595 = vpop.xlane.xlu0 %2594
        %v2596 = vmul.f32 %v2589, %v2577
        %v2597 = vmul.f32 %v2592, %v2577
        %v2598 = vmul.f32 %v2595, %v2577
        %v2599 = vadd.f32 %v2596, 1e-05
        %v2600 = vadd.f32 %v2597, 1e-05
        %v2601 = vadd.f32 %v2598, 1e-05
        %v2602 = vrsqrt.pop %v2599
        %v2603 = vrsqrt.pop %v2600
        %v2604 = vrsqrt.pop %v2601
        %v2605 = vmul.f32 %v2581, %v2602
        %v2606 = vmul.f32 %v2582, %v2603
        %v2607 = vmul.f32 %v2583, %v2604
        %v2608 = vmul.f32 %v2605, %v2566
        %v2609 = vmul.f32 %v2606, %v2566
        %v2610 = vmul.f32 %v2607, %v2566
        %v2611 = vadd.f32 %v2608, %v2567
        %v2612 = vadd.f32 %v2609, %v2567
        %v2613 = vadd.f32 %v2610, %v2567
        %v2614 = vpack.c.bf16 %v2612, %v2611
        %v2615 = vpack.c.bf16 %v2613, %v2613
        %v2616 = vld [vmem:[%s4] sm:$0xff]
        %v2617 = vld [vmem:[%s4 + $0x8] sm:$0xff]
        %v2618 = vld [vmem:[%s4 + $0x40] sm:$0xff]
        %v2619 = vld [vmem:[%s4 + $0x48] sm:$0xff]
        %v2620 = vld [vmem:[%s4 + $0x80] sm:$0xff]
        %v2621 = vld [vmem:[%s4 + $0x88] sm:$0xff]
        %v2622 = vld [vmem:[%s4 + $0xc0] sm:$0xff]
        %v2623 = vld [vmem:[%s4 + $0xc8] sm:$0xff]
        %v2624 = vld [vmem:[%s3] ss:$2 sm:$0xf]
        %v2626 = vlaneseq
        %v2627 = vshrl.u32 %v2626, 7
        %v2628 = vsub.s32 0, %v2627
        %v2629 = vrot.slane %v2624, %v2628
        %v2630 = vlaneseq
        %v2631 = vshrl.u32 %v2630, 7
        %v2632 = vsub.s32 1, %v2631
        %v2633 = vrot.slane %v2624, %v2632
        %v2634 = vlaneseq
        %v2635 = vshrl.u32 %v2634, 7
        %v2636 = vsub.s32 2, %v2635
        %v2637 = vrot.slane %v2624, %v2636
        %v2638 = vlaneseq
        %v2639 = vshrl.u32 %v2638, 7
        %v2640 = vsub.s32 3, %v2639
        %v2641 = vrot.slane %v2624, %v2640
        %v2654 = vunpack.c.l.b16 %v2616
        %v2655 = vunpack.c.h.b16 %v2616
        %v2656 = vunpack.c.l.b16 %v2617
        %v2657 = vunpack.c.h.b16 %v2617
        %v2658 = vunpack.c.l.b16 %v2618
        %v2659 = vunpack.c.h.b16 %v2618
        %v2660 = vunpack.c.l.b16 %v2619
        %v2661 = vunpack.c.h.b16 %v2619
        %v2662 = vunpack.c.l.b16 %v2620
        %v2663 = vunpack.c.h.b16 %v2620
        %v2664 = vunpack.c.l.b16 %v2621
        %v2665 = vunpack.c.h.b16 %v2621
        %v2666 = vunpack.c.l.b16 %v2622
        %v2667 = vunpack.c.h.b16 %v2622
        %v2668 = vunpack.c.l.b16 %v2623
        %v2669 = vunpack.c.h.b16 %v2623
        %v2670 = vpack.c.b16 %v2658, %v2654
        %v2671 = vpack.c.b16 %v2659, %v2655
        %v2672 = vpack.c.b16 %v2660, %v2656
        %v2673 = vpack.c.b16 %v2661, %v2657
        %v2674 = vpack.c.b16 %v2666, %v2662
        %v2675 = vpack.c.b16 %v2667, %v2663
        %v2676 = vpack.c.b16 %v2668, %v2664
        %v2677 = vpack.c.b16 %v2669, %v2665
        %v2687 = vsel %vm483, %v2614, 0
        %v2690 = vsel %vm483, %v2615, 0
        %2692 = vmatprep.subr.bf16.mxu0 %v2671
        %2693 = vmatpush1.bf16.msra.mxu0 %v2670
        %2694 = vmatprep.subr.bf16.mxu0 %v2675
        %2695 = vmatpush1.bf16.msra.mxu0 %v2674
        %2696 = vmatprep.subr.bf16.mxu0 0
        %2697 = vmatpush1.bf16.msra.mxu0 0
        %2698 = vmatprep.subr.bf16.mxu0 0
        %2699 = vmatpush1.bf16.msra.mxu0 0
        %2700 = vmatprep.subr.bf16.mxu0 0
        %2701 = vmatpush1.bf16.msra.mxu0 0
        %2702 = vmatprep.subr.bf16.mxu0 0
        %2703 = vmatpush1.bf16.msra.mxu0 0
        %2704 = vmatprep.subr.bf16.mxu0 0
        %2705 = vmatpush1.bf16.msra.mxu0 0
        %2706 = vmatprep.subr.bf16.mxu0 0
        %2707 = vmatpush1.bf16.msra.mxu0 0
        %2708 = vmatprep.subr.bf16.mxu0 0
        %2709 = vmatpush1.bf16.msra.mxu0 0
        %2710 = vmatprep.subr.bf16.mxu0 0
        %2711 = vmatpush1.bf16.msra.mxu0 0
        %2712 = vmatprep.subr.bf16.mxu0 0
        %2713 = vmatpush1.bf16.msra.mxu0 0
        %2714 = vmatprep.subr.bf16.mxu0 0
        %2715 = vmatpush1.bf16.msra.mxu0 0
        %2716 = vmatprep.subr.bf16.mxu0 0
        %2717 = vmatpush1.bf16.msra.mxu0 0
        %2718 = vmatprep.subr.bf16.mxu0 0
        %2719 = vmatpush1.bf16.msra.mxu0 0
        %2720 = vmatprep.subr.bf16.mxu0 0
        %2721 = vmatpush1.bf16.msra.mxu0 0
        %2722 = vmatprep.subr.bf16.mxu0 0
        %2723 = vmatpush1.bf16.msra.mxu0 0
        %2724 = vmatprep.mubr.bf16.mxu0 0
        %2725 = vmatmul.mubr.bf16.gmra.mrb[0].mxu0 %v2687
        %v2726 = vpop.f32.mrb[0].mxu0
        %v2727 = vadd.f32 %v2629, %v2726
        %v2728 = vpop.f32.mrb[0].mxu0
        %v2729 = vadd.f32 %v2633, %v2728
        %v2730 = vpop.f32.mrb[0].mxu0
        %v2731 = vadd.f32 %v2629, %v2730
        %v2732 = vpop.f32.mrb[0].mxu0
        %v2733 = vadd.f32 %v2633, %v2732
        %2734 = vmatprep.mubr.bf16.mxu0 0
        %2735 = vmatmul.mubr.bf16.gmra.mrb[0].mxu0 %v2690
        %v2736 = vpop.f32.mrb[0].mxu0
        %v2737 = vadd.f32 %v2629, %v2736
        %v2738 = vpop.f32.mrb[0].mxu0
        %v2739 = vadd.f32 %v2633, %v2738
        %v2740 = vpop.f32.mrb[0].mxu0
        %v2741 = vpop.f32.mrb[0].mxu0
        %2742 = vdwg.mxu0
        %2743 = vmatprep.subr.bf16.mxu0 %v2673
        %2744 = vmatpush1.bf16.msra.mxu0 %v2672
        %2745 = vmatprep.subr.bf16.mxu0 %v2677
        %2746 = vmatpush1.bf16.msra.mxu0 %v2676
        %2747 = vmatprep.subr.bf16.mxu0 0
        %2748 = vmatpush1.bf16.msra.mxu0 0
        %2749 = vmatprep.subr.bf16.mxu0 0
        %2750 = vmatpush1.bf16.msra.mxu0 0
        %2751 = vmatprep.subr.bf16.mxu0 0
        %2752 = vmatpush1.bf16.msra.mxu0 0
        %2753 = vmatprep.subr.bf16.mxu0 0
        %2754 = vmatpush1.bf16.msra.mxu0 0
        %2755 = vmatprep.subr.bf16.mxu0 0
        %2756 = vmatpush1.bf16.msra.mxu0 0
        %2757 = vmatprep.subr.bf16.mxu0 0
        %2758 = vmatpush1.bf16.msra.mxu0 0
        %2759 = vmatprep.subr.bf16.mxu0 0
        %2760 = vmatpush1.bf16.msra.mxu0 0
        %2761 = vmatprep.subr.bf16.mxu0 0
        %2762 = vmatpush1.bf16.msra.mxu0 0
        %2763 = vmatprep.subr.bf16.mxu0 0
        %2764 = vmatpush1.bf16.msra.mxu0 0
        %2765 = vmatprep.subr.bf16.mxu0 0
        %2766 = vmatpush1.bf16.msra.mxu0 0
        %2767 = vmatprep.subr.bf16.mxu0 0
        %2768 = vmatpush1.bf16.msra.mxu0 0
        %2769 = vmatprep.subr.bf16.mxu0 0
        %2770 = vmatpush1.bf16.msra.mxu0 0
        %2771 = vmatprep.subr.bf16.mxu0 0
        %2772 = vmatpush1.bf16.msra.mxu0 0
        %2773 = vmatprep.subr.bf16.mxu0 0
        %2774 = vmatpush1.bf16.msra.mxu0 0
        %2775 = vmatprep.mubr.bf16.mxu0 0
        %2776 = vmatmul.mubr.bf16.gmra.mrb[0].mxu0 %v2687
        %v2777 = vpop.f32.mrb[0].mxu0
        %v2778 = vadd.f32 %v2637, %v2777
        %v2779 = vpop.f32.mrb[0].mxu0
        %v2780 = vadd.f32 %v2641, %v2779
        %v2781 = vpop.f32.mrb[0].mxu0
        %v2782 = vadd.f32 %v2637, %v2781
        %v2783 = vpop.f32.mrb[0].mxu0
        %v2784 = vadd.f32 %v2641, %v2783
        %2785 = vmatprep.mubr.bf16.mxu0 0
        %2786 = vmatmul.mubr.bf16.gmra.mrb[0].mxu0 %v2690
        %v2787 = vpop.f32.mrb[0].mxu0
        %v2788 = vadd.f32 %v2637, %v2787
        %v2789 = vpop.f32.mrb[0].mxu0
        %v2790 = vadd.f32 %v2641, %v2789
        %v2791 = vpop.f32.mrb[0].mxu0
        %v2792 = vpop.f32.mrb[0].mxu0
        %2793 = vdwg.mxu0
        %v2794 = vmax.f32 %v2727, 0.0
        %v2795 = vmax.f32 %v2729, 0.0
        %v2796 = vmax.f32 %v2778, 0.0
        %v2797 = vmax.f32 %v2780, 0.0
        %v2798 = vmax.f32 %v2731, 0.0
        %v2799 = vmax.f32 %v2733, 0.0
        %v2800 = vmax.f32 %v2782, 0.0
        %v2801 = vmax.f32 %v2784, 0.0
        %v2802 = vmax.f32 %v2737, 0.0
        %v2803 = vmax.f32 %v2739, 0.0
        %v2804 = vmax.f32 %v2788, 0.0
        %v2805 = vmax.f32 %v2790, 0.0
        %v2806 = vpack.c.bf16 %v2798, %v2794
        %v2807 = vpack.c.bf16 %v2799, %v2795
        %v2808 = vpack.c.bf16 %v2800, %v2796
        %v2809 = vpack.c.bf16 %v2801, %v2797
        %v2810 = vpack.c.bf16 %v2802, %v2802
        %v2811 = vpack.c.bf16 %v2803, %v2803
        %v2812 = vpack.c.bf16 %v2804, %v2804
        %v2813 = vpack.c.bf16 %v2805, %v2805
        %v2814 = vld [vmem:[%s5] sm:$0xf]
        %v2815 = vld [vmem:[%s5 + $0x4] sm:$0xf]
        %v2816 = vld [vmem:[%s5 + $0x8] sm:$0xf]
        %v2817 = vld [vmem:[%s5 + $0xc] sm:$0xf]
        %v2818 = vld [vmem:[%s5 + $0x10] sm:$0xf]
        %v2819 = vld [vmem:[%s5 + $0x14] sm:$0xf]
        %v2820 = vld [vmem:[%s5 + $0x18] sm:$0xf]
        %v2821 = vld [vmem:[%s5 + $0x1c] sm:$0xf]
        %v2822 = vld [vmem:[%s5 + $0x20] sm:$0xf]
        %v2823 = vld [vmem:[%s5 + $0x24] sm:$0xf]
        %v2824 = vld [vmem:[%s5 + $0x28] sm:$0xf]
        %v2825 = vld [vmem:[%s5 + $0x2c] sm:$0xf]
        %v2826 = vld [vmem:[%s5 + $0x30] sm:$0xf]
        %v2827 = vld [vmem:[%s5 + $0x34] sm:$0xf]
        %v2828 = vld [vmem:[%s5 + $0x38] sm:$0xf]
        %v2829 = vld [vmem:[%s5 + $0x3c] sm:$0xf]
        %v2830 = vld [vmem:[%s5 + $0x40] sm:$0xf]
        %v2831 = vld [vmem:[%s5 + $0x44] sm:$0xf]
        %v2832 = vld [vmem:[%s5 + $0x48] sm:$0xf]
        %v2833 = vld [vmem:[%s5 + $0x4c] sm:$0xf]
        %v2834 = vld [vmem:[%s5 + $0x50] sm:$0xf]
        %v2835 = vld [vmem:[%s5 + $0x54] sm:$0xf]
        %v2836 = vld [vmem:[%s5 + $0x58] sm:$0xf]
        %v2837 = vld [vmem:[%s5 + $0x5c] sm:$0xf]
        %v2838 = vld [vmem:[%s5 + $0x60] sm:$0xf]
        %v2839 = vld [vmem:[%s5 + $0x64] sm:$0xf]
        %v2840 = vld [vmem:[%s5 + $0x68] sm:$0xf]
        %v2841 = vld [vmem:[%s5 + $0x6c] sm:$0xf]
        %v2842 = vld [vmem:[%s5 + $0x70] sm:$0xf]
        %v2843 = vld [vmem:[%s5 + $0x74] sm:$0xf]
        %v2844 = vld [vmem:[%s5 + $0x78] sm:$0xf]
        %v2845 = vld [vmem:[%s5 + $0x7c] sm:$0xf]
        %v2846 = vld [vmem:[%s5 + $0x80] sm:$0xf]
        %v2847 = vld [vmem:[%s5 + $0x84] sm:$0xf]
        %v2848 = vld [vmem:[%s5 + $0x88] sm:$0xf]
        %v2849 = vld [vmem:[%s5 + $0x8c] sm:$0xf]
        %v2850 = vld [vmem:[%s5 + $0x90] sm:$0xf]
        %v2851 = vld [vmem:[%s5 + $0x94] sm:$0xf]
        %v2852 = vld [vmem:[%s5 + $0x98] sm:$0xf]
        %v2853 = vld [vmem:[%s5 + $0x9c] sm:$0xf]
        %v2854 = vld [vmem:[%s5 + $0xa0] sm:$0xf]
        %v2855 = vld [vmem:[%s5 + $0xa4] sm:$0xf]
        %v2856 = vld [vmem:[%s5 + $0xa8] sm:$0xf]
        %v2857 = vld [vmem:[%s5 + $0xac] sm:$0xf]
        %v2858 = vld [vmem:[%s5 + $0xb0] sm:$0xf]
        %v2859 = vld [vmem:[%s5 + $0xb4] sm:$0xf]
        %v2860 = vld [vmem:[%s5 + $0xb8] sm:$0xf]
        %v2861 = vld [vmem:[%s5 + $0xbc] sm:$0xf]
        %v2862 = vld [vmem:[%s5 + $0xc0] sm:$0xf]
        %v2863 = vld [vmem:[%s5 + $0xc4] sm:$0xf]
        %v2864 = vld [vmem:[%s5 + $0xc8] sm:$0xf]
        %v2865 = vld [vmem:[%s5 + $0xcc] sm:$0xf]
        %v2866 = vld [vmem:[%s5 + $0xd0] sm:$0xf]
        %v2867 = vld [vmem:[%s5 + $0xd4] sm:$0xf]
        %v2868 = vld [vmem:[%s5 + $0xd8] sm:$0xf]
        %v2869 = vld [vmem:[%s5 + $0xdc] sm:$0xf]
        %v2870 = vld [vmem:[%s5 + $0xe0] sm:$0xf]
        %v2871 = vld [vmem:[%s5 + $0xe4] sm:$0xf]
        %v2872 = vld [vmem:[%s5 + $0xe8] sm:$0xf]
        %v2873 = vld [vmem:[%s5 + $0xec] sm:$0xf]
        %v2874 = vld [vmem:[%s5 + $0xf0] sm:$0xf]
        %v2875 = vld [vmem:[%s5 + $0xf4] sm:$0xf]
        %v2876 = vld [vmem:[%s5 + $0xf8] sm:$0xf]
        %v2877 = vld [vmem:[%s5 + $0xfc] sm:$0xf]
        %v2878 = vld [vmem:[%s4 + $0x10] sm:$0xff]
        %v2879 = vld [vmem:[%s4 + $0x18] sm:$0xff]
        %v2880 = vld [vmem:[%s4 + $0x50] sm:$0xff]
        %v2881 = vld [vmem:[%s4 + $0x58] sm:$0xff]
        %v2882 = vld [vmem:[%s4 + $0x90] sm:$0xff]
        %v2883 = vld [vmem:[%s4 + $0x98] sm:$0xff]
        %v2884 = vld [vmem:[%s4 + $0xd0] sm:$0xff]
        %v2885 = vld [vmem:[%s4 + $0xd8] sm:$0xff]
        %s2886 = scalar_lea.vmem %s3, 8
        %v2887 = vld [vmem:[%s2886] ss:$2 sm:$0xf]
        %v2889 = vlaneseq
        %v2890 = vshrl.u32 %v2889, 7
        %v2891 = vsub.s32 0, %v2890
        %v2892 = vrot.slane %v2887, %v2891
        %v2893 = vlaneseq
        %v2894 = vshrl.u32 %v2893, 7
        %v2895 = vsub.s32 1, %v2894
        %v2896 = vrot.slane %v2887, %v2895
        %v2897 = vlaneseq
        %v2898 = vshrl.u32 %v2897, 7
        %v2899 = vsub.s32 2, %v2898
        %v2900 = vrot.slane %v2887, %v2899
        %v2901 = vlaneseq
        %v2902 = vshrl.u32 %v2901, 7
        %v2903 = vsub.s32 3, %v2902
        %v2904 = vrot.slane %v2887, %v2903
        %v2917 = vunpack.c.l.b16 %v2878
        %v2918 = vunpack.c.h.b16 %v2878
        %v2919 = vunpack.c.l.b16 %v2879
        %v2920 = vunpack.c.h.b16 %v2879
        %v2921 = vunpack.c.l.b16 %v2880
        %v2922 = vunpack.c.h.b16 %v2880
        %v2923 = vunpack.c.l.b16 %v2881
        %v2924 = vunpack.c.h.b16 %v2881
        %v2925 = vunpack.c.l.b16 %v2882
        %v2926 = vunpack.c.h.b16 %v2882
        %v2927 = vunpack.c.l.b16 %v2883
        %v2928 = vunpack.c.h.b16 %v2883
        %v2929 = vunpack.c.l.b16 %v2884
        %v2930 = vunpack.c.h.b16 %v2884
        %v2931 = vunpack.c.l.b16 %v2885
        %v2932 = vunpack.c.h.b16 %v2885
        %v2933 = vpack.c.b16 %v2921, %v2917
        %v2934 = vpack.c.b16 %v2922, %v2918
        %v2935 = vpack.c.b16 %v2923, %v2919
        %v2936 = vpack.c.b16 %v2924, %v2920
        %v2937 = vpack.c.b16 %v2929, %v2925
        %v2938 = vpack.c.b16 %v2930, %v2926
        %v2939 = vpack.c.b16 %v2931, %v2927
        %v2940 = vpack.c.b16 %v2932, %v2928
        %2949 = vmatprep.subr.bf16.mxu0 %v2934
        %2950 = vmatpush1.bf16.msra.mxu0 %v2933
        %2951 = vmatprep.subr.bf16.mxu0 %v2938
        %2952 = vmatpush1.bf16.msra.mxu0 %v2937
        %2953 = vmatprep.subr.bf16.mxu0 0
        %2954 = vmatpush1.bf16.msra.mxu0 0
        %2955 = vmatprep.subr.bf16.mxu0 0
        %2956 = vmatpush1.bf16.msra.mxu0 0
        %2957 = vmatprep.subr.bf16.mxu0 0
        %2958 = vmatpush1.bf16.msra.mxu0 0
        %2959 = vmatprep.subr.bf16.mxu0 0
        %2960 = vmatpush1.bf16.msra.mxu0 0
        %2961 = vmatprep.subr.bf16.mxu0 0
        %2962 = vmatpush1.bf16.msra.mxu0 0
        %2963 = vmatprep.subr.bf16.mxu0 0
        %2964 = vmatpush1.bf16.msra.mxu0 0
        %2965 = vmatprep.subr.bf16.mxu0 0
        %2966 = vmatpush1.bf16.msra.mxu0 0
        %2967 = vmatprep.subr.bf16.mxu0 0
        %2968 = vmatpush1.bf16.msra.mxu0 0
        %2969 = vmatprep.subr.bf16.mxu0 0
        %2970 = vmatpush1.bf16.msra.mxu0 0
        %2971 = vmatprep.subr.bf16.mxu0 0
        %2972 = vmatpush1.bf16.msra.mxu0 0
        %2973 = vmatprep.subr.bf16.mxu0 0
        %2974 = vmatpush1.bf16.msra.mxu0 0
        %2975 = vmatprep.subr.bf16.mxu0 0
        %2976 = vmatpush1.bf16.msra.mxu0 0
        %2977 = vmatprep.subr.bf16.mxu0 0
        %2978 = vmatpush1.bf16.msra.mxu0 0
        %2979 = vmatprep.subr.bf16.mxu0 0
        %2980 = vmatpush1.bf16.msra.mxu0 0
        %2981 = vmatprep.mubr.bf16.mxu0 0
        %2982 = vmatmul.mubr.bf16.gmra.mrb[0].mxu0 %v2687
        %v2983 = vpop.f32.mrb[0].mxu0
        %v2984 = vadd.f32 %v2892, %v2983
        %v2985 = vpop.f32.mrb[0].mxu0
        %v2986 = vadd.f32 %v2896, %v2985
        %v2987 = vpop.f32.mrb[0].mxu0
        %v2988 = vadd.f32 %v2892, %v2987
        %v2989 = vpop.f32.mrb[0].mxu0
        %v2990 = vadd.f32 %v2896, %v2989
        %2991 = vmatprep.mubr.bf16.mxu0 0
        %2992 = vmatmul.mubr.bf16.gmra.mrb[0].mxu0 %v2690
        %v2993 = vpop.f32.mrb[0].mxu0
        %v2994 = vadd.f32 %v2892, %v2993
        %v2995 = vpop.f32.mrb[0].mxu0
        %v2996 = vadd.f32 %v2896, %v2995
        %v2997 = vpop.f32.mrb[0].mxu0
        %v2998 = vpop.f32.mrb[0].mxu0
        %2999 = vdwg.mxu0
        %3000 = vmatprep.subr.bf16.mxu0 %v2936
        %3001 = vmatpush1.bf16.msra.mxu0 %v2935
        %3002 = vmatprep.subr.bf16.mxu0 %v2940
        %3003 = vmatpush1.bf16.msra.mxu0 %v2939
        %3004 = vmatprep.subr.bf16.mxu0 0
        %3005 = vmatpush1.bf16.msra.mxu0 0
        %3006 = vmatprep.subr.bf16.mxu0 0
        %3007 = vmatpush1.bf16.msra.mxu0 0
        %3008 = vmatprep.subr.bf16.mxu0 0
        %3009 = vmatpush1.bf16.msra.mxu0 0
        %3010 = vmatprep.subr.bf16.mxu0 0
        %3011 = vmatpush1.bf16.msra.mxu0 0
        %3012 = vmatprep.subr.bf16.mxu0 0
        %3013 = vmatpush1.bf16.msra.mxu0 0
        %3014 = vmatprep.subr.bf16.mxu0 0
        %3015 = vmatpush1.bf16.msra.mxu0 0
        %3016 = vmatprep.subr.bf16.mxu0 0
        %3017 = vmatpush1.bf16.msra.mxu0 0
        %3018 = vmatprep.subr.bf16.mxu0 0
        %3019 = vmatpush1.bf16.msra.mxu0 0
        %3020 = vmatprep.subr.bf16.mxu0 0
        %3021 = vmatpush1.bf16.msra.mxu0 0
        %3022 = vmatprep.subr.bf16.mxu0 0
        %3023 = vmatpush1.bf16.msra.mxu0 0
        %3024 = vmatprep.subr.bf16.mxu0 0
        %3025 = vmatpush1.bf16.msra.mxu0 0
        %3026 = vmatprep.subr.bf16.mxu0 0
        %3027 = vmatpush1.bf16.msra.mxu0 0
        %3028 = vmatprep.subr.bf16.mxu0 0
        %3029 = vmatpush1.bf16.msra.mxu0 0
        %3030 = vmatprep.subr.bf16.mxu0 0
        %3031 = vmatpush1.bf16.msra.mxu0 0
        %3032 = vmatprep.mubr.bf16.mxu0 0
        %3033 = vmatmul.mubr.bf16.gmra.mrb[0].mxu0 %v2687
        %v3034 = vpop.f32.mrb[0].mxu0
        %v3035 = vadd.f32 %v2900, %v3034
        %v3036 = vpop.f32.mrb[0].mxu0
        %v3037 = vadd.f32 %v2904, %v3036
        %v3038 = vpop.f32.mrb[0].mxu0
        %v3039 = vadd.f32 %v2900, %v3038
        %v3040 = vpop.f32.mrb[0].mxu0
        %v3041 = vadd.f32 %v2904, %v3040
        %3042 = vmatprep.mubr.bf16.mxu0 0
        %3043 = vmatmul.mubr.bf16.gmra.mrb[0].mxu0 %v2690
        %v3044 = vpop.f32.mrb[0].mxu0
        %v3045 = vadd.f32 %v2900, %v3044
        %v3046 = vpop.f32.mrb[0].mxu0
        %v3047 = vadd.f32 %v2904, %v3046
        %v3048 = vpop.f32.mrb[0].mxu0
        %v3049 = vpop.f32.mrb[0].mxu0
        %3050 = vdwg.mxu0
        %v3051 = vmax.f32 %v2984, 0.0
        %v3052 = vmax.f32 %v2986, 0.0
        %v3053 = vmax.f32 %v3035, 0.0
        %v3054 = vmax.f32 %v3037, 0.0
        %v3055 = vmax.f32 %v2988, 0.0
        %v3056 = vmax.f32 %v2990, 0.0
        %v3057 = vmax.f32 %v3039, 0.0
        %v3058 = vmax.f32 %v3041, 0.0
        %v3059 = vmax.f32 %v2994, 0.0
        %v3060 = vmax.f32 %v2996, 0.0
        %v3061 = vmax.f32 %v3045, 0.0
        %v3062 = vmax.f32 %v3047, 0.0
        %v3063 = vpack.c.bf16 %v3055, %v3051
        %v3064 = vpack.c.bf16 %v3056, %v3052
        %v3065 = vpack.c.bf16 %v3057, %v3053
        %v3066 = vpack.c.bf16 %v3058, %v3054
        %v3067 = vpack.c.bf16 %v3059, %v3059
        %v3068 = vpack.c.bf16 %v3060, %v3060
        %v3069 = vpack.c.bf16 %v3061, %v3061
        %v3070 = vpack.c.bf16 %v3062, %v3062
        %v3071 = vld [vmem:[%s5 + $0x100] sm:$0xf]
        %v3072 = vld [vmem:[%s5 + $0x104] sm:$0xf]
        %v3073 = vld [vmem:[%s5 + $0x108] sm:$0xf]
        %v3074 = vld [vmem:[%s5 + $0x10c] sm:$0xf]
        %v3075 = vld [vmem:[%s5 + $0x110] sm:$0xf]
        %v3076 = vld [vmem:[%s5 + $0x114] sm:$0xf]
        %v3077 = vld [vmem:[%s5 + $0x118] sm:$0xf]
        %v3078 = vld [vmem:[%s5 + $0x11c] sm:$0xf]
        %v3079 = vld [vmem:[%s5 + $0x120] sm:$0xf]
        %v3080 = vld [vmem:[%s5 + $0x124] sm:$0xf]
        %v3081 = vld [vmem:[%s5 + $0x128] sm:$0xf]
        %v3082 = vld [vmem:[%s5 + $0x12c] sm:$0xf]
        %v3083 = vld [vmem:[%s5 + $0x130] sm:$0xf]
        %v3084 = vld [vmem:[%s5 + $0x134] sm:$0xf]
        %v3085 = vld [vmem:[%s5 + $0x138] sm:$0xf]
        %v3086 = vld [vmem:[%s5 + $0x13c] sm:$0xf]
        %v3087 = vld [vmem:[%s5 + $0x140] sm:$0xf]
        %v3088 = vld [vmem:[%s5 + $0x144] sm:$0xf]
        %v3089 = vld [vmem:[%s5 + $0x148] sm:$0xf]
        %v3090 = vld [vmem:[%s5 + $0x14c] sm:$0xf]
        %v3091 = vld [vmem:[%s5 + $0x150] sm:$0xf]
        %v3092 = vld [vmem:[%s5 + $0x154] sm:$0xf]
        %v3093 = vld [vmem:[%s5 + $0x158] sm:$0xf]
        %v3094 = vld [vmem:[%s5 + $0x15c] sm:$0xf]
        %v3095 = vld [vmem:[%s5 + $0x160] sm:$0xf]
        %v3096 = vld [vmem:[%s5 + $0x164] sm:$0xf]
        %v3097 = vld [vmem:[%s5 + $0x168] sm:$0xf]
        %v3098 = vld [vmem:[%s5 + $0x16c] sm:$0xf]
        %v3099 = vld [vmem:[%s5 + $0x170] sm:$0xf]
        %v3100 = vld [vmem:[%s5 + $0x174] sm:$0xf]
        %v3101 = vld [vmem:[%s5 + $0x178] sm:$0xf]
        %v3102 = vld [vmem:[%s5 + $0x17c] sm:$0xf]
        %v3103 = vld [vmem:[%s5 + $0x180] sm:$0xf]
        %v3104 = vld [vmem:[%s5 + $0x184] sm:$0xf]
        %v3105 = vld [vmem:[%s5 + $0x188] sm:$0xf]
        %v3106 = vld [vmem:[%s5 + $0x18c] sm:$0xf]
        %v3107 = vld [vmem:[%s5 + $0x190] sm:$0xf]
        %v3108 = vld [vmem:[%s5 + $0x194] sm:$0xf]
        %v3109 = vld [vmem:[%s5 + $0x198] sm:$0xf]
        %v3110 = vld [vmem:[%s5 + $0x19c] sm:$0xf]
        %v3111 = vld [vmem:[%s5 + $0x1a0] sm:$0xf]
        %v3112 = vld [vmem:[%s5 + $0x1a4] sm:$0xf]
        %v3113 = vld [vmem:[%s5 + $0x1a8] sm:$0xf]
        %v3114 = vld [vmem:[%s5 + $0x1ac] sm:$0xf]
        %v3115 = vld [vmem:[%s5 + $0x1b0] sm:$0xf]
        %v3116 = vld [vmem:[%s5 + $0x1b4] sm:$0xf]
        %v3117 = vld [vmem:[%s5 + $0x1b8] sm:$0xf]
        %v3118 = vld [vmem:[%s5 + $0x1bc] sm:$0xf]
        %v3119 = vld [vmem:[%s5 + $0x1c0] sm:$0xf]
        %v3120 = vld [vmem:[%s5 + $0x1c4] sm:$0xf]
        %v3121 = vld [vmem:[%s5 + $0x1c8] sm:$0xf]
        %v3122 = vld [vmem:[%s5 + $0x1cc] sm:$0xf]
        %v3123 = vld [vmem:[%s5 + $0x1d0] sm:$0xf]
        %v3124 = vld [vmem:[%s5 + $0x1d4] sm:$0xf]
        %v3125 = vld [vmem:[%s5 + $0x1d8] sm:$0xf]
        %v3126 = vld [vmem:[%s5 + $0x1dc] sm:$0xf]
        %v3127 = vld [vmem:[%s5 + $0x1e0] sm:$0xf]
        %v3128 = vld [vmem:[%s5 + $0x1e4] sm:$0xf]
        %v3129 = vld [vmem:[%s5 + $0x1e8] sm:$0xf]
        %v3130 = vld [vmem:[%s5 + $0x1ec] sm:$0xf]
        %v3131 = vld [vmem:[%s5 + $0x1f0] sm:$0xf]
        %v3132 = vld [vmem:[%s5 + $0x1f4] sm:$0xf]
        %v3133 = vld [vmem:[%s5 + $0x1f8] sm:$0xf]
        %v3134 = vld [vmem:[%s5 + $0x1fc] sm:$0xf]
        %v3199 = vunpack.c.l.b16 %v3071
        %v3200 = vunpack.c.l.b16 %v3072
        %v3201 = vunpack.c.l.b16 %v3073
        %v3202 = vunpack.c.l.b16 %v3074
        %v3203 = vunpack.c.l.b16 %v3075
        %v3204 = vunpack.c.l.b16 %v3076
        %v3205 = vunpack.c.l.b16 %v3077
        %v3206 = vunpack.c.l.b16 %v3078
        %v3207 = vunpack.c.l.b16 %v3079
        %v3208 = vunpack.c.l.b16 %v3080
        %v3209 = vunpack.c.l.b16 %v3081
        %v3210 = vunpack.c.l.b16 %v3082
        %v3211 = vunpack.c.l.b16 %v3083
        %v3212 = vunpack.c.l.b16 %v3084
        %v3213 = vunpack.c.l.b16 %v3085
        %v3214 = vunpack.c.l.b16 %v3086
        %v3215 = vunpack.c.l.b16 %v3087
        %v3216 = vunpack.c.l.b16 %v3088
        %v3217 = vunpack.c.l.b16 %v3089
        %v3218 = vunpack.c.l.b16 %v3090
        %v3219 = vunpack.c.l.b16 %v3091
        %v3220 = vunpack.c.l.b16 %v3092
        %v3221 = vunpack.c.l.b16 %v3093
        %v3222 = vunpack.c.l.b16 %v3094
        %v3223 = vunpack.c.l.b16 %v3095
        %v3224 = vunpack.c.l.b16 %v3096
        %v3225 = vunpack.c.l.b16 %v3097
        %v3226 = vunpack.c.l.b16 %v3098
        %v3227 = vunpack.c.l.b16 %v3099
        %v3228 = vunpack.c.l.b16 %v3100
        %v3229 = vunpack.c.l.b16 %v3101
        %v3230 = vunpack.c.l.b16 %v3102
        %v3231 = vunpack.c.l.b16 %v3103
        %v3232 = vunpack.c.l.b16 %v3104
        %v3233 = vunpack.c.l.b16 %v3105
        %v3234 = vunpack.c.l.b16 %v3106
        %v3235 = vunpack.c.l.b16 %v3107
        %v3236 = vunpack.c.l.b16 %v3108
        %v3237 = vunpack.c.l.b16 %v3109
        %v3238 = vunpack.c.l.b16 %v3110
        %v3239 = vunpack.c.l.b16 %v3111
        %v3240 = vunpack.c.l.b16 %v3112
        %v3241 = vunpack.c.l.b16 %v3113
        %v3242 = vunpack.c.l.b16 %v3114
        %v3243 = vunpack.c.l.b16 %v3115
        %v3244 = vunpack.c.l.b16 %v3116
        %v3245 = vunpack.c.l.b16 %v3117
        %v3246 = vunpack.c.l.b16 %v3118
        %v3247 = vunpack.c.l.b16 %v3119
        %v3248 = vunpack.c.l.b16 %v3120
        %v3249 = vunpack.c.l.b16 %v3121
        %v3250 = vunpack.c.l.b16 %v3122
        %v3251 = vunpack.c.l.b16 %v3123
        %v3252 = vunpack.c.l.b16 %v3124
        %v3253 = vunpack.c.l.b16 %v3125
        %v3254 = vunpack.c.l.b16 %v3126
        %v3255 = vunpack.c.l.b16 %v3127
        %v3256 = vunpack.c.l.b16 %v3128
        %v3257 = vunpack.c.l.b16 %v3129
        %v3258 = vunpack.c.l.b16 %v3130
        %v3259 = vunpack.c.l.b16 %v3131
        %v3260 = vunpack.c.l.b16 %v3132
        %v3261 = vunpack.c.l.b16 %v3133
        %v3262 = vunpack.c.l.b16 %v3134
        %v3263 = vpack.c.b16 %v3200, %v3199
        %v3264 = vpack.c.b16 %v3202, %v3201
        %v3265 = vpack.c.b16 %v3204, %v3203
        %v3266 = vpack.c.b16 %v3206, %v3205
        %v3267 = vpack.c.b16 %v3208, %v3207
        %v3268 = vpack.c.b16 %v3210, %v3209
        %v3269 = vpack.c.b16 %v3212, %v3211
        %v3270 = vpack.c.b16 %v3214, %v3213
        %v3271 = vpack.c.b16 %v3216, %v3215
        %v3272 = vpack.c.b16 %v3218, %v3217
        %v3273 = vpack.c.b16 %v3220, %v3219
        %v3274 = vpack.c.b16 %v3222, %v3221
        %v3275 = vpack.c.b16 %v3224, %v3223
        %v3276 = vpack.c.b16 %v3226, %v3225
        %v3277 = vpack.c.b16 %v3228, %v3227
        %v3278 = vpack.c.b16 %v3230, %v3229
        %v3279 = vpack.c.b16 %v3232, %v3231
        %v3280 = vpack.c.b16 %v3234, %v3233
        %v3281 = vpack.c.b16 %v3236, %v3235
        %v3282 = vpack.c.b16 %v3238, %v3237
        %v3283 = vpack.c.b16 %v3240, %v3239
        %v3284 = vpack.c.b16 %v3242, %v3241
        %v3285 = vpack.c.b16 %v3244, %v3243
        %v3286 = vpack.c.b16 %v3246, %v3245
        %v3287 = vpack.c.b16 %v3248, %v3247
        %v3288 = vpack.c.b16 %v3250, %v3249
        %v3289 = vpack.c.b16 %v3252, %v3251
        %v3290 = vpack.c.b16 %v3254, %v3253
        %v3291 = vpack.c.b16 %v3256, %v3255
        %v3292 = vpack.c.b16 %v3258, %v3257
        %v3293 = vpack.c.b16 %v3260, %v3259
        %v3294 = vpack.c.b16 %v3262, %v3261
        %3327 = vmatprep.subr.bf16.mxu0 0
        %3328 = vmatpush1.bf16.msra.mxu0 %v3263
        %3329 = vmatprep.subr.bf16.mxu0 0
        %3330 = vmatpush1.bf16.msra.mxu0 %v3264
        %3331 = vmatprep.subr.bf16.mxu0 0
        %3332 = vmatpush1.bf16.msra.mxu0 %v3265
        %3333 = vmatprep.subr.bf16.mxu0 0
        %3334 = vmatpush1.bf16.msra.mxu0 %v3266
        %3335 = vmatprep.subr.bf16.mxu0 0
        %3336 = vmatpush1.bf16.msra.mxu0 %v3267
        %3337 = vmatprep.subr.bf16.mxu0 0
        %3338 = vmatpush1.bf16.msra.mxu0 %v3268
        %3339 = vmatprep.subr.bf16.mxu0 0
        %3340 = vmatpush1.bf16.msra.mxu0 %v3269
        %3341 = vmatprep.subr.bf16.mxu0 0
        %3342 = vmatpush1.bf16.msra.mxu0 %v3270
        %3343 = vmatprep.subr.bf16.mxu0 0
        %3344 = vmatpush1.bf16.msra.mxu0 %v3271
        %3345 = vmatprep.subr.bf16.mxu0 0
        %3346 = vmatpush1.bf16.msra.mxu0 %v3272
        %3347 = vmatprep.subr.bf16.mxu0 0
        %3348 = vmatpush1.bf16.msra.mxu0 %v3273
        %3349 = vmatprep.subr.bf16.mxu0 0
        %3350 = vmatpush1.bf16.msra.mxu0 %v3274
        %3351 = vmatprep.subr.bf16.mxu0 0
        %3352 = vmatpush1.bf16.msra.mxu0 %v3275
        %3353 = vmatprep.subr.bf16.mxu0 0
        %3354 = vmatpush1.bf16.msra.mxu0 %v3276
        %3355 = vmatprep.subr.bf16.mxu0 0
        %3356 = vmatpush1.bf16.msra.mxu0 %v3277
        %3357 = vmatprep.subr.bf16.mxu0 0
        %3358 = vmatpush1.bf16.msra.mxu0 %v3278
        %3359 = vmatprep.mubr.bf16.mxu0 %v3064
        %3360 = vmatmul.mubr.bf16.gmra.mrb[0].mxu0 %v3063
        %v3361 = vpop.f32.mrb[0].mxu0
        %v3362 = vadd.f32 0.0, %v3361
        %v3363 = vpop.f32.mrb[0].mxu0
        %v3364 = vpop.f32.mrb[0].mxu0
        %v3365 = vadd.f32 0.0, %v3364
        %v3366 = vpop.f32.mrb[0].mxu0
        %3367 = vmatprep.mubr.bf16.mxu0 %v3068
        %3368 = vmatmul.mubr.bf16.gmra.mrb[0].mxu0 %v3067
        %v3369 = vpop.f32.mrb[0].mxu0
        %v3370 = vadd.f32 0.0, %v3369
        %v3371 = vpop.f32.mrb[0].mxu0
        %v3372 = vpop.f32.mrb[0].mxu0
        %v3373 = vpop.f32.mrb[0].mxu0
        %3374 = vdwg.mxu0
        %3375 = vmatprep.subr.bf16.mxu0 0
        %3376 = vmatpush1.bf16.msra.mxu0 %v3279
        %3377 = vmatprep.subr.bf16.mxu0 0
        %3378 = vmatpush1.bf16.msra.mxu0 %v3280
        %3379 = vmatprep.subr.bf16.mxu0 0
        %3380 = vmatpush1.bf16.msra.mxu0 %v3281
        %3381 = vmatprep.subr.bf16.mxu0 0
        %3382 = vmatpush1.bf16.msra.mxu0 %v3282
        %3383 = vmatprep.subr.bf16.mxu0 0
        %3384 = vmatpush1.bf16.msra.mxu0 %v3283
        %3385 = vmatprep.subr.bf16.mxu0 0
        %3386 = vmatpush1.bf16.msra.mxu0 %v3284
        %3387 = vmatprep.subr.bf16.mxu0 0
        %3388 = vmatpush1.bf16.msra.mxu0 %v3285
        %3389 = vmatprep.subr.bf16.mxu0 0
        %3390 = vmatpush1.bf16.msra.mxu0 %v3286
        %3391 = vmatprep.subr.bf16.mxu0 0
        %3392 = vmatpush1.bf16.msra.mxu0 %v3287
        %3393 = vmatprep.subr.bf16.mxu0 0
        %3394 = vmatpush1.bf16.msra.mxu0 %v3288
        %3395 = vmatprep.subr.bf16.mxu0 0
        %3396 = vmatpush1.bf16.msra.mxu0 %v3289
        %3397 = vmatprep.subr.bf16.mxu0 0
        %3398 = vmatpush1.bf16.msra.mxu0 %v3290
        %3399 = vmatprep.subr.bf16.mxu0 0
        %3400 = vmatpush1.bf16.msra.mxu0 %v3291
        %3401 = vmatprep.subr.bf16.mxu0 0
        %3402 = vmatpush1.bf16.msra.mxu0 %v3292
        %3403 = vmatprep.subr.bf16.mxu0 0
        %3404 = vmatpush1.bf16.msra.mxu0 %v3293
        %3405 = vmatprep.subr.bf16.mxu0 0
        %3406 = vmatpush1.bf16.msra.mxu0 %v3294
        %3407 = vmatprep.mubr.bf16.mxu0 %v3066
        %3408 = vmatmul.mubr.bf16.gmra.mrb[0].mxu0 %v3065
        %v3409 = vpop.f32.mrb[0].mxu0
        %v3410 = vadd.f32 %v3362, %v3409
        %v3411 = vpop.f32.mrb[0].mxu0
        %v3412 = vpop.f32.mrb[0].mxu0
        %v3413 = vadd.f32 %v3365, %v3412
        %v3414 = vpop.f32.mrb[0].mxu0
        %3415 = vmatprep.mubr.bf16.mxu0 %v3070
        %3416 = vmatmul.mubr.bf16.gmra.mrb[0].mxu0 %v3069
        %v3417 = vpop.f32.mrb[0].mxu0
        %v3418 = vadd.f32 %v3370, %v3417
        %v3419 = vpop.f32.mrb[0].mxu0
        %v3420 = vpop.f32.mrb[0].mxu0
        %v3421 = vpop.f32.mrb[0].mxu0
        %3422 = vdwg.mxu0
        %v3487 = vunpack.c.l.b16 %v2814
        %v3488 = vunpack.c.l.b16 %v2815
        %v3489 = vunpack.c.l.b16 %v2816
        %v3490 = vunpack.c.l.b16 %v2817
        %v3491 = vunpack.c.l.b16 %v2818
        %v3492 = vunpack.c.l.b16 %v2819
        %v3493 = vunpack.c.l.b16 %v2820
        %v3494 = vunpack.c.l.b16 %v2821
        %v3495 = vunpack.c.l.b16 %v2822
        %v3496 = vunpack.c.l.b16 %v2823
        %v3497 = vunpack.c.l.b16 %v2824
        %v3498 = vunpack.c.l.b16 %v2825
        %v3499 = vunpack.c.l.b16 %v2826
        %v3500 = vunpack.c.l.b16 %v2827
        %v3501 = vunpack.c.l.b16 %v2828
        %v3502 = vunpack.c.l.b16 %v2829
        %v3503 = vunpack.c.l.b16 %v2830
        %v3504 = vunpack.c.l.b16 %v2831
        %v3505 = vunpack.c.l.b16 %v2832
        %v3506 = vunpack.c.l.b16 %v2833
        %v3507 = vunpack.c.l.b16 %v2834
        %v3508 = vunpack.c.l.b16 %v2835
        %v3509 = vunpack.c.l.b16 %v2836
        %v3510 = vunpack.c.l.b16 %v2837
        %v3511 = vunpack.c.l.b16 %v2838
        %v3512 = vunpack.c.l.b16 %v2839
        %v3513 = vunpack.c.l.b16 %v2840
        %v3514 = vunpack.c.l.b16 %v2841
        %v3515 = vunpack.c.l.b16 %v2842
        %v3516 = vunpack.c.l.b16 %v2843
        %v3517 = vunpack.c.l.b16 %v2844
        %v3518 = vunpack.c.l.b16 %v2845
        %v3519 = vunpack.c.l.b16 %v2846
        %v3520 = vunpack.c.l.b16 %v2847
        %v3521 = vunpack.c.l.b16 %v2848
        %v3522 = vunpack.c.l.b16 %v2849
        %v3523 = vunpack.c.l.b16 %v2850
        %v3524 = vunpack.c.l.b16 %v2851
        %v3525 = vunpack.c.l.b16 %v2852
        %v3526 = vunpack.c.l.b16 %v2853
        %v3527 = vunpack.c.l.b16 %v2854
        %v3528 = vunpack.c.l.b16 %v2855
        %v3529 = vunpack.c.l.b16 %v2856
        %v3530 = vunpack.c.l.b16 %v2857
        %v3531 = vunpack.c.l.b16 %v2858
        %v3532 = vunpack.c.l.b16 %v2859
        %v3533 = vunpack.c.l.b16 %v2860
        %v3534 = vunpack.c.l.b16 %v2861
        %v3535 = vunpack.c.l.b16 %v2862
        %v3536 = vunpack.c.l.b16 %v2863
        %v3537 = vunpack.c.l.b16 %v2864
        %v3538 = vunpack.c.l.b16 %v2865
        %v3539 = vunpack.c.l.b16 %v2866
        %v3540 = vunpack.c.l.b16 %v2867
        %v3541 = vunpack.c.l.b16 %v2868
        %v3542 = vunpack.c.l.b16 %v2869
        %v3543 = vunpack.c.l.b16 %v2870
        %v3544 = vunpack.c.l.b16 %v2871
        %v3545 = vunpack.c.l.b16 %v2872
        %v3546 = vunpack.c.l.b16 %v2873
        %v3547 = vunpack.c.l.b16 %v2874
        %v3548 = vunpack.c.l.b16 %v2875
        %v3549 = vunpack.c.l.b16 %v2876
        %v3550 = vunpack.c.l.b16 %v2877
        %v3551 = vpack.c.b16 %v3488, %v3487
        %v3552 = vpack.c.b16 %v3490, %v3489
        %v3553 = vpack.c.b16 %v3492, %v3491
        %v3554 = vpack.c.b16 %v3494, %v3493
        %v3555 = vpack.c.b16 %v3496, %v3495
        %v3556 = vpack.c.b16 %v3498, %v3497
        %v3557 = vpack.c.b16 %v3500, %v3499
        %v3558 = vpack.c.b16 %v3502, %v3501
        %v3559 = vpack.c.b16 %v3504, %v3503
        %v3560 = vpack.c.b16 %v3506, %v3505
        %v3561 = vpack.c.b16 %v3508, %v3507
        %v3562 = vpack.c.b16 %v3510, %v3509
        %v3563 = vpack.c.b16 %v3512, %v3511
        %v3564 = vpack.c.b16 %v3514, %v3513
        %v3565 = vpack.c.b16 %v3516, %v3515
        %v3566 = vpack.c.b16 %v3518, %v3517
        %v3567 = vpack.c.b16 %v3520, %v3519
        %v3568 = vpack.c.b16 %v3522, %v3521
        %v3569 = vpack.c.b16 %v3524, %v3523
        %v3570 = vpack.c.b16 %v3526, %v3525
        %v3571 = vpack.c.b16 %v3528, %v3527
        %v3572 = vpack.c.b16 %v3530, %v3529
        %v3573 = vpack.c.b16 %v3532, %v3531
        %v3574 = vpack.c.b16 %v3534, %v3533
        %v3575 = vpack.c.b16 %v3536, %v3535
        %v3576 = vpack.c.b16 %v3538, %v3537
        %v3577 = vpack.c.b16 %v3540, %v3539
        %v3578 = vpack.c.b16 %v3542, %v3541
        %v3579 = vpack.c.b16 %v3544, %v3543
        %v3580 = vpack.c.b16 %v3546, %v3545
        %v3581 = vpack.c.b16 %v3548, %v3547
        %v3582 = vpack.c.b16 %v3550, %v3549
        %3615 = vmatprep.subr.bf16.mxu0 0
        %3616 = vmatpush1.bf16.msra.mxu0 %v3551
        %3617 = vmatprep.subr.bf16.mxu0 0
        %3618 = vmatpush1.bf16.msra.mxu0 %v3552
        %3619 = vmatprep.subr.bf16.mxu0 0
        %3620 = vmatpush1.bf16.msra.mxu0 %v3553
        %3621 = vmatprep.subr.bf16.mxu0 0
        %3622 = vmatpush1.bf16.msra.mxu0 %v3554
        %3623 = vmatprep.subr.bf16.mxu0 0
        %3624 = vmatpush1.bf16.msra.mxu0 %v3555
        %3625 = vmatprep.subr.bf16.mxu0 0
        %3626 = vmatpush1.bf16.msra.mxu0 %v3556
        %3627 = vmatprep.subr.bf16.mxu0 0
        %3628 = vmatpush1.bf16.msra.mxu0 %v3557
        %3629 = vmatprep.subr.bf16.mxu0 0
        %3630 = vmatpush1.bf16.msra.mxu0 %v3558
        %3631 = vmatprep.subr.bf16.mxu0 0
        %3632 = vmatpush1.bf16.msra.mxu0 %v3559
        %3633 = vmatprep.subr.bf16.mxu0 0
        %3634 = vmatpush1.bf16.msra.mxu0 %v3560
        %3635 = vmatprep.subr.bf16.mxu0 0
        %3636 = vmatpush1.bf16.msra.mxu0 %v3561
        %3637 = vmatprep.subr.bf16.mxu0 0
        %3638 = vmatpush1.bf16.msra.mxu0 %v3562
        %3639 = vmatprep.subr.bf16.mxu0 0
        %3640 = vmatpush1.bf16.msra.mxu0 %v3563
        %3641 = vmatprep.subr.bf16.mxu0 0
        %3642 = vmatpush1.bf16.msra.mxu0 %v3564
        %3643 = vmatprep.subr.bf16.mxu0 0
        %3644 = vmatpush1.bf16.msra.mxu0 %v3565
        %3645 = vmatprep.subr.bf16.mxu0 0
        %3646 = vmatpush1.bf16.msra.mxu0 %v3566
        %3647 = vmatprep.mubr.bf16.mxu0 %v2807
        %3648 = vmatmul.mubr.bf16.gmra.mrb[0].mxu0 %v2806
        %v3649 = vpop.f32.mrb[0].mxu0
        %v3650 = vadd.f32 %v3410, %v3649
        %v3651 = vpop.f32.mrb[0].mxu0
        %v3652 = vpop.f32.mrb[0].mxu0
        %v3653 = vadd.f32 %v3413, %v3652
        %v3654 = vpop.f32.mrb[0].mxu0
        %3655 = vmatprep.mubr.bf16.mxu0 %v2811
        %3656 = vmatmul.mubr.bf16.gmra.mrb[0].mxu0 %v2810
        %v3657 = vpop.f32.mrb[0].mxu0
        %v3658 = vadd.f32 %v3418, %v3657
        %v3659 = vpop.f32.mrb[0].mxu0
        %v3660 = vpop.f32.mrb[0].mxu0
        %v3661 = vpop.f32.mrb[0].mxu0
        %3662 = vdwg.mxu0
        %3663 = vmatprep.subr.bf16.mxu0 0
        %3664 = vmatpush1.bf16.msra.mxu0 %v3567
        %3665 = vmatprep.subr.bf16.mxu0 0
        %3666 = vmatpush1.bf16.msra.mxu0 %v3568
        %3667 = vmatprep.subr.bf16.mxu0 0
        %3668 = vmatpush1.bf16.msra.mxu0 %v3569
        %3669 = vmatprep.subr.bf16.mxu0 0
        %3670 = vmatpush1.bf16.msra.mxu0 %v3570
        %3671 = vmatprep.subr.bf16.mxu0 0
        %3672 = vmatpush1.bf16.msra.mxu0 %v3571
        %3673 = vmatprep.subr.bf16.mxu0 0
        %3674 = vmatpush1.bf16.msra.mxu0 %v3572
        %3675 = vmatprep.subr.bf16.mxu0 0
        %3676 = vmatpush1.bf16.msra.mxu0 %v3573
        %3677 = vmatprep.subr.bf16.mxu0 0
        %3678 = vmatpush1.bf16.msra.mxu0 %v3574
        %3679 = vmatprep.subr.bf16.mxu0 0
        %3680 = vmatpush1.bf16.msra.mxu0 %v3575
        %3681 = vmatprep.subr.bf16.mxu0 0
        %3682 = vmatpush1.bf16.msra.mxu0 %v3576
        %3683 = vmatprep.subr.bf16.mxu0 0
        %3684 = vmatpush1.bf16.msra.mxu0 %v3577
        %3685 = vmatprep.subr.bf16.mxu0 0
        %3686 = vmatpush1.bf16.msra.mxu0 %v3578
        %3687 = vmatprep.subr.bf16.mxu0 0
        %3688 = vmatpush1.bf16.msra.mxu0 %v3579
        %3689 = vmatprep.subr.bf16.mxu0 0
        %3690 = vmatpush1.bf16.msra.mxu0 %v3580
        %3691 = vmatprep.subr.bf16.mxu0 0
        %3692 = vmatpush1.bf16.msra.mxu0 %v3581
        %3693 = vmatprep.subr.bf16.mxu0 0
        %3694 = vmatpush1.bf16.msra.mxu0 %v3582
        %3695 = vmatprep.mubr.bf16.mxu0 %v2809
        %3696 = vmatmul.mubr.bf16.gmra.mrb[0].mxu0 %v2808
        %v3697 = vpop.f32.mrb[0].mxu0
        %v3698 = vadd.f32 %v3650, %v3697
        %v3699 = vpop.f32.mrb[0].mxu0
        %v3700 = vpop.f32.mrb[0].mxu0
        %v3701 = vadd.f32 %v3653, %v3700
        %v3702 = vpop.f32.mrb[0].mxu0
        %3703 = vmatprep.mubr.bf16.mxu0 %v2813
        %3704 = vmatmul.mubr.bf16.gmra.mrb[0].mxu0 %v2812
        %v3705 = vpop.f32.mrb[0].mxu0
        %v3706 = vadd.f32 %v3658, %v3705
        %v3707 = vpop.f32.mrb[0].mxu0
        %v3708 = vpop.f32.mrb[0].mxu0
        %v3709 = vpop.f32.mrb[0].mxu0
        %3710 = vdwg.mxu0
        %v3711 = vld [vmem:[%s4 + $0x20] sm:$0xff]
        %v3712 = vld [vmem:[%s4 + $0x28] sm:$0xff]
        %v3713 = vld [vmem:[%s4 + $0x60] sm:$0xff]
        %v3714 = vld [vmem:[%s4 + $0x68] sm:$0xff]
        %v3715 = vld [vmem:[%s4 + $0xa0] sm:$0xff]
        %v3716 = vld [vmem:[%s4 + $0xa8] sm:$0xff]
        %v3717 = vld [vmem:[%s4 + $0xe0] sm:$0xff]
        %v3718 = vld [vmem:[%s4 + $0xe8] sm:$0xff]
        %s3719 = scalar_lea.vmem %s3, 16
        %v3720 = vld [vmem:[%s3719] ss:$2 sm:$0xf]
        %v3722 = vlaneseq
        %v3723 = vshrl.u32 %v3722, 7
        %v3724 = vsub.s32 0, %v3723
        %v3725 = vrot.slane %v3720, %v3724
        %v3726 = vlaneseq
        %v3727 = vshrl.u32 %v3726, 7
        %v3728 = vsub.s32 1, %v3727
        %v3729 = vrot.slane %v3720, %v3728
        %v3730 = vlaneseq
        %v3731 = vshrl.u32 %v3730, 7
        %v3732 = vsub.s32 2, %v3731
        %v3733 = vrot.slane %v3720, %v3732
        %v3734 = vlaneseq
        %v3735 = vshrl.u32 %v3734, 7
        %v3736 = vsub.s32 3, %v3735
        %v3737 = vrot.slane %v3720, %v3736
        %v3750 = vunpack.c.l.b16 %v3711
        %v3751 = vunpack.c.h.b16 %v3711
        %v3752 = vunpack.c.l.b16 %v3712
        %v3753 = vunpack.c.h.b16 %v3712
        %v3754 = vunpack.c.l.b16 %v3713
        %v3755 = vunpack.c.h.b16 %v3713
        %v3756 = vunpack.c.l.b16 %v3714
        %v3757 = vunpack.c.h.b16 %v3714
        %v3758 = vunpack.c.l.b16 %v3715
        %v3759 = vunpack.c.h.b16 %v3715
        %v3760 = vunpack.c.l.b16 %v3716
        %v3761 = vunpack.c.h.b16 %v3716
        %v3762 = vunpack.c.l.b16 %v3717
        %v3763 = vunpack.c.h.b16 %v3717
        %v3764 = vunpack.c.l.b16 %v3718
        %v3765 = vunpack.c.h.b16 %v3718
        %v3766 = vpack.c.b16 %v3754, %v3750
        %v3767 = vpack.c.b16 %v3755, %v3751
        %v3768 = vpack.c.b16 %v3756, %v3752
        %v3769 = vpack.c.b16 %v3757, %v3753
        %v3770 = vpack.c.b16 %v3762, %v3758
        %v3771 = vpack.c.b16 %v3763, %v3759
        %v3772 = vpack.c.b16 %v3764, %v3760
        %v3773 = vpack.c.b16 %v3765, %v3761
        %3782 = vmatprep.subr.bf16.mxu0 %v3767
        %3783 = vmatpush1.bf16.msra.mxu0 %v3766
        %3784 = vmatprep.subr.bf16.mxu0 %v3771
        %3785 = vmatpush1.bf16.msra.mxu0 %v3770
        %3786 = vmatprep.subr.bf16.mxu0 0
        %3787 = vmatpush1.bf16.msra.mxu0 0
        %3788 = vmatprep.subr.bf16.mxu0 0
        %3789 = vmatpush1.bf16.msra.mxu0 0
        %3790 = vmatprep.subr.bf16.mxu0 0
        %3791 = vmatpush1.bf16.msra.mxu0 0
        %3792 = vmatprep.subr.bf16.mxu0 0
        %3793 = vmatpush1.bf16.msra.mxu0 0
        %3794 = vmatprep.subr.bf16.mxu0 0
        %3795 = vmatpush1.bf16.msra.mxu0 0
        %3796 = vmatprep.subr.bf16.mxu0 0
        %3797 = vmatpush1.bf16.msra.mxu0 0
        %3798 = vmatprep.subr.bf16.mxu0 0
        %3799 = vmatpush1.bf16.msra.mxu0 0
        %3800 = vmatprep.subr.bf16.mxu0 0
        %3801 = vmatpush1.bf16.msra.mxu0 0
        %3802 = vmatprep.subr.bf16.mxu0 0
        %3803 = vmatpush1.bf16.msra.mxu0 0
        %3804 = vmatprep.subr.bf16.mxu0 0
        %3805 = vmatpush1.bf16.msra.mxu0 0
        %3806 = vmatprep.subr.bf16.mxu0 0
        %3807 = vmatpush1.bf16.msra.mxu0 0
        %3808 = vmatprep.subr.bf16.mxu0 0
        %3809 = vmatpush1.bf16.msra.mxu0 0
        %3810 = vmatprep.subr.bf16.mxu0 0
        %3811 = vmatpush1.bf16.msra.mxu0 0
        %3812 = vmatprep.subr.bf16.mxu0 0
        %3813 = vmatpush1.bf16.msra.mxu0 0
        %3814 = vmatprep.mubr.bf16.mxu0 0
        %3815 = vmatmul.mubr.bf16.gmra.mrb[0].mxu0 %v2687
        %v3816 = vpop.f32.mrb[0].mxu0
        %v3817 = vadd.f32 %v3725, %v3816
        %v3818 = vpop.f32.mrb[0].mxu0
        %v3819 = vadd.f32 %v3729, %v3818
        %v3820 = vpop.f32.mrb[0].mxu0
        %v3821 = vadd.f32 %v3725, %v3820
        %v3822 = vpop.f32.mrb[0].mxu0
        %v3823 = vadd.f32 %v3729, %v3822
        %3824 = vmatprep.mubr.bf16.mxu0 0
        %3825 = vmatmul.mubr.bf16.gmra.mrb[0].mxu0 %v2690
        %v3826 = vpop.f32.mrb[0].mxu0
        %v3827 = vadd.f32 %v3725, %v3826
        %v3828 = vpop.f32.mrb[0].mxu0
        %v3829 = vadd.f32 %v3729, %v3828
        %v3830 = vpop.f32.mrb[0].mxu0
        %v3831 = vpop.f32.mrb[0].mxu0
        %3832 = vdwg.mxu0
        %3833 = vmatprep.subr.bf16.mxu0 %v3769
        %3834 = vmatpush1.bf16.msra.mxu0 %v3768
        %3835 = vmatprep.subr.bf16.mxu0 %v3773
        %3836 = vmatpush1.bf16.msra.mxu0 %v3772
        %3837 = vmatprep.subr.bf16.mxu0 0
        %3838 = vmatpush1.bf16.msra.mxu0 0
        %3839 = vmatprep.subr.bf16.mxu0 0
        %3840 = vmatpush1.bf16.msra.mxu0 0
        %3841 = vmatprep.subr.bf16.mxu0 0
        %3842 = vmatpush1.bf16.msra.mxu0 0
        %3843 = vmatprep.subr.bf16.mxu0 0
        %3844 = vmatpush1.bf16.msra.mxu0 0
        %3845 = vmatprep.subr.bf16.mxu0 0
        %3846 = vmatpush1.bf16.msra.mxu0 0
        %3847 = vmatprep.subr.bf16.mxu0 0
        %3848 = vmatpush1.bf16.msra.mxu0 0
        %3849 = vmatprep.subr.bf16.mxu0 0
        %3850 = vmatpush1.bf16.msra.mxu0 0
        %3851 = vmatprep.subr.bf16.mxu0 0
        %3852 = vmatpush1.bf16.msra.mxu0 0
        %3853 = vmatprep.subr.bf16.mxu0 0
        %3854 = vmatpush1.bf16.msra.mxu0 0
        %3855 = vmatprep.subr.bf16.mxu0 0
        %3856 = vmatpush1.bf16.msra.mxu0 0
        %3857 = vmatprep.subr.bf16.mxu0 0
        %3858 = vmatpush1.bf16.msra.mxu0 0
        %3859 = vmatprep.subr.bf16.mxu0 0
        %3860 = vmatpush1.bf16.msra.mxu0 0
        %3861 = vmatprep.subr.bf16.mxu0 0
        %3862 = vmatpush1.bf16.msra.mxu0 0
        %3863 = vmatprep.subr.bf16.mxu0 0
        %3864 = vmatpush1.bf16.msra.mxu0 0
        %3865 = vmatprep.mubr.bf16.mxu0 0
        %3866 = vmatmul.mubr.bf16.gmra.mrb[0].mxu0 %v2687
        %v3867 = vpop.f32.mrb[0].mxu0
        %v3868 = vadd.f32 %v3733, %v3867
        %v3869 = vpop.f32.mrb[0].mxu0
        %v3870 = vadd.f32 %v3737, %v3869
        %v3871 = vpop.f32.mrb[0].mxu0
        %v3872 = vadd.f32 %v3733, %v3871
        %v3873 = vpop.f32.mrb[0].mxu0
        %v3874 = vadd.f32 %v3737, %v3873
        %3875 = vmatprep.mubr.bf16.mxu0 0
        %3876 = vmatmul.mubr.bf16.gmra.mrb[0].mxu0 %v2690
        %v3877 = vpop.f32.mrb[0].mxu0
        %v3878 = vadd.f32 %v3733, %v3877
        %v3879 = vpop.f32.mrb[0].mxu0
        %v3880 = vadd.f32 %v3737, %v3879
        %v3881 = vpop.f32.mrb[0].mxu0
        %v3882 = vpop.f32.mrb[0].mxu0
        %3883 = vdwg.mxu0
        %v3884 = vmax.f32 %v3817, 0.0
        %v3885 = vmax.f32 %v3819, 0.0
        %v3886 = vmax.f32 %v3868, 0.0
        %v3887 = vmax.f32 %v3870, 0.0
        %v3888 = vmax.f32 %v3821, 0.0
        %v3889 = vmax.f32 %v3823, 0.0
        %v3890 = vmax.f32 %v3872, 0.0
        %v3891 = vmax.f32 %v3874, 0.0
        %v3892 = vmax.f32 %v3827, 0.0
        %v3893 = vmax.f32 %v3829, 0.0
        %v3894 = vmax.f32 %v3878, 0.0
        %v3895 = vmax.f32 %v3880, 0.0
        %v3896 = vpack.c.bf16 %v3888, %v3884
        %v3897 = vpack.c.bf16 %v3889, %v3885
        %v3898 = vpack.c.bf16 %v3890, %v3886
        %v3899 = vpack.c.bf16 %v3891, %v3887
        %v3900 = vpack.c.bf16 %v3892, %v3892
        %v3901 = vpack.c.bf16 %v3893, %v3893
        %v3902 = vpack.c.bf16 %v3894, %v3894
        %v3903 = vpack.c.bf16 %v3895, %v3895
        %v3904 = vld [vmem:[%s5 + $0x200] sm:$0xf]
        %v3905 = vld [vmem:[%s5 + $0x204] sm:$0xf]
        %v3906 = vld [vmem:[%s5 + $0x208] sm:$0xf]
        %v3907 = vld [vmem:[%s5 + $0x20c] sm:$0xf]
        %v3908 = vld [vmem:[%s5 + $0x210] sm:$0xf]
        %v3909 = vld [vmem:[%s5 + $0x214] sm:$0xf]
        %v3910 = vld [vmem:[%s5 + $0x218] sm:$0xf]
        %v3911 = vld [vmem:[%s5 + $0x21c] sm:$0xf]
        %v3912 = vld [vmem:[%s5 + $0x220] sm:$0xf]
        %v3913 = vld [vmem:[%s5 + $0x224] sm:$0xf]
        %v3914 = vld [vmem:[%s5 + $0x228] sm:$0xf]
        %v3915 = vld [vmem:[%s5 + $0x22c] sm:$0xf]
        %v3916 = vld [vmem:[%s5 + $0x230] sm:$0xf]
        %v3917 = vld [vmem:[%s5 + $0x234] sm:$0xf]
        %v3918 = vld [vmem:[%s5 + $0x238] sm:$0xf]
        %v3919 = vld [vmem:[%s5 + $0x23c] sm:$0xf]
        %v3920 = vld [vmem:[%s5 + $0x240] sm:$0xf]
        %v3921 = vld [vmem:[%s5 + $0x244] sm:$0xf]
        %v3922 = vld [vmem:[%s5 + $0x248] sm:$0xf]
        %v3923 = vld [vmem:[%s5 + $0x24c] sm:$0xf]
        %v3924 = vld [vmem:[%s5 + $0x250] sm:$0xf]
        %v3925 = vld [vmem:[%s5 + $0x254] sm:$0xf]
        %v3926 = vld [vmem:[%s5 + $0x258] sm:$0xf]
        %v3927 = vld [vmem:[%s5 + $0x25c] sm:$0xf]
        %v3928 = vld [vmem:[%s5 + $0x260] sm:$0xf]
        %v3929 = vld [vmem:[%s5 + $0x264] sm:$0xf]
        %v3930 = vld [vmem:[%s5 + $0x268] sm:$0xf]
        %v3931 = vld [vmem:[%s5 + $0x26c] sm:$0xf]
        %v3932 = vld [vmem:[%s5 + $0x270] sm:$0xf]
        %v3933 = vld [vmem:[%s5 + $0x274] sm:$0xf]
        %v3934 = vld [vmem:[%s5 + $0x278] sm:$0xf]
        %v3935 = vld [vmem:[%s5 + $0x27c] sm:$0xf]
        %v3936 = vld [vmem:[%s5 + $0x280] sm:$0xf]
        %v3937 = vld [vmem:[%s5 + $0x284] sm:$0xf]
        %v3938 = vld [vmem:[%s5 + $0x288] sm:$0xf]
        %v3939 = vld [vmem:[%s5 + $0x28c] sm:$0xf]
        %v3940 = vld [vmem:[%s5 + $0x290] sm:$0xf]
        %v3941 = vld [vmem:[%s5 + $0x294] sm:$0xf]
        %v3942 = vld [vmem:[%s5 + $0x298] sm:$0xf]
        %v3943 = vld [vmem:[%s5 + $0x29c] sm:$0xf]
        %v3944 = vld [vmem:[%s5 + $0x2a0] sm:$0xf]
        %v3945 = vld [vmem:[%s5 + $0x2a4] sm:$0xf]
        %v3946 = vld [vmem:[%s5 + $0x2a8] sm:$0xf]
        %v3947 = vld [vmem:[%s5 + $0x2ac] sm:$0xf]
        %v3948 = vld [vmem:[%s5 + $0x2b0] sm:$0xf]
        %v3949 = vld [vmem:[%s5 + $0x2b4] sm:$0xf]
        %v3950 = vld [vmem:[%s5 + $0x2b8] sm:$0xf]
        %v3951 = vld [vmem:[%s5 + $0x2bc] sm:$0xf]
        %v3952 = vld [vmem:[%s5 + $0x2c0] sm:$0xf]
        %v3953 = vld [vmem:[%s5 + $0x2c4] sm:$0xf]
        %v3954 = vld [vmem:[%s5 + $0x2c8] sm:$0xf]
        %v3955 = vld [vmem:[%s5 + $0x2cc] sm:$0xf]
        %v3956 = vld [vmem:[%s5 + $0x2d0] sm:$0xf]
        %v3957 = vld [vmem:[%s5 + $0x2d4] sm:$0xf]
        %v3958 = vld [vmem:[%s5 + $0x2d8] sm:$0xf]
        %v3959 = vld [vmem:[%s5 + $0x2dc] sm:$0xf]
        %v3960 = vld [vmem:[%s5 + $0x2e0] sm:$0xf]
        %v3961 = vld [vmem:[%s5 + $0x2e4] sm:$0xf]
        %v3962 = vld [vmem:[%s5 + $0x2e8] sm:$0xf]
        %v3963 = vld [vmem:[%s5 + $0x2ec] sm:$0xf]
        %v3964 = vld [vmem:[%s5 + $0x2f0] sm:$0xf]
        %v3965 = vld [vmem:[%s5 + $0x2f4] sm:$0xf]
        %v3966 = vld [vmem:[%s5 + $0x2f8] sm:$0xf]
        %v3967 = vld [vmem:[%s5 + $0x2fc] sm:$0xf]
        %v4032 = vunpack.c.l.b16 %v3904
        %v4033 = vunpack.c.l.b16 %v3905
        %v4034 = vunpack.c.l.b16 %v3906
        %v4035 = vunpack.c.l.b16 %v3907
        %v4036 = vunpack.c.l.b16 %v3908
        %v4037 = vunpack.c.l.b16 %v3909
        %v4038 = vunpack.c.l.b16 %v3910
        %v4039 = vunpack.c.l.b16 %v3911
        %v4040 = vunpack.c.l.b16 %v3912
        %v4041 = vunpack.c.l.b16 %v3913
        %v4042 = vunpack.c.l.b16 %v3914
        %v4043 = vunpack.c.l.b16 %v3915
        %v4044 = vunpack.c.l.b16 %v3916
        %v4045 = vunpack.c.l.b16 %v3917
        %v4046 = vunpack.c.l.b16 %v3918
        %v4047 = vunpack.c.l.b16 %v3919
        %v4048 = vunpack.c.l.b16 %v3920
        %v4049 = vunpack.c.l.b16 %v3921
        %v4050 = vunpack.c.l.b16 %v3922
        %v4051 = vunpack.c.l.b16 %v3923
        %v4052 = vunpack.c.l.b16 %v3924
        %v4053 = vunpack.c.l.b16 %v3925
        %v4054 = vunpack.c.l.b16 %v3926
        %v4055 = vunpack.c.l.b16 %v3927
        %v4056 = vunpack.c.l.b16 %v3928
        %v4057 = vunpack.c.l.b16 %v3929
        %v4058 = vunpack.c.l.b16 %v3930
        %v4059 = vunpack.c.l.b16 %v3931
        %v4060 = vunpack.c.l.b16 %v3932
        %v4061 = vunpack.c.l.b16 %v3933
        %v4062 = vunpack.c.l.b16 %v3934
        %v4063 = vunpack.c.l.b16 %v3935
        %v4064 = vunpack.c.l.b16 %v3936
        %v4065 = vunpack.c.l.b16 %v3937
        %v4066 = vunpack.c.l.b16 %v3938
        %v4067 = vunpack.c.l.b16 %v3939
        %v4068 = vunpack.c.l.b16 %v3940
        %v4069 = vunpack.c.l.b16 %v3941
        %v4070 = vunpack.c.l.b16 %v3942
        %v4071 = vunpack.c.l.b16 %v3943
        %v4072 = vunpack.c.l.b16 %v3944
        %v4073 = vunpack.c.l.b16 %v3945
        %v4074 = vunpack.c.l.b16 %v3946
        %v4075 = vunpack.c.l.b16 %v3947
        %v4076 = vunpack.c.l.b16 %v3948
        %v4077 = vunpack.c.l.b16 %v3949
        %v4078 = vunpack.c.l.b16 %v3950
        %v4079 = vunpack.c.l.b16 %v3951
        %v4080 = vunpack.c.l.b16 %v3952
        %v4081 = vunpack.c.l.b16 %v3953
        %v4082 = vunpack.c.l.b16 %v3954
        %v4083 = vunpack.c.l.b16 %v3955
        %v4084 = vunpack.c.l.b16 %v3956
        %v4085 = vunpack.c.l.b16 %v3957
        %v4086 = vunpack.c.l.b16 %v3958
        %v4087 = vunpack.c.l.b16 %v3959
        %v4088 = vunpack.c.l.b16 %v3960
        %v4089 = vunpack.c.l.b16 %v3961
        %v4090 = vunpack.c.l.b16 %v3962
        %v4091 = vunpack.c.l.b16 %v3963
        %v4092 = vunpack.c.l.b16 %v3964
        %v4093 = vunpack.c.l.b16 %v3965
        %v4094 = vunpack.c.l.b16 %v3966
        %v4095 = vunpack.c.l.b16 %v3967
        %v4096 = vpack.c.b16 %v4033, %v4032
        %v4097 = vpack.c.b16 %v4035, %v4034
        %v4098 = vpack.c.b16 %v4037, %v4036
        %v4099 = vpack.c.b16 %v4039, %v4038
        %v4100 = vpack.c.b16 %v4041, %v4040
        %v4101 = vpack.c.b16 %v4043, %v4042
        %v4102 = vpack.c.b16 %v4045, %v4044
        %v4103 = vpack.c.b16 %v4047, %v4046
        %v4104 = vpack.c.b16 %v4049, %v4048
        %v4105 = vpack.c.b16 %v4051, %v4050
        %v4106 = vpack.c.b16 %v4053, %v4052
        %v4107 = vpack.c.b16 %v4055, %v4054
        %v4108 = vpack.c.b16 %v4057, %v4056
        %v4109 = vpack.c.b16 %v4059, %v4058
        %v4110 = vpack.c.b16 %v4061, %v4060
        %v4111 = vpack.c.b16 %v4063, %v4062
        %v4112 = vpack.c.b16 %v4065, %v4064
        %v4113 = vpack.c.b16 %v4067, %v4066
        %v4114 = vpack.c.b16 %v4069, %v4068
        %v4115 = vpack.c.b16 %v4071, %v4070
        %v4116 = vpack.c.b16 %v4073, %v4072
        %v4117 = vpack.c.b16 %v4075, %v4074
        %v4118 = vpack.c.b16 %v4077, %v4076
        %v4119 = vpack.c.b16 %v4079, %v4078
        %v4120 = vpack.c.b16 %v4081, %v4080
        %v4121 = vpack.c.b16 %v4083, %v4082
        %v4122 = vpack.c.b16 %v4085, %v4084
        %v4123 = vpack.c.b16 %v4087, %v4086
        %v4124 = vpack.c.b16 %v4089, %v4088
        %v4125 = vpack.c.b16 %v4091, %v4090
        %v4126 = vpack.c.b16 %v4093, %v4092
        %v4127 = vpack.c.b16 %v4095, %v4094
        %4160 = vmatprep.subr.bf16.mxu0 0
        %4161 = vmatpush1.bf16.msra.mxu0 %v4096
        %4162 = vmatprep.subr.bf16.mxu0 0
        %4163 = vmatpush1.bf16.msra.mxu0 %v4097
        %4164 = vmatprep.subr.bf16.mxu0 0
        %4165 = vmatpush1.bf16.msra.mxu0 %v4098
        %4166 = vmatprep.subr.bf16.mxu0 0
        %4167 = vmatpush1.bf16.msra.mxu0 %v4099
        %4168 = vmatprep.subr.bf16.mxu0 0
        %4169 = vmatpush1.bf16.msra.mxu0 %v4100
        %4170 = vmatprep.subr.bf16.mxu0 0
        %4171 = vmatpush1.bf16.msra.mxu0 %v4101
        %4172 = vmatprep.subr.bf16.mxu0 0
        %4173 = vmatpush1.bf16.msra.mxu0 %v4102
        %4174 = vmatprep.subr.bf16.mxu0 0
        %4175 = vmatpush1.bf16.msra.mxu0 %v4103
        %4176 = vmatprep.subr.bf16.mxu0 0
        %4177 = vmatpush1.bf16.msra.mxu0 %v4104
        %4178 = vmatprep.subr.bf16.mxu0 0
        %4179 = vmatpush1.bf16.msra.mxu0 %v4105
        %4180 = vmatprep.subr.bf16.mxu0 0
        %4181 = vmatpush1.bf16.msra.mxu0 %v4106
        %4182 = vmatprep.subr.bf16.mxu0 0
        %4183 = vmatpush1.bf16.msra.mxu0 %v4107
        %4184 = vmatprep.subr.bf16.mxu0 0
        %4185 = vmatpush1.bf16.msra.mxu0 %v4108
        %4186 = vmatprep.subr.bf16.mxu0 0
        %4187 = vmatpush1.bf16.msra.mxu0 %v4109
        %4188 = vmatprep.subr.bf16.mxu0 0
        %4189 = vmatpush1.bf16.msra.mxu0 %v4110
        %4190 = vmatprep.subr.bf16.mxu0 0
        %4191 = vmatpush1.bf16.msra.mxu0 %v4111
        %4192 = vmatprep.mubr.bf16.mxu0 %v3897
        %4193 = vmatmul.mubr.bf16.gmra.mrb[0].mxu0 %v3896
        %v4194 = vpop.f32.mrb[0].mxu0
        %v4195 = vadd.f32 0.0, %v4194
        %v4196 = vpop.f32.mrb[0].mxu0
        %v4197 = vpop.f32.mrb[0].mxu0
        %v4198 = vadd.f32 0.0, %v4197
        %v4199 = vpop.f32.mrb[0].mxu0
        %4200 = vmatprep.mubr.bf16.mxu0 %v3901
        %4201 = vmatmul.mubr.bf16.gmra.mrb[0].mxu0 %v3900
        %v4202 = vpop.f32.mrb[0].mxu0
        %v4203 = vadd.f32 0.0, %v4202
        %v4204 = vpop.f32.mrb[0].mxu0
        %v4205 = vpop.f32.mrb[0].mxu0
        %v4206 = vpop.f32.mrb[0].mxu0
        %4207 = vdwg.mxu0
        %4208 = vmatprep.subr.bf16.mxu0 0
        %4209 = vmatpush1.bf16.msra.mxu0 %v4112
        %4210 = vmatprep.subr.bf16.mxu0 0
        %4211 = vmatpush1.bf16.msra.mxu0 %v4113
        %4212 = vmatprep.subr.bf16.mxu0 0
        %4213 = vmatpush1.bf16.msra.mxu0 %v4114
        %4214 = vmatprep.subr.bf16.mxu0 0
        %4215 = vmatpush1.bf16.msra.mxu0 %v4115
        %4216 = vmatprep.subr.bf16.mxu0 0
        %4217 = vmatpush1.bf16.msra.mxu0 %v4116
        %4218 = vmatprep.subr.bf16.mxu0 0
        %4219 = vmatpush1.bf16.msra.mxu0 %v4117
        %4220 = vmatprep.subr.bf16.mxu0 0
        %4221 = vmatpush1.bf16.msra.mxu0 %v4118
        %4222 = vmatprep.subr.bf16.mxu0 0
        %4223 = vmatpush1.bf16.msra.mxu0 %v4119
        %4224 = vmatprep.subr.bf16.mxu0 0
        %4225 = vmatpush1.bf16.msra.mxu0 %v4120
        %4226 = vmatprep.subr.bf16.mxu0 0
        %4227 = vmatpush1.bf16.msra.mxu0 %v4121
        %4228 = vmatprep.subr.bf16.mxu0 0
        %4229 = vmatpush1.bf16.msra.mxu0 %v4122
        %4230 = vmatprep.subr.bf16.mxu0 0
        %4231 = vmatpush1.bf16.msra.mxu0 %v4123
        %4232 = vmatprep.subr.bf16.mxu0 0
        %4233 = vmatpush1.bf16.msra.mxu0 %v4124
        %4234 = vmatprep.subr.bf16.mxu0 0
        %4235 = vmatpush1.bf16.msra.mxu0 %v4125
        %4236 = vmatprep.subr.bf16.mxu0 0
        %4237 = vmatpush1.bf16.msra.mxu0 %v4126
        %4238 = vmatprep.subr.bf16.mxu0 0
        %4239 = vmatpush1.bf16.msra.mxu0 %v4127
        %4240 = vmatprep.mubr.bf16.mxu0 %v3899
        %4241 = vmatmul.mubr.bf16.gmra.mrb[0].mxu0 %v3898
        %v4242 = vpop.f32.mrb[0].mxu0
        %v4243 = vadd.f32 %v4195, %v4242
        %v4244 = vpop.f32.mrb[0].mxu0
        %v4245 = vpop.f32.mrb[0].mxu0
        %v4246 = vadd.f32 %v4198, %v4245
        %v4247 = vpop.f32.mrb[0].mxu0
        %4248 = vmatprep.mubr.bf16.mxu0 %v3903
        %4249 = vmatmul.mubr.bf16.gmra.mrb[0].mxu0 %v3902
        %v4250 = vpop.f32.mrb[0].mxu0
        %v4251 = vadd.f32 %v4203, %v4250
        %v4252 = vpop.f32.mrb[0].mxu0
        %v4253 = vpop.f32.mrb[0].mxu0
        %v4254 = vpop.f32.mrb[0].mxu0
        %4255 = vdwg.mxu0
        %v4256 = vadd.f32 %v3698, %v4243
        %v4257 = vadd.f32 %v3701, %v4246
        %v4258 = vadd.f32 %v3706, %v4251
        %v4259 = vld [vmem:[%s4 + $0x30] sm:$0xff]
        %v4260 = vld [vmem:[%s4 + $0x38] sm:$0xff]
        %v4261 = vld [vmem:[%s4 + $0x70] sm:$0xff]
        %v4262 = vld [vmem:[%s4 + $0x78] sm:$0xff]
        %v4263 = vld [vmem:[%s4 + $0xb0] sm:$0xff]
        %v4264 = vld [vmem:[%s4 + $0xb8] sm:$0xff]
        %v4265 = vld [vmem:[%s4 + $0xf0] sm:$0xff]
        %v4266 = vld [vmem:[%s4 + $0xf8] sm:$0xff]
        %s4267 = scalar_lea.vmem %s3, 24
        %v4268 = vld [vmem:[%s4267] ss:$2 sm:$0xf]
        %v4270 = vlaneseq
        %v4271 = vshrl.u32 %v4270, 7
        %v4272 = vsub.s32 0, %v4271
        %v4273 = vrot.slane %v4268, %v4272
        %v4274 = vlaneseq
        %v4275 = vshrl.u32 %v4274, 7
        %v4276 = vsub.s32 1, %v4275
        %v4277 = vrot.slane %v4268, %v4276
        %v4278 = vlaneseq
        %v4279 = vshrl.u32 %v4278, 7
        %v4280 = vsub.s32 2, %v4279
        %v4281 = vrot.slane %v4268, %v4280
        %v4282 = vlaneseq
        %v4283 = vshrl.u32 %v4282, 7
        %v4284 = vsub.s32 3, %v4283
        %v4285 = vrot.slane %v4268, %v4284
        %v4298 = vunpack.c.l.b16 %v4259
        %v4299 = vunpack.c.h.b16 %v4259
        %v4300 = vunpack.c.l.b16 %v4260
        %v4301 = vunpack.c.h.b16 %v4260
        %v4302 = vunpack.c.l.b16 %v4261
        %v4303 = vunpack.c.h.b16 %v4261
        %v4304 = vunpack.c.l.b16 %v4262
        %v4305 = vunpack.c.h.b16 %v4262
        %v4306 = vunpack.c.l.b16 %v4263
        %v4307 = vunpack.c.h.b16 %v4263
        %v4308 = vunpack.c.l.b16 %v4264
        %v4309 = vunpack.c.h.b16 %v4264
        %v4310 = vunpack.c.l.b16 %v4265
        %v4311 = vunpack.c.h.b16 %v4265
        %v4312 = vunpack.c.l.b16 %v4266
        %v4313 = vunpack.c.h.b16 %v4266
        %v4314 = vpack.c.b16 %v4302, %v4298
        %v4315 = vpack.c.b16 %v4303, %v4299
        %v4316 = vpack.c.b16 %v4304, %v4300
        %v4317 = vpack.c.b16 %v4305, %v4301
        %v4318 = vpack.c.b16 %v4310, %v4306
        %v4319 = vpack.c.b16 %v4311, %v4307
        %v4320 = vpack.c.b16 %v4312, %v4308
        %v4321 = vpack.c.b16 %v4313, %v4309
        %4330 = vmatprep.subr.bf16.mxu0 %v4315
        %4331 = vmatpush1.bf16.msra.mxu0 %v4314
        %4332 = vmatprep.subr.bf16.mxu0 %v4319
        %4333 = vmatpush1.bf16.msra.mxu0 %v4318
        %4334 = vmatprep.subr.bf16.mxu0 0
        %4335 = vmatpush1.bf16.msra.mxu0 0
        %4336 = vmatprep.subr.bf16.mxu0 0
        %4337 = vmatpush1.bf16.msra.mxu0 0
        %4338 = vmatprep.subr.bf16.mxu0 0
        %4339 = vmatpush1.bf16.msra.mxu0 0
        %4340 = vmatprep.subr.bf16.mxu0 0
        %4341 = vmatpush1.bf16.msra.mxu0 0
        %4342 = vmatprep.subr.bf16.mxu0 0
        %4343 = vmatpush1.bf16.msra.mxu0 0
        %4344 = vmatprep.subr.bf16.mxu0 0
        %4345 = vmatpush1.bf16.msra.mxu0 0
        %4346 = vmatprep.subr.bf16.mxu0 0
        %4347 = vmatpush1.bf16.msra.mxu0 0
        %4348 = vmatprep.subr.bf16.mxu0 0
        %4349 = vmatpush1.bf16.msra.mxu0 0
        %4350 = vmatprep.subr.bf16.mxu0 0
        %4351 = vmatpush1.bf16.msra.mxu0 0
        %4352 = vmatprep.subr.bf16.mxu0 0
        %4353 = vmatpush1.bf16.msra.mxu0 0
        %4354 = vmatprep.subr.bf16.mxu0 0
        %4355 = vmatpush1.bf16.msra.mxu0 0
        %4356 = vmatprep.subr.bf16.mxu0 0
        %4357 = vmatpush1.bf16.msra.mxu0 0
        %4358 = vmatprep.subr.bf16.mxu0 0
        %4359 = vmatpush1.bf16.msra.mxu0 0
        %4360 = vmatprep.subr.bf16.mxu0 0
        %4361 = vmatpush1.bf16.msra.mxu0 0
        %4362 = vmatprep.mubr.bf16.mxu0 0
        %4363 = vmatmul.mubr.bf16.gmra.mrb[0].mxu0 %v2687
        %v4364 = vpop.f32.mrb[0].mxu0
        %v4365 = vadd.f32 %v4273, %v4364
        %v4366 = vpop.f32.mrb[0].mxu0
        %v4367 = vadd.f32 %v4277, %v4366
        %v4368 = vpop.f32.mrb[0].mxu0
        %v4369 = vadd.f32 %v4273, %v4368
        %v4370 = vpop.f32.mrb[0].mxu0
        %v4371 = vadd.f32 %v4277, %v4370
        %4372 = vmatprep.mubr.bf16.mxu0 0
        %4373 = vmatmul.mubr.bf16.gmra.mrb[0].mxu0 %v2690
        %v4374 = vpop.f32.mrb[0].mxu0
        %v4375 = vadd.f32 %v4273, %v4374
        %v4376 = vpop.f32.mrb[0].mxu0
        %v4377 = vadd.f32 %v4277, %v4376
        %v4378 = vpop.f32.mrb[0].mxu0
        %v4379 = vpop.f32.mrb[0].mxu0
        %4380 = vdwg.mxu0
        %4381 = vmatprep.subr.bf16.mxu0 %v4317
        %4382 = vmatpush1.bf16.msra.mxu0 %v4316
        %4383 = vmatprep.subr.bf16.mxu0 %v4321
        %4384 = vmatpush1.bf16.msra.mxu0 %v4320
        %4385 = vmatprep.subr.bf16.mxu0 0
        %4386 = vmatpush1.bf16.msra.mxu0 0
        %4387 = vmatprep.subr.bf16.mxu0 0
        %4388 = vmatpush1.bf16.msra.mxu0 0
        %4389 = vmatprep.subr.bf16.mxu0 0
        %4390 = vmatpush1.bf16.msra.mxu0 0
        %4391 = vmatprep.subr.bf16.mxu0 0
        %4392 = vmatpush1.bf16.msra.mxu0 0
        %4393 = vmatprep.subr.bf16.mxu0 0
        %4394 = vmatpush1.bf16.msra.mxu0 0
        %4395 = vmatprep.subr.bf16.mxu0 0
        %4396 = vmatpush1.bf16.msra.mxu0 0
        %4397 = vmatprep.subr.bf16.mxu0 0
        %4398 = vmatpush1.bf16.msra.mxu0 0
        %4399 = vmatprep.subr.bf16.mxu0 0
        %4400 = vmatpush1.bf16.msra.mxu0 0
        %4401 = vmatprep.subr.bf16.mxu0 0
        %4402 = vmatpush1.bf16.msra.mxu0 0
        %4403 = vmatprep.subr.bf16.mxu0 0
        %4404 = vmatpush1.bf16.msra.mxu0 0
        %4405 = vmatprep.subr.bf16.mxu0 0
        %4406 = vmatpush1.bf16.msra.mxu0 0
        %4407 = vmatprep.subr.bf16.mxu0 0
        %4408 = vmatpush1.bf16.msra.mxu0 0
        %4409 = vmatprep.subr.bf16.mxu0 0
        %4410 = vmatpush1.bf16.msra.mxu0 0
        %4411 = vmatprep.subr.bf16.mxu0 0
        %4412 = vmatpush1.bf16.msra.mxu0 0
        %4413 = vmatprep.mubr.bf16.mxu0 0
        %4414 = vmatmul.mubr.bf16.gmra.mrb[0].mxu0 %v2687
        %v4415 = vpop.f32.mrb[0].mxu0
        %v4416 = vadd.f32 %v4281, %v4415
        %v4417 = vpop.f32.mrb[0].mxu0
        %v4418 = vadd.f32 %v4285, %v4417
        %v4419 = vpop.f32.mrb[0].mxu0
        %v4420 = vadd.f32 %v4281, %v4419
        %v4421 = vpop.f32.mrb[0].mxu0
        %v4422 = vadd.f32 %v4285, %v4421
        %4423 = vmatprep.mubr.bf16.mxu0 0
        %4424 = vmatmul.mubr.bf16.gmra.mrb[0].mxu0 %v2690
        %v4425 = vpop.f32.mrb[0].mxu0
        %v4426 = vadd.f32 %v4281, %v4425
        %v4427 = vpop.f32.mrb[0].mxu0
        %v4428 = vadd.f32 %v4285, %v4427
        %v4429 = vpop.f32.mrb[0].mxu0
        %v4430 = vpop.f32.mrb[0].mxu0
        %4431 = vdwg.mxu0
        %v4432 = vmax.f32 %v4365, 0.0
        %v4433 = vmax.f32 %v4367, 0.0
        %v4434 = vmax.f32 %v4416, 0.0
        %v4435 = vmax.f32 %v4418, 0.0
        %v4436 = vmax.f32 %v4369, 0.0
        %v4437 = vmax.f32 %v4371, 0.0
        %v4438 = vmax.f32 %v4420, 0.0
        %v4439 = vmax.f32 %v4422, 0.0
        %v4440 = vmax.f32 %v4375, 0.0
        %v4441 = vmax.f32 %v4377, 0.0
        %v4442 = vmax.f32 %v4426, 0.0
        %v4443 = vmax.f32 %v4428, 0.0
        %v4444 = vpack.c.bf16 %v4436, %v4432
        %v4445 = vpack.c.bf16 %v4437, %v4433
        %v4446 = vpack.c.bf16 %v4438, %v4434
        %v4447 = vpack.c.bf16 %v4439, %v4435
        %v4448 = vpack.c.bf16 %v4440, %v4440
        %v4449 = vpack.c.bf16 %v4441, %v4441
        %v4450 = vpack.c.bf16 %v4442, %v4442
        %v4451 = vpack.c.bf16 %v4443, %v4443
        %v4452 = vld [vmem:[%s5 + $0x300] sm:$0xf]
        %v4453 = vld [vmem:[%s5 + $0x304] sm:$0xf]
        %v4454 = vld [vmem:[%s5 + $0x308] sm:$0xf]
        %v4455 = vld [vmem:[%s5 + $0x30c] sm:$0xf]
        %v4456 = vld [vmem:[%s5 + $0x310] sm:$0xf]
        %v4457 = vld [vmem:[%s5 + $0x314] sm:$0xf]
        %v4458 = vld [vmem:[%s5 + $0x318] sm:$0xf]
        %v4459 = vld [vmem:[%s5 + $0x31c] sm:$0xf]
        %v4460 = vld [vmem:[%s5 + $0x320] sm:$0xf]
        %v4461 = vld [vmem:[%s5 + $0x324] sm:$0xf]
        %v4462 = vld [vmem:[%s5 + $0x328] sm:$0xf]
        %v4463 = vld [vmem:[%s5 + $0x32c] sm:$0xf]
        %v4464 = vld [vmem:[%s5 + $0x330] sm:$0xf]
        %v4465 = vld [vmem:[%s5 + $0x334] sm:$0xf]
        %v4466 = vld [vmem:[%s5 + $0x338] sm:$0xf]
        %v4467 = vld [vmem:[%s5 + $0x33c] sm:$0xf]
        %v4468 = vld [vmem:[%s5 + $0x340] sm:$0xf]
        %v4469 = vld [vmem:[%s5 + $0x344] sm:$0xf]
        %v4470 = vld [vmem:[%s5 + $0x348] sm:$0xf]
        %v4471 = vld [vmem:[%s5 + $0x34c] sm:$0xf]
        %v4472 = vld [vmem:[%s5 + $0x350] sm:$0xf]
        %v4473 = vld [vmem:[%s5 + $0x354] sm:$0xf]
        %v4474 = vld [vmem:[%s5 + $0x358] sm:$0xf]
        %v4475 = vld [vmem:[%s5 + $0x35c] sm:$0xf]
        %v4476 = vld [vmem:[%s5 + $0x360] sm:$0xf]
        %v4477 = vld [vmem:[%s5 + $0x364] sm:$0xf]
        %v4478 = vld [vmem:[%s5 + $0x368] sm:$0xf]
        %v4479 = vld [vmem:[%s5 + $0x36c] sm:$0xf]
        %v4480 = vld [vmem:[%s5 + $0x370] sm:$0xf]
        %v4481 = vld [vmem:[%s5 + $0x374] sm:$0xf]
        %v4482 = vld [vmem:[%s5 + $0x378] sm:$0xf]
        %v4483 = vld [vmem:[%s5 + $0x37c] sm:$0xf]
        %v4484 = vld [vmem:[%s5 + $0x380] sm:$0xf]
        %v4485 = vld [vmem:[%s5 + $0x384] sm:$0xf]
        %v4486 = vld [vmem:[%s5 + $0x388] sm:$0xf]
        %v4487 = vld [vmem:[%s5 + $0x38c] sm:$0xf]
        %v4488 = vld [vmem:[%s5 + $0x390] sm:$0xf]
        %v4489 = vld [vmem:[%s5 + $0x394] sm:$0xf]
        %v4490 = vld [vmem:[%s5 + $0x398] sm:$0xf]
        %v4491 = vld [vmem:[%s5 + $0x39c] sm:$0xf]
        %v4492 = vld [vmem:[%s5 + $0x3a0] sm:$0xf]
        %v4493 = vld [vmem:[%s5 + $0x3a4] sm:$0xf]
        %v4494 = vld [vmem:[%s5 + $0x3a8] sm:$0xf]
        %v4495 = vld [vmem:[%s5 + $0x3ac] sm:$0xf]
        %v4496 = vld [vmem:[%s5 + $0x3b0] sm:$0xf]
        %v4497 = vld [vmem:[%s5 + $0x3b4] sm:$0xf]
        %v4498 = vld [vmem:[%s5 + $0x3b8] sm:$0xf]
        %v4499 = vld [vmem:[%s5 + $0x3bc] sm:$0xf]
        %v4500 = vld [vmem:[%s5 + $0x3c0] sm:$0xf]
        %v4501 = vld [vmem:[%s5 + $0x3c4] sm:$0xf]
        %v4502 = vld [vmem:[%s5 + $0x3c8] sm:$0xf]
        %v4503 = vld [vmem:[%s5 + $0x3cc] sm:$0xf]
        %v4504 = vld [vmem:[%s5 + $0x3d0] sm:$0xf]
        %v4505 = vld [vmem:[%s5 + $0x3d4] sm:$0xf]
        %v4506 = vld [vmem:[%s5 + $0x3d8] sm:$0xf]
        %v4507 = vld [vmem:[%s5 + $0x3dc] sm:$0xf]
        %v4508 = vld [vmem:[%s5 + $0x3e0] sm:$0xf]
        %v4509 = vld [vmem:[%s5 + $0x3e4] sm:$0xf]
        %v4510 = vld [vmem:[%s5 + $0x3e8] sm:$0xf]
        %v4511 = vld [vmem:[%s5 + $0x3ec] sm:$0xf]
        %v4512 = vld [vmem:[%s5 + $0x3f0] sm:$0xf]
        %v4513 = vld [vmem:[%s5 + $0x3f4] sm:$0xf]
        %v4514 = vld [vmem:[%s5 + $0x3f8] sm:$0xf]
        %v4515 = vld [vmem:[%s5 + $0x3fc] sm:$0xf]
        %v4580 = vunpack.c.l.b16 %v4452
        %v4581 = vunpack.c.l.b16 %v4453
        %v4582 = vunpack.c.l.b16 %v4454
        %v4583 = vunpack.c.l.b16 %v4455
        %v4584 = vunpack.c.l.b16 %v4456
        %v4585 = vunpack.c.l.b16 %v4457
        %v4586 = vunpack.c.l.b16 %v4458
        %v4587 = vunpack.c.l.b16 %v4459
        %v4588 = vunpack.c.l.b16 %v4460
        %v4589 = vunpack.c.l.b16 %v4461
        %v4590 = vunpack.c.l.b16 %v4462
        %v4591 = vunpack.c.l.b16 %v4463
        %v4592 = vunpack.c.l.b16 %v4464
        %v4593 = vunpack.c.l.b16 %v4465
        %v4594 = vunpack.c.l.b16 %v4466
        %v4595 = vunpack.c.l.b16 %v4467
        %v4596 = vunpack.c.l.b16 %v4468
        %v4597 = vunpack.c.l.b16 %v4469
        %v4598 = vunpack.c.l.b16 %v4470
        %v4599 = vunpack.c.l.b16 %v4471
        %v4600 = vunpack.c.l.b16 %v4472
        %v4601 = vunpack.c.l.b16 %v4473
        %v4602 = vunpack.c.l.b16 %v4474
        %v4603 = vunpack.c.l.b16 %v4475
        %v4604 = vunpack.c.l.b16 %v4476
        %v4605 = vunpack.c.l.b16 %v4477
        %v4606 = vunpack.c.l.b16 %v4478
        %v4607 = vunpack.c.l.b16 %v4479
        %v4608 = vunpack.c.l.b16 %v4480
        %v4609 = vunpack.c.l.b16 %v4481
        %v4610 = vunpack.c.l.b16 %v4482
        %v4611 = vunpack.c.l.b16 %v4483
        %v4612 = vunpack.c.l.b16 %v4484
        %v4613 = vunpack.c.l.b16 %v4485
        %v4614 = vunpack.c.l.b16 %v4486
        %v4615 = vunpack.c.l.b16 %v4487
        %v4616 = vunpack.c.l.b16 %v4488
        %v4617 = vunpack.c.l.b16 %v4489
        %v4618 = vunpack.c.l.b16 %v4490
        %v4619 = vunpack.c.l.b16 %v4491
        %v4620 = vunpack.c.l.b16 %v4492
        %v4621 = vunpack.c.l.b16 %v4493
        %v4622 = vunpack.c.l.b16 %v4494
        %v4623 = vunpack.c.l.b16 %v4495
        %v4624 = vunpack.c.l.b16 %v4496
        %v4625 = vunpack.c.l.b16 %v4497
        %v4626 = vunpack.c.l.b16 %v4498
        %v4627 = vunpack.c.l.b16 %v4499
        %v4628 = vunpack.c.l.b16 %v4500
        %v4629 = vunpack.c.l.b16 %v4501
        %v4630 = vunpack.c.l.b16 %v4502
        %v4631 = vunpack.c.l.b16 %v4503
        %v4632 = vunpack.c.l.b16 %v4504
        %v4633 = vunpack.c.l.b16 %v4505
        %v4634 = vunpack.c.l.b16 %v4506
        %v4635 = vunpack.c.l.b16 %v4507
        %v4636 = vunpack.c.l.b16 %v4508
        %v4637 = vunpack.c.l.b16 %v4509
        %v4638 = vunpack.c.l.b16 %v4510
        %v4639 = vunpack.c.l.b16 %v4511
        %v4640 = vunpack.c.l.b16 %v4512
        %v4641 = vunpack.c.l.b16 %v4513
        %v4642 = vunpack.c.l.b16 %v4514
        %v4643 = vunpack.c.l.b16 %v4515
        %v4644 = vpack.c.b16 %v4581, %v4580
        %v4645 = vpack.c.b16 %v4583, %v4582
        %v4646 = vpack.c.b16 %v4585, %v4584
        %v4647 = vpack.c.b16 %v4587, %v4586
        %v4648 = vpack.c.b16 %v4589, %v4588
        %v4649 = vpack.c.b16 %v4591, %v4590
        %v4650 = vpack.c.b16 %v4593, %v4592
        %v4651 = vpack.c.b16 %v4595, %v4594
        %v4652 = vpack.c.b16 %v4597, %v4596
        %v4653 = vpack.c.b16 %v4599, %v4598
        %v4654 = vpack.c.b16 %v4601, %v4600
        %v4655 = vpack.c.b16 %v4603, %v4602
        %v4656 = vpack.c.b16 %v4605, %v4604
        %v4657 = vpack.c.b16 %v4607, %v4606
        %v4658 = vpack.c.b16 %v4609, %v4608
        %v4659 = vpack.c.b16 %v4611, %v4610
        %v4660 = vpack.c.b16 %v4613, %v4612
        %v4661 = vpack.c.b16 %v4615, %v4614
        %v4662 = vpack.c.b16 %v4617, %v4616
        %v4663 = vpack.c.b16 %v4619, %v4618
        %v4664 = vpack.c.b16 %v4621, %v4620
        %v4665 = vpack.c.b16 %v4623, %v4622
        %v4666 = vpack.c.b16 %v4625, %v4624
        %v4667 = vpack.c.b16 %v4627, %v4626
        %v4668 = vpack.c.b16 %v4629, %v4628
        %v4669 = vpack.c.b16 %v4631, %v4630
        %v4670 = vpack.c.b16 %v4633, %v4632
        %v4671 = vpack.c.b16 %v4635, %v4634
        %v4672 = vpack.c.b16 %v4637, %v4636
        %v4673 = vpack.c.b16 %v4639, %v4638
        %v4674 = vpack.c.b16 %v4641, %v4640
        %v4675 = vpack.c.b16 %v4643, %v4642
        %4708 = vmatprep.subr.bf16.mxu0 0
        %4709 = vmatpush1.bf16.msra.mxu0 %v4644
        %4710 = vmatprep.subr.bf16.mxu0 0
        %4711 = vmatpush1.bf16.msra.mxu0 %v4645
        %4712 = vmatprep.subr.bf16.mxu0 0
        %4713 = vmatpush1.bf16.msra.mxu0 %v4646
        %4714 = vmatprep.subr.bf16.mxu0 0
        %4715 = vmatpush1.bf16.msra.mxu0 %v4647
        %4716 = vmatprep.subr.bf16.mxu0 0
        %4717 = vmatpush1.bf16.msra.mxu0 %v4648
        %4718 = vmatprep.subr.bf16.mxu0 0
        %4719 = vmatpush1.bf16.msra.mxu0 %v4649
        %4720 = vmatprep.subr.bf16.mxu0 0
        %4721 = vmatpush1.bf16.msra.mxu0 %v4650
        %4722 = vmatprep.subr.bf16.mxu0 0
        %4723 = vmatpush1.bf16.msra.mxu0 %v4651
        %4724 = vmatprep.subr.bf16.mxu0 0
        %4725 = vmatpush1.bf16.msra.mxu0 %v4652
        %4726 = vmatprep.subr.bf16.mxu0 0
        %4727 = vmatpush1.bf16.msra.mxu0 %v4653
        %4728 = vmatprep.subr.bf16.mxu0 0
        %4729 = vmatpush1.bf16.msra.mxu0 %v4654
        %4730 = vmatprep.subr.bf16.mxu0 0
        %4731 = vmatpush1.bf16.msra.mxu0 %v4655
        %4732 = vmatprep.subr.bf16.mxu0 0
        %4733 = vmatpush1.bf16.msra.mxu0 %v4656
        %4734 = vmatprep.subr.bf16.mxu0 0
        %4735 = vmatpush1.bf16.msra.mxu0 %v4657
        %4736 = vmatprep.subr.bf16.mxu0 0
        %4737 = vmatpush1.bf16.msra.mxu0 %v4658
        %4738 = vmatprep.subr.bf16.mxu0 0
        %4739 = vmatpush1.bf16.msra.mxu0 %v4659
        %4740 = vmatprep.mubr.bf16.mxu0 %v4445
        %4741 = vmatmul.mubr.bf16.gmra.mrb[0].mxu0 %v4444
        %v4742 = vpop.f32.mrb[0].mxu0
        %v4743 = vadd.f32 0.0, %v4742
        %v4744 = vpop.f32.mrb[0].mxu0
        %v4745 = vpop.f32.mrb[0].mxu0
        %v4746 = vadd.f32 0.0, %v4745
        %v4747 = vpop.f32.mrb[0].mxu0
        %4748 = vmatprep.mubr.bf16.mxu0 %v4449
        %4749 = vmatmul.mubr.bf16.gmra.mrb[0].mxu0 %v4448
        %v4750 = vpop.f32.mrb[0].mxu0
        %v4751 = vadd.f32 0.0, %v4750
        %v4752 = vpop.f32.mrb[0].mxu0
        %v4753 = vpop.f32.mrb[0].mxu0
        %v4754 = vpop.f32.mrb[0].mxu0
        %4755 = vdwg.mxu0
        %4756 = vmatprep.subr.bf16.mxu0 0
        %4757 = vmatpush1.bf16.msra.mxu0 %v4660
        %4758 = vmatprep.subr.bf16.mxu0 0
        %4759 = vmatpush1.bf16.msra.mxu0 %v4661
        %4760 = vmatprep.subr.bf16.mxu0 0
        %4761 = vmatpush1.bf16.msra.mxu0 %v4662
        %4762 = vmatprep.subr.bf16.mxu0 0
        %4763 = vmatpush1.bf16.msra.mxu0 %v4663
        %4764 = vmatprep.subr.bf16.mxu0 0
        %4765 = vmatpush1.bf16.msra.mxu0 %v4664
        %4766 = vmatprep.subr.bf16.mxu0 0
        %4767 = vmatpush1.bf16.msra.mxu0 %v4665
        %4768 = vmatprep.subr.bf16.mxu0 0
        %4769 = vmatpush1.bf16.msra.mxu0 %v4666
        %4770 = vmatprep.subr.bf16.mxu0 0
        %4771 = vmatpush1.bf16.msra.mxu0 %v4667
        %4772 = vmatprep.subr.bf16.mxu0 0
        %4773 = vmatpush1.bf16.msra.mxu0 %v4668
        %4774 = vmatprep.subr.bf16.mxu0 0
        %4775 = vmatpush1.bf16.msra.mxu0 %v4669
        %4776 = vmatprep.subr.bf16.mxu0 0
        %4777 = vmatpush1.bf16.msra.mxu0 %v4670
        %4778 = vmatprep.subr.bf16.mxu0 0
        %4779 = vmatpush1.bf16.msra.mxu0 %v4671
        %4780 = vmatprep.subr.bf16.mxu0 0
        %4781 = vmatpush1.bf16.msra.mxu0 %v4672
        %4782 = vmatprep.subr.bf16.mxu0 0
        %4783 = vmatpush1.bf16.msra.mxu0 %v4673
        %4784 = vmatprep.subr.bf16.mxu0 0
        %4785 = vmatpush1.bf16.msra.mxu0 %v4674
        %4786 = vmatprep.subr.bf16.mxu0 0
        %4787 = vmatpush1.bf16.msra.mxu0 %v4675
        %4788 = vmatprep.mubr.bf16.mxu0 %v4447
        %4789 = vmatmul.mubr.bf16.gmra.mrb[0].mxu0 %v4446
        %v4790 = vpop.f32.mrb[0].mxu0
        %v4791 = vadd.f32 %v4743, %v4790
        %v4792 = vpop.f32.mrb[0].mxu0
        %v4793 = vpop.f32.mrb[0].mxu0
        %v4794 = vadd.f32 %v4746, %v4793
        %v4795 = vpop.f32.mrb[0].mxu0
        %4796 = vmatprep.mubr.bf16.mxu0 %v4451
        %4797 = vmatmul.mubr.bf16.gmra.mrb[0].mxu0 %v4450
        %v4798 = vpop.f32.mrb[0].mxu0
        %v4799 = vadd.f32 %v4751, %v4798
        %v4800 = vpop.f32.mrb[0].mxu0
        %v4801 = vpop.f32.mrb[0].mxu0
        %v4802 = vpop.f32.mrb[0].mxu0
        %4803 = vdwg.mxu0
        %v4804 = vadd.f32 %v4256, %v4791
        %v4805 = vadd.f32 %v4257, %v4794
        %v4806 = vadd.f32 %v4258, %v4799
        %v4807 = vadd.f32 %v2611, %v4804
        %v4808 = vadd.f32 %v2612, %v4805
        %v4809 = vadd.f32 %v2613, %v4806
        %v4810 = vld [vmem:[%s2 + $0x1cd] ss:$0 sm:$0xff]
        %v4811 = vadd.f32 %v4807, %v4810
        %v4812 = vadd.f32 %v4808, %v4810
        %v4813 = vadd.f32 %v4809, %v4810
        %v4814 = vld [vmem:[%s2 + $0x1cb] ss:$0 sm:$0xff]
        %v4815 = vld [vmem:[%s2 + $0x1cc] ss:$0 sm:$0xff]
        %v4816 = vsel %vm483, %v4811, 0.0
        %4817 = vadd.xlane.f32.xlu0 %v4816
        %v4818 = vpop.xlane.xlu0 %4817
        %v4819 = vsel %vm483, %v4812, 0.0
        %4820 = vadd.xlane.f32.xlu0 %v4819
        %v4821 = vpop.xlane.xlu0 %4820
        %v4822 = vsel %vm483, %v4813, 0.0
        %4823 = vadd.xlane.f32.xlu0 %v4822
        %v4824 = vpop.xlane.xlu0 %4823
        %v4825 = vmul.f32 %v4818, %v2577
        %v4826 = vmul.f32 %v4821, %v2577
        %v4827 = vmul.f32 %v4824, %v2577
        %v4828 = vsub.f32 %v4811, %v4825
        %v4829 = vsub.f32 %v4812, %v4826
        %v4830 = vsub.f32 %v4813, %v4827
        %v4831 = vmul.f32 %v4828, %v4828
        %v4832 = vmul.f32 %v4829, %v4829
        %v4833 = vmul.f32 %v4830, %v4830
        %v4834 = vsel %vm483, %v4831, 0.0
        %4835 = vadd.xlane.f32.xlu0 %v4834
        %v4836 = vpop.xlane.xlu0 %4835
        %v4837 = vsel %vm483, %v4832, 0.0
        %4838 = vadd.xlane.f32.xlu0 %v4837
        %v4839 = vpop.xlane.xlu0 %4838
        %v4840 = vsel %vm483, %v4833, 0.0
        %4841 = vadd.xlane.f32.xlu0 %v4840
        %v4842 = vpop.xlane.xlu0 %4841
        %v4843 = vmul.f32 %v4836, %v2577
        %v4844 = vmul.f32 %v4839, %v2577
        %v4845 = vmul.f32 %v4842, %v2577
        %v4846 = vadd.f32 %v4843, 1e-05
        %v4847 = vadd.f32 %v4844, 1e-05
        %v4848 = vadd.f32 %v4845, 1e-05
        %v4849 = vrsqrt.pop %v4846
        %v4850 = vrsqrt.pop %v4847
        %v4851 = vrsqrt.pop %v4848
        %v4852 = vmul.f32 %v4828, %v4849
        %v4853 = vmul.f32 %v4829, %v4850
        %v4854 = vmul.f32 %v4830, %v4851
        %v4855 = vmul.f32 %v4852, %v4814
        %v4856 = vmul.f32 %v4853, %v4814
        %v4857 = vmul.f32 %v4854, %v4814
        %v4858 = vadd.f32 %v4855, %v4815
        %v4859 = vadd.f32 %v4856, %v4815
        %v4860 = vadd.f32 %v4857, %v4815
        %v4861 = vld [vmem:[%s2 + $0x60] sm:$0xff]
        %v4862 = vld [vmem:[%s2 + $0x68] sm:$0xff]
        %v4863 = vld [vmem:[%s2 + $0x70] sm:$0xff]
        %v4864 = vld [vmem:[%s2 + $0x78] sm:$0xff]
        %v4865 = vld [vmem:[%s2 + $0x80] sm:$0xff]
        %v4866 = vld [vmem:[%s2 + $0x88] sm:$0xff]
        %v4867 = vld [vmem:[%s2 + $0x90] sm:$0xff]
        %v4868 = vld [vmem:[%s2 + $0x98] sm:$0xff]
        %v4869 = vld [vmem:[%s2 + $0xa0] sm:$0xff]
        %v4870 = vld [vmem:[%s2 + $0xa8] sm:$0xff]
        %v4871 = vld [vmem:[%s2 + $0xb0] sm:$0xff]
        %v4872 = vld [vmem:[%s2 + $0xb8] sm:$0xff]
        %v4874 = vsel %vm483, %v4858, 0
        %v4877 = vsel %vm483, %v4859, 0
        %v4880 = vsel %vm483, %v4860, 0
        %4882 = vmatprep.subr.mxu0 %v4862
        %4883 = vmatpush1.msra.mxu0 %v4861
        %4884 = vmatprep.subr.mxu0 %v4865
        %4885 = vmatpush1.msra.mxu0 %v4864
        %4886 = vmatprep.subr.mxu0 %v4868
        %4887 = vmatpush1.msra.mxu0 %v4867
        %4888 = vmatprep.subr.mxu0 %v4871
        %4889 = vmatpush1.msra.mxu0 %v4870
        %4890 = vmatprep.subr.mxu0 0.0
        %4891 = vmatpush1.msra.mxu0 0.0
        %4892 = vmatprep.subr.mxu0 0.0
        %4893 = vmatpush1.msra.mxu0 0.0
        %4894 = vmatprep.subr.mxu0 0.0
        %4895 = vmatpush1.msra.mxu0 0.0
        %4896 = vmatprep.subr.mxu0 0.0
        %4897 = vmatpush1.msra.mxu0 0.0
        %4898 = vmatprep.subr.mxu0 0.0
        %4899 = vmatpush1.msra.mxu0 0.0
        %4900 = vmatprep.subr.mxu0 0.0
        %4901 = vmatpush1.msra.mxu0 0.0
        %4902 = vmatprep.subr.mxu0 0.0
        %4903 = vmatpush1.msra.mxu0 0.0
        %4904 = vmatprep.subr.mxu0 0.0
        %4905 = vmatpush1.msra.mxu0 0.0
        %4906 = vmatprep.subr.mxu0 0.0
        %4907 = vmatpush1.msra.mxu0 0.0
        %4908 = vmatprep.subr.mxu0 0.0
        %4909 = vmatpush1.msra.mxu0 0.0
        %4910 = vmatprep.subr.mxu0 0.0
        %4911 = vmatpush1.msra.mxu0 0.0
        %4912 = vmatprep.subr.mxu0 0.0
        %4913 = vmatpush1.msra.mxu0 0.0
        %4914 = vmatprep.subr.mxu0 0.0
        %4915 = vmatpush1.msra.mxu0 0.0
        %4916 = vmatprep.subr.mxu0 0.0
        %4917 = vmatpush1.msra.mxu0 0.0
        %4918 = vmatprep.subr.mxu0 0.0
        %4919 = vmatpush1.msra.mxu0 0.0
        %4920 = vmatprep.subr.mxu0 0.0
        %4921 = vmatpush1.msra.mxu0 0.0
        %4922 = vmatprep.subr.mxu0 0.0
        %4923 = vmatpush1.msra.mxu0 0.0
        %4924 = vmatprep.subr.mxu0 0.0
        %4925 = vmatpush1.msra.mxu0 0.0
        %4926 = vmatprep.subr.mxu0 0.0
        %4927 = vmatpush1.msra.mxu0 0.0
        %4928 = vmatprep.subr.mxu0 0.0
        %4929 = vmatpush1.msra.mxu0 0.0
        %4930 = vmatprep.subr.mxu0 0.0
        %4931 = vmatpush1.msra.mxu0 0.0
        %4932 = vmatprep.subr.mxu0 0.0
        %4933 = vmatpush1.msra.mxu0 0.0
        %4934 = vmatprep.subr.mxu0 0.0
        %4935 = vmatpush1.msra.mxu0 0.0
        %4936 = vmatprep.subr.mxu0 0.0
        %4937 = vmatpush1.msra.mxu0 0.0
        %4938 = vmatprep.subr.mxu0 0.0
        %4939 = vmatpush1.msra.mxu0 0.0
        %4940 = vmatprep.subr.mxu0 0.0
        %4941 = vmatpush1.msra.mxu0 0.0
        %4942 = vmatprep.subr.mxu0 0.0
        %4943 = vmatpush1.msra.mxu0 0.0
        %4944 = vmatprep.subr.mxu0 0.0
        %4945 = vmatpush1.msra.mxu0 0.0
        %4946 = vmatprep.mubr.f32.mxu0 0.0
        %4947 = vmatmul.mubr.f32.gmra.mrb[0].mxu0 %v4874
        %v4948 = vpop.f32.mrb[0].mxu0
        %v4949 = vadd.f32 0.0, %v4948
        %v4950 = vpop.f32.mrb[0].mxu0
        %v4951 = vadd.f32 0.0, %v4950
        %4952 = vmatprep.mubr.f32.mxu0 0.0
        %4953 = vmatmul.mubr.f32.gmra.mrb[0].mxu0 %v4877
        %v4954 = vpop.f32.mrb[0].mxu0
        %v4955 = vadd.f32 0.0, %v4954
        %v4956 = vpop.f32.mrb[0].mxu0
        %v4957 = vadd.f32 0.0, %v4956
        %4958 = vmatprep.mubr.f32.mxu0 0.0
        %4959 = vmatmul.mubr.f32.gmra.mrb[0].mxu0 %v4880
        %v4960 = vpop.f32.mrb[0].mxu0
        %v4961 = vadd.f32 0.0, %v4960
        %v4962 = vpop.f32.mrb[0].mxu0
        %v4963 = vadd.f32 0.0, %v4962
        %4964 = vdwg.mxu0
        %4965 = vmatprep.subr.mxu0 0.0
        %4966 = vmatpush1.msra.mxu0 %v4863
        %4967 = vmatprep.subr.mxu0 0.0
        %4968 = vmatpush1.msra.mxu0 %v4866
        %4969 = vmatprep.subr.mxu0 0.0
        %4970 = vmatpush1.msra.mxu0 %v4869
        %4971 = vmatprep.subr.mxu0 0.0
        %4972 = vmatpush1.msra.mxu0 %v4872
        %4973 = vmatprep.subr.mxu0 0.0
        %4974 = vmatpush1.msra.mxu0 0.0
        %4975 = vmatprep.subr.mxu0 0.0
        %4976 = vmatpush1.msra.mxu0 0.0
        %4977 = vmatprep.subr.mxu0 0.0
        %4978 = vmatpush1.msra.mxu0 0.0
        %4979 = vmatprep.subr.mxu0 0.0
        %4980 = vmatpush1.msra.mxu0 0.0
        %4981 = vmatprep.subr.mxu0 0.0
        %4982 = vmatpush1.msra.mxu0 0.0
        %4983 = vmatprep.subr.mxu0 0.0
        %4984 = vmatpush1.msra.mxu0 0.0
        %4985 = vmatprep.subr.mxu0 0.0
        %4986 = vmatpush1.msra.mxu0 0.0
        %4987 = vmatprep.subr.mxu0 0.0
        %4988 = vmatpush1.msra.mxu0 0.0
        %4989 = vmatprep.subr.mxu0 0.0
        %4990 = vmatpush1.msra.mxu0 0.0
        %4991 = vmatprep.subr.mxu0 0.0
        %4992 = vmatpush1.msra.mxu0 0.0
        %4993 = vmatprep.subr.mxu0 0.0
        %4994 = vmatpush1.msra.mxu0 0.0
        %4995 = vmatprep.subr.mxu0 0.0
        %4996 = vmatpush1.msra.mxu0 0.0
        %4997 = vmatprep.subr.mxu0 0.0
        %4998 = vmatpush1.msra.mxu0 0.0
        %4999 = vmatprep.subr.mxu0 0.0
        %5000 = vmatpush1.msra.mxu0 0.0
        %5001 = vmatprep.subr.mxu0 0.0
        %5002 = vmatpush1.msra.mxu0 0.0
        %5003 = vmatprep.subr.mxu0 0.0
        %5004 = vmatpush1.msra.mxu0 0.0
        %5005 = vmatprep.subr.mxu0 0.0
        %5006 = vmatpush1.msra.mxu0 0.0
        %5007 = vmatprep.subr.mxu0 0.0
        %5008 = vmatpush1.msra.mxu0 0.0
        %5009 = vmatprep.subr.mxu0 0.0
        %5010 = vmatpush1.msra.mxu0 0.0
        %5011 = vmatprep.subr.mxu0 0.0
        %5012 = vmatpush1.msra.mxu0 0.0
        %5013 = vmatprep.subr.mxu0 0.0
        %5014 = vmatpush1.msra.mxu0 0.0
        %5015 = vmatprep.subr.mxu0 0.0
        %5016 = vmatpush1.msra.mxu0 0.0
        %5017 = vmatprep.subr.mxu0 0.0
        %5018 = vmatpush1.msra.mxu0 0.0
        %5019 = vmatprep.subr.mxu0 0.0
        %5020 = vmatpush1.msra.mxu0 0.0
        %5021 = vmatprep.subr.mxu0 0.0
        %5022 = vmatpush1.msra.mxu0 0.0
        %5023 = vmatprep.subr.mxu0 0.0
        %5024 = vmatpush1.msra.mxu0 0.0
        %5025 = vmatprep.subr.mxu0 0.0
        %5026 = vmatpush1.msra.mxu0 0.0
        %5027 = vmatprep.subr.mxu0 0.0
        %5028 = vmatpush1.msra.mxu0 0.0
        %5029 = vmatprep.mubr.f32.mxu0 0.0
        %5030 = vmatmul.mubr.f32.gmra.mrb[0].mxu0 %v4874
        %v5031 = vpop.f32.mrb[0].mxu0
        %v5032 = vadd.f32 0.0, %v5031
        %v5033 = vpop.f32.mrb[0].mxu0
        %5034 = vmatprep.mubr.f32.mxu0 0.0
        %5035 = vmatmul.mubr.f32.gmra.mrb[0].mxu0 %v4877
        %v5036 = vpop.f32.mrb[0].mxu0
        %v5037 = vadd.f32 0.0, %v5036
        %v5038 = vpop.f32.mrb[0].mxu0
        %5039 = vmatprep.mubr.f32.mxu0 0.0
        %5040 = vmatmul.mubr.f32.gmra.mrb[0].mxu0 %v4880
        %v5041 = vpop.f32.mrb[0].mxu0
        %v5042 = vadd.f32 0.0, %v5041
        %v5043 = vpop.f32.mrb[0].mxu0
        %5044 = vdwg.mxu0
        %v5045 = vld [vmem:[%s2 + $0x1ce] ss:$0 sm:$0xff]
        %v5046 = vadd.f32 %v4949, %v5045
        %v5047 = vadd.f32 %v4955, %v5045
        %v5048 = vadd.f32 %v4961, %v5045
        %v5049 = vld [vmem:[%s2 + $0x1cf] ss:$0 sm:$0xff]
        %5051 = vrot.lane.b32.xlu0 %v5049, 32
        %v5052 = vpop.permute.xlu0 %5051
        %v5054 = vadd.f32 %v4949, %v5052
        %v5055 = vadd.f32 %v4955, %v5052
        %v5056 = vadd.f32 %v4961, %v5052
        %5060 = vrot.lane.b32.xlu0 %v5054, 96
        %v5061 = vpop.permute.xlu0 %5060
        %5062 = vrot.lane.b32.xlu0 %v5055, 96
        %v5063 = vpop.permute.xlu0 %5062
        %5064 = vrot.lane.b32.xlu0 %v5056, 96
        %v5065 = vpop.permute.xlu0 %5064
        %v5067 = vsel %vm677, %v5046, 0
        %v5070 = vsel %vm677, %v5047, 0
        %v5073 = vsel %vm677, %v5048, 0
        %v5075 = vsel %vm677, %v5061, 0
        %v5077 = vsel %vm677, %v5063, 0
        %v5079 = vsel %vm677, %v5065, 0
        %5081 = vmatprep.subr.mxu0 0.0
        %5082 = vmatpush1.xpose.msra.mxu0 %v5075
        %5083 = vmatprep.subr.mxu0 0.0
        %5084 = vmatpush1.xpose.msra.mxu0 %v5077
        %5085 = vmatprep.subr.mxu0 0.0
        %5086 = vmatpush1.xpose.msra.mxu0 %v5079
        %5087 = vmatprep.subr.mxu0 0.0
        %5088 = vmatpush1.xpose.msra.mxu0 0.0
        %5089 = vmatprep.subr.mxu0 0.0
        %5090 = vmatpush1.xpose.msra.mxu0 0.0
        %5091 = vmatprep.subr.mxu0 0.0
        %5092 = vmatpush1.xpose.msra.mxu0 0.0
        %5093 = vmatprep.subr.mxu0 0.0
        %5094 = vmatpush1.xpose.msra.mxu0 0.0
        %5095 = vmatprep.subr.mxu0 0.0
        %5096 = vmatpush1.xpose.msra.mxu0 0.0
        %5097 = vmatprep.subr.mxu0 0.0
        %5098 = vmatpush1.xpose.msra.mxu0 0.0
        %5099 = vmatprep.subr.mxu0 0.0
        %5100 = vmatpush1.xpose.msra.mxu0 0.0
        %5101 = vmatprep.subr.mxu0 0.0
        %5102 = vmatpush1.xpose.msra.mxu0 0.0
        %5103 = vmatprep.subr.mxu0 0.0
        %5104 = vmatpush1.xpose.msra.mxu0 0.0
        %5105 = vmatprep.subr.mxu0 0.0
        %5106 = vmatpush1.xpose.msra.mxu0 0.0
        %5107 = vmatprep.subr.mxu0 0.0
        %5108 = vmatpush1.xpose.msra.mxu0 0.0
        %5109 = vmatprep.subr.mxu0 0.0
        %5110 = vmatpush1.xpose.msra.mxu0 0.0
        %5111 = vmatprep.subr.mxu0 0.0
        %5112 = vmatpush1.xpose.msra.mxu0 0.0
        %5113 = vmatprep.subr.mxu0 0.0
        %5114 = vmatpush1.xpose.msra.mxu0 0.0
        %5115 = vmatprep.subr.mxu0 0.0
        %5116 = vmatpush1.xpose.msra.mxu0 0.0
        %5117 = vmatprep.subr.mxu0 0.0
        %5118 = vmatpush1.xpose.msra.mxu0 0.0
        %5119 = vmatprep.subr.mxu0 0.0
        %5120 = vmatpush1.xpose.msra.mxu0 0.0
        %5121 = vmatprep.subr.mxu0 0.0
        %5122 = vmatpush1.xpose.msra.mxu0 0.0
        %5123 = vmatprep.subr.mxu0 0.0
        %5124 = vmatpush1.xpose.msra.mxu0 0.0
        %5125 = vmatprep.subr.mxu0 0.0
        %5126 = vmatpush1.xpose.msra.mxu0 0.0
        %5127 = vmatprep.subr.mxu0 0.0
        %5128 = vmatpush1.xpose.msra.mxu0 0.0
        %5129 = vmatprep.subr.mxu0 0.0
        %5130 = vmatpush1.xpose.msra.mxu0 0.0
        %5131 = vmatprep.subr.mxu0 0.0
        %5132 = vmatpush1.xpose.msra.mxu0 0.0
        %5133 = vmatprep.subr.mxu0 0.0
        %5134 = vmatpush1.xpose.msra.mxu0 0.0
        %5135 = vmatprep.subr.mxu0 0.0
        %5136 = vmatpush1.xpose.msra.mxu0 0.0
        %5137 = vmatprep.subr.mxu0 0.0
        %5138 = vmatpush1.xpose.msra.mxu0 0.0
        %5139 = vmatprep.subr.mxu0 0.0
        %5140 = vmatpush1.xpose.msra.mxu0 0.0
        %5141 = vmatprep.subr.mxu0 0.0
        %5142 = vmatpush1.xpose.msra.mxu0 0.0
        %5143 = vmatprep.subr.mxu0 0.0
        %5144 = vmatpush1.xpose.msra.mxu0 0.0
        %5145 = vmatprep.mubr.f32.mxu0 0.0
        %5146 = vmatmul.mubr.f32.gmra.mrb[0].mxu0 %v5067
        %v5147 = vpop.f32.mrb[0].mxu0
        %v5148 = vadd.f32 %v470, %v5147
        %v5149 = vpop.f32.mrb[0].mxu0
        %5150 = vmatprep.mubr.f32.mxu0 0.0
        %5151 = vmatmul.mubr.f32.gmra.mrb[0].mxu0 %v5070
        %v5152 = vpop.f32.mrb[0].mxu0
        %v5153 = vadd.f32 %v470, %v5152
        %v5154 = vpop.f32.mrb[0].mxu0
        %5155 = vmatprep.mubr.f32.mxu0 0.0
        %5156 = vmatmul.mubr.f32.gmra.mrb[0].mxu0 %v5073
        %v5157 = vpop.f32.mrb[0].mxu0
        %v5158 = vadd.f32 %v470, %v5157
        %v5159 = vpop.f32.mrb[0].mxu0
        %5160 = vdwg.mxu0
        %v5161 = vsel %vm773, %v5148, -inf
        %5162 = vmax.xlane.f32.xlu0 %v5161
        %v5163 = vpop.xlane.xlu0 %5162
        %v5164 = vsel %vm773, %v5153, -inf
        %5165 = vmax.xlane.f32.xlu0 %v5164
        %v5166 = vpop.xlane.xlu0 %5165
        %v5167 = vsel %vm773, %v5158, -inf
        %5168 = vmax.xlane.f32.xlu0 %v5167
        %v5169 = vpop.xlane.xlu0 %5168
        %v5170 = vsub.f32 %v5148, %v5163
        %v5171 = vsub.f32 %v5153, %v5166
        %v5172 = vsub.f32 %v5158, %v5169
        %v5173 = vmul.f32 %v5170, 1.442695
        %v5174 = vpow.pop %v5173
        %v5175 = vmul.f32 %v5171, 1.442695
        %v5176 = vpow.pop %v5175
        %v5177 = vmul.f32 %v5172, 1.442695
        %v5178 = vpow.pop %v5177
        %v5179 = vsel %vm773, %v5174, 0.0
        %5180 = vadd.xlane.f32.xlu0 %v5179
        %v5181 = vpop.xlane.xlu0 %5180
        %v5182 = vsel %vm773, %v5176, 0.0
        %5183 = vadd.xlane.f32.xlu0 %v5182
        %v5184 = vpop.xlane.xlu0 %5183
        %v5185 = vsel %vm773, %v5178, 0.0
        %5186 = vadd.xlane.f32.xlu0 %v5185
        %v5187 = vpop.xlane.xlu0 %5186
        %v5188 = vrcp.pop %v5181
        %v5189 = vmul.f32 %v5174, %v5188
        %v5190 = vrcp.pop %v5184
        %v5191 = vmul.f32 %v5176, %v5190
        %v5192 = vrcp.pop %v5187
        %v5193 = vmul.f32 %v5178, %v5192
        %5194 = vrot.lane.b32.xlu0 %v5046, 124
        %v5195 = vpop.permute.xlu0 %5194
        %5196 = vrot.lane.b32.xlu0 %v5047, 124
        %v5197 = vpop.permute.xlu0 %5196
        %5198 = vrot.lane.b32.xlu0 %v5048, 124
        %v5199 = vpop.permute.xlu0 %5198
        %5200 = vrot.lane.b32.xlu0 %v5054, 92
        %v5201 = vpop.permute.xlu0 %5200
        %5202 = vrot.lane.b32.xlu0 %v5055, 92
        %v5203 = vpop.permute.xlu0 %5202
        %5204 = vrot.lane.b32.xlu0 %v5056, 92
        %v5205 = vpop.permute.xlu0 %5204
        %v5206 = vsel %vm677, %v5195, 0
        %v5208 = vsel %vm677, %v5197, 0
        %v5210 = vsel %vm677, %v5199, 0
        %v5212 = vsel %vm677, %v5201, 0
        %v5214 = vsel %vm677, %v5203, 0
        %v5216 = vsel %vm677, %v5205, 0
        %5218 = vmatprep.subr.mxu0 0.0
        %5219 = vmatpush1.xpose.msra.mxu0 %v5212
        %5220 = vmatprep.subr.mxu0 0.0
        %5221 = vmatpush1.xpose.msra.mxu0 %v5214
        %5222 = vmatprep.subr.mxu0 0.0
        %5223 = vmatpush1.xpose.msra.mxu0 %v5216
        %5224 = vmatprep.subr.mxu0 0.0
        %5225 = vmatpush1.xpose.msra.mxu0 0.0
        %5226 = vmatprep.subr.mxu0 0.0
        %5227 = vmatpush1.xpose.msra.mxu0 0.0
        %5228 = vmatprep.subr.mxu0 0.0
        %5229 = vmatpush1.xpose.msra.mxu0 0.0
        %5230 = vmatprep.subr.mxu0 0.0
        %5231 = vmatpush1.xpose.msra.mxu0 0.0
        %5232 = vmatprep.subr.mxu0 0.0
        %5233 = vmatpush1.xpose.msra.mxu0 0.0
        %5234 = vmatprep.subr.mxu0 0.0
        %5235 = vmatpush1.xpose.msra.mxu0 0.0
        %5236 = vmatprep.subr.mxu0 0.0
        %5237 = vmatpush1.xpose.msra.mxu0 0.0
        %5238 = vmatprep.subr.mxu0 0.0
        %5239 = vmatpush1.xpose.msra.mxu0 0.0
        %5240 = vmatprep.subr.mxu0 0.0
        %5241 = vmatpush1.xpose.msra.mxu0 0.0
        %5242 = vmatprep.subr.mxu0 0.0
        %5243 = vmatpush1.xpose.msra.mxu0 0.0
        %5244 = vmatprep.subr.mxu0 0.0
        %5245 = vmatpush1.xpose.msra.mxu0 0.0
        %5246 = vmatprep.subr.mxu0 0.0
        %5247 = vmatpush1.xpose.msra.mxu0 0.0
        %5248 = vmatprep.subr.mxu0 0.0
        %5249 = vmatpush1.xpose.msra.mxu0 0.0
        %5250 = vmatprep.subr.mxu0 0.0
        %5251 = vmatpush1.xpose.msra.mxu0 0.0
        %5252 = vmatprep.subr.mxu0 0.0
        %5253 = vmatpush1.xpose.msra.mxu0 0.0
        %5254 = vmatprep.subr.mxu0 0.0
        %5255 = vmatpush1.xpose.msra.mxu0 0.0
        %5256 = vmatprep.subr.mxu0 0.0
        %5257 = vmatpush1.xpose.msra.mxu0 0.0
        %5258 = vmatprep.subr.mxu0 0.0
        %5259 = vmatpush1.xpose.msra.mxu0 0.0
        %5260 = vmatprep.subr.mxu0 0.0
        %5261 = vmatpush1.xpose.msra.mxu0 0.0
        %5262 = vmatprep.subr.mxu0 0.0
        %5263 = vmatpush1.xpose.msra.mxu0 0.0
        %5264 = vmatprep.subr.mxu0 0.0
        %5265 = vmatpush1.xpose.msra.mxu0 0.0
        %5266 = vmatprep.subr.mxu0 0.0
        %5267 = vmatpush1.xpose.msra.mxu0 0.0
        %5268 = vmatprep.subr.mxu0 0.0
        %5269 = vmatpush1.xpose.msra.mxu0 0.0
        %5270 = vmatprep.subr.mxu0 0.0
        %5271 = vmatpush1.xpose.msra.mxu0 0.0
        %5272 = vmatprep.subr.mxu0 0.0
        %5273 = vmatpush1.xpose.msra.mxu0 0.0
        %5274 = vmatprep.subr.mxu0 0.0
        %5275 = vmatpush1.xpose.msra.mxu0 0.0
        %5276 = vmatprep.subr.mxu0 0.0
        %5277 = vmatpush1.xpose.msra.mxu0 0.0
        %5278 = vmatprep.subr.mxu0 0.0
        %5279 = vmatpush1.xpose.msra.mxu0 0.0
        %5280 = vmatprep.subr.mxu0 0.0
        %5281 = vmatpush1.xpose.msra.mxu0 0.0
        %5282 = vmatprep.mubr.f32.mxu0 0.0
        %5283 = vmatmul.mubr.f32.gmra.mrb[0].mxu0 %v5206
        %v5284 = vpop.f32.mrb[0].mxu0
        %v5285 = vadd.f32 %v470, %v5284
        %v5286 = vpop.f32.mrb[0].mxu0
        %5287 = vmatprep.mubr.f32.mxu0 0.0
        %5288 = vmatmul.mubr.f32.gmra.mrb[0].mxu0 %v5208
        %v5289 = vpop.f32.mrb[0].mxu0
        %v5290 = vadd.f32 %v470, %v5289
        %v5291 = vpop.f32.mrb[0].mxu0
        %5292 = vmatprep.mubr.f32.mxu0 0.0
        %5293 = vmatmul.mubr.f32.gmra.mrb[0].mxu0 %v5210
        %v5294 = vpop.f32.mrb[0].mxu0
        %v5295 = vadd.f32 %v470, %v5294
        %v5296 = vpop.f32.mrb[0].mxu0
        %5297 = vdwg.mxu0
        %v5298 = vsel %vm773, %v5285, -inf
        %5299 = vmax.xlane.f32.xlu0 %v5298
        %v5300 = vpop.xlane.xlu0 %5299
        %v5301 = vsel %vm773, %v5290, -inf
        %5302 = vmax.xlane.f32.xlu0 %v5301
        %v5303 = vpop.xlane.xlu0 %5302
        %v5304 = vsel %vm773, %v5295, -inf
        %5305 = vmax.xlane.f32.xlu0 %v5304
        %v5306 = vpop.xlane.xlu0 %5305
        %v5307 = vsub.f32 %v5285, %v5300
        %v5308 = vsub.f32 %v5290, %v5303
        %v5309 = vsub.f32 %v5295, %v5306
        %v5310 = vmul.f32 %v5307, 1.442695
        %v5311 = vpow.pop %v5310
        %v5312 = vmul.f32 %v5308, 1.442695
        %v5313 = vpow.pop %v5312
        %v5314 = vmul.f32 %v5309, 1.442695
        %v5315 = vpow.pop %v5314
        %v5316 = vsel %vm773, %v5311, 0.0
        %5317 = vadd.xlane.f32.xlu0 %v5316
        %v5318 = vpop.xlane.xlu0 %5317
        %v5319 = vsel %vm773, %v5313, 0.0
        %5320 = vadd.xlane.f32.xlu0 %v5319
        %v5321 = vpop.xlane.xlu0 %5320
        %v5322 = vsel %vm773, %v5315, 0.0
        %5323 = vadd.xlane.f32.xlu0 %v5322
        %v5324 = vpop.xlane.xlu0 %5323
        %v5325 = vrcp.pop %v5318
        %v5326 = vmul.f32 %v5311, %v5325
        %v5327 = vrcp.pop %v5321
        %v5328 = vmul.f32 %v5313, %v5327
        %v5329 = vrcp.pop %v5324
        %v5330 = vmul.f32 %v5315, %v5329
        %5334 = vrot.lane.b32.xlu0 %v4949, 32
        %v5335 = vpop.permute.xlu0 %5334
        %5336 = vrot.lane.b32.xlu0 %v4955, 32
        %v5337 = vpop.permute.xlu0 %5336
        %5338 = vrot.lane.b32.xlu0 %v4961, 32
        %v5339 = vpop.permute.xlu0 %5338
        %v5344 = vsel %vm773, %v5326, 0
        %v5347 = vsel %vm773, %v5328, 0
        %v5350 = vsel %vm773, %v5330, 0
        %5352 = vmatprep.subr.mxu0 0.0
        %5353 = vmatpush1.msra.mxu0 %v5335
        %5354 = vmatprep.subr.mxu0 0.0
        %5355 = vmatpush1.msra.mxu0 %v5337
        %5356 = vmatprep.subr.mxu0 0.0
        %5357 = vmatpush1.msra.mxu0 %v5339
        %5358 = vmatprep.subr.mxu0 0.0
        %5359 = vmatpush1.msra.mxu0 0.0
        %5360 = vmatprep.subr.mxu0 0.0
        %5361 = vmatpush1.msra.mxu0 0.0
        %5362 = vmatprep.subr.mxu0 0.0
        %5363 = vmatpush1.msra.mxu0 0.0
        %5364 = vmatprep.subr.mxu0 0.0
        %5365 = vmatpush1.msra.mxu0 0.0
        %5366 = vmatprep.subr.mxu0 0.0
        %5367 = vmatpush1.msra.mxu0 0.0
        %5368 = vmatprep.subr.mxu0 0.0
        %5369 = vmatpush1.msra.mxu0 0.0
        %5370 = vmatprep.subr.mxu0 0.0
        %5371 = vmatpush1.msra.mxu0 0.0
        %5372 = vmatprep.subr.mxu0 0.0
        %5373 = vmatpush1.msra.mxu0 0.0
        %5374 = vmatprep.subr.mxu0 0.0
        %5375 = vmatpush1.msra.mxu0 0.0
        %5376 = vmatprep.subr.mxu0 0.0
        %5377 = vmatpush1.msra.mxu0 0.0
        %5378 = vmatprep.subr.mxu0 0.0
        %5379 = vmatpush1.msra.mxu0 0.0
        %5380 = vmatprep.subr.mxu0 0.0
        %5381 = vmatpush1.msra.mxu0 0.0
        %5382 = vmatprep.subr.mxu0 0.0
        %5383 = vmatpush1.msra.mxu0 0.0
        %5384 = vmatprep.subr.mxu0 0.0
        %5385 = vmatpush1.msra.mxu0 0.0
        %5386 = vmatprep.subr.mxu0 0.0
        %5387 = vmatpush1.msra.mxu0 0.0
        %5388 = vmatprep.subr.mxu0 0.0
        %5389 = vmatpush1.msra.mxu0 0.0
        %5390 = vmatprep.subr.mxu0 0.0
        %5391 = vmatpush1.msra.mxu0 0.0
        %5392 = vmatprep.subr.mxu0 0.0
        %5393 = vmatpush1.msra.mxu0 0.0
        %5394 = vmatprep.subr.mxu0 0.0
        %5395 = vmatpush1.msra.mxu0 0.0
        %5396 = vmatprep.subr.mxu0 0.0
        %5397 = vmatpush1.msra.mxu0 0.0
        %5398 = vmatprep.subr.mxu0 0.0
        %5399 = vmatpush1.msra.mxu0 0.0
        %5400 = vmatprep.subr.mxu0 0.0
        %5401 = vmatpush1.msra.mxu0 0.0
        %5402 = vmatprep.subr.mxu0 0.0
        %5403 = vmatpush1.msra.mxu0 0.0
        %5404 = vmatprep.subr.mxu0 0.0
        %5405 = vmatpush1.msra.mxu0 0.0
        %5406 = vmatprep.subr.mxu0 0.0
        %5407 = vmatpush1.msra.mxu0 0.0
        %5408 = vmatprep.subr.mxu0 0.0
        %5409 = vmatpush1.msra.mxu0 0.0
        %5410 = vmatprep.subr.mxu0 0.0
        %5411 = vmatpush1.msra.mxu0 0.0
        %5412 = vmatprep.subr.mxu0 0.0
        %5413 = vmatpush1.msra.mxu0 0.0
        %5414 = vmatprep.subr.mxu0 0.0
        %5415 = vmatpush1.msra.mxu0 0.0
        %5416 = vmatprep.mubr.f32.mxu0 0.0
        %5417 = vmatmul.mubr.f32.gmra.mrb[0].mxu0 %v5344
        %v5418 = vpop.f32.mrb[0].mxu0
        %v5419 = vadd.f32 0.0, %v5418
        %v5420 = vpop.f32.mrb[0].mxu0
        %5421 = vmatprep.mubr.f32.mxu0 0.0
        %5422 = vmatmul.mubr.f32.gmra.mrb[0].mxu0 %v5347
        %v5423 = vpop.f32.mrb[0].mxu0
        %v5424 = vadd.f32 0.0, %v5423
        %v5425 = vpop.f32.mrb[0].mxu0
        %5426 = vmatprep.mubr.f32.mxu0 0.0
        %5427 = vmatmul.mubr.f32.gmra.mrb[0].mxu0 %v5350
        %v5428 = vpop.f32.mrb[0].mxu0
        %v5429 = vadd.f32 0.0, %v5428
        %v5430 = vpop.f32.mrb[0].mxu0
        %5431 = vdwg.mxu0
        %5432 = vrot.lane.b32.xlu0 %v4949, 64
        %v5433 = vpop.permute.xlu0 %5432
        %5434 = vrot.lane.b32.xlu0 %v4955, 64
        %v5435 = vpop.permute.xlu0 %5434
        %5436 = vrot.lane.b32.xlu0 %v4961, 64
        %v5437 = vpop.permute.xlu0 %5436
        %v5442 = vsel %vm773, %v5189, 0
        %v5445 = vsel %vm773, %v5191, 0
        %v5448 = vsel %vm773, %v5193, 0
        %5450 = vmatprep.subr.mxu0 0.0
        %5451 = vmatpush1.msra.mxu0 %v5433
        %5452 = vmatprep.subr.mxu0 0.0
        %5453 = vmatpush1.msra.mxu0 %v5435
        %5454 = vmatprep.subr.mxu0 0.0
        %5455 = vmatpush1.msra.mxu0 %v5437
        %5456 = vmatprep.subr.mxu0 0.0
        %5457 = vmatpush1.msra.mxu0 0.0
        %5458 = vmatprep.subr.mxu0 0.0
        %5459 = vmatpush1.msra.mxu0 0.0
        %5460 = vmatprep.subr.mxu0 0.0
        %5461 = vmatpush1.msra.mxu0 0.0
        %5462 = vmatprep.subr.mxu0 0.0
        %5463 = vmatpush1.msra.mxu0 0.0
        %5464 = vmatprep.subr.mxu0 0.0
        %5465 = vmatpush1.msra.mxu0 0.0
        %5466 = vmatprep.subr.mxu0 0.0
        %5467 = vmatpush1.msra.mxu0 0.0
        %5468 = vmatprep.subr.mxu0 0.0
        %5469 = vmatpush1.msra.mxu0 0.0
        %5470 = vmatprep.subr.mxu0 0.0
        %5471 = vmatpush1.msra.mxu0 0.0
        %5472 = vmatprep.subr.mxu0 0.0
        %5473 = vmatpush1.msra.mxu0 0.0
        %5474 = vmatprep.subr.mxu0 0.0
        %5475 = vmatpush1.msra.mxu0 0.0
        %5476 = vmatprep.subr.mxu0 0.0
        %5477 = vmatpush1.msra.mxu0 0.0
        %5478 = vmatprep.subr.mxu0 0.0
        %5479 = vmatpush1.msra.mxu0 0.0
        %5480 = vmatprep.subr.mxu0 0.0
        %5481 = vmatpush1.msra.mxu0 0.0
        %5482 = vmatprep.subr.mxu0 0.0
        %5483 = vmatpush1.msra.mxu0 0.0
        %5484 = vmatprep.subr.mxu0 0.0
        %5485 = vmatpush1.msra.mxu0 0.0
        %5486 = vmatprep.subr.mxu0 0.0
        %5487 = vmatpush1.msra.mxu0 0.0
        %5488 = vmatprep.subr.mxu0 0.0
        %5489 = vmatpush1.msra.mxu0 0.0
        %5490 = vmatprep.subr.mxu0 0.0
        %5491 = vmatpush1.msra.mxu0 0.0
        %5492 = vmatprep.subr.mxu0 0.0
        %5493 = vmatpush1.msra.mxu0 0.0
        %5494 = vmatprep.subr.mxu0 0.0
        %5495 = vmatpush1.msra.mxu0 0.0
        %5496 = vmatprep.subr.mxu0 0.0
        %5497 = vmatpush1.msra.mxu0 0.0
        %5498 = vmatprep.subr.mxu0 0.0
        %5499 = vmatpush1.msra.mxu0 0.0
        %5500 = vmatprep.subr.mxu0 0.0
        %5501 = vmatpush1.msra.mxu0 0.0
        %5502 = vmatprep.subr.mxu0 0.0
        %5503 = vmatpush1.msra.mxu0 0.0
        %5504 = vmatprep.subr.mxu0 0.0
        %5505 = vmatpush1.msra.mxu0 0.0
        %5506 = vmatprep.subr.mxu0 0.0
        %5507 = vmatpush1.msra.mxu0 0.0
        %5508 = vmatprep.subr.mxu0 0.0
        %5509 = vmatpush1.msra.mxu0 0.0
        %5510 = vmatprep.subr.mxu0 0.0
        %5511 = vmatpush1.msra.mxu0 0.0
        %5512 = vmatprep.subr.mxu0 0.0
        %5513 = vmatpush1.msra.mxu0 0.0
        %5514 = vmatprep.mubr.f32.mxu0 0.0
        %5515 = vmatmul.mubr.f32.gmra.mrb[0].mxu0 %v5442
        %v5516 = vpop.f32.mrb[0].mxu0
        %v5517 = vadd.f32 %v5419, %v5516
        %v5518 = vpop.f32.mrb[0].mxu0
        %5519 = vmatprep.mubr.f32.mxu0 0.0
        %5520 = vmatmul.mubr.f32.gmra.mrb[0].mxu0 %v5445
        %v5521 = vpop.f32.mrb[0].mxu0
        %v5522 = vadd.f32 %v5424, %v5521
        %v5523 = vpop.f32.mrb[0].mxu0
        %5524 = vmatprep.mubr.f32.mxu0 0.0
        %5525 = vmatmul.mubr.f32.gmra.mrb[0].mxu0 %v5448
        %v5526 = vpop.f32.mrb[0].mxu0
        %v5527 = vadd.f32 %v5429, %v5526
        %v5528 = vpop.f32.mrb[0].mxu0
        %5529 = vdwg.mxu0
        %5530 = vrot.lane.b32.xlu0 %v5046, 120
        %v5531 = vpop.permute.xlu0 %5530
        %5532 = vrot.lane.b32.xlu0 %v5047, 120
        %v5533 = vpop.permute.xlu0 %5532
        %5534 = vrot.lane.b32.xlu0 %v5048, 120
        %v5535 = vpop.permute.xlu0 %5534
        %5536 = vrot.lane.b32.xlu0 %v5054, 88
        %v5537 = vpop.permute.xlu0 %5536
        %5538 = vrot.lane.b32.xlu0 %v5055, 88
        %v5539 = vpop.permute.xlu0 %5538
        %5540 = vrot.lane.b32.xlu0 %v5056, 88
        %v5541 = vpop.permute.xlu0 %5540
        %v5542 = vsel %vm677, %v5531, 0
        %v5544 = vsel %vm677, %v5533, 0
        %v5546 = vsel %vm677, %v5535, 0
        %v5548 = vsel %vm677, %v5537, 0
        %v5550 = vsel %vm677, %v5539, 0
        %v5552 = vsel %vm677, %v5541, 0
        %5554 = vmatprep.subr.mxu0 0.0
        %5555 = vmatpush1.xpose.msra.mxu0 %v5548
        %5556 = vmatprep.subr.mxu0 0.0
        %5557 = vmatpush1.xpose.msra.mxu0 %v5550
        %5558 = vmatprep.subr.mxu0 0.0
        %5559 = vmatpush1.xpose.msra.mxu0 %v5552
        %5560 = vmatprep.subr.mxu0 0.0
        %5561 = vmatpush1.xpose.msra.mxu0 0.0
        %5562 = vmatprep.subr.mxu0 0.0
        %5563 = vmatpush1.xpose.msra.mxu0 0.0
        %5564 = vmatprep.subr.mxu0 0.0
        %5565 = vmatpush1.xpose.msra.mxu0 0.0
        %5566 = vmatprep.subr.mxu0 0.0
        %5567 = vmatpush1.xpose.msra.mxu0 0.0
        %5568 = vmatprep.subr.mxu0 0.0
        %5569 = vmatpush1.xpose.msra.mxu0 0.0
        %5570 = vmatprep.subr.mxu0 0.0
        %5571 = vmatpush1.xpose.msra.mxu0 0.0
        %5572 = vmatprep.subr.mxu0 0.0
        %5573 = vmatpush1.xpose.msra.mxu0 0.0
        %5574 = vmatprep.subr.mxu0 0.0
        %5575 = vmatpush1.xpose.msra.mxu0 0.0
        %5576 = vmatprep.subr.mxu0 0.0
        %5577 = vmatpush1.xpose.msra.mxu0 0.0
        %5578 = vmatprep.subr.mxu0 0.0
        %5579 = vmatpush1.xpose.msra.mxu0 0.0
        %5580 = vmatprep.subr.mxu0 0.0
        %5581 = vmatpush1.xpose.msra.mxu0 0.0
        %5582 = vmatprep.subr.mxu0 0.0
        %5583 = vmatpush1.xpose.msra.mxu0 0.0
        %5584 = vmatprep.subr.mxu0 0.0
        %5585 = vmatpush1.xpose.msra.mxu0 0.0
        %5586 = vmatprep.subr.mxu0 0.0
        %5587 = vmatpush1.xpose.msra.mxu0 0.0
        %5588 = vmatprep.subr.mxu0 0.0
        %5589 = vmatpush1.xpose.msra.mxu0 0.0
        %5590 = vmatprep.subr.mxu0 0.0
        %5591 = vmatpush1.xpose.msra.mxu0 0.0
        %5592 = vmatprep.subr.mxu0 0.0
        %5593 = vmatpush1.xpose.msra.mxu0 0.0
        %5594 = vmatprep.subr.mxu0 0.0
        %5595 = vmatpush1.xpose.msra.mxu0 0.0
        %5596 = vmatprep.subr.mxu0 0.0
        %5597 = vmatpush1.xpose.msra.mxu0 0.0
        %5598 = vmatprep.subr.mxu0 0.0
        %5599 = vmatpush1.xpose.msra.mxu0 0.0
        %5600 = vmatprep.subr.mxu0 0.0
        %5601 = vmatpush1.xpose.msra.mxu0 0.0
        %5602 = vmatprep.subr.mxu0 0.0
        %5603 = vmatpush1.xpose.msra.mxu0 0.0
        %5604 = vmatprep.subr.mxu0 0.0
        %5605 = vmatpush1.xpose.msra.mxu0 0.0
        %5606 = vmatprep.subr.mxu0 0.0
        %5607 = vmatpush1.xpose.msra.mxu0 0.0
        %5608 = vmatprep.subr.mxu0 0.0
        %5609 = vmatpush1.xpose.msra.mxu0 0.0
        %5610 = vmatprep.subr.mxu0 0.0
        %5611 = vmatpush1.xpose.msra.mxu0 0.0
        %5612 = vmatprep.subr.mxu0 0.0
        %5613 = vmatpush1.xpose.msra.mxu0 0.0
        %5614 = vmatprep.subr.mxu0 0.0
        %5615 = vmatpush1.xpose.msra.mxu0 0.0
        %5616 = vmatprep.subr.mxu0 0.0
        %5617 = vmatpush1.xpose.msra.mxu0 0.0
        %5618 = vmatprep.mubr.f32.mxu0 0.0
        %5619 = vmatmul.mubr.f32.gmra.mrb[0].mxu0 %v5542
        %v5620 = vpop.f32.mrb[0].mxu0
        %v5621 = vadd.f32 %v470, %v5620
        %v5622 = vpop.f32.mrb[0].mxu0
        %5623 = vmatprep.mubr.f32.mxu0 0.0
        %5624 = vmatmul.mubr.f32.gmra.mrb[0].mxu0 %v5544
        %v5625 = vpop.f32.mrb[0].mxu0
        %v5626 = vadd.f32 %v470, %v5625
        %v5627 = vpop.f32.mrb[0].mxu0
        %5628 = vmatprep.mubr.f32.mxu0 0.0
        %5629 = vmatmul.mubr.f32.gmra.mrb[0].mxu0 %v5546
        %v5630 = vpop.f32.mrb[0].mxu0
        %v5631 = vadd.f32 %v470, %v5630
        %v5632 = vpop.f32.mrb[0].mxu0
        %5633 = vdwg.mxu0
        %v5634 = vsel %vm773, %v5621, -inf
        %5635 = vmax.xlane.f32.xlu0 %v5634
        %v5636 = vpop.xlane.xlu0 %5635
        %v5637 = vsel %vm773, %v5626, -inf
        %5638 = vmax.xlane.f32.xlu0 %v5637
        %v5639 = vpop.xlane.xlu0 %5638
        %v5640 = vsel %vm773, %v5631, -inf
        %5641 = vmax.xlane.f32.xlu0 %v5640
        %v5642 = vpop.xlane.xlu0 %5641
        %v5643 = vsub.f32 %v5621, %v5636
        %v5644 = vsub.f32 %v5626, %v5639
        %v5645 = vsub.f32 %v5631, %v5642
        %v5646 = vmul.f32 %v5643, 1.442695
        %v5647 = vpow.pop %v5646
        %v5648 = vmul.f32 %v5644, 1.442695
        %v5649 = vpow.pop %v5648
        %v5650 = vmul.f32 %v5645, 1.442695
        %v5651 = vpow.pop %v5650
        %v5652 = vsel %vm773, %v5647, 0.0
        %5653 = vadd.xlane.f32.xlu0 %v5652
        %v5654 = vpop.xlane.xlu0 %5653
        %v5655 = vsel %vm773, %v5649, 0.0
        %5656 = vadd.xlane.f32.xlu0 %v5655
        %v5657 = vpop.xlane.xlu0 %5656
        %v5658 = vsel %vm773, %v5651, 0.0
        %5659 = vadd.xlane.f32.xlu0 %v5658
        %v5660 = vpop.xlane.xlu0 %5659
        %v5661 = vrcp.pop %v5654
        %v5662 = vmul.f32 %v5647, %v5661
        %v5663 = vrcp.pop %v5657
        %v5664 = vmul.f32 %v5649, %v5663
        %v5665 = vrcp.pop %v5660
        %v5666 = vmul.f32 %v5651, %v5665
        %v5668 = vsel %vm773, %v5662, 0
        %v5671 = vsel %vm773, %v5664, 0
        %v5674 = vsel %vm773, %v5666, 0
        %5676 = vmatprep.subr.mxu0 0.0
        %5677 = vmatpush1.msra.mxu0 %v4951
        %5678 = vmatprep.subr.mxu0 0.0
        %5679 = vmatpush1.msra.mxu0 %v4957
        %5680 = vmatprep.subr.mxu0 0.0
        %5681 = vmatpush1.msra.mxu0 %v4963
        %5682 = vmatprep.subr.mxu0 0.0
        %5683 = vmatpush1.msra.mxu0 0.0
        %5684 = vmatprep.subr.mxu0 0.0
        %5685 = vmatpush1.msra.mxu0 0.0
        %5686 = vmatprep.subr.mxu0 0.0
        %5687 = vmatpush1.msra.mxu0 0.0
        %5688 = vmatprep.subr.mxu0 0.0
        %5689 = vmatpush1.msra.mxu0 0.0
        %5690 = vmatprep.subr.mxu0 0.0
        %5691 = vmatpush1.msra.mxu0 0.0
        %5692 = vmatprep.subr.mxu0 0.0
        %5693 = vmatpush1.msra.mxu0 0.0
        %5694 = vmatprep.subr.mxu0 0.0
        %5695 = vmatpush1.msra.mxu0 0.0
        %5696 = vmatprep.subr.mxu0 0.0
        %5697 = vmatpush1.msra.mxu0 0.0
        %5698 = vmatprep.subr.mxu0 0.0
        %5699 = vmatpush1.msra.mxu0 0.0
        %5700 = vmatprep.subr.mxu0 0.0
        %5701 = vmatpush1.msra.mxu0 0.0
        %5702 = vmatprep.subr.mxu0 0.0
        %5703 = vmatpush1.msra.mxu0 0.0
        %5704 = vmatprep.subr.mxu0 0.0
        %5705 = vmatpush1.msra.mxu0 0.0
        %5706 = vmatprep.subr.mxu0 0.0
        %5707 = vmatpush1.msra.mxu0 0.0
        %5708 = vmatprep.subr.mxu0 0.0
        %5709 = vmatpush1.msra.mxu0 0.0
        %5710 = vmatprep.subr.mxu0 0.0
        %5711 = vmatpush1.msra.mxu0 0.0
        %5712 = vmatprep.subr.mxu0 0.0
        %5713 = vmatpush1.msra.mxu0 0.0
        %5714 = vmatprep.subr.mxu0 0.0
        %5715 = vmatpush1.msra.mxu0 0.0
        %5716 = vmatprep.subr.mxu0 0.0
        %5717 = vmatpush1.msra.mxu0 0.0
        %5718 = vmatprep.subr.mxu0 0.0
        %5719 = vmatpush1.msra.mxu0 0.0
        %5720 = vmatprep.subr.mxu0 0.0
        %5721 = vmatpush1.msra.mxu0 0.0
        %5722 = vmatprep.subr.mxu0 0.0
        %5723 = vmatpush1.msra.mxu0 0.0
        %5724 = vmatprep.subr.mxu0 0.0
        %5725 = vmatpush1.msra.mxu0 0.0
        %5726 = vmatprep.subr.mxu0 0.0
        %5727 = vmatpush1.msra.mxu0 0.0
        %5728 = vmatprep.subr.mxu0 0.0
        %5729 = vmatpush1.msra.mxu0 0.0
        %5730 = vmatprep.subr.mxu0 0.0
        %5731 = vmatpush1.msra.mxu0 0.0
        %5732 = vmatprep.subr.mxu0 0.0
        %5733 = vmatpush1.msra.mxu0 0.0
        %5734 = vmatprep.subr.mxu0 0.0
        %5735 = vmatpush1.msra.mxu0 0.0
        %5736 = vmatprep.subr.mxu0 0.0
        %5737 = vmatpush1.msra.mxu0 0.0
        %5738 = vmatprep.subr.mxu0 0.0
        %5739 = vmatpush1.msra.mxu0 0.0
        %5740 = vmatprep.mubr.f32.mxu0 0.0
        %5741 = vmatmul.mubr.f32.gmra.mrb[0].mxu0 %v5668
        %v5742 = vpop.f32.mrb[0].mxu0
        %v5743 = vadd.f32 0.0, %v5742
        %v5744 = vpop.f32.mrb[0].mxu0
        %5745 = vmatprep.mubr.f32.mxu0 0.0
        %5746 = vmatmul.mubr.f32.gmra.mrb[0].mxu0 %v5671
        %v5747 = vpop.f32.mrb[0].mxu0
        %v5748 = vadd.f32 0.0, %v5747
        %v5749 = vpop.f32.mrb[0].mxu0
        %5750 = vmatprep.mubr.f32.mxu0 0.0
        %5751 = vmatmul.mubr.f32.gmra.mrb[0].mxu0 %v5674
        %v5752 = vpop.f32.mrb[0].mxu0
        %v5753 = vadd.f32 0.0, %v5752
        %v5754 = vpop.f32.mrb[0].mxu0
        %5755 = vdwg.mxu0
        %v5756 = vadd.f32 %v5517, %v5743
        %v5757 = vadd.f32 %v5522, %v5748
        %v5758 = vadd.f32 %v5527, %v5753
        %5759 = vrot.lane.b32.xlu0 %v5046, 116
        %v5760 = vpop.permute.xlu0 %5759
        %5761 = vrot.lane.b32.xlu0 %v5047, 116
        %v5762 = vpop.permute.xlu0 %5761
        %5763 = vrot.lane.b32.xlu0 %v5048, 116
        %v5764 = vpop.permute.xlu0 %5763
        %5765 = vrot.lane.b32.xlu0 %v5054, 84
        %v5766 = vpop.permute.xlu0 %5765
        %5767 = vrot.lane.b32.xlu0 %v5055, 84
        %v5768 = vpop.permute.xlu0 %5767
        %5769 = vrot.lane.b32.xlu0 %v5056, 84
        %v5770 = vpop.permute.xlu0 %5769
        %v5771 = vsel %vm677, %v5760, 0
        %v5773 = vsel %vm677, %v5762, 0
        %v5775 = vsel %vm677, %v5764, 0
        %v5777 = vsel %vm677, %v5766, 0
        %v5779 = vsel %vm677, %v5768, 0
        %v5781 = vsel %vm677, %v5770, 0
        %5783 = vmatprep.subr.mxu0 0.0
        %5784 = vmatpush1.xpose.msra.mxu0 %v5777
        %5785 = vmatprep.subr.mxu0 0.0
        %5786 = vmatpush1.xpose.msra.mxu0 %v5779
        %5787 = vmatprep.subr.mxu0 0.0
        %5788 = vmatpush1.xpose.msra.mxu0 %v5781
        %5789 = vmatprep.subr.mxu0 0.0
        %5790 = vmatpush1.xpose.msra.mxu0 0.0
        %5791 = vmatprep.subr.mxu0 0.0
        %5792 = vmatpush1.xpose.msra.mxu0 0.0
        %5793 = vmatprep.subr.mxu0 0.0
        %5794 = vmatpush1.xpose.msra.mxu0 0.0
        %5795 = vmatprep.subr.mxu0 0.0
        %5796 = vmatpush1.xpose.msra.mxu0 0.0
        %5797 = vmatprep.subr.mxu0 0.0
        %5798 = vmatpush1.xpose.msra.mxu0 0.0
        %5799 = vmatprep.subr.mxu0 0.0
        %5800 = vmatpush1.xpose.msra.mxu0 0.0
        %5801 = vmatprep.subr.mxu0 0.0
        %5802 = vmatpush1.xpose.msra.mxu0 0.0
        %5803 = vmatprep.subr.mxu0 0.0
        %5804 = vmatpush1.xpose.msra.mxu0 0.0
        %5805 = vmatprep.subr.mxu0 0.0
        %5806 = vmatpush1.xpose.msra.mxu0 0.0
        %5807 = vmatprep.subr.mxu0 0.0
        %5808 = vmatpush1.xpose.msra.mxu0 0.0
        %5809 = vmatprep.subr.mxu0 0.0
        %5810 = vmatpush1.xpose.msra.mxu0 0.0
        %5811 = vmatprep.subr.mxu0 0.0
        %5812 = vmatpush1.xpose.msra.mxu0 0.0
        %5813 = vmatprep.subr.mxu0 0.0
        %5814 = vmatpush1.xpose.msra.mxu0 0.0
        %5815 = vmatprep.subr.mxu0 0.0
        %5816 = vmatpush1.xpose.msra.mxu0 0.0
        %5817 = vmatprep.subr.mxu0 0.0
        %5818 = vmatpush1.xpose.msra.mxu0 0.0
        %5819 = vmatprep.subr.mxu0 0.0
        %5820 = vmatpush1.xpose.msra.mxu0 0.0
        %5821 = vmatprep.subr.mxu0 0.0
        %5822 = vmatpush1.xpose.msra.mxu0 0.0
        %5823 = vmatprep.subr.mxu0 0.0
        %5824 = vmatpush1.xpose.msra.mxu0 0.0
        %5825 = vmatprep.subr.mxu0 0.0
        %5826 = vmatpush1.xpose.msra.mxu0 0.0
        %5827 = vmatprep.subr.mxu0 0.0
        %5828 = vmatpush1.xpose.msra.mxu0 0.0
        %5829 = vmatprep.subr.mxu0 0.0
        %5830 = vmatpush1.xpose.msra.mxu0 0.0
        %5831 = vmatprep.subr.mxu0 0.0
        %5832 = vmatpush1.xpose.msra.mxu0 0.0
        %5833 = vmatprep.subr.mxu0 0.0
        %5834 = vmatpush1.xpose.msra.mxu0 0.0
        %5835 = vmatprep.subr.mxu0 0.0
        %5836 = vmatpush1.xpose.msra.mxu0 0.0
        %5837 = vmatprep.subr.mxu0 0.0
        %5838 = vmatpush1.xpose.msra.mxu0 0.0
        %5839 = vmatprep.subr.mxu0 0.0
        %5840 = vmatpush1.xpose.msra.mxu0 0.0
        %5841 = vmatprep.subr.mxu0 0.0
        %5842 = vmatpush1.xpose.msra.mxu0 0.0
        %5843 = vmatprep.subr.mxu0 0.0
        %5844 = vmatpush1.xpose.msra.mxu0 0.0
        %5845 = vmatprep.subr.mxu0 0.0
        %5846 = vmatpush1.xpose.msra.mxu0 0.0
        %5847 = vmatprep.mubr.f32.mxu0 0.0
        %5848 = vmatmul.mubr.f32.gmra.mrb[0].mxu0 %v5771
        %v5849 = vpop.f32.mrb[0].mxu0
        %v5850 = vadd.f32 %v470, %v5849
        %v5851 = vpop.f32.mrb[0].mxu0
        %5852 = vmatprep.mubr.f32.mxu0 0.0
        %5853 = vmatmul.mubr.f32.gmra.mrb[0].mxu0 %v5773
        %v5854 = vpop.f32.mrb[0].mxu0
        %v5855 = vadd.f32 %v470, %v5854
        %v5856 = vpop.f32.mrb[0].mxu0
        %5857 = vmatprep.mubr.f32.mxu0 0.0
        %5858 = vmatmul.mubr.f32.gmra.mrb[0].mxu0 %v5775
        %v5859 = vpop.f32.mrb[0].mxu0
        %v5860 = vadd.f32 %v470, %v5859
        %v5861 = vpop.f32.mrb[0].mxu0
        %5862 = vdwg.mxu0
        %v5863 = vsel %vm773, %v5850, -inf
        %5864 = vmax.xlane.f32.xlu0 %v5863
        %v5865 = vpop.xlane.xlu0 %5864
        %v5866 = vsel %vm773, %v5855, -inf
        %5867 = vmax.xlane.f32.xlu0 %v5866
        %v5868 = vpop.xlane.xlu0 %5867
        %v5869 = vsel %vm773, %v5860, -inf
        %5870 = vmax.xlane.f32.xlu0 %v5869
        %v5871 = vpop.xlane.xlu0 %5870
        %v5872 = vsub.f32 %v5850, %v5865
        %v5873 = vsub.f32 %v5855, %v5868
        %v5874 = vsub.f32 %v5860, %v5871
        %v5875 = vmul.f32 %v5872, 1.442695
        %v5876 = vpow.pop %v5875
        %v5877 = vmul.f32 %v5873, 1.442695
        %v5878 = vpow.pop %v5877
        %v5879 = vmul.f32 %v5874, 1.442695
        %v5880 = vpow.pop %v5879
        %v5881 = vsel %vm773, %v5876, 0.0
        %5882 = vadd.xlane.f32.xlu0 %v5881
        %v5883 = vpop.xlane.xlu0 %5882
        %v5884 = vsel %vm773, %v5878, 0.0
        %5885 = vadd.xlane.f32.xlu0 %v5884
        %v5886 = vpop.xlane.xlu0 %5885
        %v5887 = vsel %vm773, %v5880, 0.0
        %5888 = vadd.xlane.f32.xlu0 %v5887
        %v5889 = vpop.xlane.xlu0 %5888
        %v5890 = vrcp.pop %v5883
        %v5891 = vmul.f32 %v5876, %v5890
        %v5892 = vrcp.pop %v5886
        %v5893 = vmul.f32 %v5878, %v5892
        %v5894 = vrcp.pop %v5889
        %v5895 = vmul.f32 %v5880, %v5894
        %5899 = vrot.lane.b32.xlu0 %v4951, 96
        %v5900 = vpop.permute.xlu0 %5899
        %5901 = vrot.lane.b32.xlu0 %v4957, 96
        %v5902 = vpop.permute.xlu0 %5901
        %5903 = vrot.lane.b32.xlu0 %v4963, 96
        %v5904 = vpop.permute.xlu0 %5903
        %v5909 = vsel %vm773, %v5891, 0
        %v5912 = vsel %vm773, %v5893, 0
        %v5915 = vsel %vm773, %v5895, 0
        %5917 = vmatprep.subr.mxu0 0.0
        %5918 = vmatpush1.msra.mxu0 %v5900
        %5919 = vmatprep.subr.mxu0 0.0
        %5920 = vmatpush1.msra.mxu0 %v5902
        %5921 = vmatprep.subr.mxu0 0.0
        %5922 = vmatpush1.msra.mxu0 %v5904
        %5923 = vmatprep.subr.mxu0 0.0
        %5924 = vmatpush1.msra.mxu0 0.0
        %5925 = vmatprep.subr.mxu0 0.0
        %5926 = vmatpush1.msra.mxu0 0.0
        %5927 = vmatprep.subr.mxu0 0.0
        %5928 = vmatpush1.msra.mxu0 0.0
        %5929 = vmatprep.subr.mxu0 0.0
        %5930 = vmatpush1.msra.mxu0 0.0
        %5931 = vmatprep.subr.mxu0 0.0
        %5932 = vmatpush1.msra.mxu0 0.0
        %5933 = vmatprep.subr.mxu0 0.0
        %5934 = vmatpush1.msra.mxu0 0.0
        %5935 = vmatprep.subr.mxu0 0.0
        %5936 = vmatpush1.msra.mxu0 0.0
        %5937 = vmatprep.subr.mxu0 0.0
        %5938 = vmatpush1.msra.mxu0 0.0
        %5939 = vmatprep.subr.mxu0 0.0
        %5940 = vmatpush1.msra.mxu0 0.0
        %5941 = vmatprep.subr.mxu0 0.0
        %5942 = vmatpush1.msra.mxu0 0.0
        %5943 = vmatprep.subr.mxu0 0.0
        %5944 = vmatpush1.msra.mxu0 0.0
        %5945 = vmatprep.subr.mxu0 0.0
        %5946 = vmatpush1.msra.mxu0 0.0
        %5947 = vmatprep.subr.mxu0 0.0
        %5948 = vmatpush1.msra.mxu0 0.0
        %5949 = vmatprep.subr.mxu0 0.0
        %5950 = vmatpush1.msra.mxu0 0.0
        %5951 = vmatprep.subr.mxu0 0.0
        %5952 = vmatpush1.msra.mxu0 0.0
        %5953 = vmatprep.subr.mxu0 0.0
        %5954 = vmatpush1.msra.mxu0 0.0
        %5955 = vmatprep.subr.mxu0 0.0
        %5956 = vmatpush1.msra.mxu0 0.0
        %5957 = vmatprep.subr.mxu0 0.0
        %5958 = vmatpush1.msra.mxu0 0.0
        %5959 = vmatprep.subr.mxu0 0.0
        %5960 = vmatpush1.msra.mxu0 0.0
        %5961 = vmatprep.subr.mxu0 0.0
        %5962 = vmatpush1.msra.mxu0 0.0
        %5963 = vmatprep.subr.mxu0 0.0
        %5964 = vmatpush1.msra.mxu0 0.0
        %5965 = vmatprep.subr.mxu0 0.0
        %5966 = vmatpush1.msra.mxu0 0.0
        %5967 = vmatprep.subr.mxu0 0.0
        %5968 = vmatpush1.msra.mxu0 0.0
        %5969 = vmatprep.subr.mxu0 0.0
        %5970 = vmatpush1.msra.mxu0 0.0
        %5971 = vmatprep.subr.mxu0 0.0
        %5972 = vmatpush1.msra.mxu0 0.0
        %5973 = vmatprep.subr.mxu0 0.0
        %5974 = vmatpush1.msra.mxu0 0.0
        %5975 = vmatprep.subr.mxu0 0.0
        %5976 = vmatpush1.msra.mxu0 0.0
        %5977 = vmatprep.subr.mxu0 0.0
        %5978 = vmatpush1.msra.mxu0 0.0
        %5979 = vmatprep.subr.mxu0 0.0
        %5980 = vmatpush1.msra.mxu0 0.0
        %5981 = vmatprep.mubr.f32.mxu0 0.0
        %5982 = vmatmul.mubr.f32.gmra.mrb[0].mxu0 %v5909
        %v5983 = vpop.f32.mrb[0].mxu0
        %v5984 = vadd.f32 0.0, %v5983
        %v5985 = vpop.f32.mrb[0].mxu0
        %5986 = vmatprep.mubr.f32.mxu0 0.0
        %5987 = vmatmul.mubr.f32.gmra.mrb[0].mxu0 %v5912
        %v5988 = vpop.f32.mrb[0].mxu0
        %v5989 = vadd.f32 0.0, %v5988
        %v5990 = vpop.f32.mrb[0].mxu0
        %5991 = vmatprep.mubr.f32.mxu0 0.0
        %5992 = vmatmul.mubr.f32.gmra.mrb[0].mxu0 %v5915
        %v5993 = vpop.f32.mrb[0].mxu0
        %v5994 = vadd.f32 0.0, %v5993
        %v5995 = vpop.f32.mrb[0].mxu0
        %5996 = vdwg.mxu0
        %v5997 = vadd.f32 %v5756, %v5984
        %v5998 = vadd.f32 %v5757, %v5989
        %v5999 = vadd.f32 %v5758, %v5994
        %6000 = vrot.lane.b32.xlu0 %v5046, 112
        %v6001 = vpop.permute.xlu0 %6000
        %6002 = vrot.lane.b32.xlu0 %v5047, 112
        %v6003 = vpop.permute.xlu0 %6002
        %6004 = vrot.lane.b32.xlu0 %v5048, 112
        %v6005 = vpop.permute.xlu0 %6004
        %6006 = vrot.lane.b32.xlu0 %v5054, 80
        %v6007 = vpop.permute.xlu0 %6006
        %6008 = vrot.lane.b32.xlu0 %v5055, 80
        %v6009 = vpop.permute.xlu0 %6008
        %6010 = vrot.lane.b32.xlu0 %v5056, 80
        %v6011 = vpop.permute.xlu0 %6010
        %v6012 = vsel %vm677, %v6001, 0
        %v6014 = vsel %vm677, %v6003, 0
        %v6016 = vsel %vm677, %v6005, 0
        %v6018 = vsel %vm677, %v6007, 0
        %v6020 = vsel %vm677, %v6009, 0
        %v6022 = vsel %vm677, %v6011, 0
        %6024 = vmatprep.subr.mxu0 0.0
        %6025 = vmatpush1.xpose.msra.mxu0 %v6018
        %6026 = vmatprep.subr.mxu0 0.0
        %6027 = vmatpush1.xpose.msra.mxu0 %v6020
        %6028 = vmatprep.subr.mxu0 0.0
        %6029 = vmatpush1.xpose.msra.mxu0 %v6022
        %6030 = vmatprep.subr.mxu0 0.0
        %6031 = vmatpush1.xpose.msra.mxu0 0.0
        %6032 = vmatprep.subr.mxu0 0.0
        %6033 = vmatpush1.xpose.msra.mxu0 0.0
        %6034 = vmatprep.subr.mxu0 0.0
        %6035 = vmatpush1.xpose.msra.mxu0 0.0
        %6036 = vmatprep.subr.mxu0 0.0
        %6037 = vmatpush1.xpose.msra.mxu0 0.0
        %6038 = vmatprep.subr.mxu0 0.0
        %6039 = vmatpush1.xpose.msra.mxu0 0.0
        %6040 = vmatprep.subr.mxu0 0.0
        %6041 = vmatpush1.xpose.msra.mxu0 0.0
        %6042 = vmatprep.subr.mxu0 0.0
        %6043 = vmatpush1.xpose.msra.mxu0 0.0
        %6044 = vmatprep.subr.mxu0 0.0
        %6045 = vmatpush1.xpose.msra.mxu0 0.0
        %6046 = vmatprep.subr.mxu0 0.0
        %6047 = vmatpush1.xpose.msra.mxu0 0.0
        %6048 = vmatprep.subr.mxu0 0.0
        %6049 = vmatpush1.xpose.msra.mxu0 0.0
        %6050 = vmatprep.subr.mxu0 0.0
        %6051 = vmatpush1.xpose.msra.mxu0 0.0
        %6052 = vmatprep.subr.mxu0 0.0
        %6053 = vmatpush1.xpose.msra.mxu0 0.0
        %6054 = vmatprep.subr.mxu0 0.0
        %6055 = vmatpush1.xpose.msra.mxu0 0.0
        %6056 = vmatprep.subr.mxu0 0.0
        %6057 = vmatpush1.xpose.msra.mxu0 0.0
        %6058 = vmatprep.subr.mxu0 0.0
        %6059 = vmatpush1.xpose.msra.mxu0 0.0
        %6060 = vmatprep.subr.mxu0 0.0
        %6061 = vmatpush1.xpose.msra.mxu0 0.0
        %6062 = vmatprep.subr.mxu0 0.0
        %6063 = vmatpush1.xpose.msra.mxu0 0.0
        %6064 = vmatprep.subr.mxu0 0.0
        %6065 = vmatpush1.xpose.msra.mxu0 0.0
        %6066 = vmatprep.subr.mxu0 0.0
        %6067 = vmatpush1.xpose.msra.mxu0 0.0
        %6068 = vmatprep.subr.mxu0 0.0
        %6069 = vmatpush1.xpose.msra.mxu0 0.0
        %6070 = vmatprep.subr.mxu0 0.0
        %6071 = vmatpush1.xpose.msra.mxu0 0.0
        %6072 = vmatprep.subr.mxu0 0.0
        %6073 = vmatpush1.xpose.msra.mxu0 0.0
        %6074 = vmatprep.subr.mxu0 0.0
        %6075 = vmatpush1.xpose.msra.mxu0 0.0
        %6076 = vmatprep.subr.mxu0 0.0
        %6077 = vmatpush1.xpose.msra.mxu0 0.0
        %6078 = vmatprep.subr.mxu0 0.0
        %6079 = vmatpush1.xpose.msra.mxu0 0.0
        %6080 = vmatprep.subr.mxu0 0.0
        %6081 = vmatpush1.xpose.msra.mxu0 0.0
        %6082 = vmatprep.subr.mxu0 0.0
        %6083 = vmatpush1.xpose.msra.mxu0 0.0
        %6084 = vmatprep.subr.mxu0 0.0
        %6085 = vmatpush1.xpose.msra.mxu0 0.0
        %6086 = vmatprep.subr.mxu0 0.0
        %6087 = vmatpush1.xpose.msra.mxu0 0.0
        %6088 = vmatprep.mubr.f32.mxu0 0.0
        %6089 = vmatmul.mubr.f32.gmra.mrb[0].mxu0 %v6012
        %v6090 = vpop.f32.mrb[0].mxu0
        %v6091 = vadd.f32 %v470, %v6090
        %v6092 = vpop.f32.mrb[0].mxu0
        %6093 = vmatprep.mubr.f32.mxu0 0.0
        %6094 = vmatmul.mubr.f32.gmra.mrb[0].mxu0 %v6014
        %v6095 = vpop.f32.mrb[0].mxu0
        %v6096 = vadd.f32 %v470, %v6095
        %v6097 = vpop.f32.mrb[0].mxu0
        %6098 = vmatprep.mubr.f32.mxu0 0.0
        %6099 = vmatmul.mubr.f32.gmra.mrb[0].mxu0 %v6016
        %v6100 = vpop.f32.mrb[0].mxu0
        %v6101 = vadd.f32 %v470, %v6100
        %v6102 = vpop.f32.mrb[0].mxu0
        %6103 = vdwg.mxu0
        %v6104 = vsel %vm773, %v6091, -inf
        %6105 = vmax.xlane.f32.xlu0 %v6104
        %v6106 = vpop.xlane.xlu0 %6105
        %v6107 = vsel %vm773, %v6096, -inf
        %6108 = vmax.xlane.f32.xlu0 %v6107
        %v6109 = vpop.xlane.xlu0 %6108
        %v6110 = vsel %vm773, %v6101, -inf
        %6111 = vmax.xlane.f32.xlu0 %v6110
        %v6112 = vpop.xlane.xlu0 %6111
        %v6113 = vsub.f32 %v6091, %v6106
        %v6114 = vsub.f32 %v6096, %v6109
        %v6115 = vsub.f32 %v6101, %v6112
        %v6116 = vmul.f32 %v6113, 1.442695
        %v6117 = vpow.pop %v6116
        %v6118 = vmul.f32 %v6114, 1.442695
        %v6119 = vpow.pop %v6118
        %v6120 = vmul.f32 %v6115, 1.442695
        %v6121 = vpow.pop %v6120
        %v6122 = vsel %vm773, %v6117, 0.0
        %6123 = vadd.xlane.f32.xlu0 %v6122
        %v6124 = vpop.xlane.xlu0 %6123
        %v6125 = vsel %vm773, %v6119, 0.0
        %6126 = vadd.xlane.f32.xlu0 %v6125
        %v6127 = vpop.xlane.xlu0 %6126
        %v6128 = vsel %vm773, %v6121, 0.0
        %6129 = vadd.xlane.f32.xlu0 %v6128
        %v6130 = vpop.xlane.xlu0 %6129
        %v6131 = vrcp.pop %v6124
        %v6132 = vmul.f32 %v6117, %v6131
        %v6133 = vrcp.pop %v6127
        %v6134 = vmul.f32 %v6119, %v6133
        %v6135 = vrcp.pop %v6130
        %v6136 = vmul.f32 %v6121, %v6135
        %6137 = vrot.lane.b32.xlu0 %v4951, 64
        %v6138 = vpop.permute.xlu0 %6137
        %6139 = vrot.lane.b32.xlu0 %v4957, 64
        %v6140 = vpop.permute.xlu0 %6139
        %6141 = vrot.lane.b32.xlu0 %v4963, 64
        %v6142 = vpop.permute.xlu0 %6141
        %v6147 = vsel %vm773, %v6132, 0
        %v6150 = vsel %vm773, %v6134, 0
        %v6153 = vsel %vm773, %v6136, 0
        %6155 = vmatprep.subr.mxu0 0.0
        %6156 = vmatpush1.msra.mxu0 %v6138
        %6157 = vmatprep.subr.mxu0 0.0
        %6158 = vmatpush1.msra.mxu0 %v6140
        %6159 = vmatprep.subr.mxu0 0.0
        %6160 = vmatpush1.msra.mxu0 %v6142
        %6161 = vmatprep.subr.mxu0 0.0
        %6162 = vmatpush1.msra.mxu0 0.0
        %6163 = vmatprep.subr.mxu0 0.0
        %6164 = vmatpush1.msra.mxu0 0.0
        %6165 = vmatprep.subr.mxu0 0.0
        %6166 = vmatpush1.msra.mxu0 0.0
        %6167 = vmatprep.subr.mxu0 0.0
        %6168 = vmatpush1.msra.mxu0 0.0
        %6169 = vmatprep.subr.mxu0 0.0
        %6170 = vmatpush1.msra.mxu0 0.0
        %6171 = vmatprep.subr.mxu0 0.0
        %6172 = vmatpush1.msra.mxu0 0.0
        %6173 = vmatprep.subr.mxu0 0.0
        %6174 = vmatpush1.msra.mxu0 0.0
        %6175 = vmatprep.subr.mxu0 0.0
        %6176 = vmatpush1.msra.mxu0 0.0
        %6177 = vmatprep.subr.mxu0 0.0
        %6178 = vmatpush1.msra.mxu0 0.0
        %6179 = vmatprep.subr.mxu0 0.0
        %6180 = vmatpush1.msra.mxu0 0.0
        %6181 = vmatprep.subr.mxu0 0.0
        %6182 = vmatpush1.msra.mxu0 0.0
        %6183 = vmatprep.subr.mxu0 0.0
        %6184 = vmatpush1.msra.mxu0 0.0
        %6185 = vmatprep.subr.mxu0 0.0
        %6186 = vmatpush1.msra.mxu0 0.0
        %6187 = vmatprep.subr.mxu0 0.0
        %6188 = vmatpush1.msra.mxu0 0.0
        %6189 = vmatprep.subr.mxu0 0.0
        %6190 = vmatpush1.msra.mxu0 0.0
        %6191 = vmatprep.subr.mxu0 0.0
        %6192 = vmatpush1.msra.mxu0 0.0
        %6193 = vmatprep.subr.mxu0 0.0
        %6194 = vmatpush1.msra.mxu0 0.0
        %6195 = vmatprep.subr.mxu0 0.0
        %6196 = vmatpush1.msra.mxu0 0.0
        %6197 = vmatprep.subr.mxu0 0.0
        %6198 = vmatpush1.msra.mxu0 0.0
        %6199 = vmatprep.subr.mxu0 0.0
        %6200 = vmatpush1.msra.mxu0 0.0
        %6201 = vmatprep.subr.mxu0 0.0
        %6202 = vmatpush1.msra.mxu0 0.0
        %6203 = vmatprep.subr.mxu0 0.0
        %6204 = vmatpush1.msra.mxu0 0.0
        %6205 = vmatprep.subr.mxu0 0.0
        %6206 = vmatpush1.msra.mxu0 0.0
        %6207 = vmatprep.subr.mxu0 0.0
        %6208 = vmatpush1.msra.mxu0 0.0
        %6209 = vmatprep.subr.mxu0 0.0
        %6210 = vmatpush1.msra.mxu0 0.0
        %6211 = vmatprep.subr.mxu0 0.0
        %6212 = vmatpush1.msra.mxu0 0.0
        %6213 = vmatprep.subr.mxu0 0.0
        %6214 = vmatpush1.msra.mxu0 0.0
        %6215 = vmatprep.subr.mxu0 0.0
        %6216 = vmatpush1.msra.mxu0 0.0
        %6217 = vmatprep.subr.mxu0 0.0
        %6218 = vmatpush1.msra.mxu0 0.0
        %6219 = vmatprep.mubr.f32.mxu0 0.0
        %6220 = vmatmul.mubr.f32.gmra.mrb[0].mxu0 %v6147
        %v6221 = vpop.f32.mrb[0].mxu0
        %v6222 = vadd.f32 0.0, %v6221
        %v6223 = vpop.f32.mrb[0].mxu0
        %6224 = vmatprep.mubr.f32.mxu0 0.0
        %6225 = vmatmul.mubr.f32.gmra.mrb[0].mxu0 %v6150
        %v6226 = vpop.f32.mrb[0].mxu0
        %v6227 = vadd.f32 0.0, %v6226
        %v6228 = vpop.f32.mrb[0].mxu0
        %6229 = vmatprep.mubr.f32.mxu0 0.0
        %6230 = vmatmul.mubr.f32.gmra.mrb[0].mxu0 %v6153
        %v6231 = vpop.f32.mrb[0].mxu0
        %v6232 = vadd.f32 0.0, %v6231
        %v6233 = vpop.f32.mrb[0].mxu0
        %6234 = vdwg.mxu0
        %v6235 = vadd.f32 %v5997, %v6222
        %v6236 = vadd.f32 %v5998, %v6227
        %v6237 = vadd.f32 %v5999, %v6232
        %6238 = vrot.lane.b32.xlu0 %v5046, 108
        %v6239 = vpop.permute.xlu0 %6238
        %6240 = vrot.lane.b32.xlu0 %v5047, 108
        %v6241 = vpop.permute.xlu0 %6240
        %6242 = vrot.lane.b32.xlu0 %v5048, 108
        %v6243 = vpop.permute.xlu0 %6242
        %6244 = vrot.lane.b32.xlu0 %v5054, 76
        %v6245 = vpop.permute.xlu0 %6244
        %6246 = vrot.lane.b32.xlu0 %v5055, 76
        %v6247 = vpop.permute.xlu0 %6246
        %6248 = vrot.lane.b32.xlu0 %v5056, 76
        %v6249 = vpop.permute.xlu0 %6248
        %v6250 = vsel %vm677, %v6239, 0
        %v6252 = vsel %vm677, %v6241, 0
        %v6254 = vsel %vm677, %v6243, 0
        %v6256 = vsel %vm677, %v6245, 0
        %v6258 = vsel %vm677, %v6247, 0
        %v6260 = vsel %vm677, %v6249, 0
        %6262 = vmatprep.subr.mxu0 0.0
        %6263 = vmatpush1.xpose.msra.mxu0 %v6256
        %6264 = vmatprep.subr.mxu0 0.0
        %6265 = vmatpush1.xpose.msra.mxu0 %v6258
        %6266 = vmatprep.subr.mxu0 0.0
        %6267 = vmatpush1.xpose.msra.mxu0 %v6260
        %6268 = vmatprep.subr.mxu0 0.0
        %6269 = vmatpush1.xpose.msra.mxu0 0.0
        %6270 = vmatprep.subr.mxu0 0.0
        %6271 = vmatpush1.xpose.msra.mxu0 0.0
        %6272 = vmatprep.subr.mxu0 0.0
        %6273 = vmatpush1.xpose.msra.mxu0 0.0
        %6274 = vmatprep.subr.mxu0 0.0
        %6275 = vmatpush1.xpose.msra.mxu0 0.0
        %6276 = vmatprep.subr.mxu0 0.0
        %6277 = vmatpush1.xpose.msra.mxu0 0.0
        %6278 = vmatprep.subr.mxu0 0.0
        %6279 = vmatpush1.xpose.msra.mxu0 0.0
        %6280 = vmatprep.subr.mxu0 0.0
        %6281 = vmatpush1.xpose.msra.mxu0 0.0
        %6282 = vmatprep.subr.mxu0 0.0
        %6283 = vmatpush1.xpose.msra.mxu0 0.0
        %6284 = vmatprep.subr.mxu0 0.0
        %6285 = vmatpush1.xpose.msra.mxu0 0.0
        %6286 = vmatprep.subr.mxu0 0.0
        %6287 = vmatpush1.xpose.msra.mxu0 0.0
        %6288 = vmatprep.subr.mxu0 0.0
        %6289 = vmatpush1.xpose.msra.mxu0 0.0
        %6290 = vmatprep.subr.mxu0 0.0
        %6291 = vmatpush1.xpose.msra.mxu0 0.0
        %6292 = vmatprep.subr.mxu0 0.0
        %6293 = vmatpush1.xpose.msra.mxu0 0.0
        %6294 = vmatprep.subr.mxu0 0.0
        %6295 = vmatpush1.xpose.msra.mxu0 0.0
        %6296 = vmatprep.subr.mxu0 0.0
        %6297 = vmatpush1.xpose.msra.mxu0 0.0
        %6298 = vmatprep.subr.mxu0 0.0
        %6299 = vmatpush1.xpose.msra.mxu0 0.0
        %6300 = vmatprep.subr.mxu0 0.0
        %6301 = vmatpush1.xpose.msra.mxu0 0.0
        %6302 = vmatprep.subr.mxu0 0.0
        %6303 = vmatpush1.xpose.msra.mxu0 0.0
        %6304 = vmatprep.subr.mxu0 0.0
        %6305 = vmatpush1.xpose.msra.mxu0 0.0
        %6306 = vmatprep.subr.mxu0 0.0
        %6307 = vmatpush1.xpose.msra.mxu0 0.0
        %6308 = vmatprep.subr.mxu0 0.0
        %6309 = vmatpush1.xpose.msra.mxu0 0.0
        %6310 = vmatprep.subr.mxu0 0.0
        %6311 = vmatpush1.xpose.msra.mxu0 0.0
        %6312 = vmatprep.subr.mxu0 0.0
        %6313 = vmatpush1.xpose.msra.mxu0 0.0
        %6314 = vmatprep.subr.mxu0 0.0
        %6315 = vmatpush1.xpose.msra.mxu0 0.0
        %6316 = vmatprep.subr.mxu0 0.0
        %6317 = vmatpush1.xpose.msra.mxu0 0.0
        %6318 = vmatprep.subr.mxu0 0.0
        %6319 = vmatpush1.xpose.msra.mxu0 0.0
        %6320 = vmatprep.subr.mxu0 0.0
        %6321 = vmatpush1.xpose.msra.mxu0 0.0
        %6322 = vmatprep.subr.mxu0 0.0
        %6323 = vmatpush1.xpose.msra.mxu0 0.0
        %6324 = vmatprep.subr.mxu0 0.0
        %6325 = vmatpush1.xpose.msra.mxu0 0.0
        %6326 = vmatprep.mubr.f32.mxu0 0.0
        %6327 = vmatmul.mubr.f32.gmra.mrb[0].mxu0 %v6250
        %v6328 = vpop.f32.mrb[0].mxu0
        %v6329 = vadd.f32 %v470, %v6328
        %v6330 = vpop.f32.mrb[0].mxu0
        %6331 = vmatprep.mubr.f32.mxu0 0.0
        %6332 = vmatmul.mubr.f32.gmra.mrb[0].mxu0 %v6252
        %v6333 = vpop.f32.mrb[0].mxu0
        %v6334 = vadd.f32 %v470, %v6333
        %v6335 = vpop.f32.mrb[0].mxu0
        %6336 = vmatprep.mubr.f32.mxu0 0.0
        %6337 = vmatmul.mubr.f32.gmra.mrb[0].mxu0 %v6254
        %v6338 = vpop.f32.mrb[0].mxu0
        %v6339 = vadd.f32 %v470, %v6338
        %v6340 = vpop.f32.mrb[0].mxu0
        %6341 = vdwg.mxu0
        %v6342 = vsel %vm773, %v6329, -inf
        %6343 = vmax.xlane.f32.xlu0 %v6342
        %v6344 = vpop.xlane.xlu0 %6343
        %v6345 = vsel %vm773, %v6334, -inf
        %6346 = vmax.xlane.f32.xlu0 %v6345
        %v6347 = vpop.xlane.xlu0 %6346
        %v6348 = vsel %vm773, %v6339, -inf
        %6349 = vmax.xlane.f32.xlu0 %v6348
        %v6350 = vpop.xlane.xlu0 %6349
        %v6351 = vsub.f32 %v6329, %v6344
        %v6352 = vsub.f32 %v6334, %v6347
        %v6353 = vsub.f32 %v6339, %v6350
        %v6354 = vmul.f32 %v6351, 1.442695
        %v6355 = vpow.pop %v6354
        %v6356 = vmul.f32 %v6352, 1.442695
        %v6357 = vpow.pop %v6356
        %v6358 = vmul.f32 %v6353, 1.442695
        %v6359 = vpow.pop %v6358
        %v6360 = vsel %vm773, %v6355, 0.0
        %6361 = vadd.xlane.f32.xlu0 %v6360
        %v6362 = vpop.xlane.xlu0 %6361
        %v6363 = vsel %vm773, %v6357, 0.0
        %6364 = vadd.xlane.f32.xlu0 %v6363
        %v6365 = vpop.xlane.xlu0 %6364
        %v6366 = vsel %vm773, %v6359, 0.0
        %6367 = vadd.xlane.f32.xlu0 %v6366
        %v6368 = vpop.xlane.xlu0 %6367
        %v6369 = vrcp.pop %v6362
        %v6370 = vmul.f32 %v6355, %v6369
        %v6371 = vrcp.pop %v6365
        %v6372 = vmul.f32 %v6357, %v6371
        %v6373 = vrcp.pop %v6368
        %v6374 = vmul.f32 %v6359, %v6373
        %6375 = vrot.lane.b32.xlu0 %v4951, 32
        %v6376 = vpop.permute.xlu0 %6375
        %6377 = vrot.lane.b32.xlu0 %v4957, 32
        %v6378 = vpop.permute.xlu0 %6377
        %6379 = vrot.lane.b32.xlu0 %v4963, 32
        %v6380 = vpop.permute.xlu0 %6379
        %v6385 = vsel %vm773, %v6370, 0
        %v6388 = vsel %vm773, %v6372, 0
        %v6391 = vsel %vm773, %v6374, 0
        %6393 = vmatprep.subr.mxu0 0.0
        %6394 = vmatpush1.msra.mxu0 %v6376
        %6395 = vmatprep.subr.mxu0 0.0
        %6396 = vmatpush1.msra.mxu0 %v6378
        %6397 = vmatprep.subr.mxu0 0.0
        %6398 = vmatpush1.msra.mxu0 %v6380
        %6399 = vmatprep.subr.mxu0 0.0
        %6400 = vmatpush1.msra.mxu0 0.0
        %6401 = vmatprep.subr.mxu0 0.0
        %6402 = vmatpush1.msra.mxu0 0.0
        %6403 = vmatprep.subr.mxu0 0.0
        %6404 = vmatpush1.msra.mxu0 0.0
        %6405 = vmatprep.subr.mxu0 0.0
        %6406 = vmatpush1.msra.mxu0 0.0
        %6407 = vmatprep.subr.mxu0 0.0
        %6408 = vmatpush1.msra.mxu0 0.0
        %6409 = vmatprep.subr.mxu0 0.0
        %6410 = vmatpush1.msra.mxu0 0.0
        %6411 = vmatprep.subr.mxu0 0.0
        %6412 = vmatpush1.msra.mxu0 0.0
        %6413 = vmatprep.subr.mxu0 0.0
        %6414 = vmatpush1.msra.mxu0 0.0
        %6415 = vmatprep.subr.mxu0 0.0
        %6416 = vmatpush1.msra.mxu0 0.0
        %6417 = vmatprep.subr.mxu0 0.0
        %6418 = vmatpush1.msra.mxu0 0.0
        %6419 = vmatprep.subr.mxu0 0.0
        %6420 = vmatpush1.msra.mxu0 0.0
        %6421 = vmatprep.subr.mxu0 0.0
        %6422 = vmatpush1.msra.mxu0 0.0
        %6423 = vmatprep.subr.mxu0 0.0
        %6424 = vmatpush1.msra.mxu0 0.0
        %6425 = vmatprep.subr.mxu0 0.0
        %6426 = vmatpush1.msra.mxu0 0.0
        %6427 = vmatprep.subr.mxu0 0.0
        %6428 = vmatpush1.msra.mxu0 0.0
        %6429 = vmatprep.subr.mxu0 0.0
        %6430 = vmatpush1.msra.mxu0 0.0
        %6431 = vmatprep.subr.mxu0 0.0
        %6432 = vmatpush1.msra.mxu0 0.0
        %6433 = vmatprep.subr.mxu0 0.0
        %6434 = vmatpush1.msra.mxu0 0.0
        %6435 = vmatprep.subr.mxu0 0.0
        %6436 = vmatpush1.msra.mxu0 0.0
        %6437 = vmatprep.subr.mxu0 0.0
        %6438 = vmatpush1.msra.mxu0 0.0
        %6439 = vmatprep.subr.mxu0 0.0
        %6440 = vmatpush1.msra.mxu0 0.0
        %6441 = vmatprep.subr.mxu0 0.0
        %6442 = vmatpush1.msra.mxu0 0.0
        %6443 = vmatprep.subr.mxu0 0.0
        %6444 = vmatpush1.msra.mxu0 0.0
        %6445 = vmatprep.subr.mxu0 0.0
        %6446 = vmatpush1.msra.mxu0 0.0
        %6447 = vmatprep.subr.mxu0 0.0
        %6448 = vmatpush1.msra.mxu0 0.0
        %6449 = vmatprep.subr.mxu0 0.0
        %6450 = vmatpush1.msra.mxu0 0.0
        %6451 = vmatprep.subr.mxu0 0.0
        %6452 = vmatpush1.msra.mxu0 0.0
        %6453 = vmatprep.subr.mxu0 0.0
        %6454 = vmatpush1.msra.mxu0 0.0
        %6455 = vmatprep.subr.mxu0 0.0
        %6456 = vmatpush1.msra.mxu0 0.0
        %6457 = vmatprep.mubr.f32.mxu0 0.0
        %6458 = vmatmul.mubr.f32.gmra.mrb[0].mxu0 %v6385
        %v6459 = vpop.f32.mrb[0].mxu0
        %v6460 = vadd.f32 0.0, %v6459
        %v6461 = vpop.f32.mrb[0].mxu0
        %6462 = vmatprep.mubr.f32.mxu0 0.0
        %6463 = vmatmul.mubr.f32.gmra.mrb[0].mxu0 %v6388
        %v6464 = vpop.f32.mrb[0].mxu0
        %v6465 = vadd.f32 0.0, %v6464
        %v6466 = vpop.f32.mrb[0].mxu0
        %6467 = vmatprep.mubr.f32.mxu0 0.0
        %6468 = vmatmul.mubr.f32.gmra.mrb[0].mxu0 %v6391
        %v6469 = vpop.f32.mrb[0].mxu0
        %v6470 = vadd.f32 0.0, %v6469
        %v6471 = vpop.f32.mrb[0].mxu0
        %6472 = vdwg.mxu0
        %v6473 = vadd.f32 %v6235, %v6460
        %v6474 = vadd.f32 %v6236, %v6465
        %v6475 = vadd.f32 %v6237, %v6470
        %6476 = vrot.lane.b32.xlu0 %v5046, 104
        %v6477 = vpop.permute.xlu0 %6476
        %6478 = vrot.lane.b32.xlu0 %v5047, 104
        %v6479 = vpop.permute.xlu0 %6478
        %6480 = vrot.lane.b32.xlu0 %v5048, 104
        %v6481 = vpop.permute.xlu0 %6480
        %6482 = vrot.lane.b32.xlu0 %v5054, 72
        %v6483 = vpop.permute.xlu0 %6482
        %6484 = vrot.lane.b32.xlu0 %v5055, 72
        %v6485 = vpop.permute.xlu0 %6484
        %6486 = vrot.lane.b32.xlu0 %v5056, 72
        %v6487 = vpop.permute.xlu0 %6486
        %v6488 = vsel %vm677, %v6477, 0
        %v6490 = vsel %vm677, %v6479, 0
        %v6492 = vsel %vm677, %v6481, 0
        %v6494 = vsel %vm677, %v6483, 0
        %v6496 = vsel %vm677, %v6485, 0
        %v6498 = vsel %vm677, %v6487, 0
        %6500 = vmatprep.subr.mxu0 0.0
        %6501 = vmatpush1.xpose.msra.mxu0 %v6494
        %6502 = vmatprep.subr.mxu0 0.0
        %6503 = vmatpush1.xpose.msra.mxu0 %v6496
        %6504 = vmatprep.subr.mxu0 0.0
        %6505 = vmatpush1.xpose.msra.mxu0 %v6498
        %6506 = vmatprep.subr.mxu0 0.0
        %6507 = vmatpush1.xpose.msra.mxu0 0.0
        %6508 = vmatprep.subr.mxu0 0.0
        %6509 = vmatpush1.xpose.msra.mxu0 0.0
        %6510 = vmatprep.subr.mxu0 0.0
        %6511 = vmatpush1.xpose.msra.mxu0 0.0
        %6512 = vmatprep.subr.mxu0 0.0
        %6513 = vmatpush1.xpose.msra.mxu0 0.0
        %6514 = vmatprep.subr.mxu0 0.0
        %6515 = vmatpush1.xpose.msra.mxu0 0.0
        %6516 = vmatprep.subr.mxu0 0.0
        %6517 = vmatpush1.xpose.msra.mxu0 0.0
        %6518 = vmatprep.subr.mxu0 0.0
        %6519 = vmatpush1.xpose.msra.mxu0 0.0
        %6520 = vmatprep.subr.mxu0 0.0
        %6521 = vmatpush1.xpose.msra.mxu0 0.0
        %6522 = vmatprep.subr.mxu0 0.0
        %6523 = vmatpush1.xpose.msra.mxu0 0.0
        %6524 = vmatprep.subr.mxu0 0.0
        %6525 = vmatpush1.xpose.msra.mxu0 0.0
        %6526 = vmatprep.subr.mxu0 0.0
        %6527 = vmatpush1.xpose.msra.mxu0 0.0
        %6528 = vmatprep.subr.mxu0 0.0
        %6529 = vmatpush1.xpose.msra.mxu0 0.0
        %6530 = vmatprep.subr.mxu0 0.0
        %6531 = vmatpush1.xpose.msra.mxu0 0.0
        %6532 = vmatprep.subr.mxu0 0.0
        %6533 = vmatpush1.xpose.msra.mxu0 0.0
        %6534 = vmatprep.subr.mxu0 0.0
        %6535 = vmatpush1.xpose.msra.mxu0 0.0
        %6536 = vmatprep.subr.mxu0 0.0
        %6537 = vmatpush1.xpose.msra.mxu0 0.0
        %6538 = vmatprep.subr.mxu0 0.0
        %6539 = vmatpush1.xpose.msra.mxu0 0.0
        %6540 = vmatprep.subr.mxu0 0.0
        %6541 = vmatpush1.xpose.msra.mxu0 0.0
        %6542 = vmatprep.subr.mxu0 0.0
        %6543 = vmatpush1.xpose.msra.mxu0 0.0
        %6544 = vmatprep.subr.mxu0 0.0
        %6545 = vmatpush1.xpose.msra.mxu0 0.0
        %6546 = vmatprep.subr.mxu0 0.0
        %6547 = vmatpush1.xpose.msra.mxu0 0.0
        %6548 = vmatprep.subr.mxu0 0.0
        %6549 = vmatpush1.xpose.msra.mxu0 0.0
        %6550 = vmatprep.subr.mxu0 0.0
        %6551 = vmatpush1.xpose.msra.mxu0 0.0
        %6552 = vmatprep.subr.mxu0 0.0
        %6553 = vmatpush1.xpose.msra.mxu0 0.0
        %6554 = vmatprep.subr.mxu0 0.0
        %6555 = vmatpush1.xpose.msra.mxu0 0.0
        %6556 = vmatprep.subr.mxu0 0.0
        %6557 = vmatpush1.xpose.msra.mxu0 0.0
        %6558 = vmatprep.subr.mxu0 0.0
        %6559 = vmatpush1.xpose.msra.mxu0 0.0
        %6560 = vmatprep.subr.mxu0 0.0
        %6561 = vmatpush1.xpose.msra.mxu0 0.0
        %6562 = vmatprep.subr.mxu0 0.0
        %6563 = vmatpush1.xpose.msra.mxu0 0.0
        %6564 = vmatprep.mubr.f32.mxu0 0.0
        %6565 = vmatmul.mubr.f32.gmra.mrb[0].mxu0 %v6488
        %v6566 = vpop.f32.mrb[0].mxu0
        %v6567 = vadd.f32 %v470, %v6566
        %v6568 = vpop.f32.mrb[0].mxu0
        %6569 = vmatprep.mubr.f32.mxu0 0.0
        %6570 = vmatmul.mubr.f32.gmra.mrb[0].mxu0 %v6490
        %v6571 = vpop.f32.mrb[0].mxu0
        %v6572 = vadd.f32 %v470, %v6571
        %v6573 = vpop.f32.mrb[0].mxu0
        %6574 = vmatprep.mubr.f32.mxu0 0.0
        %6575 = vmatmul.mubr.f32.gmra.mrb[0].mxu0 %v6492
        %v6576 = vpop.f32.mrb[0].mxu0
        %v6577 = vadd.f32 %v470, %v6576
        %v6578 = vpop.f32.mrb[0].mxu0
        %6579 = vdwg.mxu0
        %v6580 = vsel %vm773, %v6567, -inf
        %6581 = vmax.xlane.f32.xlu0 %v6580
        %v6582 = vpop.xlane.xlu0 %6581
        %v6583 = vsel %vm773, %v6572, -inf
        %6584 = vmax.xlane.f32.xlu0 %v6583
        %v6585 = vpop.xlane.xlu0 %6584
        %v6586 = vsel %vm773, %v6577, -inf
        %6587 = vmax.xlane.f32.xlu0 %v6586
        %v6588 = vpop.xlane.xlu0 %6587
        %v6589 = vsub.f32 %v6567, %v6582
        %v6590 = vsub.f32 %v6572, %v6585
        %v6591 = vsub.f32 %v6577, %v6588
        %v6592 = vmul.f32 %v6589, 1.442695
        %v6593 = vpow.pop %v6592
        %v6594 = vmul.f32 %v6590, 1.442695
        %v6595 = vpow.pop %v6594
        %v6596 = vmul.f32 %v6591, 1.442695
        %v6597 = vpow.pop %v6596
        %v6598 = vsel %vm773, %v6593, 0.0
        %6599 = vadd.xlane.f32.xlu0 %v6598
        %v6600 = vpop.xlane.xlu0 %6599
        %v6601 = vsel %vm773, %v6595, 0.0
        %6602 = vadd.xlane.f32.xlu0 %v6601
        %v6603 = vpop.xlane.xlu0 %6602
        %v6604 = vsel %vm773, %v6597, 0.0
        %6605 = vadd.xlane.f32.xlu0 %v6604
        %v6606 = vpop.xlane.xlu0 %6605
        %v6607 = vrcp.pop %v6600
        %v6608 = vmul.f32 %v6593, %v6607
        %v6609 = vrcp.pop %v6603
        %v6610 = vmul.f32 %v6595, %v6609
        %v6611 = vrcp.pop %v6606
        %v6612 = vmul.f32 %v6597, %v6611
        %v6614 = vsel %vm773, %v6608, 0
        %v6617 = vsel %vm773, %v6610, 0
        %v6620 = vsel %vm773, %v6612, 0
        %6622 = vmatprep.subr.mxu0 0.0
        %6623 = vmatpush1.msra.mxu0 %v5032
        %6624 = vmatprep.subr.mxu0 0.0
        %6625 = vmatpush1.msra.mxu0 %v5037
        %6626 = vmatprep.subr.mxu0 0.0
        %6627 = vmatpush1.msra.mxu0 %v5042
        %6628 = vmatprep.subr.mxu0 0.0
        %6629 = vmatpush1.msra.mxu0 0.0
        %6630 = vmatprep.subr.mxu0 0.0
        %6631 = vmatpush1.msra.mxu0 0.0
        %6632 = vmatprep.subr.mxu0 0.0
        %6633 = vmatpush1.msra.mxu0 0.0
        %6634 = vmatprep.subr.mxu0 0.0
        %6635 = vmatpush1.msra.mxu0 0.0
        %6636 = vmatprep.subr.mxu0 0.0
        %6637 = vmatpush1.msra.mxu0 0.0
        %6638 = vmatprep.subr.mxu0 0.0
        %6639 = vmatpush1.msra.mxu0 0.0
        %6640 = vmatprep.subr.mxu0 0.0
        %6641 = vmatpush1.msra.mxu0 0.0
        %6642 = vmatprep.subr.mxu0 0.0
        %6643 = vmatpush1.msra.mxu0 0.0
        %6644 = vmatprep.subr.mxu0 0.0
        %6645 = vmatpush1.msra.mxu0 0.0
        %6646 = vmatprep.subr.mxu0 0.0
        %6647 = vmatpush1.msra.mxu0 0.0
        %6648 = vmatprep.subr.mxu0 0.0
        %6649 = vmatpush1.msra.mxu0 0.0
        %6650 = vmatprep.subr.mxu0 0.0
        %6651 = vmatpush1.msra.mxu0 0.0
        %6652 = vmatprep.subr.mxu0 0.0
        %6653 = vmatpush1.msra.mxu0 0.0
        %6654 = vmatprep.subr.mxu0 0.0
        %6655 = vmatpush1.msra.mxu0 0.0
        %6656 = vmatprep.subr.mxu0 0.0
        %6657 = vmatpush1.msra.mxu0 0.0
        %6658 = vmatprep.subr.mxu0 0.0
        %6659 = vmatpush1.msra.mxu0 0.0
        %6660 = vmatprep.subr.mxu0 0.0
        %6661 = vmatpush1.msra.mxu0 0.0
        %6662 = vmatprep.subr.mxu0 0.0
        %6663 = vmatpush1.msra.mxu0 0.0
        %6664 = vmatprep.subr.mxu0 0.0
        %6665 = vmatpush1.msra.mxu0 0.0
        %6666 = vmatprep.subr.mxu0 0.0
        %6667 = vmatpush1.msra.mxu0 0.0
        %6668 = vmatprep.subr.mxu0 0.0
        %6669 = vmatpush1.msra.mxu0 0.0
        %6670 = vmatprep.subr.mxu0 0.0
        %6671 = vmatpush1.msra.mxu0 0.0
        %6672 = vmatprep.subr.mxu0 0.0
        %6673 = vmatpush1.msra.mxu0 0.0
        %6674 = vmatprep.subr.mxu0 0.0
        %6675 = vmatpush1.msra.mxu0 0.0
        %6676 = vmatprep.subr.mxu0 0.0
        %6677 = vmatpush1.msra.mxu0 0.0
        %6678 = vmatprep.subr.mxu0 0.0
        %6679 = vmatpush1.msra.mxu0 0.0
        %6680 = vmatprep.subr.mxu0 0.0
        %6681 = vmatpush1.msra.mxu0 0.0
        %6682 = vmatprep.subr.mxu0 0.0
        %6683 = vmatpush1.msra.mxu0 0.0
        %6684 = vmatprep.subr.mxu0 0.0
        %6685 = vmatpush1.msra.mxu0 0.0
        %6686 = vmatprep.mubr.f32.mxu0 0.0
        %6687 = vmatmul.mubr.f32.gmra.mrb[0].mxu0 %v6614
        %v6688 = vpop.f32.mrb[0].mxu0
        %v6689 = vadd.f32 0.0, %v6688
        %v6690 = vpop.f32.mrb[0].mxu0
        %6691 = vmatprep.mubr.f32.mxu0 0.0
        %6692 = vmatmul.mubr.f32.gmra.mrb[0].mxu0 %v6617
        %v6693 = vpop.f32.mrb[0].mxu0
        %v6694 = vadd.f32 0.0, %v6693
        %v6695 = vpop.f32.mrb[0].mxu0
        %6696 = vmatprep.mubr.f32.mxu0 0.0
        %6697 = vmatmul.mubr.f32.gmra.mrb[0].mxu0 %v6620
        %v6698 = vpop.f32.mrb[0].mxu0
        %v6699 = vadd.f32 0.0, %v6698
        %v6700 = vpop.f32.mrb[0].mxu0
        %6701 = vdwg.mxu0
        %v6702 = vadd.f32 %v6473, %v6689
        %v6703 = vadd.f32 %v6474, %v6694
        %v6704 = vadd.f32 %v6475, %v6699
        %6705 = vrot.lane.b32.xlu0 %v5046, 100
        %v6706 = vpop.permute.xlu0 %6705
        %6707 = vrot.lane.b32.xlu0 %v5047, 100
        %v6708 = vpop.permute.xlu0 %6707
        %6709 = vrot.lane.b32.xlu0 %v5048, 100
        %v6710 = vpop.permute.xlu0 %6709
        %6711 = vrot.lane.b32.xlu0 %v5054, 68
        %v6712 = vpop.permute.xlu0 %6711
        %6713 = vrot.lane.b32.xlu0 %v5055, 68
        %v6714 = vpop.permute.xlu0 %6713
        %6715 = vrot.lane.b32.xlu0 %v5056, 68
        %v6716 = vpop.permute.xlu0 %6715
        %v6717 = vsel %vm677, %v6706, 0
        %v6719 = vsel %vm677, %v6708, 0
        %v6721 = vsel %vm677, %v6710, 0
        %v6723 = vsel %vm677, %v6712, 0
        %v6725 = vsel %vm677, %v6714, 0
        %v6727 = vsel %vm677, %v6716, 0
        %6729 = vmatprep.subr.mxu0 0.0
        %6730 = vmatpush1.xpose.msra.mxu0 %v6723
        %6731 = vmatprep.subr.mxu0 0.0
        %6732 = vmatpush1.xpose.msra.mxu0 %v6725
        %6733 = vmatprep.subr.mxu0 0.0
        %6734 = vmatpush1.xpose.msra.mxu0 %v6727
        %6735 = vmatprep.subr.mxu0 0.0
        %6736 = vmatpush1.xpose.msra.mxu0 0.0
        %6737 = vmatprep.subr.mxu0 0.0
        %6738 = vmatpush1.xpose.msra.mxu0 0.0
        %6739 = vmatprep.subr.mxu0 0.0
        %6740 = vmatpush1.xpose.msra.mxu0 0.0
        %6741 = vmatprep.subr.mxu0 0.0
        %6742 = vmatpush1.xpose.msra.mxu0 0.0
        %6743 = vmatprep.subr.mxu0 0.0
        %6744 = vmatpush1.xpose.msra.mxu0 0.0
        %6745 = vmatprep.subr.mxu0 0.0
        %6746 = vmatpush1.xpose.msra.mxu0 0.0
        %6747 = vmatprep.subr.mxu0 0.0
        %6748 = vmatpush1.xpose.msra.mxu0 0.0
        %6749 = vmatprep.subr.mxu0 0.0
        %6750 = vmatpush1.xpose.msra.mxu0 0.0
        %6751 = vmatprep.subr.mxu0 0.0
        %6752 = vmatpush1.xpose.msra.mxu0 0.0
        %6753 = vmatprep.subr.mxu0 0.0
        %6754 = vmatpush1.xpose.msra.mxu0 0.0
        %6755 = vmatprep.subr.mxu0 0.0
        %6756 = vmatpush1.xpose.msra.mxu0 0.0
        %6757 = vmatprep.subr.mxu0 0.0
        %6758 = vmatpush1.xpose.msra.mxu0 0.0
        %6759 = vmatprep.subr.mxu0 0.0
        %6760 = vmatpush1.xpose.msra.mxu0 0.0
        %6761 = vmatprep.subr.mxu0 0.0
        %6762 = vmatpush1.xpose.msra.mxu0 0.0
        %6763 = vmatprep.subr.mxu0 0.0
        %6764 = vmatpush1.xpose.msra.mxu0 0.0
        %6765 = vmatprep.subr.mxu0 0.0
        %6766 = vmatpush1.xpose.msra.mxu0 0.0
        %6767 = vmatprep.subr.mxu0 0.0
        %6768 = vmatpush1.xpose.msra.mxu0 0.0
        %6769 = vmatprep.subr.mxu0 0.0
        %6770 = vmatpush1.xpose.msra.mxu0 0.0
        %6771 = vmatprep.subr.mxu0 0.0
        %6772 = vmatpush1.xpose.msra.mxu0 0.0
        %6773 = vmatprep.subr.mxu0 0.0
        %6774 = vmatpush1.xpose.msra.mxu0 0.0
        %6775 = vmatprep.subr.mxu0 0.0
        %6776 = vmatpush1.xpose.msra.mxu0 0.0
        %6777 = vmatprep.subr.mxu0 0.0
        %6778 = vmatpush1.xpose.msra.mxu0 0.0
        %6779 = vmatprep.subr.mxu0 0.0
        %6780 = vmatpush1.xpose.msra.mxu0 0.0
        %6781 = vmatprep.subr.mxu0 0.0
        %6782 = vmatpush1.xpose.msra.mxu0 0.0
        %6783 = vmatprep.subr.mxu0 0.0
        %6784 = vmatpush1.xpose.msra.mxu0 0.0
        %6785 = vmatprep.subr.mxu0 0.0
        %6786 = vmatpush1.xpose.msra.mxu0 0.0
        %6787 = vmatprep.subr.mxu0 0.0
        %6788 = vmatpush1.xpose.msra.mxu0 0.0
        %6789 = vmatprep.subr.mxu0 0.0
        %6790 = vmatpush1.xpose.msra.mxu0 0.0
        %6791 = vmatprep.subr.mxu0 0.0
        %6792 = vmatpush1.xpose.msra.mxu0 0.0
        %6793 = vmatprep.mubr.f32.mxu0 0.0
        %6794 = vmatmul.mubr.f32.gmra.mrb[0].mxu0 %v6717
        %v6795 = vpop.f32.mrb[0].mxu0
        %v6796 = vadd.f32 %v470, %v6795
        %v6797 = vpop.f32.mrb[0].mxu0
        %6798 = vmatprep.mubr.f32.mxu0 0.0
        %6799 = vmatmul.mubr.f32.gmra.mrb[0].mxu0 %v6719
        %v6800 = vpop.f32.mrb[0].mxu0
        %v6801 = vadd.f32 %v470, %v6800
        %v6802 = vpop.f32.mrb[0].mxu0
        %6803 = vmatprep.mubr.f32.mxu0 0.0
        %6804 = vmatmul.mubr.f32.gmra.mrb[0].mxu0 %v6721
        %v6805 = vpop.f32.mrb[0].mxu0
        %v6806 = vadd.f32 %v470, %v6805
        %v6807 = vpop.f32.mrb[0].mxu0
        %6808 = vdwg.mxu0
        %v6809 = vsel %vm773, %v6796, -inf
        %6810 = vmax.xlane.f32.xlu0 %v6809
        %v6811 = vpop.xlane.xlu0 %6810
        %v6812 = vsel %vm773, %v6801, -inf
        %6813 = vmax.xlane.f32.xlu0 %v6812
        %v6814 = vpop.xlane.xlu0 %6813
        %v6815 = vsel %vm773, %v6806, -inf
        %6816 = vmax.xlane.f32.xlu0 %v6815
        %v6817 = vpop.xlane.xlu0 %6816
        %v6818 = vsub.f32 %v6796, %v6811
        %v6819 = vsub.f32 %v6801, %v6814
        %v6820 = vsub.f32 %v6806, %v6817
        %v6821 = vmul.f32 %v6818, 1.442695
        %v6822 = vpow.pop %v6821
        %v6823 = vmul.f32 %v6819, 1.442695
        %v6824 = vpow.pop %v6823
        %v6825 = vmul.f32 %v6820, 1.442695
        %v6826 = vpow.pop %v6825
        %v6827 = vsel %vm773, %v6822, 0.0
        %6828 = vadd.xlane.f32.xlu0 %v6827
        %v6829 = vpop.xlane.xlu0 %6828
        %v6830 = vsel %vm773, %v6824, 0.0
        %6831 = vadd.xlane.f32.xlu0 %v6830
        %v6832 = vpop.xlane.xlu0 %6831
        %v6833 = vsel %vm773, %v6826, 0.0
        %6834 = vadd.xlane.f32.xlu0 %v6833
        %v6835 = vpop.xlane.xlu0 %6834
        %v6836 = vrcp.pop %v6829
        %v6837 = vmul.f32 %v6822, %v6836
        %v6838 = vrcp.pop %v6832
        %v6839 = vmul.f32 %v6824, %v6838
        %v6840 = vrcp.pop %v6835
        %v6841 = vmul.f32 %v6826, %v6840
        %6845 = vrot.lane.b32.xlu0 %v5032, 96
        %v6846 = vpop.permute.xlu0 %6845
        %6847 = vrot.lane.b32.xlu0 %v5037, 96
        %v6848 = vpop.permute.xlu0 %6847
        %6849 = vrot.lane.b32.xlu0 %v5042, 96
        %v6850 = vpop.permute.xlu0 %6849
        %v6855 = vsel %vm773, %v6837, 0
        %v6858 = vsel %vm773, %v6839, 0
        %v6861 = vsel %vm773, %v6841, 0
        %6863 = vmatprep.subr.mxu0 0.0
        %6864 = vmatpush1.msra.mxu0 %v6846
        %6865 = vmatprep.subr.mxu0 0.0
        %6866 = vmatpush1.msra.mxu0 %v6848
        %6867 = vmatprep.subr.mxu0 0.0
        %6868 = vmatpush1.msra.mxu0 %v6850
        %6869 = vmatprep.subr.mxu0 0.0
        %6870 = vmatpush1.msra.mxu0 0.0
        %6871 = vmatprep.subr.mxu0 0.0
        %6872 = vmatpush1.msra.mxu0 0.0
        %6873 = vmatprep.subr.mxu0 0.0
        %6874 = vmatpush1.msra.mxu0 0.0
        %6875 = vmatprep.subr.mxu0 0.0
        %6876 = vmatpush1.msra.mxu0 0.0
        %6877 = vmatprep.subr.mxu0 0.0
        %6878 = vmatpush1.msra.mxu0 0.0
        %6879 = vmatprep.subr.mxu0 0.0
        %6880 = vmatpush1.msra.mxu0 0.0
        %6881 = vmatprep.subr.mxu0 0.0
        %6882 = vmatpush1.msra.mxu0 0.0
        %6883 = vmatprep.subr.mxu0 0.0
        %6884 = vmatpush1.msra.mxu0 0.0
        %6885 = vmatprep.subr.mxu0 0.0
        %6886 = vmatpush1.msra.mxu0 0.0
        %6887 = vmatprep.subr.mxu0 0.0
        %6888 = vmatpush1.msra.mxu0 0.0
        %6889 = vmatprep.subr.mxu0 0.0
        %6890 = vmatpush1.msra.mxu0 0.0
        %6891 = vmatprep.subr.mxu0 0.0
        %6892 = vmatpush1.msra.mxu0 0.0
        %6893 = vmatprep.subr.mxu0 0.0
        %6894 = vmatpush1.msra.mxu0 0.0
        %6895 = vmatprep.subr.mxu0 0.0
        %6896 = vmatpush1.msra.mxu0 0.0
        %6897 = vmatprep.subr.mxu0 0.0
        %6898 = vmatpush1.msra.mxu0 0.0
        %6899 = vmatprep.subr.mxu0 0.0
        %6900 = vmatpush1.msra.mxu0 0.0
        %6901 = vmatprep.subr.mxu0 0.0
        %6902 = vmatpush1.msra.mxu0 0.0
        %6903 = vmatprep.subr.mxu0 0.0
        %6904 = vmatpush1.msra.mxu0 0.0
        %6905 = vmatprep.subr.mxu0 0.0
        %6906 = vmatpush1.msra.mxu0 0.0
        %6907 = vmatprep.subr.mxu0 0.0
        %6908 = vmatpush1.msra.mxu0 0.0
        %6909 = vmatprep.subr.mxu0 0.0
        %6910 = vmatpush1.msra.mxu0 0.0
        %6911 = vmatprep.subr.mxu0 0.0
        %6912 = vmatpush1.msra.mxu0 0.0
        %6913 = vmatprep.subr.mxu0 0.0
        %6914 = vmatpush1.msra.mxu0 0.0
        %6915 = vmatprep.subr.mxu0 0.0
        %6916 = vmatpush1.msra.mxu0 0.0
        %6917 = vmatprep.subr.mxu0 0.0
        %6918 = vmatpush1.msra.mxu0 0.0
        %6919 = vmatprep.subr.mxu0 0.0
        %6920 = vmatpush1.msra.mxu0 0.0
        %6921 = vmatprep.subr.mxu0 0.0
        %6922 = vmatpush1.msra.mxu0 0.0
        %6923 = vmatprep.subr.mxu0 0.0
        %6924 = vmatpush1.msra.mxu0 0.0
        %6925 = vmatprep.subr.mxu0 0.0
        %6926 = vmatpush1.msra.mxu0 0.0
        %6927 = vmatprep.mubr.f32.mxu0 0.0
        %6928 = vmatmul.mubr.f32.gmra.mrb[0].mxu0 %v6855
        %v6929 = vpop.f32.mrb[0].mxu0
        %v6930 = vadd.f32 0.0, %v6929
        %v6931 = vpop.f32.mrb[0].mxu0
        %6932 = vmatprep.mubr.f32.mxu0 0.0
        %6933 = vmatmul.mubr.f32.gmra.mrb[0].mxu0 %v6858
        %v6934 = vpop.f32.mrb[0].mxu0
        %v6935 = vadd.f32 0.0, %v6934
        %v6936 = vpop.f32.mrb[0].mxu0
        %6937 = vmatprep.mubr.f32.mxu0 0.0
        %6938 = vmatmul.mubr.f32.gmra.mrb[0].mxu0 %v6861
        %v6939 = vpop.f32.mrb[0].mxu0
        %v6940 = vadd.f32 0.0, %v6939
        %v6941 = vpop.f32.mrb[0].mxu0
        %6942 = vdwg.mxu0
        %v6943 = vadd.f32 %v6702, %v6930
        %v6944 = vadd.f32 %v6703, %v6935
        %v6945 = vadd.f32 %v6704, %v6940
        %v6946 = vld [vmem:[%s2 + $0x1e0] ss:$0 sm:$0xff]
        %v6947 = vadd.f32 %v6943, %v6946
        %v6948 = vadd.f32 %v6944, %v6946
        %v6949 = vadd.f32 %v6945, %v6946
        %v6950 = vadd.f32 %v4858, %v6947
        %v6951 = vadd.f32 %v4859, %v6948
        %v6952 = vadd.f32 %v4860, %v6949
        %v6953 = vld [vmem:[%s2 + $0x1e1] ss:$0 sm:$0xff]
        %v6954 = vld [vmem:[%s2 + $0x1e2] ss:$0 sm:$0xff]
        %v6955 = vsel %vm483, %v6950, 0.0
        %6956 = vadd.xlane.f32.xlu0 %v6955
        %v6957 = vpop.xlane.xlu0 %6956
        %v6958 = vsel %vm483, %v6951, 0.0
        %6959 = vadd.xlane.f32.xlu0 %v6958
        %v6960 = vpop.xlane.xlu0 %6959
        %v6961 = vsel %vm483, %v6952, 0.0
        %6962 = vadd.xlane.f32.xlu0 %v6961
        %v6963 = vpop.xlane.xlu0 %6962
        %v6964 = vmul.f32 %v6957, %v2577
        %v6965 = vmul.f32 %v6960, %v2577
        %v6966 = vmul.f32 %v6963, %v2577
        %v6967 = vsub.f32 %v6950, %v6964
        %v6968 = vsub.f32 %v6951, %v6965
        %v6969 = vsub.f32 %v6952, %v6966
        %v6970 = vmul.f32 %v6967, %v6967
        %v6971 = vmul.f32 %v6968, %v6968
        %v6972 = vmul.f32 %v6969, %v6969
        %v6973 = vsel %vm483, %v6970, 0.0
        %6974 = vadd.xlane.f32.xlu0 %v6973
        %v6975 = vpop.xlane.xlu0 %6974
        %v6976 = vsel %vm483, %v6971, 0.0
        %6977 = vadd.xlane.f32.xlu0 %v6976
        %v6978 = vpop.xlane.xlu0 %6977
        %v6979 = vsel %vm483, %v6972, 0.0
        %6980 = vadd.xlane.f32.xlu0 %v6979
        %v6981 = vpop.xlane.xlu0 %6980
        %v6982 = vmul.f32 %v6975, %v2577
        %v6983 = vmul.f32 %v6978, %v2577
        %v6984 = vmul.f32 %v6981, %v2577
        %v6985 = vadd.f32 %v6982, 1e-05
        %v6986 = vadd.f32 %v6983, 1e-05
        %v6987 = vadd.f32 %v6984, 1e-05
        %v6988 = vrsqrt.pop %v6985
        %v6989 = vrsqrt.pop %v6986
        %v6990 = vrsqrt.pop %v6987
        %v6991 = vmul.f32 %v6967, %v6988
        %v6992 = vmul.f32 %v6968, %v6989
        %v6993 = vmul.f32 %v6969, %v6990
        %v6994 = vmul.f32 %v6991, %v6953
        %v6995 = vmul.f32 %v6992, %v6953
        %v6996 = vmul.f32 %v6993, %v6953
        %v6997 = vadd.f32 %v6994, %v6954
        %v6998 = vadd.f32 %v6995, %v6954
        %v6999 = vadd.f32 %v6996, %v6954
        %v7000 = vpack.c.bf16 %v6998, %v6997
        %v7001 = vpack.c.bf16 %v6999, %v6999
        %s7002 = scalar_lea.vmem %s4, 256
        %v7003 = vld [vmem:[%s7002] sm:$0xff]
        %v7004 = vld [vmem:[%s7002 + $0x8] sm:$0xff]
        %v7005 = vld [vmem:[%s7002 + $0x40] sm:$0xff]
        %v7006 = vld [vmem:[%s7002 + $0x48] sm:$0xff]
        %v7007 = vld [vmem:[%s7002 + $0x80] sm:$0xff]
        %v7008 = vld [vmem:[%s7002 + $0x88] sm:$0xff]
        %v7009 = vld [vmem:[%s7002 + $0xc0] sm:$0xff]
        %v7010 = vld [vmem:[%s7002 + $0xc8] sm:$0xff]
        %s7011 = scalar_lea.vmem %s3, 1
        %v7012 = vld [vmem:[%s7011] ss:$2 sm:$0xf]
        %v7014 = vlaneseq
        %v7015 = vshrl.u32 %v7014, 7
        %v7016 = vsub.s32 0, %v7015
        %v7017 = vrot.slane %v7012, %v7016
        %v7018 = vlaneseq
        %v7019 = vshrl.u32 %v7018, 7
        %v7020 = vsub.s32 1, %v7019
        %v7021 = vrot.slane %v7012, %v7020
        %v7022 = vlaneseq
        %v7023 = vshrl.u32 %v7022, 7
        %v7024 = vsub.s32 2, %v7023
        %v7025 = vrot.slane %v7012, %v7024
        %v7026 = vlaneseq
        %v7027 = vshrl.u32 %v7026, 7
        %v7028 = vsub.s32 3, %v7027
        %v7029 = vrot.slane %v7012, %v7028
        %v7042 = vunpack.c.l.b16 %v7003
        %v7043 = vunpack.c.h.b16 %v7003
        %v7044 = vunpack.c.l.b16 %v7004
        %v7045 = vunpack.c.h.b16 %v7004
        %v7046 = vunpack.c.l.b16 %v7005
        %v7047 = vunpack.c.h.b16 %v7005
        %v7048 = vunpack.c.l.b16 %v7006
        %v7049 = vunpack.c.h.b16 %v7006
        %v7050 = vunpack.c.l.b16 %v7007
        %v7051 = vunpack.c.h.b16 %v7007
        %v7052 = vunpack.c.l.b16 %v7008
        %v7053 = vunpack.c.h.b16 %v7008
        %v7054 = vunpack.c.l.b16 %v7009
        %v7055 = vunpack.c.h.b16 %v7009
        %v7056 = vunpack.c.l.b16 %v7010
        %v7057 = vunpack.c.h.b16 %v7010
        %v7058 = vpack.c.b16 %v7046, %v7042
        %v7059 = vpack.c.b16 %v7047, %v7043
        %v7060 = vpack.c.b16 %v7048, %v7044
        %v7061 = vpack.c.b16 %v7049, %v7045
        %v7062 = vpack.c.b16 %v7054, %v7050
        %v7063 = vpack.c.b16 %v7055, %v7051
        %v7064 = vpack.c.b16 %v7056, %v7052
        %v7065 = vpack.c.b16 %v7057, %v7053
        %v7075 = vsel %vm483, %v7000, 0
        %v7078 = vsel %vm483, %v7001, 0
        %7080 = vmatprep.subr.bf16.mxu0 %v7059
        %7081 = vmatpush1.bf16.msra.mxu0 %v7058
        %7082 = vmatprep.subr.bf16.mxu0 %v7063
        %7083 = vmatpush1.bf16.msra.mxu0 %v7062
        %7084 = vmatprep.subr.bf16.mxu0 0
        %7085 = vmatpush1.bf16.msra.mxu0 0
        %7086 = vmatprep.subr.bf16.mxu0 0
        %7087 = vmatpush1.bf16.msra.mxu0 0
        %7088 = vmatprep.subr.bf16.mxu0 0
        %7089 = vmatpush1.bf16.msra.mxu0 0
        %7090 = vmatprep.subr.bf16.mxu0 0
        %7091 = vmatpush1.bf16.msra.mxu0 0
        %7092 = vmatprep.subr.bf16.mxu0 0
        %7093 = vmatpush1.bf16.msra.mxu0 0
        %7094 = vmatprep.subr.bf16.mxu0 0
        %7095 = vmatpush1.bf16.msra.mxu0 0
        %7096 = vmatprep.subr.bf16.mxu0 0
        %7097 = vmatpush1.bf16.msra.mxu0 0
        %7098 = vmatprep.subr.bf16.mxu0 0
        %7099 = vmatpush1.bf16.msra.mxu0 0
        %7100 = vmatprep.subr.bf16.mxu0 0
        %7101 = vmatpush1.bf16.msra.mxu0 0
        %7102 = vmatprep.subr.bf16.mxu0 0
        %7103 = vmatpush1.bf16.msra.mxu0 0
        %7104 = vmatprep.subr.bf16.mxu0 0
        %7105 = vmatpush1.bf16.msra.mxu0 0
        %7106 = vmatprep.subr.bf16.mxu0 0
        %7107 = vmatpush1.bf16.msra.mxu0 0
        %7108 = vmatprep.subr.bf16.mxu0 0
        %7109 = vmatpush1.bf16.msra.mxu0 0
        %7110 = vmatprep.subr.bf16.mxu0 0
        %7111 = vmatpush1.bf16.msra.mxu0 0
        %7112 = vmatprep.mubr.bf16.mxu0 0
        %7113 = vmatmul.mubr.bf16.gmra.mrb[0].mxu0 %v7075
        %v7114 = vpop.f32.mrb[0].mxu0
        %v7115 = vadd.f32 %v7017, %v7114
        %v7116 = vpop.f32.mrb[0].mxu0
        %v7117 = vadd.f32 %v7021, %v7116
        %v7118 = vpop.f32.mrb[0].mxu0
        %v7119 = vadd.f32 %v7017, %v7118
        %v7120 = vpop.f32.mrb[0].mxu0
        %v7121 = vadd.f32 %v7021, %v7120
        %7122 = vmatprep.mubr.bf16.mxu0 0
        %7123 = vmatmul.mubr.bf16.gmra.mrb[0].mxu0 %v7078
        %v7124 = vpop.f32.mrb[0].mxu0
        %v7125 = vadd.f32 %v7017, %v7124
        %v7126 = vpop.f32.mrb[0].mxu0
        %v7127 = vadd.f32 %v7021, %v7126
        %v7128 = vpop.f32.mrb[0].mxu0
        %v7129 = vpop.f32.mrb[0].mxu0
        %7130 = vdwg.mxu0
        %7131 = vmatprep.subr.bf16.mxu0 %v7061
        %7132 = vmatpush1.bf16.msra.mxu0 %v7060
        %7133 = vmatprep.subr.bf16.mxu0 %v7065
        %7134 = vmatpush1.bf16.msra.mxu0 %v7064
        %7135 = vmatprep.subr.bf16.mxu0 0
        %7136 = vmatpush1.bf16.msra.mxu0 0
        %7137 = vmatprep.subr.bf16.mxu0 0
        %7138 = vmatpush1.bf16.msra.mxu0 0
        %7139 = vmatprep.subr.bf16.mxu0 0
        %7140 = vmatpush1.bf16.msra.mxu0 0
        %7141 = vmatprep.subr.bf16.mxu0 0
        %7142 = vmatpush1.bf16.msra.mxu0 0
        %7143 = vmatprep.subr.bf16.mxu0 0
        %7144 = vmatpush1.bf16.msra.mxu0 0
        %7145 = vmatprep.subr.bf16.mxu0 0
        %7146 = vmatpush1.bf16.msra.mxu0 0
        %7147 = vmatprep.subr.bf16.mxu0 0
        %7148 = vmatpush1.bf16.msra.mxu0 0
        %7149 = vmatprep.subr.bf16.mxu0 0
        %7150 = vmatpush1.bf16.msra.mxu0 0
        %7151 = vmatprep.subr.bf16.mxu0 0
        %7152 = vmatpush1.bf16.msra.mxu0 0
        %7153 = vmatprep.subr.bf16.mxu0 0
        %7154 = vmatpush1.bf16.msra.mxu0 0
        %7155 = vmatprep.subr.bf16.mxu0 0
        %7156 = vmatpush1.bf16.msra.mxu0 0
        %7157 = vmatprep.subr.bf16.mxu0 0
        %7158 = vmatpush1.bf16.msra.mxu0 0
        %7159 = vmatprep.subr.bf16.mxu0 0
        %7160 = vmatpush1.bf16.msra.mxu0 0
        %7161 = vmatprep.subr.bf16.mxu0 0
        %7162 = vmatpush1.bf16.msra.mxu0 0
        %7163 = vmatprep.mubr.bf16.mxu0 0
        %7164 = vmatmul.mubr.bf16.gmra.mrb[0].mxu0 %v7075
        %v7165 = vpop.f32.mrb[0].mxu0
        %v7166 = vadd.f32 %v7025, %v7165
        %v7167 = vpop.f32.mrb[0].mxu0
        %v7168 = vadd.f32 %v7029, %v7167
        %v7169 = vpop.f32.mrb[0].mxu0
        %v7170 = vadd.f32 %v7025, %v7169
        %v7171 = vpop.f32.mrb[0].mxu0
        %v7172 = vadd.f32 %v7029, %v7171
        %7173 = vmatprep.mubr.bf16.mxu0 0
        %7174 = vmatmul.mubr.bf16.gmra.mrb[0].mxu0 %v7078
        %v7175 = vpop.f32.mrb[0].mxu0
        %v7176 = vadd.f32 %v7025, %v7175
        %v7177 = vpop.f32.mrb[0].mxu0
        %v7178 = vadd.f32 %v7029, %v7177
        %v7179 = vpop.f32.mrb[0].mxu0
        %v7180 = vpop.f32.mrb[0].mxu0
        %7181 = vdwg.mxu0
        %v7182 = vmax.f32 %v7115, 0.0
        %v7183 = vmax.f32 %v7117, 0.0
        %v7184 = vmax.f32 %v7166, 0.0
        %v7185 = vmax.f32 %v7168, 0.0
        %v7186 = vmax.f32 %v7119, 0.0
        %v7187 = vmax.f32 %v7121, 0.0
        %v7188 = vmax.f32 %v7170, 0.0
        %v7189 = vmax.f32 %v7172, 0.0
        %v7190 = vmax.f32 %v7125, 0.0
        %v7191 = vmax.f32 %v7127, 0.0
        %v7192 = vmax.f32 %v7176, 0.0
        %v7193 = vmax.f32 %v7178, 0.0
        %v7194 = vpack.c.bf16 %v7186, %v7182
        %v7195 = vpack.c.bf16 %v7187, %v7183
        %v7196 = vpack.c.bf16 %v7188, %v7184
        %v7197 = vpack.c.bf16 %v7189, %v7185
        %v7198 = vpack.c.bf16 %v7190, %v7190
        %v7199 = vpack.c.bf16 %v7191, %v7191
        %v7200 = vpack.c.bf16 %v7192, %v7192
        %v7201 = vpack.c.bf16 %v7193, %v7193
        %s7202 = scalar_lea.vmem %s5, 1024
        %v7203 = vld [vmem:[%s7202] sm:$0xf]
        %v7204 = vld [vmem:[%s7202 + $0x4] sm:$0xf]
        %v7205 = vld [vmem:[%s7202 + $0x8] sm:$0xf]
        %v7206 = vld [vmem:[%s7202 + $0xc] sm:$0xf]
        %v7207 = vld [vmem:[%s7202 + $0x10] sm:$0xf]
        %v7208 = vld [vmem:[%s7202 + $0x14] sm:$0xf]
        %v7209 = vld [vmem:[%s7202 + $0x18] sm:$0xf]
        %v7210 = vld [vmem:[%s7202 + $0x1c] sm:$0xf]
        %v7211 = vld [vmem:[%s7202 + $0x20] sm:$0xf]
        %v7212 = vld [vmem:[%s7202 + $0x24] sm:$0xf]
        %v7213 = vld [vmem:[%s7202 + $0x28] sm:$0xf]
        %v7214 = vld [vmem:[%s7202 + $0x2c] sm:$0xf]
        %v7215 = vld [vmem:[%s7202 + $0x30] sm:$0xf]
        %v7216 = vld [vmem:[%s7202 + $0x34] sm:$0xf]
        %v7217 = vld [vmem:[%s7202 + $0x38] sm:$0xf]
        %v7218 = vld [vmem:[%s7202 + $0x3c] sm:$0xf]
        %v7219 = vld [vmem:[%s7202 + $0x40] sm:$0xf]
        %v7220 = vld [vmem:[%s7202 + $0x44] sm:$0xf]
        %v7221 = vld [vmem:[%s7202 + $0x48] sm:$0xf]
        %v7222 = vld [vmem:[%s7202 + $0x4c] sm:$0xf]
        %v7223 = vld [vmem:[%s7202 + $0x50] sm:$0xf]
        %v7224 = vld [vmem:[%s7202 + $0x54] sm:$0xf]
        %v7225 = vld [vmem:[%s7202 + $0x58] sm:$0xf]
        %v7226 = vld [vmem:[%s7202 + $0x5c] sm:$0xf]
        %v7227 = vld [vmem:[%s7202 + $0x60] sm:$0xf]
        %v7228 = vld [vmem:[%s7202 + $0x64] sm:$0xf]
        %v7229 = vld [vmem:[%s7202 + $0x68] sm:$0xf]
        %v7230 = vld [vmem:[%s7202 + $0x6c] sm:$0xf]
        %v7231 = vld [vmem:[%s7202 + $0x70] sm:$0xf]
        %v7232 = vld [vmem:[%s7202 + $0x74] sm:$0xf]
        %v7233 = vld [vmem:[%s7202 + $0x78] sm:$0xf]
        %v7234 = vld [vmem:[%s7202 + $0x7c] sm:$0xf]
        %v7235 = vld [vmem:[%s7202 + $0x80] sm:$0xf]
        %v7236 = vld [vmem:[%s7202 + $0x84] sm:$0xf]
        %v7237 = vld [vmem:[%s7202 + $0x88] sm:$0xf]
        %v7238 = vld [vmem:[%s7202 + $0x8c] sm:$0xf]
        %v7239 = vld [vmem:[%s7202 + $0x90] sm:$0xf]
        %v7240 = vld [vmem:[%s7202 + $0x94] sm:$0xf]
        %v7241 = vld [vmem:[%s7202 + $0x98] sm:$0xf]
        %v7242 = vld [vmem:[%s7202 + $0x9c] sm:$0xf]
        %v7243 = vld [vmem:[%s7202 + $0xa0] sm:$0xf]
        %v7244 = vld [vmem:[%s7202 + $0xa4] sm:$0xf]
        %v7245 = vld [vmem:[%s7202 + $0xa8] sm:$0xf]
        %v7246 = vld [vmem:[%s7202 + $0xac] sm:$0xf]
        %v7247 = vld [vmem:[%s7202 + $0xb0] sm:$0xf]
        %v7248 = vld [vmem:[%s7202 + $0xb4] sm:$0xf]
        %v7249 = vld [vmem:[%s7202 + $0xb8] sm:$0xf]
        %v7250 = vld [vmem:[%s7202 + $0xbc] sm:$0xf]
        %v7251 = vld [vmem:[%s7202 + $0xc0] sm:$0xf]
        %v7252 = vld [vmem:[%s7202 + $0xc4] sm:$0xf]
        %v7253 = vld [vmem:[%s7202 + $0xc8] sm:$0xf]
        %v7254 = vld [vmem:[%s7202 + $0xcc] sm:$0xf]
        %v7255 = vld [vmem:[%s7202 + $0xd0] sm:$0xf]
        %v7256 = vld [vmem:[%s7202 + $0xd4] sm:$0xf]
        %v7257 = vld [vmem:[%s7202 + $0xd8] sm:$0xf]
        %v7258 = vld [vmem:[%s7202 + $0xdc] sm:$0xf]
        %v7259 = vld [vmem:[%s7202 + $0xe0] sm:$0xf]
        %v7260 = vld [vmem:[%s7202 + $0xe4] sm:$0xf]
        %v7261 = vld [vmem:[%s7202 + $0xe8] sm:$0xf]
        %v7262 = vld [vmem:[%s7202 + $0xec] sm:$0xf]
        %v7263 = vld [vmem:[%s7202 + $0xf0] sm:$0xf]
        %v7264 = vld [vmem:[%s7202 + $0xf4] sm:$0xf]
        %v7265 = vld [vmem:[%s7202 + $0xf8] sm:$0xf]
        %v7266 = vld [vmem:[%s7202 + $0xfc] sm:$0xf]
        %v7267 = vld [vmem:[%s7002 + $0x10] sm:$0xff]
        %v7268 = vld [vmem:[%s7002 + $0x18] sm:$0xff]
        %v7269 = vld [vmem:[%s7002 + $0x50] sm:$0xff]
        %v7270 = vld [vmem:[%s7002 + $0x58] sm:$0xff]
        %v7271 = vld [vmem:[%s7002 + $0x90] sm:$0xff]
        %v7272 = vld [vmem:[%s7002 + $0x98] sm:$0xff]
        %v7273 = vld [vmem:[%s7002 + $0xd0] sm:$0xff]
        %v7274 = vld [vmem:[%s7002 + $0xd8] sm:$0xff]
        %s7275 = scalar_lea.vmem %s3, 9
        %v7276 = vld [vmem:[%s7275] ss:$2 sm:$0xf]
        %v7278 = vlaneseq
        %v7279 = vshrl.u32 %v7278, 7
        %v7280 = vsub.s32 0, %v7279
        %v7281 = vrot.slane %v7276, %v7280
        %v7282 = vlaneseq
        %v7283 = vshrl.u32 %v7282, 7
        %v7284 = vsub.s32 1, %v7283
        %v7285 = vrot.slane %v7276, %v7284
        %v7286 = vlaneseq
        %v7287 = vshrl.u32 %v7286, 7
        %v7288 = vsub.s32 2, %v7287
        %v7289 = vrot.slane %v7276, %v7288
        %v7290 = vlaneseq
        %v7291 = vshrl.u32 %v7290, 7
        %v7292 = vsub.s32 3, %v7291
        %v7293 = vrot.slane %v7276, %v7292
        %v7306 = vunpack.c.l.b16 %v7267
        %v7307 = vunpack.c.h.b16 %v7267
        %v7308 = vunpack.c.l.b16 %v7268
        %v7309 = vunpack.c.h.b16 %v7268
        %v7310 = vunpack.c.l.b16 %v7269
        %v7311 = vunpack.c.h.b16 %v7269
        %v7312 = vunpack.c.l.b16 %v7270
        %v7313 = vunpack.c.h.b16 %v7270
        %v7314 = vunpack.c.l.b16 %v7271
        %v7315 = vunpack.c.h.b16 %v7271
        %v7316 = vunpack.c.l.b16 %v7272
        %v7317 = vunpack.c.h.b16 %v7272
        %v7318 = vunpack.c.l.b16 %v7273
        %v7319 = vunpack.c.h.b16 %v7273
        %v7320 = vunpack.c.l.b16 %v7274
        %v7321 = vunpack.c.h.b16 %v7274
        %v7322 = vpack.c.b16 %v7310, %v7306
        %v7323 = vpack.c.b16 %v7311, %v7307
        %v7324 = vpack.c.b16 %v7312, %v7308
        %v7325 = vpack.c.b16 %v7313, %v7309
        %v7326 = vpack.c.b16 %v7318, %v7314
        %v7327 = vpack.c.b16 %v7319, %v7315
        %v7328 = vpack.c.b16 %v7320, %v7316
        %v7329 = vpack.c.b16 %v7321, %v7317
        %7338 = vmatprep.subr.bf16.mxu0 %v7323
        %7339 = vmatpush1.bf16.msra.mxu0 %v7322
        %7340 = vmatprep.subr.bf16.mxu0 %v7327
        %7341 = vmatpush1.bf16.msra.mxu0 %v7326
        %7342 = vmatprep.subr.bf16.mxu0 0
        %7343 = vmatpush1.bf16.msra.mxu0 0
        %7344 = vmatprep.subr.bf16.mxu0 0
        %7345 = vmatpush1.bf16.msra.mxu0 0
        %7346 = vmatprep.subr.bf16.mxu0 0
        %7347 = vmatpush1.bf16.msra.mxu0 0
        %7348 = vmatprep.subr.bf16.mxu0 0
        %7349 = vmatpush1.bf16.msra.mxu0 0
        %7350 = vmatprep.subr.bf16.mxu0 0
        %7351 = vmatpush1.bf16.msra.mxu0 0
        %7352 = vmatprep.subr.bf16.mxu0 0
        %7353 = vmatpush1.bf16.msra.mxu0 0
        %7354 = vmatprep.subr.bf16.mxu0 0
        %7355 = vmatpush1.bf16.msra.mxu0 0
        %7356 = vmatprep.subr.bf16.mxu0 0
        %7357 = vmatpush1.bf16.msra.mxu0 0
        %7358 = vmatprep.subr.bf16.mxu0 0
        %7359 = vmatpush1.bf16.msra.mxu0 0
        %7360 = vmatprep.subr.bf16.mxu0 0
        %7361 = vmatpush1.bf16.msra.mxu0 0
        %7362 = vmatprep.subr.bf16.mxu0 0
        %7363 = vmatpush1.bf16.msra.mxu0 0
        %7364 = vmatprep.subr.bf16.mxu0 0
        %7365 = vmatpush1.bf16.msra.mxu0 0
        %7366 = vmatprep.subr.bf16.mxu0 0
        %7367 = vmatpush1.bf16.msra.mxu0 0
        %7368 = vmatprep.subr.bf16.mxu0 0
        %7369 = vmatpush1.bf16.msra.mxu0 0
        %7370 = vmatprep.mubr.bf16.mxu0 0
        %7371 = vmatmul.mubr.bf16.gmra.mrb[0].mxu0 %v7075
        %v7372 = vpop.f32.mrb[0].mxu0
        %v7373 = vadd.f32 %v7281, %v7372
        %v7374 = vpop.f32.mrb[0].mxu0
        %v7375 = vadd.f32 %v7285, %v7374
        %v7376 = vpop.f32.mrb[0].mxu0
        %v7377 = vadd.f32 %v7281, %v7376
        %v7378 = vpop.f32.mrb[0].mxu0
        %v7379 = vadd.f32 %v7285, %v7378
        %7380 = vmatprep.mubr.bf16.mxu0 0
        %7381 = vmatmul.mubr.bf16.gmra.mrb[0].mxu0 %v7078
        %v7382 = vpop.f32.mrb[0].mxu0
        %v7383 = vadd.f32 %v7281, %v7382
        %v7384 = vpop.f32.mrb[0].mxu0
        %v7385 = vadd.f32 %v7285, %v7384
        %v7386 = vpop.f32.mrb[0].mxu0
        %v7387 = vpop.f32.mrb[0].mxu0
        %7388 = vdwg.mxu0
        %7389 = vmatprep.subr.bf16.mxu0 %v7325
        %7390 = vmatpush1.bf16.msra.mxu0 %v7324
        %7391 = vmatprep.subr.bf16.mxu0 %v7329
        %7392 = vmatpush1.bf16.msra.mxu0 %v7328
        %7393 = vmatprep.subr.bf16.mxu0 0
        %7394 = vmatpush1.bf16.msra.mxu0 0
        %7395 = vmatprep.subr.bf16.mxu0 0
        %7396 = vmatpush1.bf16.msra.mxu0 0
        %7397 = vmatprep.subr.bf16.mxu0 0
        %7398 = vmatpush1.bf16.msra.mxu0 0
        %7399 = vmatprep.subr.bf16.mxu0 0
        %7400 = vmatpush1.bf16.msra.mxu0 0
        %7401 = vmatprep.subr.bf16.mxu0 0
        %7402 = vmatpush1.bf16.msra.mxu0 0
        %7403 = vmatprep.subr.bf16.mxu0 0
        %7404 = vmatpush1.bf16.msra.mxu0 0
        %7405 = vmatprep.subr.bf16.mxu0 0
        %7406 = vmatpush1.bf16.msra.mxu0 0
        %7407 = vmatprep.subr.bf16.mxu0 0
        %7408 = vmatpush1.bf16.msra.mxu0 0
        %7409 = vmatprep.subr.bf16.mxu0 0
        %7410 = vmatpush1.bf16.msra.mxu0 0
        %7411 = vmatprep.subr.bf16.mxu0 0
        %7412 = vmatpush1.bf16.msra.mxu0 0
        %7413 = vmatprep.subr.bf16.mxu0 0
        %7414 = vmatpush1.bf16.msra.mxu0 0
        %7415 = vmatprep.subr.bf16.mxu0 0
        %7416 = vmatpush1.bf16.msra.mxu0 0
        %7417 = vmatprep.subr.bf16.mxu0 0
        %7418 = vmatpush1.bf16.msra.mxu0 0
        %7419 = vmatprep.subr.bf16.mxu0 0
        %7420 = vmatpush1.bf16.msra.mxu0 0
        %7421 = vmatprep.mubr.bf16.mxu0 0
        %7422 = vmatmul.mubr.bf16.gmra.mrb[0].mxu0 %v7075
        %v7423 = vpop.f32.mrb[0].mxu0
        %v7424 = vadd.f32 %v7289, %v7423
        %v7425 = vpop.f32.mrb[0].mxu0
        %v7426 = vadd.f32 %v7293, %v7425
        %v7427 = vpop.f32.mrb[0].mxu0
        %v7428 = vadd.f32 %v7289, %v7427
        %v7429 = vpop.f32.mrb[0].mxu0
        %v7430 = vadd.f32 %v7293, %v7429
        %7431 = vmatprep.mubr.bf16.mxu0 0
        %7432 = vmatmul.mubr.bf16.gmra.mrb[0].mxu0 %v7078
        %v7433 = vpop.f32.mrb[0].mxu0
        %v7434 = vadd.f32 %v7289, %v7433
        %v7435 = vpop.f32.mrb[0].mxu0
        %v7436 = vadd.f32 %v7293, %v7435
        %v7437 = vpop.f32.mrb[0].mxu0
        %v7438 = vpop.f32.mrb[0].mxu0
        %7439 = vdwg.mxu0
        %v7440 = vmax.f32 %v7373, 0.0
        %v7441 = vmax.f32 %v7375, 0.0
        %v7442 = vmax.f32 %v7424, 0.0
        %v7443 = vmax.f32 %v7426, 0.0
        %v7444 = vmax.f32 %v7377, 0.0
        %v7445 = vmax.f32 %v7379, 0.0
        %v7446 = vmax.f32 %v7428, 0.0
        %v7447 = vmax.f32 %v7430, 0.0
        %v7448 = vmax.f32 %v7383, 0.0
        %v7449 = vmax.f32 %v7385, 0.0
        %v7450 = vmax.f32 %v7434, 0.0
        %v7451 = vmax.f32 %v7436, 0.0
        %v7452 = vpack.c.bf16 %v7444, %v7440
        %v7453 = vpack.c.bf16 %v7445, %v7441
        %v7454 = vpack.c.bf16 %v7446, %v7442
        %v7455 = vpack.c.bf16 %v7447, %v7443
        %v7456 = vpack.c.bf16 %v7448, %v7448
        %v7457 = vpack.c.bf16 %v7449, %v7449
        %v7458 = vpack.c.bf16 %v7450, %v7450
        %v7459 = vpack.c.bf16 %v7451, %v7451
        %v7460 = vld [vmem:[%s7202 + $0x100] sm:$0xf]
        %v7461 = vld [vmem:[%s7202 + $0x104] sm:$0xf]
        %v7462 = vld [vmem:[%s7202 + $0x108] sm:$0xf]
        %v7463 = vld [vmem:[%s7202 + $0x10c] sm:$0xf]
        %v7464 = vld [vmem:[%s7202 + $0x110] sm:$0xf]
        %v7465 = vld [vmem:[%s7202 + $0x114] sm:$0xf]
        %v7466 = vld [vmem:[%s7202 + $0x118] sm:$0xf]
        %v7467 = vld [vmem:[%s7202 + $0x11c] sm:$0xf]
        %v7468 = vld [vmem:[%s7202 + $0x120] sm:$0xf]
        %v7469 = vld [vmem:[%s7202 + $0x124] sm:$0xf]
        %v7470 = vld [vmem:[%s7202 + $0x128] sm:$0xf]
        %v7471 = vld [vmem:[%s7202 + $0x12c] sm:$0xf]
        %v7472 = vld [vmem:[%s7202 + $0x130] sm:$0xf]
        %v7473 = vld [vmem:[%s7202 + $0x134] sm:$0xf]
        %v7474 = vld [vmem:[%s7202 + $0x138] sm:$0xf]
        %v7475 = vld [vmem:[%s7202 + $0x13c] sm:$0xf]
        %v7476 = vld [vmem:[%s7202 + $0x140] sm:$0xf]
        %v7477 = vld [vmem:[%s7202 + $0x144] sm:$0xf]
        %v7478 = vld [vmem:[%s7202 + $0x148] sm:$0xf]
        %v7479 = vld [vmem:[%s7202 + $0x14c] sm:$0xf]
        %v7480 = vld [vmem:[%s7202 + $0x150] sm:$0xf]
        %v7481 = vld [vmem:[%s7202 + $0x154] sm:$0xf]
        %v7482 = vld [vmem:[%s7202 + $0x158] sm:$0xf]
        %v7483 = vld [vmem:[%s7202 + $0x15c] sm:$0xf]
        %v7484 = vld [vmem:[%s7202 + $0x160] sm:$0xf]
        %v7485 = vld [vmem:[%s7202 + $0x164] sm:$0xf]
        %v7486 = vld [vmem:[%s7202 + $0x168] sm:$0xf]
        %v7487 = vld [vmem:[%s7202 + $0x16c] sm:$0xf]
        %v7488 = vld [vmem:[%s7202 + $0x170] sm:$0xf]
        %v7489 = vld [vmem:[%s7202 + $0x174] sm:$0xf]
        %v7490 = vld [vmem:[%s7202 + $0x178] sm:$0xf]
        %v7491 = vld [vmem:[%s7202 + $0x17c] sm:$0xf]
        %v7492 = vld [vmem:[%s7202 + $0x180] sm:$0xf]
        %v7493 = vld [vmem:[%s7202 + $0x184] sm:$0xf]
        %v7494 = vld [vmem:[%s7202 + $0x188] sm:$0xf]
        %v7495 = vld [vmem:[%s7202 + $0x18c] sm:$0xf]
        %v7496 = vld [vmem:[%s7202 + $0x190] sm:$0xf]
        %v7497 = vld [vmem:[%s7202 + $0x194] sm:$0xf]
        %v7498 = vld [vmem:[%s7202 + $0x198] sm:$0xf]
        %v7499 = vld [vmem:[%s7202 + $0x19c] sm:$0xf]
        %v7500 = vld [vmem:[%s7202 + $0x1a0] sm:$0xf]
        %v7501 = vld [vmem:[%s7202 + $0x1a4] sm:$0xf]
        %v7502 = vld [vmem:[%s7202 + $0x1a8] sm:$0xf]
        %v7503 = vld [vmem:[%s7202 + $0x1ac] sm:$0xf]
        %v7504 = vld [vmem:[%s7202 + $0x1b0] sm:$0xf]
        %v7505 = vld [vmem:[%s7202 + $0x1b4] sm:$0xf]
        %v7506 = vld [vmem:[%s7202 + $0x1b8] sm:$0xf]
        %v7507 = vld [vmem:[%s7202 + $0x1bc] sm:$0xf]
        %v7508 = vld [vmem:[%s7202 + $0x1c0] sm:$0xf]
        %v7509 = vld [vmem:[%s7202 + $0x1c4] sm:$0xf]
        %v7510 = vld [vmem:[%s7202 + $0x1c8] sm:$0xf]
        %v7511 = vld [vmem:[%s7202 + $0x1cc] sm:$0xf]
        %v7512 = vld [vmem:[%s7202 + $0x1d0] sm:$0xf]
        %v7513 = vld [vmem:[%s7202 + $0x1d4] sm:$0xf]
        %v7514 = vld [vmem:[%s7202 + $0x1d8] sm:$0xf]
        %v7515 = vld [vmem:[%s7202 + $0x1dc] sm:$0xf]
        %v7516 = vld [vmem:[%s7202 + $0x1e0] sm:$0xf]
        %v7517 = vld [vmem:[%s7202 + $0x1e4] sm:$0xf]
        %v7518 = vld [vmem:[%s7202 + $0x1e8] sm:$0xf]
        %v7519 = vld [vmem:[%s7202 + $0x1ec] sm:$0xf]
        %v7520 = vld [vmem:[%s7202 + $0x1f0] sm:$0xf]
        %v7521 = vld [vmem:[%s7202 + $0x1f4] sm:$0xf]
        %v7522 = vld [vmem:[%s7202 + $0x1f8] sm:$0xf]
        %v7523 = vld [vmem:[%s7202 + $0x1fc] sm:$0xf]
        %v7588 = vunpack.c.l.b16 %v7460
        %v7589 = vunpack.c.l.b16 %v7461
        %v7590 = vunpack.c.l.b16 %v7462
        %v7591 = vunpack.c.l.b16 %v7463
        %v7592 = vunpack.c.l.b16 %v7464
        %v7593 = vunpack.c.l.b16 %v7465
        %v7594 = vunpack.c.l.b16 %v7466
        %v7595 = vunpack.c.l.b16 %v7467
        %v7596 = vunpack.c.l.b16 %v7468
        %v7597 = vunpack.c.l.b16 %v7469
        %v7598 = vunpack.c.l.b16 %v7470
        %v7599 = vunpack.c.l.b16 %v7471
        %v7600 = vunpack.c.l.b16 %v7472
        %v7601 = vunpack.c.l.b16 %v7473
        %v7602 = vunpack.c.l.b16 %v7474
        %v7603 = vunpack.c.l.b16 %v7475
        %v7604 = vunpack.c.l.b16 %v7476
        %v7605 = vunpack.c.l.b16 %v7477
        %v7606 = vunpack.c.l.b16 %v7478
        %v7607 = vunpack.c.l.b16 %v7479
        %v7608 = vunpack.c.l.b16 %v7480
        %v7609 = vunpack.c.l.b16 %v7481
        %v7610 = vunpack.c.l.b16 %v7482
        %v7611 = vunpack.c.l.b16 %v7483
        %v7612 = vunpack.c.l.b16 %v7484
        %v7613 = vunpack.c.l.b16 %v7485
        %v7614 = vunpack.c.l.b16 %v7486
        %v7615 = vunpack.c.l.b16 %v7487
        %v7616 = vunpack.c.l.b16 %v7488
        %v7617 = vunpack.c.l.b16 %v7489
        %v7618 = vunpack.c.l.b16 %v7490
        %v7619 = vunpack.c.l.b16 %v7491
        %v7620 = vunpack.c.l.b16 %v7492
        %v7621 = vunpack.c.l.b16 %v7493
        %v7622 = vunpack.c.l.b16 %v7494
        %v7623 = vunpack.c.l.b16 %v7495
        %v7624 = vunpack.c.l.b16 %v7496
        %v7625 = vunpack.c.l.b16 %v7497
        %v7626 = vunpack.c.l.b16 %v7498
        %v7627 = vunpack.c.l.b16 %v7499
        %v7628 = vunpack.c.l.b16 %v7500
        %v7629 = vunpack.c.l.b16 %v7501
        %v7630 = vunpack.c.l.b16 %v7502
        %v7631 = vunpack.c.l.b16 %v7503
        %v7632 = vunpack.c.l.b16 %v7504
        %v7633 = vunpack.c.l.b16 %v7505
        %v7634 = vunpack.c.l.b16 %v7506
        %v7635 = vunpack.c.l.b16 %v7507
        %v7636 = vunpack.c.l.b16 %v7508
        %v7637 = vunpack.c.l.b16 %v7509
        %v7638 = vunpack.c.l.b16 %v7510
        %v7639 = vunpack.c.l.b16 %v7511
        %v7640 = vunpack.c.l.b16 %v7512
        %v7641 = vunpack.c.l.b16 %v7513
        %v7642 = vunpack.c.l.b16 %v7514
        %v7643 = vunpack.c.l.b16 %v7515
        %v7644 = vunpack.c.l.b16 %v7516
        %v7645 = vunpack.c.l.b16 %v7517
        %v7646 = vunpack.c.l.b16 %v7518
        %v7647 = vunpack.c.l.b16 %v7519
        %v7648 = vunpack.c.l.b16 %v7520
        %v7649 = vunpack.c.l.b16 %v7521
        %v7650 = vunpack.c.l.b16 %v7522
        %v7651 = vunpack.c.l.b16 %v7523
        %v7652 = vpack.c.b16 %v7589, %v7588
        %v7653 = vpack.c.b16 %v7591, %v7590
        %v7654 = vpack.c.b16 %v7593, %v7592
        %v7655 = vpack.c.b16 %v7595, %v7594
        %v7656 = vpack.c.b16 %v7597, %v7596
        %v7657 = vpack.c.b16 %v7599, %v7598
        %v7658 = vpack.c.b16 %v7601, %v7600
        %v7659 = vpack.c.b16 %v7603, %v7602
        %v7660 = vpack.c.b16 %v7605, %v7604
        %v7661 = vpack.c.b16 %v7607, %v7606
        %v7662 = vpack.c.b16 %v7609, %v7608
        %v7663 = vpack.c.b16 %v7611, %v7610
        %v7664 = vpack.c.b16 %v7613, %v7612
        %v7665 = vpack.c.b16 %v7615, %v7614
        %v7666 = vpack.c.b16 %v7617, %v7616
        %v7667 = vpack.c.b16 %v7619, %v7618
        %v7668 = vpack.c.b16 %v7621, %v7620
        %v7669 = vpack.c.b16 %v7623, %v7622
        %v7670 = vpack.c.b16 %v7625, %v7624
        %v7671 = vpack.c.b16 %v7627, %v7626
        %v7672 = vpack.c.b16 %v7629, %v7628
        %v7673 = vpack.c.b16 %v7631, %v7630
        %v7674 = vpack.c.b16 %v7633, %v7632
        %v7675 = vpack.c.b16 %v7635, %v7634
        %v7676 = vpack.c.b16 %v7637, %v7636
        %v7677 = vpack.c.b16 %v7639, %v7638
        %v7678 = vpack.c.b16 %v7641, %v7640
        %v7679 = vpack.c.b16 %v7643, %v7642
        %v7680 = vpack.c.b16 %v7645, %v7644
        %v7681 = vpack.c.b16 %v7647, %v7646
        %v7682 = vpack.c.b16 %v7649, %v7648
        %v7683 = vpack.c.b16 %v7651, %v7650
        %7716 = vmatprep.subr.bf16.mxu0 0
        %7717 = vmatpush1.bf16.msra.mxu0 %v7652
        %7718 = vmatprep.subr.bf16.mxu0 0
        %7719 = vmatpush1.bf16.msra.mxu0 %v7653
        %7720 = vmatprep.subr.bf16.mxu0 0
        %7721 = vmatpush1.bf16.msra.mxu0 %v7654
        %7722 = vmatprep.subr.bf16.mxu0 0
        %7723 = vmatpush1.bf16.msra.mxu0 %v7655
        %7724 = vmatprep.subr.bf16.mxu0 0
        %7725 = vmatpush1.bf16.msra.mxu0 %v7656
        %7726 = vmatprep.subr.bf16.mxu0 0
        %7727 = vmatpush1.bf16.msra.mxu0 %v7657
        %7728 = vmatprep.subr.bf16.mxu0 0
        %7729 = vmatpush1.bf16.msra.mxu0 %v7658
        %7730 = vmatprep.subr.bf16.mxu0 0
        %7731 = vmatpush1.bf16.msra.mxu0 %v7659
        %7732 = vmatprep.subr.bf16.mxu0 0
        %7733 = vmatpush1.bf16.msra.mxu0 %v7660
        %7734 = vmatprep.subr.bf16.mxu0 0
        %7735 = vmatpush1.bf16.msra.mxu0 %v7661
        %7736 = vmatprep.subr.bf16.mxu0 0
        %7737 = vmatpush1.bf16.msra.mxu0 %v7662
        %7738 = vmatprep.subr.bf16.mxu0 0
        %7739 = vmatpush1.bf16.msra.mxu0 %v7663
        %7740 = vmatprep.subr.bf16.mxu0 0
        %7741 = vmatpush1.bf16.msra.mxu0 %v7664
        %7742 = vmatprep.subr.bf16.mxu0 0
        %7743 = vmatpush1.bf16.msra.mxu0 %v7665
        %7744 = vmatprep.subr.bf16.mxu0 0
        %7745 = vmatpush1.bf16.msra.mxu0 %v7666
        %7746 = vmatprep.subr.bf16.mxu0 0
        %7747 = vmatpush1.bf16.msra.mxu0 %v7667
        %7748 = vmatprep.mubr.bf16.mxu0 %v7453
        %7749 = vmatmul.mubr.bf16.gmra.mrb[0].mxu0 %v7452
        %v7750 = vpop.f32.mrb[0].mxu0
        %v7751 = vpop.f32.mrb[0].mxu0
        %v7752 = vpop.f32.mrb[0].mxu0
        %v7753 = vpop.f32.mrb[0].mxu0
        %7754 = vmatprep.mubr.bf16.mxu0 %v7457
        %7755 = vmatmul.mubr.bf16.gmra.mrb[0].mxu0 %v7456
        %v7756 = vpop.f32.mrb[0].mxu0
        %v7757 = vadd.f32 0.0, %v7756
        %v7758 = vpop.f32.mrb[0].mxu0
        %v7759 = vpop.f32.mrb[0].mxu0
        %v7760 = vpop.f32.mrb[0].mxu0
        %7761 = vdwg.mxu0
        %7762 = vmatprep.subr.bf16.mxu0 0
        %7763 = vmatpush1.bf16.msra.mxu0 %v7668
        %7764 = vmatprep.subr.bf16.mxu0 0
        %7765 = vmatpush1.bf16.msra.mxu0 %v7669
        %7766 = vmatprep.subr.bf16.mxu0 0
        %7767 = vmatpush1.bf16.msra.mxu0 %v7670
        %7768 = vmatprep.subr.bf16.mxu0 0
        %7769 = vmatpush1.bf16.msra.mxu0 %v7671
        %7770 = vmatprep.subr.bf16.mxu0 0
        %7771 = vmatpush1.bf16.msra.mxu0 %v7672
        %7772 = vmatprep.subr.bf16.mxu0 0
        %7773 = vmatpush1.bf16.msra.mxu0 %v7673
        %7774 = vmatprep.subr.bf16.mxu0 0
        %7775 = vmatpush1.bf16.msra.mxu0 %v7674
        %7776 = vmatprep.subr.bf16.mxu0 0
        %7777 = vmatpush1.bf16.msra.mxu0 %v7675
        %7778 = vmatprep.subr.bf16.mxu0 0
        %7779 = vmatpush1.bf16.msra.mxu0 %v7676
        %7780 = vmatprep.subr.bf16.mxu0 0
        %7781 = vmatpush1.bf16.msra.mxu0 %v7677
        %7782 = vmatprep.subr.bf16.mxu0 0
        %7783 = vmatpush1.bf16.msra.mxu0 %v7678
        %7784 = vmatprep.subr.bf16.mxu0 0
        %7785 = vmatpush1.bf16.msra.mxu0 %v7679
        %7786 = vmatprep.subr.bf16.mxu0 0
        %7787 = vmatpush1.bf16.msra.mxu0 %v7680
        %7788 = vmatprep.subr.bf16.mxu0 0
        %7789 = vmatpush1.bf16.msra.mxu0 %v7681
        %7790 = vmatprep.subr.bf16.mxu0 0
        %7791 = vmatpush1.bf16.msra.mxu0 %v7682
        %7792 = vmatprep.subr.bf16.mxu0 0
        %7793 = vmatpush1.bf16.msra.mxu0 %v7683
        %7794 = vmatprep.mubr.bf16.mxu0 %v7455
        %7795 = vmatmul.mubr.bf16.gmra.mrb[0].mxu0 %v7454
        %v7796 = vpop.f32.mrb[0].mxu0
        %v7797 = vpop.f32.mrb[0].mxu0
        %v7798 = vpop.f32.mrb[0].mxu0
        %v7799 = vpop.f32.mrb[0].mxu0
        %7800 = vmatprep.mubr.bf16.mxu0 %v7459
        %7801 = vmatmul.mubr.bf16.gmra.mrb[0].mxu0 %v7458
        %v7802 = vpop.f32.mrb[0].mxu0
        %v7803 = vadd.f32 %v7757, %v7802
        %v7804 = vpop.f32.mrb[0].mxu0
        %v7805 = vpop.f32.mrb[0].mxu0
        %v7806 = vpop.f32.mrb[0].mxu0
        %7807 = vdwg.mxu0
        %v7872 = vunpack.c.l.b16 %v7203
        %v7873 = vunpack.c.l.b16 %v7204
        %v7874 = vunpack.c.l.b16 %v7205
        %v7875 = vunpack.c.l.b16 %v7206
        %v7876 = vunpack.c.l.b16 %v7207
        %v7877 = vunpack.c.l.b16 %v7208
        %v7878 = vunpack.c.l.b16 %v7209
        %v7879 = vunpack.c.l.b16 %v7210
        %v7880 = vunpack.c.l.b16 %v7211
        %v7881 = vunpack.c.l.b16 %v7212
        %v7882 = vunpack.c.l.b16 %v7213
        %v7883 = vunpack.c.l.b16 %v7214
        %v7884 = vunpack.c.l.b16 %v7215
        %v7885 = vunpack.c.l.b16 %v7216
        %v7886 = vunpack.c.l.b16 %v7217
        %v7887 = vunpack.c.l.b16 %v7218
        %v7888 = vunpack.c.l.b16 %v7219
        %v7889 = vunpack.c.l.b16 %v7220
        %v7890 = vunpack.c.l.b16 %v7221
        %v7891 = vunpack.c.l.b16 %v7222
        %v7892 = vunpack.c.l.b16 %v7223
        %v7893 = vunpack.c.l.b16 %v7224
        %v7894 = vunpack.c.l.b16 %v7225
        %v7895 = vunpack.c.l.b16 %v7226
        %v7896 = vunpack.c.l.b16 %v7227
        %v7897 = vunpack.c.l.b16 %v7228
        %v7898 = vunpack.c.l.b16 %v7229
        %v7899 = vunpack.c.l.b16 %v7230
        %v7900 = vunpack.c.l.b16 %v7231
        %v7901 = vunpack.c.l.b16 %v7232
        %v7902 = vunpack.c.l.b16 %v7233
        %v7903 = vunpack.c.l.b16 %v7234
        %v7904 = vunpack.c.l.b16 %v7235
        %v7905 = vunpack.c.l.b16 %v7236
        %v7906 = vunpack.c.l.b16 %v7237
        %v7907 = vunpack.c.l.b16 %v7238
        %v7908 = vunpack.c.l.b16 %v7239
        %v7909 = vunpack.c.l.b16 %v7240
        %v7910 = vunpack.c.l.b16 %v7241
        %v7911 = vunpack.c.l.b16 %v7242
        %v7912 = vunpack.c.l.b16 %v7243
        %v7913 = vunpack.c.l.b16 %v7244
        %v7914 = vunpack.c.l.b16 %v7245
        %v7915 = vunpack.c.l.b16 %v7246
        %v7916 = vunpack.c.l.b16 %v7247
        %v7917 = vunpack.c.l.b16 %v7248
        %v7918 = vunpack.c.l.b16 %v7249
        %v7919 = vunpack.c.l.b16 %v7250
        %v7920 = vunpack.c.l.b16 %v7251
        %v7921 = vunpack.c.l.b16 %v7252
        %v7922 = vunpack.c.l.b16 %v7253
        %v7923 = vunpack.c.l.b16 %v7254
        %v7924 = vunpack.c.l.b16 %v7255
        %v7925 = vunpack.c.l.b16 %v7256
        %v7926 = vunpack.c.l.b16 %v7257
        %v7927 = vunpack.c.l.b16 %v7258
        %v7928 = vunpack.c.l.b16 %v7259
        %v7929 = vunpack.c.l.b16 %v7260
        %v7930 = vunpack.c.l.b16 %v7261
        %v7931 = vunpack.c.l.b16 %v7262
        %v7932 = vunpack.c.l.b16 %v7263
        %v7933 = vunpack.c.l.b16 %v7264
        %v7934 = vunpack.c.l.b16 %v7265
        %v7935 = vunpack.c.l.b16 %v7266
        %v7936 = vpack.c.b16 %v7873, %v7872
        %v7937 = vpack.c.b16 %v7875, %v7874
        %v7938 = vpack.c.b16 %v7877, %v7876
        %v7939 = vpack.c.b16 %v7879, %v7878
        %v7940 = vpack.c.b16 %v7881, %v7880
        %v7941 = vpack.c.b16 %v7883, %v7882
        %v7942 = vpack.c.b16 %v7885, %v7884
        %v7943 = vpack.c.b16 %v7887, %v7886
        %v7944 = vpack.c.b16 %v7889, %v7888
        %v7945 = vpack.c.b16 %v7891, %v7890
        %v7946 = vpack.c.b16 %v7893, %v7892
        %v7947 = vpack.c.b16 %v7895, %v7894
        %v7948 = vpack.c.b16 %v7897, %v7896
        %v7949 = vpack.c.b16 %v7899, %v7898
        %v7950 = vpack.c.b16 %v7901, %v7900
        %v7951 = vpack.c.b16 %v7903, %v7902
        %v7952 = vpack.c.b16 %v7905, %v7904
        %v7953 = vpack.c.b16 %v7907, %v7906
        %v7954 = vpack.c.b16 %v7909, %v7908
        %v7955 = vpack.c.b16 %v7911, %v7910
        %v7956 = vpack.c.b16 %v7913, %v7912
        %v7957 = vpack.c.b16 %v7915, %v7914
        %v7958 = vpack.c.b16 %v7917, %v7916
        %v7959 = vpack.c.b16 %v7919, %v7918
        %v7960 = vpack.c.b16 %v7921, %v7920
        %v7961 = vpack.c.b16 %v7923, %v7922
        %v7962 = vpack.c.b16 %v7925, %v7924
        %v7963 = vpack.c.b16 %v7927, %v7926
        %v7964 = vpack.c.b16 %v7929, %v7928
        %v7965 = vpack.c.b16 %v7931, %v7930
        %v7966 = vpack.c.b16 %v7933, %v7932
        %v7967 = vpack.c.b16 %v7935, %v7934
        %8000 = vmatprep.subr.bf16.mxu0 0
        %8001 = vmatpush1.bf16.msra.mxu0 %v7936
        %8002 = vmatprep.subr.bf16.mxu0 0
        %8003 = vmatpush1.bf16.msra.mxu0 %v7937
        %8004 = vmatprep.subr.bf16.mxu0 0
        %8005 = vmatpush1.bf16.msra.mxu0 %v7938
        %8006 = vmatprep.subr.bf16.mxu0 0
        %8007 = vmatpush1.bf16.msra.mxu0 %v7939
        %8008 = vmatprep.subr.bf16.mxu0 0
        %8009 = vmatpush1.bf16.msra.mxu0 %v7940
        %8010 = vmatprep.subr.bf16.mxu0 0
        %8011 = vmatpush1.bf16.msra.mxu0 %v7941
        %8012 = vmatprep.subr.bf16.mxu0 0
        %8013 = vmatpush1.bf16.msra.mxu0 %v7942
        %8014 = vmatprep.subr.bf16.mxu0 0
        %8015 = vmatpush1.bf16.msra.mxu0 %v7943
        %8016 = vmatprep.subr.bf16.mxu0 0
        %8017 = vmatpush1.bf16.msra.mxu0 %v7944
        %8018 = vmatprep.subr.bf16.mxu0 0
        %8019 = vmatpush1.bf16.msra.mxu0 %v7945
        %8020 = vmatprep.subr.bf16.mxu0 0
        %8021 = vmatpush1.bf16.msra.mxu0 %v7946
        %8022 = vmatprep.subr.bf16.mxu0 0
        %8023 = vmatpush1.bf16.msra.mxu0 %v7947
        %8024 = vmatprep.subr.bf16.mxu0 0
        %8025 = vmatpush1.bf16.msra.mxu0 %v7948
        %8026 = vmatprep.subr.bf16.mxu0 0
        %8027 = vmatpush1.bf16.msra.mxu0 %v7949
        %8028 = vmatprep.subr.bf16.mxu0 0
        %8029 = vmatpush1.bf16.msra.mxu0 %v7950
        %8030 = vmatprep.subr.bf16.mxu0 0
        %8031 = vmatpush1.bf16.msra.mxu0 %v7951
        %8032 = vmatprep.mubr.bf16.mxu0 %v7195
        %8033 = vmatmul.mubr.bf16.gmra.mrb[0].mxu0 %v7194
        %v8034 = vpop.f32.mrb[0].mxu0
        %v8035 = vpop.f32.mrb[0].mxu0
        %v8036 = vpop.f32.mrb[0].mxu0
        %v8037 = vpop.f32.mrb[0].mxu0
        %8038 = vmatprep.mubr.bf16.mxu0 %v7199
        %8039 = vmatmul.mubr.bf16.gmra.mrb[0].mxu0 %v7198
        %v8040 = vpop.f32.mrb[0].mxu0
        %v8041 = vadd.f32 %v7803, %v8040
        %v8042 = vpop.f32.mrb[0].mxu0
        %v8043 = vpop.f32.mrb[0].mxu0
        %v8044 = vpop.f32.mrb[0].mxu0
        %8045 = vdwg.mxu0
        %8046 = vmatprep.subr.bf16.mxu0 0
        %8047 = vmatpush1.bf16.msra.mxu0 %v7952
        %8048 = vmatprep.subr.bf16.mxu0 0
        %8049 = vmatpush1.bf16.msra.mxu0 %v7953
        %8050 = vmatprep.subr.bf16.mxu0 0
        %8051 = vmatpush1.bf16.msra.mxu0 %v7954
        %8052 = vmatprep.subr.bf16.mxu0 0
        %8053 = vmatpush1.bf16.msra.mxu0 %v7955
        %8054 = vmatprep.subr.bf16.mxu0 0
        %8055 = vmatpush1.bf16.msra.mxu0 %v7956
        %8056 = vmatprep.subr.bf16.mxu0 0
        %8057 = vmatpush1.bf16.msra.mxu0 %v7957
        %8058 = vmatprep.subr.bf16.mxu0 0
        %8059 = vmatpush1.bf16.msra.mxu0 %v7958
        %8060 = vmatprep.subr.bf16.mxu0 0
        %8061 = vmatpush1.bf16.msra.mxu0 %v7959
        %8062 = vmatprep.subr.bf16.mxu0 0
        %8063 = vmatpush1.bf16.msra.mxu0 %v7960
        %8064 = vmatprep.subr.bf16.mxu0 0
        %8065 = vmatpush1.bf16.msra.mxu0 %v7961
        %8066 = vmatprep.subr.bf16.mxu0 0
        %8067 = vmatpush1.bf16.msra.mxu0 %v7962
        %8068 = vmatprep.subr.bf16.mxu0 0
        %8069 = vmatpush1.bf16.msra.mxu0 %v7963
        %8070 = vmatprep.subr.bf16.mxu0 0
        %8071 = vmatpush1.bf16.msra.mxu0 %v7964
        %8072 = vmatprep.subr.bf16.mxu0 0
        %8073 = vmatpush1.bf16.msra.mxu0 %v7965
        %8074 = vmatprep.subr.bf16.mxu0 0
        %8075 = vmatpush1.bf16.msra.mxu0 %v7966
        %8076 = vmatprep.subr.bf16.mxu0 0
        %8077 = vmatpush1.bf16.msra.mxu0 %v7967
        %8078 = vmatprep.mubr.bf16.mxu0 %v7197
        %8079 = vmatmul.mubr.bf16.gmra.mrb[0].mxu0 %v7196
        %v8080 = vpop.f32.mrb[0].mxu0
        %v8081 = vpop.f32.mrb[0].mxu0
        %v8082 = vpop.f32.mrb[0].mxu0
        %v8083 = vpop.f32.mrb[0].mxu0
        %8084 = vmatprep.mubr.bf16.mxu0 %v7201
        %8085 = vmatmul.mubr.bf16.gmra.mrb[0].mxu0 %v7200
        %v8086 = vpop.f32.mrb[0].mxu0
        %v8087 = vadd.f32 %v8041, %v8086
        %v8088 = vpop.f32.mrb[0].mxu0
        %v8089 = vpop.f32.mrb[0].mxu0
        %v8090 = vpop.f32.mrb[0].mxu0
        %8091 = vdwg.mxu0
        %v8092 = vld [vmem:[%s7002 + $0x20] sm:$0xff]
        %v8093 = vld [vmem:[%s7002 + $0x28] sm:$0xff]
        %v8094 = vld [vmem:[%s7002 + $0x60] sm:$0xff]
        %v8095 = vld [vmem:[%s7002 + $0x68] sm:$0xff]
        %v8096 = vld [vmem:[%s7002 + $0xa0] sm:$0xff]
        %v8097 = vld [vmem:[%s7002 + $0xa8] sm:$0xff]
        %v8098 = vld [vmem:[%s7002 + $0xe0] sm:$0xff]
        %v8099 = vld [vmem:[%s7002 + $0xe8] sm:$0xff]
        %s8100 = scalar_lea.vmem %s3, 17
        %v8101 = vld [vmem:[%s8100] ss:$2 sm:$0xf]
        %v8103 = vlaneseq
        %v8104 = vshrl.u32 %v8103, 7
        %v8105 = vsub.s32 0, %v8104
        %v8106 = vrot.slane %v8101, %v8105
        %v8107 = vlaneseq
        %v8108 = vshrl.u32 %v8107, 7
        %v8109 = vsub.s32 1, %v8108
        %v8110 = vrot.slane %v8101, %v8109
        %v8111 = vlaneseq
        %v8112 = vshrl.u32 %v8111, 7
        %v8113 = vsub.s32 2, %v8112
        %v8114 = vrot.slane %v8101, %v8113
        %v8115 = vlaneseq
        %v8116 = vshrl.u32 %v8115, 7
        %v8117 = vsub.s32 3, %v8116
        %v8118 = vrot.slane %v8101, %v8117
        %v8131 = vunpack.c.l.b16 %v8092
        %v8132 = vunpack.c.h.b16 %v8092
        %v8133 = vunpack.c.l.b16 %v8093
        %v8134 = vunpack.c.h.b16 %v8093
        %v8135 = vunpack.c.l.b16 %v8094
        %v8136 = vunpack.c.h.b16 %v8094
        %v8137 = vunpack.c.l.b16 %v8095
        %v8138 = vunpack.c.h.b16 %v8095
        %v8139 = vunpack.c.l.b16 %v8096
        %v8140 = vunpack.c.h.b16 %v8096
        %v8141 = vunpack.c.l.b16 %v8097
        %v8142 = vunpack.c.h.b16 %v8097
        %v8143 = vunpack.c.l.b16 %v8098
        %v8144 = vunpack.c.h.b16 %v8098
        %v8145 = vunpack.c.l.b16 %v8099
        %v8146 = vunpack.c.h.b16 %v8099
        %v8147 = vpack.c.b16 %v8135, %v8131
        %v8148 = vpack.c.b16 %v8136, %v8132
        %v8149 = vpack.c.b16 %v8137, %v8133
        %v8150 = vpack.c.b16 %v8138, %v8134
        %v8151 = vpack.c.b16 %v8143, %v8139
        %v8152 = vpack.c.b16 %v8144, %v8140
        %v8153 = vpack.c.b16 %v8145, %v8141
        %v8154 = vpack.c.b16 %v8146, %v8142
        %8163 = vmatprep.subr.bf16.mxu0 %v8148
        %8164 = vmatpush1.bf16.msra.mxu0 %v8147
        %8165 = vmatprep.subr.bf16.mxu0 %v8152
        %8166 = vmatpush1.bf16.msra.mxu0 %v8151
        %8167 = vmatprep.subr.bf16.mxu0 0
        %8168 = vmatpush1.bf16.msra.mxu0 0
        %8169 = vmatprep.subr.bf16.mxu0 0
        %8170 = vmatpush1.bf16.msra.mxu0 0
        %8171 = vmatprep.subr.bf16.mxu0 0
        %8172 = vmatpush1.bf16.msra.mxu0 0
        %8173 = vmatprep.subr.bf16.mxu0 0
        %8174 = vmatpush1.bf16.msra.mxu0 0
        %8175 = vmatprep.subr.bf16.mxu0 0
        %8176 = vmatpush1.bf16.msra.mxu0 0
        %8177 = vmatprep.subr.bf16.mxu0 0
        %8178 = vmatpush1.bf16.msra.mxu0 0
        %8179 = vmatprep.subr.bf16.mxu0 0
        %8180 = vmatpush1.bf16.msra.mxu0 0
        %8181 = vmatprep.subr.bf16.mxu0 0
        %8182 = vmatpush1.bf16.msra.mxu0 0
        %8183 = vmatprep.subr.bf16.mxu0 0
        %8184 = vmatpush1.bf16.msra.mxu0 0
        %8185 = vmatprep.subr.bf16.mxu0 0
        %8186 = vmatpush1.bf16.msra.mxu0 0
        %8187 = vmatprep.subr.bf16.mxu0 0
        %8188 = vmatpush1.bf16.msra.mxu0 0
        %8189 = vmatprep.subr.bf16.mxu0 0
        %8190 = vmatpush1.bf16.msra.mxu0 0
        %8191 = vmatprep.subr.bf16.mxu0 0
        %8192 = vmatpush1.bf16.msra.mxu0 0
        %8193 = vmatprep.subr.bf16.mxu0 0
        %8194 = vmatpush1.bf16.msra.mxu0 0
        %8195 = vmatprep.mubr.bf16.mxu0 0
        %8196 = vmatmul.mubr.bf16.gmra.mrb[0].mxu0 %v7075
        %v8197 = vpop.f32.mrb[0].mxu0
        %v8198 = vadd.f32 %v8106, %v8197
        %v8199 = vpop.f32.mrb[0].mxu0
        %v8200 = vadd.f32 %v8110, %v8199
        %v8201 = vpop.f32.mrb[0].mxu0
        %v8202 = vadd.f32 %v8106, %v8201
        %v8203 = vpop.f32.mrb[0].mxu0
        %v8204 = vadd.f32 %v8110, %v8203
        %8205 = vmatprep.mubr.bf16.mxu0 0
        %8206 = vmatmul.mubr.bf16.gmra.mrb[0].mxu0 %v7078
        %v8207 = vpop.f32.mrb[0].mxu0
        %v8208 = vadd.f32 %v8106, %v8207
        %v8209 = vpop.f32.mrb[0].mxu0
        %v8210 = vadd.f32 %v8110, %v8209
        %v8211 = vpop.f32.mrb[0].mxu0
        %v8212 = vpop.f32.mrb[0].mxu0
        %8213 = vdwg.mxu0
        %8214 = vmatprep.subr.bf16.mxu0 %v8150
        %8215 = vmatpush1.bf16.msra.mxu0 %v8149
        %8216 = vmatprep.subr.bf16.mxu0 %v8154
        %8217 = vmatpush1.bf16.msra.mxu0 %v8153
        %8218 = vmatprep.subr.bf16.mxu0 0
        %8219 = vmatpush1.bf16.msra.mxu0 0
        %8220 = vmatprep.subr.bf16.mxu0 0
        %8221 = vmatpush1.bf16.msra.mxu0 0
        %8222 = vmatprep.subr.bf16.mxu0 0
        %8223 = vmatpush1.bf16.msra.mxu0 0
        %8224 = vmatprep.subr.bf16.mxu0 0
        %8225 = vmatpush1.bf16.msra.mxu0 0
        %8226 = vmatprep.subr.bf16.mxu0 0
        %8227 = vmatpush1.bf16.msra.mxu0 0
        %8228 = vmatprep.subr.bf16.mxu0 0
        %8229 = vmatpush1.bf16.msra.mxu0 0
        %8230 = vmatprep.subr.bf16.mxu0 0
        %8231 = vmatpush1.bf16.msra.mxu0 0
        %8232 = vmatprep.subr.bf16.mxu0 0
        %8233 = vmatpush1.bf16.msra.mxu0 0
        %8234 = vmatprep.subr.bf16.mxu0 0
        %8235 = vmatpush1.bf16.msra.mxu0 0
        %8236 = vmatprep.subr.bf16.mxu0 0
        %8237 = vmatpush1.bf16.msra.mxu0 0
        %8238 = vmatprep.subr.bf16.mxu0 0
        %8239 = vmatpush1.bf16.msra.mxu0 0
        %8240 = vmatprep.subr.bf16.mxu0 0
        %8241 = vmatpush1.bf16.msra.mxu0 0
        %8242 = vmatprep.subr.bf16.mxu0 0
        %8243 = vmatpush1.bf16.msra.mxu0 0
        %8244 = vmatprep.subr.bf16.mxu0 0
        %8245 = vmatpush1.bf16.msra.mxu0 0
        %8246 = vmatprep.mubr.bf16.mxu0 0
        %8247 = vmatmul.mubr.bf16.gmra.mrb[0].mxu0 %v7075
        %v8248 = vpop.f32.mrb[0].mxu0
        %v8249 = vadd.f32 %v8114, %v8248
        %v8250 = vpop.f32.mrb[0].mxu0
        %v8251 = vadd.f32 %v8118, %v8250
        %v8252 = vpop.f32.mrb[0].mxu0
        %v8253 = vadd.f32 %v8114, %v8252
        %v8254 = vpop.f32.mrb[0].mxu0
        %v8255 = vadd.f32 %v8118, %v8254
        %8256 = vmatprep.mubr.bf16.mxu0 0
        %8257 = vmatmul.mubr.bf16.gmra.mrb[0].mxu0 %v7078
        %v8258 = vpop.f32.mrb[0].mxu0
        %v8259 = vadd.f32 %v8114, %v8258
        %v8260 = vpop.f32.mrb[0].mxu0
        %v8261 = vadd.f32 %v8118, %v8260
        %v8262 = vpop.f32.mrb[0].mxu0
        %v8263 = vpop.f32.mrb[0].mxu0
        %8264 = vdwg.mxu0
        %v8265 = vmax.f32 %v8198, 0.0
        %v8266 = vmax.f32 %v8200, 0.0
        %v8267 = vmax.f32 %v8249, 0.0
        %v8268 = vmax.f32 %v8251, 0.0
        %v8269 = vmax.f32 %v8202, 0.0
        %v8270 = vmax.f32 %v8204, 0.0
        %v8271 = vmax.f32 %v8253, 0.0
        %v8272 = vmax.f32 %v8255, 0.0
        %v8273 = vmax.f32 %v8208, 0.0
        %v8274 = vmax.f32 %v8210, 0.0
        %v8275 = vmax.f32 %v8259, 0.0
        %v8276 = vmax.f32 %v8261, 0.0
        %v8277 = vpack.c.bf16 %v8269, %v8265
        %v8278 = vpack.c.bf16 %v8270, %v8266
        %v8279 = vpack.c.bf16 %v8271, %v8267
        %v8280 = vpack.c.bf16 %v8272, %v8268
        %v8281 = vpack.c.bf16 %v8273, %v8273
        %v8282 = vpack.c.bf16 %v8274, %v8274
        %v8283 = vpack.c.bf16 %v8275, %v8275
        %v8284 = vpack.c.bf16 %v8276, %v8276
        %v8285 = vld [vmem:[%s7202 + $0x200] sm:$0xf]
        %v8286 = vld [vmem:[%s7202 + $0x204] sm:$0xf]
        %v8287 = vld [vmem:[%s7202 + $0x208] sm:$0xf]
        %v8288 = vld [vmem:[%s7202 + $0x20c] sm:$0xf]
        %v8289 = vld [vmem:[%s7202 + $0x210] sm:$0xf]
        %v8290 = vld [vmem:[%s7202 + $0x214] sm:$0xf]
        %v8291 = vld [vmem:[%s7202 + $0x218] sm:$0xf]
        %v8292 = vld [vmem:[%s7202 + $0x21c] sm:$0xf]
        %v8293 = vld [vmem:[%s7202 + $0x220] sm:$0xf]
        %v8294 = vld [vmem:[%s7202 + $0x224] sm:$0xf]
        %v8295 = vld [vmem:[%s7202 + $0x228] sm:$0xf]
        %v8296 = vld [vmem:[%s7202 + $0x22c] sm:$0xf]
        %v8297 = vld [vmem:[%s7202 + $0x230] sm:$0xf]
        %v8298 = vld [vmem:[%s7202 + $0x234] sm:$0xf]
        %v8299 = vld [vmem:[%s7202 + $0x238] sm:$0xf]
        %v8300 = vld [vmem:[%s7202 + $0x23c] sm:$0xf]
        %v8301 = vld [vmem:[%s7202 + $0x240] sm:$0xf]
        %v8302 = vld [vmem:[%s7202 + $0x244] sm:$0xf]
        %v8303 = vld [vmem:[%s7202 + $0x248] sm:$0xf]
        %v8304 = vld [vmem:[%s7202 + $0x24c] sm:$0xf]
        %v8305 = vld [vmem:[%s7202 + $0x250] sm:$0xf]
        %v8306 = vld [vmem:[%s7202 + $0x254] sm:$0xf]
        %v8307 = vld [vmem:[%s7202 + $0x258] sm:$0xf]
        %v8308 = vld [vmem:[%s7202 + $0x25c] sm:$0xf]
        %v8309 = vld [vmem:[%s7202 + $0x260] sm:$0xf]
        %v8310 = vld [vmem:[%s7202 + $0x264] sm:$0xf]
        %v8311 = vld [vmem:[%s7202 + $0x268] sm:$0xf]
        %v8312 = vld [vmem:[%s7202 + $0x26c] sm:$0xf]
        %v8313 = vld [vmem:[%s7202 + $0x270] sm:$0xf]
        %v8314 = vld [vmem:[%s7202 + $0x274] sm:$0xf]
        %v8315 = vld [vmem:[%s7202 + $0x278] sm:$0xf]
        %v8316 = vld [vmem:[%s7202 + $0x27c] sm:$0xf]
        %v8317 = vld [vmem:[%s7202 + $0x280] sm:$0xf]
        %v8318 = vld [vmem:[%s7202 + $0x284] sm:$0xf]
        %v8319 = vld [vmem:[%s7202 + $0x288] sm:$0xf]
        %v8320 = vld [vmem:[%s7202 + $0x28c] sm:$0xf]
        %v8321 = vld [vmem:[%s7202 + $0x290] sm:$0xf]
        %v8322 = vld [vmem:[%s7202 + $0x294] sm:$0xf]
        %v8323 = vld [vmem:[%s7202 + $0x298] sm:$0xf]
        %v8324 = vld [vmem:[%s7202 + $0x29c] sm:$0xf]
        %v8325 = vld [vmem:[%s7202 + $0x2a0] sm:$0xf]
        %v8326 = vld [vmem:[%s7202 + $0x2a4] sm:$0xf]
        %v8327 = vld [vmem:[%s7202 + $0x2a8] sm:$0xf]
        %v8328 = vld [vmem:[%s7202 + $0x2ac] sm:$0xf]
        %v8329 = vld [vmem:[%s7202 + $0x2b0] sm:$0xf]
        %v8330 = vld [vmem:[%s7202 + $0x2b4] sm:$0xf]
        %v8331 = vld [vmem:[%s7202 + $0x2b8] sm:$0xf]
        %v8332 = vld [vmem:[%s7202 + $0x2bc] sm:$0xf]
        %v8333 = vld [vmem:[%s7202 + $0x2c0] sm:$0xf]
        %v8334 = vld [vmem:[%s7202 + $0x2c4] sm:$0xf]
        %v8335 = vld [vmem:[%s7202 + $0x2c8] sm:$0xf]
        %v8336 = vld [vmem:[%s7202 + $0x2cc] sm:$0xf]
        %v8337 = vld [vmem:[%s7202 + $0x2d0] sm:$0xf]
        %v8338 = vld [vmem:[%s7202 + $0x2d4] sm:$0xf]
        %v8339 = vld [vmem:[%s7202 + $0x2d8] sm:$0xf]
        %v8340 = vld [vmem:[%s7202 + $0x2dc] sm:$0xf]
        %v8341 = vld [vmem:[%s7202 + $0x2e0] sm:$0xf]
        %v8342 = vld [vmem:[%s7202 + $0x2e4] sm:$0xf]
        %v8343 = vld [vmem:[%s7202 + $0x2e8] sm:$0xf]
        %v8344 = vld [vmem:[%s7202 + $0x2ec] sm:$0xf]
        %v8345 = vld [vmem:[%s7202 + $0x2f0] sm:$0xf]
        %v8346 = vld [vmem:[%s7202 + $0x2f4] sm:$0xf]
        %v8347 = vld [vmem:[%s7202 + $0x2f8] sm:$0xf]
        %v8348 = vld [vmem:[%s7202 + $0x2fc] sm:$0xf]
        %v8413 = vunpack.c.l.b16 %v8285
        %v8414 = vunpack.c.l.b16 %v8286
        %v8415 = vunpack.c.l.b16 %v8287
        %v8416 = vunpack.c.l.b16 %v8288
        %v8417 = vunpack.c.l.b16 %v8289
        %v8418 = vunpack.c.l.b16 %v8290
        %v8419 = vunpack.c.l.b16 %v8291
        %v8420 = vunpack.c.l.b16 %v8292
        %v8421 = vunpack.c.l.b16 %v8293
        %v8422 = vunpack.c.l.b16 %v8294
        %v8423 = vunpack.c.l.b16 %v8295
        %v8424 = vunpack.c.l.b16 %v8296
        %v8425 = vunpack.c.l.b16 %v8297
        %v8426 = vunpack.c.l.b16 %v8298
        %v8427 = vunpack.c.l.b16 %v8299
        %v8428 = vunpack.c.l.b16 %v8300
        %v8429 = vunpack.c.l.b16 %v8301
        %v8430 = vunpack.c.l.b16 %v8302
        %v8431 = vunpack.c.l.b16 %v8303
        %v8432 = vunpack.c.l.b16 %v8304
        %v8433 = vunpack.c.l.b16 %v8305
        %v8434 = vunpack.c.l.b16 %v8306
        %v8435 = vunpack.c.l.b16 %v8307
        %v8436 = vunpack.c.l.b16 %v8308
        %v8437 = vunpack.c.l.b16 %v8309
        %v8438 = vunpack.c.l.b16 %v8310
        %v8439 = vunpack.c.l.b16 %v8311
        %v8440 = vunpack.c.l.b16 %v8312
        %v8441 = vunpack.c.l.b16 %v8313
        %v8442 = vunpack.c.l.b16 %v8314
        %v8443 = vunpack.c.l.b16 %v8315
        %v8444 = vunpack.c.l.b16 %v8316
        %v8445 = vunpack.c.l.b16 %v8317
        %v8446 = vunpack.c.l.b16 %v8318
        %v8447 = vunpack.c.l.b16 %v8319
        %v8448 = vunpack.c.l.b16 %v8320
        %v8449 = vunpack.c.l.b16 %v8321
        %v8450 = vunpack.c.l.b16 %v8322
        %v8451 = vunpack.c.l.b16 %v8323
        %v8452 = vunpack.c.l.b16 %v8324
        %v8453 = vunpack.c.l.b16 %v8325
        %v8454 = vunpack.c.l.b16 %v8326
        %v8455 = vunpack.c.l.b16 %v8327
        %v8456 = vunpack.c.l.b16 %v8328
        %v8457 = vunpack.c.l.b16 %v8329
        %v8458 = vunpack.c.l.b16 %v8330
        %v8459 = vunpack.c.l.b16 %v8331
        %v8460 = vunpack.c.l.b16 %v8332
        %v8461 = vunpack.c.l.b16 %v8333
        %v8462 = vunpack.c.l.b16 %v8334
        %v8463 = vunpack.c.l.b16 %v8335
        %v8464 = vunpack.c.l.b16 %v8336
        %v8465 = vunpack.c.l.b16 %v8337
        %v8466 = vunpack.c.l.b16 %v8338
        %v8467 = vunpack.c.l.b16 %v8339
        %v8468 = vunpack.c.l.b16 %v8340
        %v8469 = vunpack.c.l.b16 %v8341
        %v8470 = vunpack.c.l.b16 %v8342
        %v8471 = vunpack.c.l.b16 %v8343
        %v8472 = vunpack.c.l.b16 %v8344
        %v8473 = vunpack.c.l.b16 %v8345
        %v8474 = vunpack.c.l.b16 %v8346
        %v8475 = vunpack.c.l.b16 %v8347
        %v8476 = vunpack.c.l.b16 %v8348
        %v8477 = vpack.c.b16 %v8414, %v8413
        %v8478 = vpack.c.b16 %v8416, %v8415
        %v8479 = vpack.c.b16 %v8418, %v8417
        %v8480 = vpack.c.b16 %v8420, %v8419
        %v8481 = vpack.c.b16 %v8422, %v8421
        %v8482 = vpack.c.b16 %v8424, %v8423
        %v8483 = vpack.c.b16 %v8426, %v8425
        %v8484 = vpack.c.b16 %v8428, %v8427
        %v8485 = vpack.c.b16 %v8430, %v8429
        %v8486 = vpack.c.b16 %v8432, %v8431
        %v8487 = vpack.c.b16 %v8434, %v8433
        %v8488 = vpack.c.b16 %v8436, %v8435
        %v8489 = vpack.c.b16 %v8438, %v8437
        %v8490 = vpack.c.b16 %v8440, %v8439
        %v8491 = vpack.c.b16 %v8442, %v8441
        %v8492 = vpack.c.b16 %v8444, %v8443
        %v8493 = vpack.c.b16 %v8446, %v8445
        %v8494 = vpack.c.b16 %v8448, %v8447
        %v8495 = vpack.c.b16 %v8450, %v8449
        %v8496 = vpack.c.b16 %v8452, %v8451
        %v8497 = vpack.c.b16 %v8454, %v8453
        %v8498 = vpack.c.b16 %v8456, %v8455
        %v8499 = vpack.c.b16 %v8458, %v8457
        %v8500 = vpack.c.b16 %v8460, %v8459
        %v8501 = vpack.c.b16 %v8462, %v8461
        %v8502 = vpack.c.b16 %v8464, %v8463
        %v8503 = vpack.c.b16 %v8466, %v8465
        %v8504 = vpack.c.b16 %v8468, %v8467
        %v8505 = vpack.c.b16 %v8470, %v8469
        %v8506 = vpack.c.b16 %v8472, %v8471
        %v8507 = vpack.c.b16 %v8474, %v8473
        %v8508 = vpack.c.b16 %v8476, %v8475
        %8541 = vmatprep.subr.bf16.mxu0 0
        %8542 = vmatpush1.bf16.msra.mxu0 %v8477
        %8543 = vmatprep.subr.bf16.mxu0 0
        %8544 = vmatpush1.bf16.msra.mxu0 %v8478
        %8545 = vmatprep.subr.bf16.mxu0 0
        %8546 = vmatpush1.bf16.msra.mxu0 %v8479
        %8547 = vmatprep.subr.bf16.mxu0 0
        %8548 = vmatpush1.bf16.msra.mxu0 %v8480
        %8549 = vmatprep.subr.bf16.mxu0 0
        %8550 = vmatpush1.bf16.msra.mxu0 %v8481
        %8551 = vmatprep.subr.bf16.mxu0 0
        %8552 = vmatpush1.bf16.msra.mxu0 %v8482
        %8553 = vmatprep.subr.bf16.mxu0 0
        %8554 = vmatpush1.bf16.msra.mxu0 %v8483
        %8555 = vmatprep.subr.bf16.mxu0 0
        %8556 = vmatpush1.bf16.msra.mxu0 %v8484
        %8557 = vmatprep.subr.bf16.mxu0 0
        %8558 = vmatpush1.bf16.msra.mxu0 %v8485
        %8559 = vmatprep.subr.bf16.mxu0 0
        %8560 = vmatpush1.bf16.msra.mxu0 %v8486
        %8561 = vmatprep.subr.bf16.mxu0 0
        %8562 = vmatpush1.bf16.msra.mxu0 %v8487
        %8563 = vmatprep.subr.bf16.mxu0 0
        %8564 = vmatpush1.bf16.msra.mxu0 %v8488
        %8565 = vmatprep.subr.bf16.mxu0 0
        %8566 = vmatpush1.bf16.msra.mxu0 %v8489
        %8567 = vmatprep.subr.bf16.mxu0 0
        %8568 = vmatpush1.bf16.msra.mxu0 %v8490
        %8569 = vmatprep.subr.bf16.mxu0 0
        %8570 = vmatpush1.bf16.msra.mxu0 %v8491
        %8571 = vmatprep.subr.bf16.mxu0 0
        %8572 = vmatpush1.bf16.msra.mxu0 %v8492
        %8573 = vmatprep.mubr.bf16.mxu0 %v8278
        %8574 = vmatmul.mubr.bf16.gmra.mrb[0].mxu0 %v8277
        %v8575 = vpop.f32.mrb[0].mxu0
        %v8576 = vpop.f32.mrb[0].mxu0
        %v8577 = vpop.f32.mrb[0].mxu0
        %v8578 = vpop.f32.mrb[0].mxu0
        %8579 = vmatprep.mubr.bf16.mxu0 %v8282
        %8580 = vmatmul.mubr.bf16.gmra.mrb[0].mxu0 %v8281
        %v8581 = vpop.f32.mrb[0].mxu0
        %v8582 = vadd.f32 0.0, %v8581
        %v8583 = vpop.f32.mrb[0].mxu0
        %v8584 = vpop.f32.mrb[0].mxu0
        %v8585 = vpop.f32.mrb[0].mxu0
        %8586 = vdwg.mxu0
        %8587 = vmatprep.subr.bf16.mxu0 0
        %8588 = vmatpush1.bf16.msra.mxu0 %v8493
        %8589 = vmatprep.subr.bf16.mxu0 0
        %8590 = vmatpush1.bf16.msra.mxu0 %v8494
        %8591 = vmatprep.subr.bf16.mxu0 0
        %8592 = vmatpush1.bf16.msra.mxu0 %v8495
        %8593 = vmatprep.subr.bf16.mxu0 0
        %8594 = vmatpush1.bf16.msra.mxu0 %v8496
        %8595 = vmatprep.subr.bf16.mxu0 0
        %8596 = vmatpush1.bf16.msra.mxu0 %v8497
        %8597 = vmatprep.subr.bf16.mxu0 0
        %8598 = vmatpush1.bf16.msra.mxu0 %v8498
        %8599 = vmatprep.subr.bf16.mxu0 0
        %8600 = vmatpush1.bf16.msra.mxu0 %v8499
        %8601 = vmatprep.subr.bf16.mxu0 0
        %8602 = vmatpush1.bf16.msra.mxu0 %v8500
        %8603 = vmatprep.subr.bf16.mxu0 0
        %8604 = vmatpush1.bf16.msra.mxu0 %v8501
        %8605 = vmatprep.subr.bf16.mxu0 0
        %8606 = vmatpush1.bf16.msra.mxu0 %v8502
        %8607 = vmatprep.subr.bf16.mxu0 0
        %8608 = vmatpush1.bf16.msra.mxu0 %v8503
        %8609 = vmatprep.subr.bf16.mxu0 0
        %8610 = vmatpush1.bf16.msra.mxu0 %v8504
        %8611 = vmatprep.subr.bf16.mxu0 0
        %8612 = vmatpush1.bf16.msra.mxu0 %v8505
        %8613 = vmatprep.subr.bf16.mxu0 0
        %8614 = vmatpush1.bf16.msra.mxu0 %v8506
        %8615 = vmatprep.subr.bf16.mxu0 0
        %8616 = vmatpush1.bf16.msra.mxu0 %v8507
        %8617 = vmatprep.subr.bf16.mxu0 0
        %8618 = vmatpush1.bf16.msra.mxu0 %v8508
        %8619 = vmatprep.mubr.bf16.mxu0 %v8280
        %8620 = vmatmul.mubr.bf16.gmra.mrb[0].mxu0 %v8279
        %v8621 = vpop.f32.mrb[0].mxu0
        %v8622 = vpop.f32.mrb[0].mxu0
        %v8623 = vpop.f32.mrb[0].mxu0
        %v8624 = vpop.f32.mrb[0].mxu0
        %8625 = vmatprep.mubr.bf16.mxu0 %v8284
        %8626 = vmatmul.mubr.bf16.gmra.mrb[0].mxu0 %v8283
        %v8627 = vpop.f32.mrb[0].mxu0
        %v8628 = vadd.f32 %v8582, %v8627
        %v8629 = vpop.f32.mrb[0].mxu0
        %v8630 = vpop.f32.mrb[0].mxu0
        %v8631 = vpop.f32.mrb[0].mxu0
        %8632 = vdwg.mxu0
        %v8633 = vadd.f32 %v8087, %v8628
        %v8634 = vld [vmem:[%s7002 + $0x30] sm:$0xff]
        %v8635 = vld [vmem:[%s7002 + $0x38] sm:$0xff]
        %v8636 = vld [vmem:[%s7002 + $0x70] sm:$0xff]
        %v8637 = vld [vmem:[%s7002 + $0x78] sm:$0xff]
        %v8638 = vld [vmem:[%s7002 + $0xb0] sm:$0xff]
        %v8639 = vld [vmem:[%s7002 + $0xb8] sm:$0xff]
        %v8640 = vld [vmem:[%s7002 + $0xf0] sm:$0xff]
        %v8641 = vld [vmem:[%s7002 + $0xf8] sm:$0xff]
        %s8642 = scalar_lea.vmem %s3, 25
        %v8643 = vld [vmem:[%s8642] ss:$2 sm:$0xf]
        %v8645 = vlaneseq
        %v8646 = vshrl.u32 %v8645, 7
        %v8647 = vsub.s32 0, %v8646
        %v8648 = vrot.slane %v8643, %v8647
        %v8649 = vlaneseq
        %v8650 = vshrl.u32 %v8649, 7
        %v8651 = vsub.s32 1, %v8650
        %v8652 = vrot.slane %v8643, %v8651
        %v8653 = vlaneseq
        %v8654 = vshrl.u32 %v8653, 7
        %v8655 = vsub.s32 2, %v8654
        %v8656 = vrot.slane %v8643, %v8655
        %v8657 = vlaneseq
        %v8658 = vshrl.u32 %v8657, 7
        %v8659 = vsub.s32 3, %v8658
        %v8660 = vrot.slane %v8643, %v8659
        %v8673 = vunpack.c.l.b16 %v8634
        %v8674 = vunpack.c.h.b16 %v8634
        %v8675 = vunpack.c.l.b16 %v8635
        %v8676 = vunpack.c.h.b16 %v8635
        %v8677 = vunpack.c.l.b16 %v8636
        %v8678 = vunpack.c.h.b16 %v8636
        %v8679 = vunpack.c.l.b16 %v8637
        %v8680 = vunpack.c.h.b16 %v8637
        %v8681 = vunpack.c.l.b16 %v8638
        %v8682 = vunpack.c.h.b16 %v8638
        %v8683 = vunpack.c.l.b16 %v8639
        %v8684 = vunpack.c.h.b16 %v8639
        %v8685 = vunpack.c.l.b16 %v8640
        %v8686 = vunpack.c.h.b16 %v8640
        %v8687 = vunpack.c.l.b16 %v8641
        %v8688 = vunpack.c.h.b16 %v8641
        %v8689 = vpack.c.b16 %v8677, %v8673
        %v8690 = vpack.c.b16 %v8678, %v8674
        %v8691 = vpack.c.b16 %v8679, %v8675
        %v8692 = vpack.c.b16 %v8680, %v8676
        %v8693 = vpack.c.b16 %v8685, %v8681
        %v8694 = vpack.c.b16 %v8686, %v8682
        %v8695 = vpack.c.b16 %v8687, %v8683
        %v8696 = vpack.c.b16 %v8688, %v8684
        %8705 = vmatprep.subr.bf16.mxu0 %v8690
        %8706 = vmatpush1.bf16.msra.mxu0 %v8689
        %8707 = vmatprep.subr.bf16.mxu0 %v8694
        %8708 = vmatpush1.bf16.msra.mxu0 %v8693
        %8709 = vmatprep.subr.bf16.mxu0 0
        %8710 = vmatpush1.bf16.msra.mxu0 0
        %8711 = vmatprep.subr.bf16.mxu0 0
        %8712 = vmatpush1.bf16.msra.mxu0 0
        %8713 = vmatprep.subr.bf16.mxu0 0
        %8714 = vmatpush1.bf16.msra.mxu0 0
        %8715 = vmatprep.subr.bf16.mxu0 0
        %8716 = vmatpush1.bf16.msra.mxu0 0
        %8717 = vmatprep.subr.bf16.mxu0 0
        %8718 = vmatpush1.bf16.msra.mxu0 0
        %8719 = vmatprep.subr.bf16.mxu0 0
        %8720 = vmatpush1.bf16.msra.mxu0 0
        %8721 = vmatprep.subr.bf16.mxu0 0
        %8722 = vmatpush1.bf16.msra.mxu0 0
        %8723 = vmatprep.subr.bf16.mxu0 0
        %8724 = vmatpush1.bf16.msra.mxu0 0
        %8725 = vmatprep.subr.bf16.mxu0 0
        %8726 = vmatpush1.bf16.msra.mxu0 0
        %8727 = vmatprep.subr.bf16.mxu0 0
        %8728 = vmatpush1.bf16.msra.mxu0 0
        %8729 = vmatprep.subr.bf16.mxu0 0
        %8730 = vmatpush1.bf16.msra.mxu0 0
        %8731 = vmatprep.subr.bf16.mxu0 0
        %8732 = vmatpush1.bf16.msra.mxu0 0
        %8733 = vmatprep.subr.bf16.mxu0 0
        %8734 = vmatpush1.bf16.msra.mxu0 0
        %8735 = vmatprep.subr.bf16.mxu0 0
        %8736 = vmatpush1.bf16.msra.mxu0 0
        %8737 = vmatprep.mubr.bf16.mxu0 0
        %8738 = vmatmul.mubr.bf16.gmra.mrb[0].mxu0 %v7075
        %v8739 = vpop.f32.mrb[0].mxu0
        %v8740 = vadd.f32 %v8648, %v8739
        %v8741 = vpop.f32.mrb[0].mxu0
        %v8742 = vadd.f32 %v8652, %v8741
        %v8743 = vpop.f32.mrb[0].mxu0
        %v8744 = vadd.f32 %v8648, %v8743
        %v8745 = vpop.f32.mrb[0].mxu0
        %v8746 = vadd.f32 %v8652, %v8745
        %8747 = vmatprep.mubr.bf16.mxu0 0
        %8748 = vmatmul.mubr.bf16.gmra.mrb[0].mxu0 %v7078
        %v8749 = vpop.f32.mrb[0].mxu0
        %v8750 = vadd.f32 %v8648, %v8749
        %v8751 = vpop.f32.mrb[0].mxu0
        %v8752 = vadd.f32 %v8652, %v8751
        %v8753 = vpop.f32.mrb[0].mxu0
        %v8754 = vpop.f32.mrb[0].mxu0
        %8755 = vdwg.mxu0
        %8756 = vmatprep.subr.bf16.mxu0 %v8692
        %8757 = vmatpush1.bf16.msra.mxu0 %v8691
        %8758 = vmatprep.subr.bf16.mxu0 %v8696
        %8759 = vmatpush1.bf16.msra.mxu0 %v8695
        %8760 = vmatprep.subr.bf16.mxu0 0
        %8761 = vmatpush1.bf16.msra.mxu0 0
        %8762 = vmatprep.subr.bf16.mxu0 0
        %8763 = vmatpush1.bf16.msra.mxu0 0
        %8764 = vmatprep.subr.bf16.mxu0 0
        %8765 = vmatpush1.bf16.msra.mxu0 0
        %8766 = vmatprep.subr.bf16.mxu0 0
        %8767 = vmatpush1.bf16.msra.mxu0 0
        %8768 = vmatprep.subr.bf16.mxu0 0
        %8769 = vmatpush1.bf16.msra.mxu0 0
        %8770 = vmatprep.subr.bf16.mxu0 0
        %8771 = vmatpush1.bf16.msra.mxu0 0
        %8772 = vmatprep.subr.bf16.mxu0 0
        %8773 = vmatpush1.bf16.msra.mxu0 0
        %8774 = vmatprep.subr.bf16.mxu0 0
        %8775 = vmatpush1.bf16.msra.mxu0 0
        %8776 = vmatprep.subr.bf16.mxu0 0
        %8777 = vmatpush1.bf16.msra.mxu0 0
        %8778 = vmatprep.subr.bf16.mxu0 0
        %8779 = vmatpush1.bf16.msra.mxu0 0
        %8780 = vmatprep.subr.bf16.mxu0 0
        %8781 = vmatpush1.bf16.msra.mxu0 0
        %8782 = vmatprep.subr.bf16.mxu0 0
        %8783 = vmatpush1.bf16.msra.mxu0 0
        %8784 = vmatprep.subr.bf16.mxu0 0
        %8785 = vmatpush1.bf16.msra.mxu0 0
        %8786 = vmatprep.subr.bf16.mxu0 0
        %8787 = vmatpush1.bf16.msra.mxu0 0
        %8788 = vmatprep.mubr.bf16.mxu0 0
        %8789 = vmatmul.mubr.bf16.gmra.mrb[0].mxu0 %v7075
        %v8790 = vpop.f32.mrb[0].mxu0
        %v8791 = vadd.f32 %v8656, %v8790
        %v8792 = vpop.f32.mrb[0].mxu0
        %v8793 = vadd.f32 %v8660, %v8792
        %v8794 = vpop.f32.mrb[0].mxu0
        %v8795 = vadd.f32 %v8656, %v8794
        %v8796 = vpop.f32.mrb[0].mxu0
        %v8797 = vadd.f32 %v8660, %v8796
        %8798 = vmatprep.mubr.bf16.mxu0 0
        %8799 = vmatmul.mubr.bf16.gmra.mrb[0].mxu0 %v7078
        %v8800 = vpop.f32.mrb[0].mxu0
        %v8801 = vadd.f32 %v8656, %v8800
        %v8802 = vpop.f32.mrb[0].mxu0
        %v8803 = vadd.f32 %v8660, %v8802
        %v8804 = vpop.f32.mrb[0].mxu0
        %v8805 = vpop.f32.mrb[0].mxu0
        %8806 = vdwg.mxu0
        %v8807 = vmax.f32 %v8740, 0.0
        %v8808 = vmax.f32 %v8742, 0.0
        %v8809 = vmax.f32 %v8791, 0.0
        %v8810 = vmax.f32 %v8793, 0.0
        %v8811 = vmax.f32 %v8744, 0.0
        %v8812 = vmax.f32 %v8746, 0.0
        %v8813 = vmax.f32 %v8795, 0.0
        %v8814 = vmax.f32 %v8797, 0.0
        %v8815 = vmax.f32 %v8750, 0.0
        %v8816 = vmax.f32 %v8752, 0.0
        %v8817 = vmax.f32 %v8801, 0.0
        %v8818 = vmax.f32 %v8803, 0.0
        %v8819 = vpack.c.bf16 %v8811, %v8807
        %v8820 = vpack.c.bf16 %v8812, %v8808
        %v8821 = vpack.c.bf16 %v8813, %v8809
        %v8822 = vpack.c.bf16 %v8814, %v8810
        %v8823 = vpack.c.bf16 %v8815, %v8815
        %v8824 = vpack.c.bf16 %v8816, %v8816
        %v8825 = vpack.c.bf16 %v8817, %v8817
        %v8826 = vpack.c.bf16 %v8818, %v8818
        %v8827 = vld [vmem:[%s7202 + $0x300] sm:$0xf]
        %v8828 = vld [vmem:[%s7202 + $0x304] sm:$0xf]
        %v8829 = vld [vmem:[%s7202 + $0x308] sm:$0xf]
        %v8830 = vld [vmem:[%s7202 + $0x30c] sm:$0xf]
        %v8831 = vld [vmem:[%s7202 + $0x310] sm:$0xf]
        %v8832 = vld [vmem:[%s7202 + $0x314] sm:$0xf]
        %v8833 = vld [vmem:[%s7202 + $0x318] sm:$0xf]
        %v8834 = vld [vmem:[%s7202 + $0x31c] sm:$0xf]
        %v8835 = vld [vmem:[%s7202 + $0x320] sm:$0xf]
        %v8836 = vld [vmem:[%s7202 + $0x324] sm:$0xf]
        %v8837 = vld [vmem:[%s7202 + $0x328] sm:$0xf]
        %v8838 = vld [vmem:[%s7202 + $0x32c] sm:$0xf]
        %v8839 = vld [vmem:[%s7202 + $0x330] sm:$0xf]
        %v8840 = vld [vmem:[%s7202 + $0x334] sm:$0xf]
        %v8841 = vld [vmem:[%s7202 + $0x338] sm:$0xf]
        %v8842 = vld [vmem:[%s7202 + $0x33c] sm:$0xf]
        %v8843 = vld [vmem:[%s7202 + $0x340] sm:$0xf]
        %v8844 = vld [vmem:[%s7202 + $0x344] sm:$0xf]
        %v8845 = vld [vmem:[%s7202 + $0x348] sm:$0xf]
        %v8846 = vld [vmem:[%s7202 + $0x34c] sm:$0xf]
        %v8847 = vld [vmem:[%s7202 + $0x350] sm:$0xf]
        %v8848 = vld [vmem:[%s7202 + $0x354] sm:$0xf]
        %v8849 = vld [vmem:[%s7202 + $0x358] sm:$0xf]
        %v8850 = vld [vmem:[%s7202 + $0x35c] sm:$0xf]
        %v8851 = vld [vmem:[%s7202 + $0x360] sm:$0xf]
        %v8852 = vld [vmem:[%s7202 + $0x364] sm:$0xf]
        %v8853 = vld [vmem:[%s7202 + $0x368] sm:$0xf]
        %v8854 = vld [vmem:[%s7202 + $0x36c] sm:$0xf]
        %v8855 = vld [vmem:[%s7202 + $0x370] sm:$0xf]
        %v8856 = vld [vmem:[%s7202 + $0x374] sm:$0xf]
        %v8857 = vld [vmem:[%s7202 + $0x378] sm:$0xf]
        %v8858 = vld [vmem:[%s7202 + $0x37c] sm:$0xf]
        %v8859 = vld [vmem:[%s7202 + $0x380] sm:$0xf]
        %v8860 = vld [vmem:[%s7202 + $0x384] sm:$0xf]
        %v8861 = vld [vmem:[%s7202 + $0x388] sm:$0xf]
        %v8862 = vld [vmem:[%s7202 + $0x38c] sm:$0xf]
        %v8863 = vld [vmem:[%s7202 + $0x390] sm:$0xf]
        %v8864 = vld [vmem:[%s7202 + $0x394] sm:$0xf]
        %v8865 = vld [vmem:[%s7202 + $0x398] sm:$0xf]
        %v8866 = vld [vmem:[%s7202 + $0x39c] sm:$0xf]
        %v8867 = vld [vmem:[%s7202 + $0x3a0] sm:$0xf]
        %v8868 = vld [vmem:[%s7202 + $0x3a4] sm:$0xf]
        %v8869 = vld [vmem:[%s7202 + $0x3a8] sm:$0xf]
        %v8870 = vld [vmem:[%s7202 + $0x3ac] sm:$0xf]
        %v8871 = vld [vmem:[%s7202 + $0x3b0] sm:$0xf]
        %v8872 = vld [vmem:[%s7202 + $0x3b4] sm:$0xf]
        %v8873 = vld [vmem:[%s7202 + $0x3b8] sm:$0xf]
        %v8874 = vld [vmem:[%s7202 + $0x3bc] sm:$0xf]
        %v8875 = vld [vmem:[%s7202 + $0x3c0] sm:$0xf]
        %v8876 = vld [vmem:[%s7202 + $0x3c4] sm:$0xf]
        %v8877 = vld [vmem:[%s7202 + $0x3c8] sm:$0xf]
        %v8878 = vld [vmem:[%s7202 + $0x3cc] sm:$0xf]
        %v8879 = vld [vmem:[%s7202 + $0x3d0] sm:$0xf]
        %v8880 = vld [vmem:[%s7202 + $0x3d4] sm:$0xf]
        %v8881 = vld [vmem:[%s7202 + $0x3d8] sm:$0xf]
        %v8882 = vld [vmem:[%s7202 + $0x3dc] sm:$0xf]
        %v8883 = vld [vmem:[%s7202 + $0x3e0] sm:$0xf]
        %v8884 = vld [vmem:[%s7202 + $0x3e4] sm:$0xf]
        %v8885 = vld [vmem:[%s7202 + $0x3e8] sm:$0xf]
        %v8886 = vld [vmem:[%s7202 + $0x3ec] sm:$0xf]
        %v8887 = vld [vmem:[%s7202 + $0x3f0] sm:$0xf]
        %v8888 = vld [vmem:[%s7202 + $0x3f4] sm:$0xf]
        %v8889 = vld [vmem:[%s7202 + $0x3f8] sm:$0xf]
        %v8890 = vld [vmem:[%s7202 + $0x3fc] sm:$0xf]
        %v8955 = vunpack.c.l.b16 %v8827
        %v8956 = vunpack.c.l.b16 %v8828
        %v8957 = vunpack.c.l.b16 %v8829
        %v8958 = vunpack.c.l.b16 %v8830
        %v8959 = vunpack.c.l.b16 %v8831
        %v8960 = vunpack.c.l.b16 %v8832
        %v8961 = vunpack.c.l.b16 %v8833
        %v8962 = vunpack.c.l.b16 %v8834
        %v8963 = vunpack.c.l.b16 %v8835
        %v8964 = vunpack.c.l.b16 %v8836
        %v8965 = vunpack.c.l.b16 %v8837
        %v8966 = vunpack.c.l.b16 %v8838
        %v8967 = vunpack.c.l.b16 %v8839
        %v8968 = vunpack.c.l.b16 %v8840
        %v8969 = vunpack.c.l.b16 %v8841
        %v8970 = vunpack.c.l.b16 %v8842
        %v8971 = vunpack.c.l.b16 %v8843
        %v8972 = vunpack.c.l.b16 %v8844
        %v8973 = vunpack.c.l.b16 %v8845
        %v8974 = vunpack.c.l.b16 %v8846
        %v8975 = vunpack.c.l.b16 %v8847
        %v8976 = vunpack.c.l.b16 %v8848
        %v8977 = vunpack.c.l.b16 %v8849
        %v8978 = vunpack.c.l.b16 %v8850
        %v8979 = vunpack.c.l.b16 %v8851
        %v8980 = vunpack.c.l.b16 %v8852
        %v8981 = vunpack.c.l.b16 %v8853
        %v8982 = vunpack.c.l.b16 %v8854
        %v8983 = vunpack.c.l.b16 %v8855
        %v8984 = vunpack.c.l.b16 %v8856
        %v8985 = vunpack.c.l.b16 %v8857
        %v8986 = vunpack.c.l.b16 %v8858
        %v8987 = vunpack.c.l.b16 %v8859
        %v8988 = vunpack.c.l.b16 %v8860
        %v8989 = vunpack.c.l.b16 %v8861
        %v8990 = vunpack.c.l.b16 %v8862
        %v8991 = vunpack.c.l.b16 %v8863
        %v8992 = vunpack.c.l.b16 %v8864
        %v8993 = vunpack.c.l.b16 %v8865
        %v8994 = vunpack.c.l.b16 %v8866
        %v8995 = vunpack.c.l.b16 %v8867
        %v8996 = vunpack.c.l.b16 %v8868
        %v8997 = vunpack.c.l.b16 %v8869
        %v8998 = vunpack.c.l.b16 %v8870
        %v8999 = vunpack.c.l.b16 %v8871
        %v9000 = vunpack.c.l.b16 %v8872
        %v9001 = vunpack.c.l.b16 %v8873
        %v9002 = vunpack.c.l.b16 %v8874
        %v9003 = vunpack.c.l.b16 %v8875
        %v9004 = vunpack.c.l.b16 %v8876
        %v9005 = vunpack.c.l.b16 %v8877
        %v9006 = vunpack.c.l.b16 %v8878
        %v9007 = vunpack.c.l.b16 %v8879
        %v9008 = vunpack.c.l.b16 %v8880
        %v9009 = vunpack.c.l.b16 %v8881
        %v9010 = vunpack.c.l.b16 %v8882
        %v9011 = vunpack.c.l.b16 %v8883
        %v9012 = vunpack.c.l.b16 %v8884
        %v9013 = vunpack.c.l.b16 %v8885
        %v9014 = vunpack.c.l.b16 %v8886
        %v9015 = vunpack.c.l.b16 %v8887
        %v9016 = vunpack.c.l.b16 %v8888
        %v9017 = vunpack.c.l.b16 %v8889
        %v9018 = vunpack.c.l.b16 %v8890
        %v9019 = vpack.c.b16 %v8956, %v8955
        %v9020 = vpack.c.b16 %v8958, %v8957
        %v9021 = vpack.c.b16 %v8960, %v8959
        %v9022 = vpack.c.b16 %v8962, %v8961
        %v9023 = vpack.c.b16 %v8964, %v8963
        %v9024 = vpack.c.b16 %v8966, %v8965
        %v9025 = vpack.c.b16 %v8968, %v8967
        %v9026 = vpack.c.b16 %v8970, %v8969
        %v9027 = vpack.c.b16 %v8972, %v8971
        %v9028 = vpack.c.b16 %v8974, %v8973
        %v9029 = vpack.c.b16 %v8976, %v8975
        %v9030 = vpack.c.b16 %v8978, %v8977
        %v9031 = vpack.c.b16 %v8980, %v8979
        %v9032 = vpack.c.b16 %v8982, %v8981
        %v9033 = vpack.c.b16 %v8984, %v8983
        %v9034 = vpack.c.b16 %v8986, %v8985
        %v9035 = vpack.c.b16 %v8988, %v8987
        %v9036 = vpack.c.b16 %v8990, %v8989
        %v9037 = vpack.c.b16 %v8992, %v8991
        %v9038 = vpack.c.b16 %v8994, %v8993
        %v9039 = vpack.c.b16 %v8996, %v8995
        %v9040 = vpack.c.b16 %v8998, %v8997
        %v9041 = vpack.c.b16 %v9000, %v8999
        %v9042 = vpack.c.b16 %v9002, %v9001
        %v9043 = vpack.c.b16 %v9004, %v9003
        %v9044 = vpack.c.b16 %v9006, %v9005
        %v9045 = vpack.c.b16 %v9008, %v9007
        %v9046 = vpack.c.b16 %v9010, %v9009
        %v9047 = vpack.c.b16 %v9012, %v9011
        %v9048 = vpack.c.b16 %v9014, %v9013
        %v9049 = vpack.c.b16 %v9016, %v9015
        %v9050 = vpack.c.b16 %v9018, %v9017
        %9083 = vmatprep.subr.bf16.mxu0 0
        %9084 = vmatpush1.bf16.msra.mxu0 %v9019
        %9085 = vmatprep.subr.bf16.mxu0 0
        %9086 = vmatpush1.bf16.msra.mxu0 %v9020
        %9087 = vmatprep.subr.bf16.mxu0 0
        %9088 = vmatpush1.bf16.msra.mxu0 %v9021
        %9089 = vmatprep.subr.bf16.mxu0 0
        %9090 = vmatpush1.bf16.msra.mxu0 %v9022
        %9091 = vmatprep.subr.bf16.mxu0 0
        %9092 = vmatpush1.bf16.msra.mxu0 %v9023
        %9093 = vmatprep.subr.bf16.mxu0 0
        %9094 = vmatpush1.bf16.msra.mxu0 %v9024
        %9095 = vmatprep.subr.bf16.mxu0 0
        %9096 = vmatpush1.bf16.msra.mxu0 %v9025
        %9097 = vmatprep.subr.bf16.mxu0 0
        %9098 = vmatpush1.bf16.msra.mxu0 %v9026
        %9099 = vmatprep.subr.bf16.mxu0 0
        %9100 = vmatpush1.bf16.msra.mxu0 %v9027
        %9101 = vmatprep.subr.bf16.mxu0 0
        %9102 = vmatpush1.bf16.msra.mxu0 %v9028
        %9103 = vmatprep.subr.bf16.mxu0 0
        %9104 = vmatpush1.bf16.msra.mxu0 %v9029
        %9105 = vmatprep.subr.bf16.mxu0 0
        %9106 = vmatpush1.bf16.msra.mxu0 %v9030
        %9107 = vmatprep.subr.bf16.mxu0 0
        %9108 = vmatpush1.bf16.msra.mxu0 %v9031
        %9109 = vmatprep.subr.bf16.mxu0 0
        %9110 = vmatpush1.bf16.msra.mxu0 %v9032
        %9111 = vmatprep.subr.bf16.mxu0 0
        %9112 = vmatpush1.bf16.msra.mxu0 %v9033
        %9113 = vmatprep.subr.bf16.mxu0 0
        %9114 = vmatpush1.bf16.msra.mxu0 %v9034
        %9115 = vmatprep.mubr.bf16.mxu0 %v8820
        %9116 = vmatmul.mubr.bf16.gmra.mrb[0].mxu0 %v8819
        %v9117 = vpop.f32.mrb[0].mxu0
        %v9118 = vpop.f32.mrb[0].mxu0
        %v9119 = vpop.f32.mrb[0].mxu0
        %v9120 = vpop.f32.mrb[0].mxu0
        %9121 = vmatprep.mubr.bf16.mxu0 %v8824
        %9122 = vmatmul.mubr.bf16.gmra.mrb[0].mxu0 %v8823
        %v9123 = vpop.f32.mrb[0].mxu0
        %v9124 = vadd.f32 0.0, %v9123
        %v9125 = vpop.f32.mrb[0].mxu0
        %v9126 = vpop.f32.mrb[0].mxu0
        %v9127 = vpop.f32.mrb[0].mxu0
        %9128 = vdwg.mxu0
        %9129 = vmatprep.subr.bf16.mxu0 0
        %9130 = vmatpush1.bf16.msra.mxu0 %v9035
        %9131 = vmatprep.subr.bf16.mxu0 0
        %9132 = vmatpush1.bf16.msra.mxu0 %v9036
        %9133 = vmatprep.subr.bf16.mxu0 0
        %9134 = vmatpush1.bf16.msra.mxu0 %v9037
        %9135 = vmatprep.subr.bf16.mxu0 0
        %9136 = vmatpush1.bf16.msra.mxu0 %v9038
        %9137 = vmatprep.subr.bf16.mxu0 0
        %9138 = vmatpush1.bf16.msra.mxu0 %v9039
        %9139 = vmatprep.subr.bf16.mxu0 0
        %9140 = vmatpush1.bf16.msra.mxu0 %v9040
        %9141 = vmatprep.subr.bf16.mxu0 0
        %9142 = vmatpush1.bf16.msra.mxu0 %v9041
        %9143 = vmatprep.subr.bf16.mxu0 0
        %9144 = vmatpush1.bf16.msra.mxu0 %v9042
        %9145 = vmatprep.subr.bf16.mxu0 0
        %9146 = vmatpush1.bf16.msra.mxu0 %v9043
        %9147 = vmatprep.subr.bf16.mxu0 0
        %9148 = vmatpush1.bf16.msra.mxu0 %v9044
        %9149 = vmatprep.subr.bf16.mxu0 0
        %9150 = vmatpush1.bf16.msra.mxu0 %v9045
        %9151 = vmatprep.subr.bf16.mxu0 0
        %9152 = vmatpush1.bf16.msra.mxu0 %v9046
        %9153 = vmatprep.subr.bf16.mxu0 0
        %9154 = vmatpush1.bf16.msra.mxu0 %v9047
        %9155 = vmatprep.subr.bf16.mxu0 0
        %9156 = vmatpush1.bf16.msra.mxu0 %v9048
        %9157 = vmatprep.subr.bf16.mxu0 0
        %9158 = vmatpush1.bf16.msra.mxu0 %v9049
        %9159 = vmatprep.subr.bf16.mxu0 0
        %9160 = vmatpush1.bf16.msra.mxu0 %v9050
        %9161 = vmatprep.mubr.bf16.mxu0 %v8822
        %9162 = vmatmul.mubr.bf16.gmra.mrb[0].mxu0 %v8821
        %v9163 = vpop.f32.mrb[0].mxu0
        %v9164 = vpop.f32.mrb[0].mxu0
        %v9165 = vpop.f32.mrb[0].mxu0
        %v9166 = vpop.f32.mrb[0].mxu0
        %9167 = vmatprep.mubr.bf16.mxu0 %v8826
        %9168 = vmatmul.mubr.bf16.gmra.mrb[0].mxu0 %v8825
        %v9169 = vpop.f32.mrb[0].mxu0
        %v9170 = vadd.f32 %v9124, %v9169
        %v9171 = vpop.f32.mrb[0].mxu0
        %v9172 = vpop.f32.mrb[0].mxu0
        %v9173 = vpop.f32.mrb[0].mxu0
        %9174 = vdwg.mxu0
        %v9175 = vadd.f32 %v8633, %v9170
        %v9176 = vadd.f32 %v6999, %v9175
        %v9177 = vld [vmem:[%s2 + $0x1e5] ss:$0 sm:$0xff]
        %v9178 = vadd.f32 %v9176, %v9177
        %v9179 = vld [vmem:[%s2 + $0x1e3] ss:$0 sm:$0xff]
        %v9180 = vld [vmem:[%s2 + $0x1e4] ss:$0 sm:$0xff]
        %v9181 = vsel %vm483, %v9178, 0.0
        %9182 = vadd.xlane.f32.xlu0 %v9181
        %v9183 = vpop.xlane.xlu0 %9182
        %v9184 = vmul.f32 %v9183, %v2577
        %v9185 = vsub.f32 %v9178, %v9184
        %v9186 = vmul.f32 %v9185, %v9185
        %v9187 = vsel %vm483, %v9186, 0.0
        %9188 = vadd.xlane.f32.xlu0 %v9187
        %v9189 = vpop.xlane.xlu0 %9188
        %v9190 = vmul.f32 %v9189, %v2577
        %v9191 = vadd.f32 %v9190, 1e-05
        %v9192 = vrsqrt.pop %v9191
        %v9193 = vmul.f32 %v9185, %v9192
        %v9194 = vmul.f32 %v9193, %v9179
        %v9195 = vadd.f32 %v9194, %v9180
        %v9196 = vld [vmem:[%s2 + $0x150] sm:$0xf8]
        %v9197 = vld [vmem:[%s2 + $0x168] sm:$0xff]
        %v9198 = vld [vmem:[%s2 + $0x180] sm:$0xff]
        %v9199 = vld [vmem:[%s2 + $0x198] sm:$0xff]
        %v9200 = vld [vmem:[%s2 + $0x1b0] sm:$0x7]
        %v9201 = vld [vmem:[%s2 + $0x1b5] ss:$0 sm:$0xff]
        %vm9207 = vcmask 1044480
        %v9208 = vrot.slane %v9196, 3
        %v9209 = vrot.slane %v9197, 3
        %v9210 = vsel %vm9207, %v9208, %v9209
        %v9211 = vrot.slane %v9198, 3
        %v9212 = vsel %vm9207, %v9209, %v9211
        %v9213 = vrot.slane %v9199, 3
        %v9214 = vsel %vm9207, %v9211, %v9213
        %v9215 = vrot.slane %v9200, 3
        %v9216 = vsel %vm9207, %v9213, %v9215
        %v9222 = vsel %vm483, %v9195, 0
        %9224 = vmatprep.subr.mxu0 0.0
        %9225 = vmatpush1.msra.mxu0 %v9210
        %9226 = vmatprep.subr.mxu0 0.0
        %9227 = vmatpush1.msra.mxu0 %v9212
        %9228 = vmatprep.subr.mxu0 0.0
        %9229 = vmatpush1.msra.mxu0 %v9214
        %9230 = vmatprep.subr.mxu0 0.0
        %9231 = vmatpush1.msra.mxu0 %v9216
        %9232 = vmatprep.subr.mxu0 0.0
        %9233 = vmatpush1.msra.mxu0 0.0
        %9234 = vmatprep.subr.mxu0 0.0
        %9235 = vmatpush1.msra.mxu0 0.0
        %9236 = vmatprep.subr.mxu0 0.0
        %9237 = vmatpush1.msra.mxu0 0.0
        %9238 = vmatprep.subr.mxu0 0.0
        %9239 = vmatpush1.msra.mxu0 0.0
        %9240 = vmatprep.subr.mxu0 0.0
        %9241 = vmatpush1.msra.mxu0 0.0
        %9242 = vmatprep.subr.mxu0 0.0
        %9243 = vmatpush1.msra.mxu0 0.0
        %9244 = vmatprep.subr.mxu0 0.0
        %9245 = vmatpush1.msra.mxu0 0.0
        %9246 = vmatprep.subr.mxu0 0.0
        %9247 = vmatpush1.msra.mxu0 0.0
        %9248 = vmatprep.subr.mxu0 0.0
        %9249 = vmatpush1.msra.mxu0 0.0
        %9250 = vmatprep.subr.mxu0 0.0
        %9251 = vmatpush1.msra.mxu0 0.0
        %9252 = vmatprep.subr.mxu0 0.0
        %9253 = vmatpush1.msra.mxu0 0.0
        %9254 = vmatprep.subr.mxu0 0.0
        %9255 = vmatpush1.msra.mxu0 0.0
        %9256 = vmatprep.subr.mxu0 0.0
        %9257 = vmatpush1.msra.mxu0 0.0
        %9258 = vmatprep.subr.mxu0 0.0
        %9259 = vmatpush1.msra.mxu0 0.0
        %9260 = vmatprep.subr.mxu0 0.0
        %9261 = vmatpush1.msra.mxu0 0.0
        %9262 = vmatprep.subr.mxu0 0.0
        %9263 = vmatpush1.msra.mxu0 0.0
        %9264 = vmatprep.subr.mxu0 0.0
        %9265 = vmatpush1.msra.mxu0 0.0
        %9266 = vmatprep.subr.mxu0 0.0
        %9267 = vmatpush1.msra.mxu0 0.0
        %9268 = vmatprep.subr.mxu0 0.0
        %9269 = vmatpush1.msra.mxu0 0.0
        %9270 = vmatprep.subr.mxu0 0.0
        %9271 = vmatpush1.msra.mxu0 0.0
        %9272 = vmatprep.subr.mxu0 0.0
        %9273 = vmatpush1.msra.mxu0 0.0
        %9274 = vmatprep.subr.mxu0 0.0
        %9275 = vmatpush1.msra.mxu0 0.0
        %9276 = vmatprep.subr.mxu0 0.0
        %9277 = vmatpush1.msra.mxu0 0.0
        %9278 = vmatprep.subr.mxu0 0.0
        %9279 = vmatpush1.msra.mxu0 0.0
        %9280 = vmatprep.subr.mxu0 0.0
        %9281 = vmatpush1.msra.mxu0 0.0
        %9282 = vmatprep.subr.mxu0 0.0
        %9283 = vmatpush1.msra.mxu0 0.0
        %9284 = vmatprep.subr.mxu0 0.0
        %9285 = vmatpush1.msra.mxu0 0.0
        %9286 = vmatprep.subr.mxu0 0.0
        %9287 = vmatpush1.msra.mxu0 0.0
        %9288 = vmatprep.mubr.f32.mxu0 0.0
        %9289 = vmatmul.mubr.f32.gmra.mrb[0].mxu0 %v9222
        %v9290 = vpop.f32.mrb[0].mxu0
        %v9291 = vadd.f32 %v9201, %v9290
        %v9292 = vpop.f32.mrb[0].mxu0
        %9293 = vdwg.mxu0
        %vm9294 = vcmask 32768
        %9295 = vst.msk [vmem:[%s255] sm:$0x1] %vm9294, %v9291
        %s9296 = sand.u32 %s164, 1
        %s9297 = scalar_lea.sflag [#allocation3], %s9296
        %s9298 = sand.u32 %s164, 1
        %s9299 = scalar_lea.vmem [#allocation2], %s9298
        // Predicated region
        $region45: #{tpu_custom_call.1} parent=43 // pred_check
          %p9300 = pneg %p174
        $region46: #{tpu_custom_call.1} parent=43 // pred_check_branch
          %9302 = sbr.rel (%p9300) target = $region48
        $region47: #{tpu_custom_call.1} parent=43 // pred_region
          %s9304 = ssub.s32 16, 16
          %9305 = vsyncadd %s9297, %s9304
          %s9306 = smul.addr %s20, 16
          %s9307 = scalar_lea.hbm %s6, %s9306
          %s9309 = sshll.u32 %s9299, 4
          %s9310 = int_to_ptr.vmem [resolvable:$true] %s9309
          %9312 = dma.vmem_to_hbm [thread:$0]  %s9310, 16, %s9307, %s9297
        $region48: #{tpu_custom_call.1} parent=43 // pred_fallthru
          _
      $region44: #{tpu_custom_call.1} parent=5 // pred_fallthru
        _
      %p9313 = scmp.le.s32.totalorder 2, %s15
      // Predicated region
      $region49: #{tpu_custom_call.1} parent=5 // pred_check
        %p9314 = pneg %p9313
      $region50: #{tpu_custom_call.1} parent=5 // pred_check_branch
        %9316 = sbr.rel (%p9314) target = $region52
      $region51: #{tpu_custom_call.1} parent=5 // pred_region
        %s9317 = ssub.s32 %s15, 2
        // Predicated region
        $region53: #{tpu_custom_call.1} parent=51 // pred_check
          %p9318 = pneg %p180
        $region54: #{tpu_custom_call.1} parent=51 // pred_check_branch
          %9320 = sbr.rel (%p9318) target = $region56
        $region55: #{tpu_custom_call.1} parent=51 // pred_region
          %s9321 = sand.u32 %s165, 1
          %s9322 = scalar_lea.sflag [#allocation3], %s9321
          %s9323 = sand.u32 %s165, 1
          %s9324 = scalar_lea.vmem [#allocation2], %s9323
          %9325 = dma.done %s9322, 16
        $region56: #{tpu_custom_call.1} parent=51 // pred_fallthru
          _
      $region52: #{tpu_custom_call.1} parent=5 // pred_fallthru
        _
    $region6: #{tpu_custom_call.1} parent=1 // loop_footer
      %s19 = sadd.s32 1, %s15
    $region7: #{tpu_custom_call.1} parent=1 // loop_footer_branch
      %14 = sbr.rel target = $region3
    $region8: #{tpu_custom_call.1} parent=1 // loop_exit
      _
    %9326 = vsyncpa [#allocation3], 1
    %s9327 = scalar_lea.sflag [#allocation3], 1
    %9328 = vsyncpa %s9327, 1

</llo_original>
